<compile_context>
chip_gen: v7x
topology: tpu7x:2x2x1
jax: 0.10.0
libtpu: 0.0.40
codegen_flags: <defaults>
</compile_context>

<pallas_src>
import functools
import math

import jax
import jax.numpy as jnp
from jax import lax
from jax.experimental import pallas as pl
from jax.experimental.pallas import tpu as pltpu


_TIME_CHUNK = 64   # phase-1 chunk length; bounds x-gate scratch to O(Tc)


# ----------------------------- Pallas kernel --------------------------------

def make_fused_lstm_kernel(n_layers, seq_len, time_chunk, b_tile, hidden_p):
    """Builds the fused kernel for static (n_layers, T, Tc, b_tile, Hp)."""
    Hp = hidden_p
    T = seq_len
    Tc = time_chunk
    n_chunks = (T + Tc - 1) // Tc

    def kernel(*refs):
        # refs layout:
        #   x_ref                              (T*b_tile, D)        bf16
        #   [w_ih_l, w_hh_l, b_l] * n_layers   (D_l,4Hp) bf16, (Hp,4Hp) bf16,
        #                                      (1,4Hp) f32
        #   w_lin (Hp,Op) bf16, b_lin (1,Op) f32
        #   out_ref (b_tile, Op) f32
        #   scratch: seq_scr (T*b_tile,Hp) bf16, gx_scr (Tc*b_tile,4Hp) f32
        x_ref = refs[0]
        w_refs = refs[1:1 + 3 * n_layers]
        w_lin_ref = refs[1 + 3 * n_layers]
        b_lin_ref = refs[2 + 3 * n_layers]
        out_ref = refs[3 + 3 * n_layers]
        seq_scr, gx_scr = refs[4 + 3 * n_layers:]

        h = jnp.zeros((b_tile, Hp), jnp.float32)
        for layer in range(n_layers):
            w_ih_ref, w_hh_ref, b_ref = w_refs[3 * layer:3 * layer + 3]
            w_hh = w_hh_ref[...]              # bf16, loop-invariant (hoisted)
            bias = b_ref[...]                 # f32 (1, 4Hp)
            last_layer = layer + 1 == n_layers

            h = jnp.zeros((b_tile, Hp), jnp.float32)
            c = jnp.zeros((b_tile, Hp), jnp.float32)

            for ci in range(n_chunks):
                t0 = ci * Tc
                tcur = min(Tc, T - t0)
                rows0, nrows = t0 * b_tile, tcur * b_tile

                # Phase 1 (per time chunk): one batched (Tc*b_tile, K)@(K, 4Hp)
                # MXU matmul for the input projection + bias, hoisted off the
                # serial recurrence. bf16 operands, f32 accumulation.
                if layer == 0:
                    inp = x_ref[pl.ds(rows0, nrows), :]
                else:
                    inp = seq_scr[pl.ds(rows0, nrows), :]
                gx_scr[pl.ds(0, nrows), :] = (
                    jnp.dot(inp, w_ih_ref[...],
                            preferred_element_type=jnp.float32) + bias)

                # Phase 2: sequential recurrence. Only h @ W_hh + gate math is
                # on the critical path; (h, c) live in vregs (loop carry).
                def step(t, carry, w_hh=w_hh, rows0=rows0,
                         last_layer=last_layer):
                    h, c = carry
                    row = pl.multiple_of(t * b_tile, b_tile)
                    gates = gx_scr[pl.ds(row, b_tile), :] + jnp.dot(
                        h.astype(jnp.bfloat16), w_hh,
                        preferred_element_type=jnp.float32)
                    # gate layout [i | f | o | g]; each block is Hp (=k*128)
                    # lanes wide so every slice below is vreg-aligned.
                    ifo = jax.nn.sigmoid(gates[:, :3 * Hp])
                    g = jnp.tanh(gates[:, 3 * Hp:])
                    c_new = ifo[:, Hp:2 * Hp] * c + ifo[:, :Hp] * g
                    h_new = ifo[:, 2 * Hp:] * jnp.tanh(c_new)
                    if not last_layer:          # next layer's input sequence
                        grow = pl.multiple_of(rows0 + t * b_tile, b_tile)
                        seq_scr[pl.ds(grow, b_tile), :] = h_new.astype(
                            jnp.bfloat16)
                    return (h_new, c_new)

                h, c = lax.fori_loop(0, tcur, step, (h, c),
                                     unroll=math.gcd(tcur, 8))

        # Final linear on the last-timestep hidden state (== lstm_out[:, -1, :]).
        out_ref[...] = (jnp.dot(h.astype(jnp.bfloat16), w_lin_ref[...],
                                preferred_element_type=jnp.float32)
                        + b_lin_ref[...]).astype(out_ref.dtype)

    return kernel


# ---------------------------- VMEM budget helpers ----------------------------

def _estimate_vmem_bytes(n_layers, T, tc, b_tile, d_in, Hp, Op):
    bf, f32 = 2, 4
    x_blk = T * b_tile * d_in * bf
    w_bytes = 0
    for layer in range(n_layers):
        k = d_in if layer == 0 else Hp
        w_bytes += (k + Hp) * 4 * Hp * bf + 4 * Hp * f32
    w_bytes += Hp * Op * bf + Op * f32
    out_blk = b_tile * Op * f32
    scratch = T * b_tile * Hp * bf + tc * b_tile * 4 * Hp * f32
    return 2 * (x_blk + w_bytes + out_blk) + scratch   # x2: double-buffering


def _vmem_limit_bytes(needed):
    cap = 128 << 20                       # v5e/v6e physical VMEM
    try:                                  # generation-aware (64 MiB on v7x)
        cap = int(getattr(pltpu.get_tpu_info(), "vmem_capacity_bytes", cap))
    except Exception:
        pass
    ceiling = (3 * cap) // 4
    return int(max(32 << 20, min(needed + (8 << 20), ceiling)))


# ----------------------------- pallas_call wrapper ---------------------------

def _fused_forward(x_k, flat_weights, *, n_layers, seq_len, b_tile, d_in,
                   hidden_p, out_p):
    Hp, Op, T = hidden_p, out_p, seq_len
    tc = min(T, _TIME_CHUNK)
    n_btiles = x_k.shape[0]
    b_pad = n_btiles * b_tile

    kernel = make_fused_lstm_kernel(n_layers, T, tc, b_tile, Hp)

    in_specs = [pl.BlockSpec((None, T * b_tile, d_in), lambda i: (i, 0, 0))]
    for layer in range(n_layers):
        k = d_in if layer == 0 else Hp
        in_specs += [pl.BlockSpec((k, 4 * Hp), lambda i: (0, 0)),
                     pl.BlockSpec((Hp, 4 * Hp), lambda i: (0, 0)),
                     pl.BlockSpec((1, 4 * Hp), lambda i: (0, 0))]
    in_specs += [pl.BlockSpec((Hp, Op), lambda i: (0, 0)),
                 pl.BlockSpec((1, Op), lambda i: (0, 0))]

    scratch = [pltpu.VMEM((T * b_tile, Hp), jnp.bfloat16),       # hidden seq
               pltpu.VMEM((tc * b_tile, 4 * Hp), jnp.float32)]   # x-gate chunk

    vmem_limit = _vmem_limit_bytes(
        _estimate_vmem_bytes(n_layers, T, tc, b_tile, d_in, Hp, Op))

    return pl.pallas_call(
        kernel,
        out_shape=jax.ShapeDtypeStruct((b_pad, Op), jnp.float32),
        grid_spec=pltpu.PrefetchScalarGridSpec(
            num_scalar_prefetch=0,
            grid=(n_btiles,),
            in_specs=in_specs,
            out_specs=pl.BlockSpec((b_tile, Op), lambda i: (i, 0)),
            scratch_shapes=scratch),
        compiler_params=pltpu.CompilerParams(
            dimension_semantics=("parallel",),
            vmem_limit_bytes=vmem_limit),
    )(x_k, *flat_weights)


# ------------------------------ JAX wrapper ----------------------------------

def _round_up(n, m):
    return ((n + m - 1) // m) * m


def _pad_gate_cols(w, h_true, h_pad):
    """Pad each gate block's columns ([i|f|o|g] layout) from h_true to h_pad."""
    if h_pad == h_true:
        return w
    d = w.shape[0]
    return jnp.pad(w.reshape(d, 4, h_true),
                   ((0, 0), (0, 0), (0, h_pad - h_true))).reshape(d, 4 * h_pad)


@functools.partial(jax.jit, static_argnames=("n_layers",))
def lstm_model_forward(x, params, n_layers):
    """Equivalent of LSTM.forward: multi-layer LSTM -> Linear on last step.

    x: (B, T, input_size) batch-first float32. Returns (B, out_size).
    """
    B, T, D = x.shape
    w_lin, b_lin = params["lin"]
    H, O = w_lin.shape
    Hp = _round_up(H, 128)                 # lane-aligned gate blocks
    Op = _round_up(O, 128)                 # lane-dense output store
    b_tile = min(128, _round_up(B, 16))    # 16 = bf16 sublane tile; >1 tile
    b_pad = _round_up(B, b_tile)           #   => 2nd TensorCore on v7x
    n_btiles = b_pad // b_tile

    # Layout pass: time-major, batch-padded, batch-tiled, bf16.  For large
    # activations the producer should emit this layout directly to skip the
    # extra HBM pass (the bf16 cast requires one pass anyway).
    x_tm = jnp.transpose(x, (1, 0, 2)).astype(jnp.bfloat16)      # (T, B, D)
    if b_pad != B:
        x_tm = jnp.pad(x_tm, ((0, 0), (0, b_pad - B), (0, 0)))
    x_k = (x_tm.reshape(T, n_btiles, b_tile, D)
               .transpose(1, 0, 2, 3)
               .reshape(n_btiles, T * b_tile, D))

    # Pad gate columns to Hp, recurrent/inter-layer rows to Hp (zeros), cast
    # matmul operands to bf16; biases stay f32 (they add into f32 gates).
    flat_w = []
    for layer in range(n_layers):
        w_ih, w_hh, b = params["lstm"][layer]
        w_ih_p = _pad_gate_cols(w_ih, H, Hp)
        if layer > 0:
            w_ih_p = jnp.pad(w_ih_p, ((0, Hp - H), (0, 0)))
        w_hh_p = jnp.pad(_pad_gate_cols(w_hh, H, Hp), ((0, Hp - H), (0, 0)))
        b_p = _pad_gate_cols(b, H, Hp)
        flat_w += [w_ih_p.astype(jnp.bfloat16), w_hh_p.astype(jnp.bfloat16),
                   b_p.astype(jnp.float32)]
    flat_w += [jnp.pad(w_lin, ((0, Hp - H), (0, Op - O))).astype(jnp.bfloat16),
               jnp.pad(b_lin, ((0, 0), (0, Op - O))).astype(jnp.float32)]

    out_pad = _fused_forward(x_k, flat_w, n_layers=n_layers, seq_len=T,
                             b_tile=b_tile, d_in=D, hidden_p=Hp, out_p=Op)
    return out_pad[:B, :O]


# --------------------------- parameter construction --------------------------

def init_params(key, input_size, out_size, hidden_size, n_layers):
    """PyTorch-style U(-1/sqrt(H), 1/sqrt(H)) init.

    Weights are stored transposed ((D_in,4H)/(H,4H)) with gate columns in
    [i, f, o, g] order (a column permutation of PyTorch's [i, f, g, o]); the
    kernel wrapper and the reference below use the same convention. Loading
    real PyTorch weights requires permuting the gate blocks accordingly.
    """
    H = hidden_size
    bound = 1.0 / jnp.sqrt(jnp.float32(H))
    lstm_params = []
    for layer in range(n_layers):
        d_in = input_size if layer == 0 else H
        key, k1, k2, k3, k4 = jax.random.split(key, 5)
        w_ih = jax.random.uniform(k1, (d_in, 4 * H), jnp.float32, -bound, bound)
        w_hh = jax.random.uniform(k2, (H, 4 * H), jnp.float32, -bound, bound)
        b_ih = jax.random.uniform(k3, (4 * H,), jnp.float32, -bound, bound)
        b_hh = jax.random.uniform(k4, (4 * H,), jnp.float32, -bound, bound)
        b = (b_ih + b_hh).reshape(1, 4 * H)
        lstm_params.append((w_ih, w_hh, b))
    key, k5, k6 = jax.random.split(key, 3)
    w_lin = jax.random.uniform(k5, (H, out_size), jnp.float32, -bound, bound)
    b_lin = jax.random.uniform(k6, (1, out_size), jnp.float32, -bound, bound)
    return {"lstm": lstm_params, "lin": (w_lin, b_lin)}


# ------------------------------ pure-JAX reference ---------------------------

def reference_forward(x, params, n_layers):
    seq = x  # (B, T, D)
    B = x.shape[0]
    for layer in range(n_layers):
        w_ih, w_hh, b = params["lstm"][layer]
        H = w_hh.shape[0]
        h = jnp.zeros((B, H), jnp.float32)
        c = jnp.zeros((B, H), jnp.float32)
        outs = []
        for t in range(seq.shape[1]):
            gates = seq[:, t, :] @ w_ih + h @ w_hh + b   # [i | f | o | g]
            i_g = jax.nn.sigmoid(gates[:, 0 * H:1 * H])
            f_g = jax.nn.sigmoid(gates[:, 1 * H:2 * H])
            o_g = jax.nn.sigmoid(gates[:, 2 * H:3 * H])
            g_g = jnp.tanh(gates[:, 3 * H:4 * H])
            c = f_g * c + i_g * g_g
            h = o_g * jnp.tanh(c)
            outs.append(h)
        seq = jnp.stack(outs, axis=1)
    w_lin, b_lin = params["lin"]
    return seq[:, -1, :] @ w_lin + b_lin


# ----------------------------------- main ------------------------------------

if __name__ == "__main__":
    batch, seq_len = 2, 8
    input_size, out_size, hidden_size, n_layers = 8, 3, 32, 3

    key = jax.random.PRNGKey(0)
    key, xk, pk = jax.random.split(key, 3)
    x = jax.random.normal(xk, (batch, seq_len, input_size), jnp.float32)
    params = init_params(pk, input_size, out_size, hidden_size, n_layers)

    out = lstm_model_forward(x, params, n_layers)
    out = jax.block_until_ready(out)

    ref = reference_forward(x, params, n_layers)
    assert out.shape == (batch, out_size)
    max_err = float(jnp.max(jnp.abs(out - ref)))
    # bf16 MXU operands vs f32 reference -> loosened tolerance.
    assert jnp.allclose(out, ref, rtol=3e-2, atol=3e-2), f"mismatch: {max_err}"

    print("KERNEL_OK")
</pallas_src>

<mosaic_0001>
module attributes {stable_mosaic.version = 11 : i64} {
  func.func @kernel(%arg0: i32, %arg1: memref<1x128x8xbf16, #tpu.memory_space<vmem>>, %arg2: memref<8x512xbf16, #tpu.memory_space<vmem>>, %arg3: memref<128x512xbf16, #tpu.memory_space<vmem>>, %arg4: memref<1x512xf32, #tpu.memory_space<vmem>>, %arg5: memref<128x512xbf16, #tpu.memory_space<vmem>>, %arg6: memref<128x512xbf16, #tpu.memory_space<vmem>>, %arg7: memref<1x512xf32, #tpu.memory_space<vmem>>, %arg8: memref<128x512xbf16, #tpu.memory_space<vmem>>, %arg9: memref<128x512xbf16, #tpu.memory_space<vmem>>, %arg10: memref<1x512xf32, #tpu.memory_space<vmem>>, %arg11: memref<128x128xbf16, #tpu.memory_space<vmem>>, %arg12: memref<1x128xf32, #tpu.memory_space<vmem>>, %arg13: memref<16x128xf32, #tpu.memory_space<vmem>>, %arg14: memref<128x128xbf16, #tpu.memory_space<vmem>>, %arg15: memref<128x512xf32, #tpu.memory_space<vmem>>) attributes {dimension_semantics = [#tpu.dimension_semantics<parallel>], iteration_bounds = array<i64: 1>, scalar_prefetch = 0 : i64, scratch_operands = 2 : i64, tpu.core_type = #tpu.core_type<tc>, window_params = [{transform_indices = @transform_0, window_bounds = array<i64: 1, 128, 8>}, {pipeline_mode = #tpu.pipeline_mode<synchronous>, transform_indices = @transform_1, window_bounds = array<i64: 8, 512>}, {pipeline_mode = #tpu.pipeline_mode<synchronous>, transform_indices = @transform_2, window_bounds = array<i64: 128, 512>}, {pipeline_mode = #tpu.pipeline_mode<synchronous>, transform_indices = @transform_3, window_bounds = array<i64: 1, 512>}, {pipeline_mode = #tpu.pipeline_mode<synchronous>, transform_indices = @transform_4, window_bounds = array<i64: 128, 512>}, {pipeline_mode = #tpu.pipeline_mode<synchronous>, transform_indices = @transform_5, window_bounds = array<i64: 128, 512>}, {pipeline_mode = #tpu.pipeline_mode<synchronous>, transform_indices = @transform_6, window_bounds = array<i64: 1, 512>}, {pipeline_mode = #tpu.pipeline_mode<synchronous>, transform_indices = @transform_7, window_bounds = array<i64: 128, 512>}, {pipeline_mode = #tpu.pipeline_mode<synchronous>, transform_indices = @transform_8, window_bounds = array<i64: 128, 512>}, {pipeline_mode = #tpu.pipeline_mode<synchronous>, transform_indices = @transform_9, window_bounds = array<i64: 1, 512>}, {pipeline_mode = #tpu.pipeline_mode<synchronous>, transform_indices = @transform_10, window_bounds = array<i64: 128, 128>}, {pipeline_mode = #tpu.pipeline_mode<synchronous>, transform_indices = @transform_11, window_bounds = array<i64: 1, 128>}, {transform_indices = @transform_12, window_bounds = array<i64: 16, 128>}]} {
    %c0 = arith.constant 0 : index
    %c0_0 = arith.constant 0 : index
    %0 = vector.load %arg3[%c0, %c0_0] : memref<128x512xbf16, #tpu.memory_space<vmem>>, vector<128x512xbf16>
    %c0_1 = arith.constant 0 : index
    %c0_2 = arith.constant 0 : index
    %1 = vector.load %arg4[%c0_1, %c0_2] : memref<1x512xf32, #tpu.memory_space<vmem>>, vector<1x512xf32>
    %cst = arith.constant 0.000000e+00 : f32
    %2 = vector.broadcast %cst : f32 to vector<16x128xf32>
    %cst_3 = arith.constant 0.000000e+00 : f32
    %3 = vector.broadcast %cst_3 : f32 to vector<16x128xf32>
    %c0_4 = arith.constant 0 : index
    %c0_5 = arith.constant 0 : index
    %c0_6 = arith.constant 0 : index
    %4 = vector.load %arg1[%c0_4, %c0_5, %c0_6] : memref<1x128x8xbf16, #tpu.memory_space<vmem>>, vector<1x128x8xbf16>
    %5 = vector.shape_cast %4 : vector<1x128x8xbf16> to vector<128x8xbf16>
    %c0_7 = arith.constant 0 : index
    %c0_8 = arith.constant 0 : index
    %6 = vector.load %arg2[%c0_7, %c0_8] : memref<8x512xbf16, #tpu.memory_space<vmem>>, vector<8x512xbf16>
    %cst_9 = arith.constant dense<0.000000e+00> : vector<128x512xf32>
    %7 = tpu.matmul %5, %6, %cst_9 {dimension_numbers = #tpu.dot_dimension_numbers<[1], [0], [0], [1], [0, 0, 1, 1], [], []>} : vector<128x8xbf16>, vector<8x512xbf16>, vector<128x512xf32> -> vector<128x512xf32>
    %8 = vector.broadcast %1 : vector<1x512xf32> to vector<128x512xf32>
    %9 = arith.addf %7, %8 : vector<128x512xf32>
    %c0_10 = arith.constant 0 : index
    %c0_11 = arith.constant 0 : index
    %10 = vector.load %arg15[%c0_10, %c0_11] : memref<128x512xf32, #tpu.memory_space<vmem>>, vector<128x512xf32>
    tpu.vector_store %arg15[%c0_10, %c0_11], %9 {strides = array<i32>} : memref<128x512xf32, #tpu.memory_space<vmem>>, vector<128x512xf32>,
    %c0_i32 = arith.constant 0 : i32
    %c16_i32 = arith.constant 16 : i32
    %11 = arith.muli %c0_i32, %c16_i32 : i32
    %12 = tpu.assume_multiple %11, 16 : i32
    %13 = arith.index_cast %12 : i32 to index
    %c0_12 = arith.constant 0 : index
    %14 = vector.load %arg15[%13, %c0_12] : memref<128x512xf32, #tpu.memory_space<vmem>>, vector<16x512xf32>
    %15 = arith.truncf %2 : vector<16x128xf32> to vector<16x128xbf16>
    %cst_13 = arith.constant dense<0.000000e+00> : vector<16x512xf32>
    %16 = tpu.matmul %15, %0, %cst_13 {dimension_numbers = #tpu.dot_dimension_numbers<[1], [0], [0], [1], [0, 0, 1, 1], [], []>} : vector<16x128xbf16>, vector<128x512xbf16>, vector<16x512xf32> -> vector<16x512xf32>
    %17 = arith.addf %14, %16 : vector<16x512xf32>
    %18 = vector.extract_strided_slice %17 {offsets = [0, 0], sizes = [16, 384], strides = [1, 1]} : vector<16x512xf32> to vector<16x384xf32>
    %19 = arith.negf %18 : vector<16x384xf32>
    %20 = math.exp %19 : vector<16x384xf32>
    %cst_14 = arith.constant 1.000000e+00 : f32
    %21 = vector.broadcast %cst_14 : f32 to vector<16x384xf32>
    %22 = arith.addf %21, %20 : vector<16x384xf32>
    %23 = arith.divf %21, %22 : vector<16x384xf32>
    %24 = vector.extract_strided_slice %17 {offsets = [0, 384], sizes = [16, 128], strides = [1, 1]} : vector<16x512xf32> to vector<16x128xf32>
    %25 = math.tanh %24 : vector<16x128xf32>
    %26 = vector.extract_strided_slice %23 {offsets = [0, 128], sizes = [16, 128], strides = [1, 1]} : vector<16x384xf32> to vector<16x128xf32>
    %27 = arith.mulf %26, %3 : vector<16x128xf32>
    %28 = vector.extract_strided_slice %23 {offsets = [0, 0], sizes = [16, 128], strides = [1, 1]} : vector<16x384xf32> to vector<16x128xf32>
    %29 = arith.mulf %28, %25 : vector<16x128xf32>
    %30 = arith.addf %27, %29 : vector<16x128xf32>
    %31 = vector.extract_strided_slice %23 {offsets = [0, 256], sizes = [16, 128], strides = [1, 1]} : vector<16x384xf32> to vector<16x128xf32>
    %32 = math.tanh %30 : vector<16x128xf32>
    %33 = arith.mulf %31, %32 : vector<16x128xf32>
    %c16_i32_15 = arith.constant 16 : i32
    %34 = arith.muli %c0_i32, %c16_i32_15 : i32
    %c0_i32_16 = arith.constant 0 : i32
    %35 = arith.addi %c0_i32_16, %34 : i32
    %36 = tpu.assume_multiple %35, 16 : i32
    %37 = arith.truncf %33 : vector<16x128xf32> to vector<16x128xbf16>
    %38 = arith.index_cast %36 : i32 to index
    %c0_17 = arith.constant 0 : index
    %39 = vector.load %arg14[%38, %c0_17] : memref<128x128xbf16, #tpu.memory_space<vmem>>, vector<16x128xbf16>
    tpu.vector_store %arg14[%38, %c0_17], %37 {strides = array<i32>} : memref<128x128xbf16, #tpu.memory_space<vmem>>, vector<16x128xbf16>,
    %c1_i32 = arith.constant 1 : i32
    %c16_i32_18 = arith.constant 16 : i32
    %40 = arith.muli %c1_i32, %c16_i32_18 : i32
    %41 = tpu.assume_multiple %40, 16 : i32
    %42 = arith.index_cast %41 : i32 to index
    %c0_19 = arith.constant 0 : index
    %43 = vector.load %arg15[%42, %c0_19] : memref<128x512xf32, #tpu.memory_space<vmem>>, vector<16x512xf32>
    %44 = arith.truncf %33 : vector<16x128xf32> to vector<16x128xbf16>
    %cst_20 = arith.constant dense<0.000000e+00> : vector<16x512xf32>
    %45 = tpu.matmul %44, %0, %cst_20 {dimension_numbers = #tpu.dot_dimension_numbers<[1], [0], [0], [1], [0, 0, 1, 1], [], []>} : vector<16x128xbf16>, vector<128x512xbf16>, vector<16x512xf32> -> vector<16x512xf32>
    %46 = arith.addf %43, %45 : vector<16x512xf32>
    %47 = vector.extract_strided_slice %46 {offsets = [0, 0], sizes = [16, 384], strides = [1, 1]} : vector<16x512xf32> to vector<16x384xf32>
    %48 = arith.negf %47 : vector<16x384xf32>
    %49 = math.exp %48 : vector<16x384xf32>
    %cst_21 = arith.constant 1.000000e+00 : f32
    %50 = vector.broadcast %cst_21 : f32 to vector<16x384xf32>
    %51 = arith.addf %50, %49 : vector<16x384xf32>
    %52 = arith.divf %50, %51 : vector<16x384xf32>
    %53 = vector.extract_strided_slice %46 {offsets = [0, 384], sizes = [16, 128], strides = [1, 1]} : vector<16x512xf32> to vector<16x128xf32>
    %54 = math.tanh %53 : vector<16x128xf32>
    %55 = vector.extract_strided_slice %52 {offsets = [0, 128], sizes = [16, 128], strides = [1, 1]} : vector<16x384xf32> to vector<16x128xf32>
    %56 = arith.mulf %55, %30 : vector<16x128xf32>
    %57 = vector.extract_strided_slice %52 {offsets = [0, 0], sizes = [16, 128], strides = [1, 1]} : vector<16x384xf32> to vector<16x128xf32>
    %58 = arith.mulf %57, %54 : vector<16x128xf32>
    %59 = arith.addf %56, %58 : vector<16x128xf32>
    %60 = vector.extract_strided_slice %52 {offsets = [0, 256], sizes = [16, 128], strides = [1, 1]} : vector<16x384xf32> to vector<16x128xf32>
    %61 = math.tanh %59 : vector<16x128xf32>
    %62 = arith.mulf %60, %61 : vector<16x128xf32>
    %c16_i32_22 = arith.constant 16 : i32
    %63 = arith.muli %c1_i32, %c16_i32_22 : i32
    %c0_i32_23 = arith.constant 0 : i32
    %64 = arith.addi %c0_i32_23, %63 : i32
    %65 = tpu.assume_multiple %64, 16 : i32
    %66 = arith.truncf %62 : vector<16x128xf32> to vector<16x128xbf16>
    %67 = arith.index_cast %65 : i32 to index
    %c0_24 = arith.constant 0 : index
    %68 = vector.load %arg14[%67, %c0_24] : memref<128x128xbf16, #tpu.memory_space<vmem>>, vector<16x128xbf16>
    tpu.vector_store %arg14[%67, %c0_24], %66 {strides = array<i32>} : memref<128x128xbf16, #tpu.memory_space<vmem>>, vector<16x128xbf16>,
    %c2_i32 = arith.constant 2 : i32
    %c16_i32_25 = arith.constant 16 : i32
    %69 = arith.muli %c2_i32, %c16_i32_25 : i32
    %70 = tpu.assume_multiple %69, 16 : i32
    %71 = arith.index_cast %70 : i32 to index
    %c0_26 = arith.constant 0 : index
    %72 = vector.load %arg15[%71, %c0_26] : memref<128x512xf32, #tpu.memory_space<vmem>>, vector<16x512xf32>
    %73 = arith.truncf %62 : vector<16x128xf32> to vector<16x128xbf16>
    %cst_27 = arith.constant dense<0.000000e+00> : vector<16x512xf32>
    %74 = tpu.matmul %73, %0, %cst_27 {dimension_numbers = #tpu.dot_dimension_numbers<[1], [0], [0], [1], [0, 0, 1, 1], [], []>} : vector<16x128xbf16>, vector<128x512xbf16>, vector<16x512xf32> -> vector<16x512xf32>
    %75 = arith.addf %72, %74 : vector<16x512xf32>
    %76 = vector.extract_strided_slice %75 {offsets = [0, 0], sizes = [16, 384], strides = [1, 1]} : vector<16x512xf32> to vector<16x384xf32>
    %77 = arith.negf %76 : vector<16x384xf32>
    %78 = math.exp %77 : vector<16x384xf32>
    %cst_28 = arith.constant 1.000000e+00 : f32
    %79 = vector.broadcast %cst_28 : f32 to vector<16x384xf32>
    %80 = arith.addf %79, %78 : vector<16x384xf32>
    %81 = arith.divf %79, %80 : vector<16x384xf32>
    %82 = vector.extract_strided_slice %75 {offsets = [0, 384], sizes = [16, 128], strides = [1, 1]} : vector<16x512xf32> to vector<16x128xf32>
    %83 = math.tanh %82 : vector<16x128xf32>
    %84 = vector.extract_strided_slice %81 {offsets = [0, 128], sizes = [16, 128], strides = [1, 1]} : vector<16x384xf32> to vector<16x128xf32>
    %85 = arith.mulf %84, %59 : vector<16x128xf32>
    %86 = vector.extract_strided_slice %81 {offsets = [0, 0], sizes = [16, 128], strides = [1, 1]} : vector<16x384xf32> to vector<16x128xf32>
    %87 = arith.mulf %86, %83 : vector<16x128xf32>
    %88 = arith.addf %85, %87 : vector<16x128xf32>
    %89 = vector.extract_strided_slice %81 {offsets = [0, 256], sizes = [16, 128], strides = [1, 1]} : vector<16x384xf32> to vector<16x128xf32>
    %90 = math.tanh %88 : vector<16x128xf32>
    %91 = arith.mulf %89, %90 : vector<16x128xf32>
    %c16_i32_29 = arith.constant 16 : i32
    %92 = arith.muli %c2_i32, %c16_i32_29 : i32
    %c0_i32_30 = arith.constant 0 : i32
    %93 = arith.addi %c0_i32_30, %92 : i32
    %94 = tpu.assume_multiple %93, 16 : i32
    %95 = arith.truncf %91 : vector<16x128xf32> to vector<16x128xbf16>
    %96 = arith.index_cast %94 : i32 to index
    %c0_31 = arith.constant 0 : index
    %97 = vector.load %arg14[%96, %c0_31] : memref<128x128xbf16, #tpu.memory_space<vmem>>, vector<16x128xbf16>
    tpu.vector_store %arg14[%96, %c0_31], %95 {strides = array<i32>} : memref<128x128xbf16, #tpu.memory_space<vmem>>, vector<16x128xbf16>,
    %c3_i32 = arith.constant 3 : i32
    %c16_i32_32 = arith.constant 16 : i32
    %98 = arith.muli %c3_i32, %c16_i32_32 : i32
    %99 = tpu.assume_multiple %98, 16 : i32
    %100 = arith.index_cast %99 : i32 to index
    %c0_33 = arith.constant 0 : index
    %101 = vector.load %arg15[%100, %c0_33] : memref<128x512xf32, #tpu.memory_space<vmem>>, vector<16x512xf32>
    %102 = arith.truncf %91 : vector<16x128xf32> to vector<16x128xbf16>
    %cst_34 = arith.constant dense<0.000000e+00> : vector<16x512xf32>
    %103 = tpu.matmul %102, %0, %cst_34 {dimension_numbers = #tpu.dot_dimension_numbers<[1], [0], [0], [1], [0, 0, 1, 1], [], []>} : vector<16x128xbf16>, vector<128x512xbf16>, vector<16x512xf32> -> vector<16x512xf32>
    %104 = arith.addf %101, %103 : vector<16x512xf32>
    %105 = vector.extract_strided_slice %104 {offsets = [0, 0], sizes = [16, 384], strides = [1, 1]} : vector<16x512xf32> to vector<16x384xf32>
    %106 = arith.negf %105 : vector<16x384xf32>
    %107 = math.exp %106 : vector<16x384xf32>
    %cst_35 = arith.constant 1.000000e+00 : f32
    %108 = vector.broadcast %cst_35 : f32 to vector<16x384xf32>
    %109 = arith.addf %108, %107 : vector<16x384xf32>
    %110 = arith.divf %108, %109 : vector<16x384xf32>
    %111 = vector.extract_strided_slice %104 {offsets = [0, 384], sizes = [16, 128], strides = [1, 1]} : vector<16x512xf32> to vector<16x128xf32>
    %112 = math.tanh %111 : vector<16x128xf32>
    %113 = vector.extract_strided_slice %110 {offsets = [0, 128], sizes = [16, 128], strides = [1, 1]} : vector<16x384xf32> to vector<16x128xf32>
    %114 = arith.mulf %113, %88 : vector<16x128xf32>
    %115 = vector.extract_strided_slice %110 {offsets = [0, 0], sizes = [16, 128], strides = [1, 1]} : vector<16x384xf32> to vector<16x128xf32>
    %116 = arith.mulf %115, %112 : vector<16x128xf32>
    %117 = arith.addf %114, %116 : vector<16x128xf32>
    %118 = vector.extract_strided_slice %110 {offsets = [0, 256], sizes = [16, 128], strides = [1, 1]} : vector<16x384xf32> to vector<16x128xf32>
    %119 = math.tanh %117 : vector<16x128xf32>
    %120 = arith.mulf %118, %119 : vector<16x128xf32>
    %c16_i32_36 = arith.constant 16 : i32
    %121 = arith.muli %c3_i32, %c16_i32_36 : i32
    %c0_i32_37 = arith.constant 0 : i32
    %122 = arith.addi %c0_i32_37, %121 : i32
    %123 = tpu.assume_multiple %122, 16 : i32
    %124 = arith.truncf %120 : vector<16x128xf32> to vector<16x128xbf16>
    %125 = arith.index_cast %123 : i32 to index
    %c0_38 = arith.constant 0 : index
    %126 = vector.load %arg14[%125, %c0_38] : memref<128x128xbf16, #tpu.memory_space<vmem>>, vector<16x128xbf16>
    tpu.vector_store %arg14[%125, %c0_38], %124 {strides = array<i32>} : memref<128x128xbf16, #tpu.memory_space<vmem>>, vector<16x128xbf16>,
    %c4_i32 = arith.constant 4 : i32
    %c16_i32_39 = arith.constant 16 : i32
    %127 = arith.muli %c4_i32, %c16_i32_39 : i32
    %128 = tpu.assume_multiple %127, 16 : i32
    %129 = arith.index_cast %128 : i32 to index
    %c0_40 = arith.constant 0 : index
    %130 = vector.load %arg15[%129, %c0_40] : memref<128x512xf32, #tpu.memory_space<vmem>>, vector<16x512xf32>
    %131 = arith.truncf %120 : vector<16x128xf32> to vector<16x128xbf16>
    %cst_41 = arith.constant dense<0.000000e+00> : vector<16x512xf32>
    %132 = tpu.matmul %131, %0, %cst_41 {dimension_numbers = #tpu.dot_dimension_numbers<[1], [0], [0], [1], [0, 0, 1, 1], [], []>} : vector<16x128xbf16>, vector<128x512xbf16>, vector<16x512xf32> -> vector<16x512xf32>
    %133 = arith.addf %130, %132 : vector<16x512xf32>
    %134 = vector.extract_strided_slice %133 {offsets = [0, 0], sizes = [16, 384], strides = [1, 1]} : vector<16x512xf32> to vector<16x384xf32>
    %135 = arith.negf %134 : vector<16x384xf32>
    %136 = math.exp %135 : vector<16x384xf32>
    %cst_42 = arith.constant 1.000000e+00 : f32
    %137 = vector.broadcast %cst_42 : f32 to vector<16x384xf32>
    %138 = arith.addf %137, %136 : vector<16x384xf32>
    %139 = arith.divf %137, %138 : vector<16x384xf32>
    %140 = vector.extract_strided_slice %133 {offsets = [0, 384], sizes = [16, 128], strides = [1, 1]} : vector<16x512xf32> to vector<16x128xf32>
    %141 = math.tanh %140 : vector<16x128xf32>
    %142 = vector.extract_strided_slice %139 {offsets = [0, 128], sizes = [16, 128], strides = [1, 1]} : vector<16x384xf32> to vector<16x128xf32>
    %143 = arith.mulf %142, %117 : vector<16x128xf32>
    %144 = vector.extract_strided_slice %139 {offsets = [0, 0], sizes = [16, 128], strides = [1, 1]} : vector<16x384xf32> to vector<16x128xf32>
    %145 = arith.mulf %144, %141 : vector<16x128xf32>
    %146 = arith.addf %143, %145 : vector<16x128xf32>
    %147 = vector.extract_strided_slice %139 {offsets = [0, 256], sizes = [16, 128], strides = [1, 1]} : vector<16x384xf32> to vector<16x128xf32>
    %148 = math.tanh %146 : vector<16x128xf32>
    %149 = arith.mulf %147, %148 : vector<16x128xf32>
    %c16_i32_43 = arith.constant 16 : i32
    %150 = arith.muli %c4_i32, %c16_i32_43 : i32
    %c0_i32_44 = arith.constant 0 : i32
    %151 = arith.addi %c0_i32_44, %150 : i32
    %152 = tpu.assume_multiple %151, 16 : i32
    %153 = arith.truncf %149 : vector<16x128xf32> to vector<16x128xbf16>
    %154 = arith.index_cast %152 : i32 to index
    %c0_45 = arith.constant 0 : index
    %155 = vector.load %arg14[%154, %c0_45] : memref<128x128xbf16, #tpu.memory_space<vmem>>, vector<16x128xbf16>
    tpu.vector_store %arg14[%154, %c0_45], %153 {strides = array<i32>} : memref<128x128xbf16, #tpu.memory_space<vmem>>, vector<16x128xbf16>,
    %c5_i32 = arith.constant 5 : i32
    %c16_i32_46 = arith.constant 16 : i32
    %156 = arith.muli %c5_i32, %c16_i32_46 : i32
    %157 = tpu.assume_multiple %156, 16 : i32
    %158 = arith.index_cast %157 : i32 to index
    %c0_47 = arith.constant 0 : index
    %159 = vector.load %arg15[%158, %c0_47] : memref<128x512xf32, #tpu.memory_space<vmem>>, vector<16x512xf32>
    %160 = arith.truncf %149 : vector<16x128xf32> to vector<16x128xbf16>
    %cst_48 = arith.constant dense<0.000000e+00> : vector<16x512xf32>
    %161 = tpu.matmul %160, %0, %cst_48 {dimension_numbers = #tpu.dot_dimension_numbers<[1], [0], [0], [1], [0, 0, 1, 1], [], []>} : vector<16x128xbf16>, vector<128x512xbf16>, vector<16x512xf32> -> vector<16x512xf32>
    %162 = arith.addf %159, %161 : vector<16x512xf32>
    %163 = vector.extract_strided_slice %162 {offsets = [0, 0], sizes = [16, 384], strides = [1, 1]} : vector<16x512xf32> to vector<16x384xf32>
    %164 = arith.negf %163 : vector<16x384xf32>
    %165 = math.exp %164 : vector<16x384xf32>
    %cst_49 = arith.constant 1.000000e+00 : f32
    %166 = vector.broadcast %cst_49 : f32 to vector<16x384xf32>
    %167 = arith.addf %166, %165 : vector<16x384xf32>
    %168 = arith.divf %166, %167 : vector<16x384xf32>
    %169 = vector.extract_strided_slice %162 {offsets = [0, 384], sizes = [16, 128], strides = [1, 1]} : vector<16x512xf32> to vector<16x128xf32>
    %170 = math.tanh %169 : vector<16x128xf32>
    %171 = vector.extract_strided_slice %168 {offsets = [0, 128], sizes = [16, 128], strides = [1, 1]} : vector<16x384xf32> to vector<16x128xf32>
    %172 = arith.mulf %171, %146 : vector<16x128xf32>
    %173 = vector.extract_strided_slice %168 {offsets = [0, 0], sizes = [16, 128], strides = [1, 1]} : vector<16x384xf32> to vector<16x128xf32>
    %174 = arith.mulf %173, %170 : vector<16x128xf32>
    %175 = arith.addf %172, %174 : vector<16x128xf32>
    %176 = vector.extract_strided_slice %168 {offsets = [0, 256], sizes = [16, 128], strides = [1, 1]} : vector<16x384xf32> to vector<16x128xf32>
    %177 = math.tanh %175 : vector<16x128xf32>
    %178 = arith.mulf %176, %177 : vector<16x128xf32>
    %c16_i32_50 = arith.constant 16 : i32
    %179 = arith.muli %c5_i32, %c16_i32_50 : i32
    %c0_i32_51 = arith.constant 0 : i32
    %180 = arith.addi %c0_i32_51, %179 : i32
    %181 = tpu.assume_multiple %180, 16 : i32
    %182 = arith.truncf %178 : vector<16x128xf32> to vector<16x128xbf16>
    %183 = arith.index_cast %181 : i32 to index
    %c0_52 = arith.constant 0 : index
    %184 = vector.load %arg14[%183, %c0_52] : memref<128x128xbf16, #tpu.memory_space<vmem>>, vector<16x128xbf16>
    tpu.vector_store %arg14[%183, %c0_52], %182 {strides = array<i32>} : memref<128x128xbf16, #tpu.memory_space<vmem>>, vector<16x128xbf16>,
    %c6_i32 = arith.constant 6 : i32
    %c16_i32_53 = arith.constant 16 : i32
    %185 = arith.muli %c6_i32, %c16_i32_53 : i32
    %186 = tpu.assume_multiple %185, 16 : i32
    %187 = arith.index_cast %186 : i32 to index
    %c0_54 = arith.constant 0 : index
    %188 = vector.load %arg15[%187, %c0_54] : memref<128x512xf32, #tpu.memory_space<vmem>>, vector<16x512xf32>
    %189 = arith.truncf %178 : vector<16x128xf32> to vector<16x128xbf16>
    %cst_55 = arith.constant dense<0.000000e+00> : vector<16x512xf32>
    %190 = tpu.matmul %189, %0, %cst_55 {dimension_numbers = #tpu.dot_dimension_numbers<[1], [0], [0], [1], [0, 0, 1, 1], [], []>} : vector<16x128xbf16>, vector<128x512xbf16>, vector<16x512xf32> -> vector<16x512xf32>
    %191 = arith.addf %188, %190 : vector<16x512xf32>
    %192 = vector.extract_strided_slice %191 {offsets = [0, 0], sizes = [16, 384], strides = [1, 1]} : vector<16x512xf32> to vector<16x384xf32>
    %193 = arith.negf %192 : vector<16x384xf32>
    %194 = math.exp %193 : vector<16x384xf32>
    %cst_56 = arith.constant 1.000000e+00 : f32
    %195 = vector.broadcast %cst_56 : f32 to vector<16x384xf32>
    %196 = arith.addf %195, %194 : vector<16x384xf32>
    %197 = arith.divf %195, %196 : vector<16x384xf32>
    %198 = vector.extract_strided_slice %191 {offsets = [0, 384], sizes = [16, 128], strides = [1, 1]} : vector<16x512xf32> to vector<16x128xf32>
    %199 = math.tanh %198 : vector<16x128xf32>
    %200 = vector.extract_strided_slice %197 {offsets = [0, 128], sizes = [16, 128], strides = [1, 1]} : vector<16x384xf32> to vector<16x128xf32>
    %201 = arith.mulf %200, %175 : vector<16x128xf32>
    %202 = vector.extract_strided_slice %197 {offsets = [0, 0], sizes = [16, 128], strides = [1, 1]} : vector<16x384xf32> to vector<16x128xf32>
    %203 = arith.mulf %202, %199 : vector<16x128xf32>
    %204 = arith.addf %201, %203 : vector<16x128xf32>
    %205 = vector.extract_strided_slice %197 {offsets = [0, 256], sizes = [16, 128], strides = [1, 1]} : vector<16x384xf32> to vector<16x128xf32>
    %206 = math.tanh %204 : vector<16x128xf32>
    %207 = arith.mulf %205, %206 : vector<16x128xf32>
    %c16_i32_57 = arith.constant 16 : i32
    %208 = arith.muli %c6_i32, %c16_i32_57 : i32
    %c0_i32_58 = arith.constant 0 : i32
    %209 = arith.addi %c0_i32_58, %208 : i32
    %210 = tpu.assume_multiple %209, 16 : i32
    %211 = arith.truncf %207 : vector<16x128xf32> to vector<16x128xbf16>
    %212 = arith.index_cast %210 : i32 to index
    %c0_59 = arith.constant 0 : index
    %213 = vector.load %arg14[%212, %c0_59] : memref<128x128xbf16, #tpu.memory_space<vmem>>, vector<16x128xbf16>
    tpu.vector_store %arg14[%212, %c0_59], %211 {strides = array<i32>} : memref<128x128xbf16, #tpu.memory_space<vmem>>, vector<16x128xbf16>,
    %c7_i32 = arith.constant 7 : i32
    %c16_i32_60 = arith.constant 16 : i32
    %214 = arith.muli %c7_i32, %c16_i32_60 : i32
    %215 = tpu.assume_multiple %214, 16 : i32
    %216 = arith.index_cast %215 : i32 to index
    %c0_61 = arith.constant 0 : index
    %217 = vector.load %arg15[%216, %c0_61] : memref<128x512xf32, #tpu.memory_space<vmem>>, vector<16x512xf32>
    %218 = arith.truncf %207 : vector<16x128xf32> to vector<16x128xbf16>
    %cst_62 = arith.constant dense<0.000000e+00> : vector<16x512xf32>
    %219 = tpu.matmul %218, %0, %cst_62 {dimension_numbers = #tpu.dot_dimension_numbers<[1], [0], [0], [1], [0, 0, 1, 1], [], []>} : vector<16x128xbf16>, vector<128x512xbf16>, vector<16x512xf32> -> vector<16x512xf32>
    %220 = arith.addf %217, %219 : vector<16x512xf32>
    %221 = vector.extract_strided_slice %220 {offsets = [0, 0], sizes = [16, 384], strides = [1, 1]} : vector<16x512xf32> to vector<16x384xf32>
    %222 = arith.negf %221 : vector<16x384xf32>
    %223 = math.exp %222 : vector<16x384xf32>
    %cst_63 = arith.constant 1.000000e+00 : f32
    %224 = vector.broadcast %cst_63 : f32 to vector<16x384xf32>
    %225 = arith.addf %224, %223 : vector<16x384xf32>
    %226 = arith.divf %224, %225 : vector<16x384xf32>
    %227 = vector.extract_strided_slice %220 {offsets = [0, 384], sizes = [16, 128], strides = [1, 1]} : vector<16x512xf32> to vector<16x128xf32>
    %228 = math.tanh %227 : vector<16x128xf32>
    %229 = vector.extract_strided_slice %226 {offsets = [0, 128], sizes = [16, 128], strides = [1, 1]} : vector<16x384xf32> to vector<16x128xf32>
    %230 = arith.mulf %229, %204 : vector<16x128xf32>
    %231 = vector.extract_strided_slice %226 {offsets = [0, 0], sizes = [16, 128], strides = [1, 1]} : vector<16x384xf32> to vector<16x128xf32>
    %232 = arith.mulf %231, %228 : vector<16x128xf32>
    %233 = arith.addf %230, %232 : vector<16x128xf32>
    %234 = vector.extract_strided_slice %226 {offsets = [0, 256], sizes = [16, 128], strides = [1, 1]} : vector<16x384xf32> to vector<16x128xf32>
    %235 = math.tanh %233 : vector<16x128xf32>
    %236 = arith.mulf %234, %235 : vector<16x128xf32>
    %c16_i32_64 = arith.constant 16 : i32
    %237 = arith.muli %c7_i32, %c16_i32_64 : i32
    %c0_i32_65 = arith.constant 0 : i32
    %238 = arith.addi %c0_i32_65, %237 : i32
    %239 = tpu.assume_multiple %238, 16 : i32
    %240 = arith.truncf %236 : vector<16x128xf32> to vector<16x128xbf16>
    %241 = arith.index_cast %239 : i32 to index
    %c0_66 = arith.constant 0 : index
    %242 = vector.load %arg14[%241, %c0_66] : memref<128x128xbf16, #tpu.memory_space<vmem>>, vector<16x128xbf16>
    tpu.vector_store %arg14[%241, %c0_66], %240 {strides = array<i32>} : memref<128x128xbf16, #tpu.memory_space<vmem>>, vector<16x128xbf16>,
    %c8_i32 = arith.constant 8 : i32
    %c0_67 = arith.constant 0 : index
    %c0_68 = arith.constant 0 : index
    %243 = vector.load %arg6[%c0_67, %c0_68] : memref<128x512xbf16, #tpu.memory_space<vmem>>, vector<128x512xbf16>
    %c0_69 = arith.constant 0 : index
    %c0_70 = arith.constant 0 : index
    %244 = vector.load %arg7[%c0_69, %c0_70] : memref<1x512xf32, #tpu.memory_space<vmem>>, vector<1x512xf32>
    %cst_71 = arith.constant 0.000000e+00 : f32
    %245 = vector.broadcast %cst_71 : f32 to vector<16x128xf32>
    %cst_72 = arith.constant 0.000000e+00 : f32
    %246 = vector.broadcast %cst_72 : f32 to vector<16x128xf32>
    %c0_73 = arith.constant 0 : index
    %c0_74 = arith.constant 0 : index
    %247 = vector.load %arg14[%c0_73, %c0_74] : memref<128x128xbf16, #tpu.memory_space<vmem>>, vector<128x128xbf16>
    %c0_75 = arith.constant 0 : index
    %c0_76 = arith.constant 0 : index
    %248 = vector.load %arg5[%c0_75, %c0_76] : memref<128x512xbf16, #tpu.memory_space<vmem>>, vector<128x512xbf16>
    %cst_77 = arith.constant dense<0.000000e+00> : vector<128x512xf32>
    %249 = tpu.matmul %247, %248, %cst_77 {dimension_numbers = #tpu.dot_dimension_numbers<[1], [0], [0], [1], [0, 0, 1, 1], [], []>} : vector<128x128xbf16>, vector<128x512xbf16>, vector<128x512xf32> -> vector<128x512xf32>
    %250 = vector.broadcast %244 : vector<1x512xf32> to vector<128x512xf32>
    %251 = arith.addf %249, %250 : vector<128x512xf32>
    %c0_78 = arith.constant 0 : index
    %c0_79 = arith.constant 0 : index
    %252 = vector.load %arg15[%c0_78, %c0_79] : memref<128x512xf32, #tpu.memory_space<vmem>>, vector<128x512xf32>
    tpu.vector_store %arg15[%c0_78, %c0_79], %251 {strides = array<i32>} : memref<128x512xf32, #tpu.memory_space<vmem>>, vector<128x512xf32>,
    %c0_i32_80 = arith.constant 0 : i32
    %c16_i32_81 = arith.constant 16 : i32
    %253 = arith.muli %c0_i32_80, %c16_i32_81 : i32
    %254 = tpu.assume_multiple %253, 16 : i32
    %255 = arith.index_cast %254 : i32 to index
    %c0_82 = arith.constant 0 : index
    %256 = vector.load %arg15[%255, %c0_82] : memref<128x512xf32, #tpu.memory_space<vmem>>, vector<16x512xf32>
    %257 = arith.truncf %245 : vector<16x128xf32> to vector<16x128xbf16>
    %cst_83 = arith.constant dense<0.000000e+00> : vector<16x512xf32>
    %258 = tpu.matmul %257, %243, %cst_83 {dimension_numbers = #tpu.dot_dimension_numbers<[1], [0], [0], [1], [0, 0, 1, 1], [], []>} : vector<16x128xbf16>, vector<128x512xbf16>, vector<16x512xf32> -> vector<16x512xf32>
    %259 = arith.addf %256, %258 : vector<16x512xf32>
    %260 = vector.extract_strided_slice %259 {offsets = [0, 0], sizes = [16, 384], strides = [1, 1]} : vector<16x512xf32> to vector<16x384xf32>
    %261 = arith.negf %260 : vector<16x384xf32>
    %262 = math.exp %261 : vector<16x384xf32>
    %cst_84 = arith.constant 1.000000e+00 : f32
    %263 = vector.broadcast %cst_84 : f32 to vector<16x384xf32>
    %264 = arith.addf %263, %262 : vector<16x384xf32>
    %265 = arith.divf %263, %264 : vector<16x384xf32>
    %266 = vector.extract_strided_slice %259 {offsets = [0, 384], sizes = [16, 128], strides = [1, 1]} : vector<16x512xf32> to vector<16x128xf32>
    %267 = math.tanh %266 : vector<16x128xf32>
    %268 = vector.extract_strided_slice %265 {offsets = [0, 128], sizes = [16, 128], strides = [1, 1]} : vector<16x384xf32> to vector<16x128xf32>
    %269 = arith.mulf %268, %246 : vector<16x128xf32>
    %270 = vector.extract_strided_slice %265 {offsets = [0, 0], sizes = [16, 128], strides = [1, 1]} : vector<16x384xf32> to vector<16x128xf32>
    %271 = arith.mulf %270, %267 : vector<16x128xf32>
    %272 = arith.addf %269, %271 : vector<16x128xf32>
    %273 = vector.extract_strided_slice %265 {offsets = [0, 256], sizes = [16, 128], strides = [1, 1]} : vector<16x384xf32> to vector<16x128xf32>
    %274 = math.tanh %272 : vector<16x128xf32>
    %275 = arith.mulf %273, %274 : vector<16x128xf32>
    %c16_i32_85 = arith.constant 16 : i32
    %276 = arith.muli %c0_i32_80, %c16_i32_85 : i32
    %c0_i32_86 = arith.constant 0 : i32
    %277 = arith.addi %c0_i32_86, %276 : i32
    %278 = tpu.assume_multiple %277, 16 : i32
    %279 = arith.truncf %275 : vector<16x128xf32> to vector<16x128xbf16>
    %280 = arith.index_cast %278 : i32 to index
    %c0_87 = arith.constant 0 : index
    %281 = vector.load %arg14[%280, %c0_87] : memref<128x128xbf16, #tpu.memory_space<vmem>>, vector<16x128xbf16>
    tpu.vector_store %arg14[%280, %c0_87], %279 {strides = array<i32>} : memref<128x128xbf16, #tpu.memory_space<vmem>>, vector<16x128xbf16>,
    %c1_i32_88 = arith.constant 1 : i32
    %c16_i32_89 = arith.constant 16 : i32
    %282 = arith.muli %c1_i32_88, %c16_i32_89 : i32
    %283 = tpu.assume_multiple %282, 16 : i32
    %284 = arith.index_cast %283 : i32 to index
    %c0_90 = arith.constant 0 : index
    %285 = vector.load %arg15[%284, %c0_90] : memref<128x512xf32, #tpu.memory_space<vmem>>, vector<16x512xf32>
    %286 = arith.truncf %275 : vector<16x128xf32> to vector<16x128xbf16>
    %cst_91 = arith.constant dense<0.000000e+00> : vector<16x512xf32>
    %287 = tpu.matmul %286, %243, %cst_91 {dimension_numbers = #tpu.dot_dimension_numbers<[1], [0], [0], [1], [0, 0, 1, 1], [], []>} : vector<16x128xbf16>, vector<128x512xbf16>, vector<16x512xf32> -> vector<16x512xf32>
    %288 = arith.addf %285, %287 : vector<16x512xf32>
    %289 = vector.extract_strided_slice %288 {offsets = [0, 0], sizes = [16, 384], strides = [1, 1]} : vector<16x512xf32> to vector<16x384xf32>
    %290 = arith.negf %289 : vector<16x384xf32>
    %291 = math.exp %290 : vector<16x384xf32>
    %cst_92 = arith.constant 1.000000e+00 : f32
    %292 = vector.broadcast %cst_92 : f32 to vector<16x384xf32>
    %293 = arith.addf %292, %291 : vector<16x384xf32>
    %294 = arith.divf %292, %293 : vector<16x384xf32>
    %295 = vector.extract_strided_slice %288 {offsets = [0, 384], sizes = [16, 128], strides = [1, 1]} : vector<16x512xf32> to vector<16x128xf32>
    %296 = math.tanh %295 : vector<16x128xf32>
    %297 = vector.extract_strided_slice %294 {offsets = [0, 128], sizes = [16, 128], strides = [1, 1]} : vector<16x384xf32> to vector<16x128xf32>
    %298 = arith.mulf %297, %272 : vector<16x128xf32>
    %299 = vector.extract_strided_slice %294 {offsets = [0, 0], sizes = [16, 128], strides = [1, 1]} : vector<16x384xf32> to vector<16x128xf32>
    %300 = arith.mulf %299, %296 : vector<16x128xf32>
    %301 = arith.addf %298, %300 : vector<16x128xf32>
    %302 = vector.extract_strided_slice %294 {offsets = [0, 256], sizes = [16, 128], strides = [1, 1]} : vector<16x384xf32> to vector<16x128xf32>
    %303 = math.tanh %301 : vector<16x128xf32>
    %304 = arith.mulf %302, %303 : vector<16x128xf32>
    %c16_i32_93 = arith.constant 16 : i32
    %305 = arith.muli %c1_i32_88, %c16_i32_93 : i32
    %c0_i32_94 = arith.constant 0 : i32
    %306 = arith.addi %c0_i32_94, %305 : i32
    %307 = tpu.assume_multiple %306, 16 : i32
    %308 = arith.truncf %304 : vector<16x128xf32> to vector<16x128xbf16>
    %309 = arith.index_cast %307 : i32 to index
    %c0_95 = arith.constant 0 : index
    %310 = vector.load %arg14[%309, %c0_95] : memref<128x128xbf16, #tpu.memory_space<vmem>>, vector<16x128xbf16>
    tpu.vector_store %arg14[%309, %c0_95], %308 {strides = array<i32>} : memref<128x128xbf16, #tpu.memory_space<vmem>>, vector<16x128xbf16>,
    %c2_i32_96 = arith.constant 2 : i32
    %c16_i32_97 = arith.constant 16 : i32
    %311 = arith.muli %c2_i32_96, %c16_i32_97 : i32
    %312 = tpu.assume_multiple %311, 16 : i32
    %313 = arith.index_cast %312 : i32 to index
    %c0_98 = arith.constant 0 : index
    %314 = vector.load %arg15[%313, %c0_98] : memref<128x512xf32, #tpu.memory_space<vmem>>, vector<16x512xf32>
    %315 = arith.truncf %304 : vector<16x128xf32> to vector<16x128xbf16>
    %cst_99 = arith.constant dense<0.000000e+00> : vector<16x512xf32>
    %316 = tpu.matmul %315, %243, %cst_99 {dimension_numbers = #tpu.dot_dimension_numbers<[1], [0], [0], [1], [0, 0, 1, 1], [], []>} : vector<16x128xbf16>, vector<128x512xbf16>, vector<16x512xf32> -> vector<16x512xf32>
    %317 = arith.addf %314, %316 : vector<16x512xf32>
    %318 = vector.extract_strided_slice %317 {offsets = [0, 0], sizes = [16, 384], strides = [1, 1]} : vector<16x512xf32> to vector<16x384xf32>
    %319 = arith.negf %318 : vector<16x384xf32>
    %320 = math.exp %319 : vector<16x384xf32>
    %cst_100 = arith.constant 1.000000e+00 : f32
    %321 = vector.broadcast %cst_100 : f32 to vector<16x384xf32>
    %322 = arith.addf %321, %320 : vector<16x384xf32>
    %323 = arith.divf %321, %322 : vector<16x384xf32>
    %324 = vector.extract_strided_slice %317 {offsets = [0, 384], sizes = [16, 128], strides = [1, 1]} : vector<16x512xf32> to vector<16x128xf32>
    %325 = math.tanh %324 : vector<16x128xf32>
    %326 = vector.extract_strided_slice %323 {offsets = [0, 128], sizes = [16, 128], strides = [1, 1]} : vector<16x384xf32> to vector<16x128xf32>
    %327 = arith.mulf %326, %301 : vector<16x128xf32>
    %328 = vector.extract_strided_slice %323 {offsets = [0, 0], sizes = [16, 128], strides = [1, 1]} : vector<16x384xf32> to vector<16x128xf32>
    %329 = arith.mulf %328, %325 : vector<16x128xf32>
    %330 = arith.addf %327, %329 : vector<16x128xf32>
    %331 = vector.extract_strided_slice %323 {offsets = [0, 256], sizes = [16, 128], strides = [1, 1]} : vector<16x384xf32> to vector<16x128xf32>
    %332 = math.tanh %330 : vector<16x128xf32>
    %333 = arith.mulf %331, %332 : vector<16x128xf32>
    %c16_i32_101 = arith.constant 16 : i32
    %334 = arith.muli %c2_i32_96, %c16_i32_101 : i32
    %c0_i32_102 = arith.constant 0 : i32
    %335 = arith.addi %c0_i32_102, %334 : i32
    %336 = tpu.assume_multiple %335, 16 : i32
    %337 = arith.truncf %333 : vector<16x128xf32> to vector<16x128xbf16>
    %338 = arith.index_cast %336 : i32 to index
    %c0_103 = arith.constant 0 : index
    %339 = vector.load %arg14[%338, %c0_103] : memref<128x128xbf16, #tpu.memory_space<vmem>>, vector<16x128xbf16>
    tpu.vector_store %arg14[%338, %c0_103], %337 {strides = array<i32>} : memref<128x128xbf16, #tpu.memory_space<vmem>>, vector<16x128xbf16>,
    %c3_i32_104 = arith.constant 3 : i32
    %c16_i32_105 = arith.constant 16 : i32
    %340 = arith.muli %c3_i32_104, %c16_i32_105 : i32
    %341 = tpu.assume_multiple %340, 16 : i32
    %342 = arith.index_cast %341 : i32 to index
    %c0_106 = arith.constant 0 : index
    %343 = vector.load %arg15[%342, %c0_106] : memref<128x512xf32, #tpu.memory_space<vmem>>, vector<16x512xf32>
    %344 = arith.truncf %333 : vector<16x128xf32> to vector<16x128xbf16>
    %cst_107 = arith.constant dense<0.000000e+00> : vector<16x512xf32>
    %345 = tpu.matmul %344, %243, %cst_107 {dimension_numbers = #tpu.dot_dimension_numbers<[1], [0], [0], [1], [0, 0, 1, 1], [], []>} : vector<16x128xbf16>, vector<128x512xbf16>, vector<16x512xf32> -> vector<16x512xf32>
    %346 = arith.addf %343, %345 : vector<16x512xf32>
    %347 = vector.extract_strided_slice %346 {offsets = [0, 0], sizes = [16, 384], strides = [1, 1]} : vector<16x512xf32> to vector<16x384xf32>
    %348 = arith.negf %347 : vector<16x384xf32>
    %349 = math.exp %348 : vector<16x384xf32>
    %cst_108 = arith.constant 1.000000e+00 : f32
    %350 = vector.broadcast %cst_108 : f32 to vector<16x384xf32>
    %351 = arith.addf %350, %349 : vector<16x384xf32>
    %352 = arith.divf %350, %351 : vector<16x384xf32>
    %353 = vector.extract_strided_slice %346 {offsets = [0, 384], sizes = [16, 128], strides = [1, 1]} : vector<16x512xf32> to vector<16x128xf32>
    %354 = math.tanh %353 : vector<16x128xf32>
    %355 = vector.extract_strided_slice %352 {offsets = [0, 128], sizes = [16, 128], strides = [1, 1]} : vector<16x384xf32> to vector<16x128xf32>
    %356 = arith.mulf %355, %330 : vector<16x128xf32>
    %357 = vector.extract_strided_slice %352 {offsets = [0, 0], sizes = [16, 128], strides = [1, 1]} : vector<16x384xf32> to vector<16x128xf32>
    %358 = arith.mulf %357, %354 : vector<16x128xf32>
    %359 = arith.addf %356, %358 : vector<16x128xf32>
    %360 = vector.extract_strided_slice %352 {offsets = [0, 256], sizes = [16, 128], strides = [1, 1]} : vector<16x384xf32> to vector<16x128xf32>
    %361 = math.tanh %359 : vector<16x128xf32>
    %362 = arith.mulf %360, %361 : vector<16x128xf32>
    %c16_i32_109 = arith.constant 16 : i32
    %363 = arith.muli %c3_i32_104, %c16_i32_109 : i32
    %c0_i32_110 = arith.constant 0 : i32
    %364 = arith.addi %c0_i32_110, %363 : i32
    %365 = tpu.assume_multiple %364, 16 : i32
    %366 = arith.truncf %362 : vector<16x128xf32> to vector<16x128xbf16>
    %367 = arith.index_cast %365 : i32 to index
    %c0_111 = arith.constant 0 : index
    %368 = vector.load %arg14[%367, %c0_111] : memref<128x128xbf16, #tpu.memory_space<vmem>>, vector<16x128xbf16>
    tpu.vector_store %arg14[%367, %c0_111], %366 {strides = array<i32>} : memref<128x128xbf16, #tpu.memory_space<vmem>>, vector<16x128xbf16>,
    %c4_i32_112 = arith.constant 4 : i32
    %c16_i32_113 = arith.constant 16 : i32
    %369 = arith.muli %c4_i32_112, %c16_i32_113 : i32
    %370 = tpu.assume_multiple %369, 16 : i32
    %371 = arith.index_cast %370 : i32 to index
    %c0_114 = arith.constant 0 : index
    %372 = vector.load %arg15[%371, %c0_114] : memref<128x512xf32, #tpu.memory_space<vmem>>, vector<16x512xf32>
    %373 = arith.truncf %362 : vector<16x128xf32> to vector<16x128xbf16>
    %cst_115 = arith.constant dense<0.000000e+00> : vector<16x512xf32>
    %374 = tpu.matmul %373, %243, %cst_115 {dimension_numbers = #tpu.dot_dimension_numbers<[1], [0], [0], [1], [0, 0, 1, 1], [], []>} : vector<16x128xbf16>, vector<128x512xbf16>, vector<16x512xf32> -> vector<16x512xf32>
    %375 = arith.addf %372, %374 : vector<16x512xf32>
    %376 = vector.extract_strided_slice %375 {offsets = [0, 0], sizes = [16, 384], strides = [1, 1]} : vector<16x512xf32> to vector<16x384xf32>
    %377 = arith.negf %376 : vector<16x384xf32>
    %378 = math.exp %377 : vector<16x384xf32>
    %cst_116 = arith.constant 1.000000e+00 : f32
    %379 = vector.broadcast %cst_116 : f32 to vector<16x384xf32>
    %380 = arith.addf %379, %378 : vector<16x384xf32>
    %381 = arith.divf %379, %380 : vector<16x384xf32>
    %382 = vector.extract_strided_slice %375 {offsets = [0, 384], sizes = [16, 128], strides = [1, 1]} : vector<16x512xf32> to vector<16x128xf32>
    %383 = math.tanh %382 : vector<16x128xf32>
    %384 = vector.extract_strided_slice %381 {offsets = [0, 128], sizes = [16, 128], strides = [1, 1]} : vector<16x384xf32> to vector<16x128xf32>
    %385 = arith.mulf %384, %359 : vector<16x128xf32>
    %386 = vector.extract_strided_slice %381 {offsets = [0, 0], sizes = [16, 128], strides = [1, 1]} : vector<16x384xf32> to vector<16x128xf32>
    %387 = arith.mulf %386, %383 : vector<16x128xf32>
    %388 = arith.addf %385, %387 : vector<16x128xf32>
    %389 = vector.extract_strided_slice %381 {offsets = [0, 256], sizes = [16, 128], strides = [1, 1]} : vector<16x384xf32> to vector<16x128xf32>
    %390 = math.tanh %388 : vector<16x128xf32>
    %391 = arith.mulf %389, %390 : vector<16x128xf32>
    %c16_i32_117 = arith.constant 16 : i32
    %392 = arith.muli %c4_i32_112, %c16_i32_117 : i32
    %c0_i32_118 = arith.constant 0 : i32
    %393 = arith.addi %c0_i32_118, %392 : i32
    %394 = tpu.assume_multiple %393, 16 : i32
    %395 = arith.truncf %391 : vector<16x128xf32> to vector<16x128xbf16>
    %396 = arith.index_cast %394 : i32 to index
    %c0_119 = arith.constant 0 : index
    %397 = vector.load %arg14[%396, %c0_119] : memref<128x128xbf16, #tpu.memory_space<vmem>>, vector<16x128xbf16>
    tpu.vector_store %arg14[%396, %c0_119], %395 {strides = array<i32>} : memref<128x128xbf16, #tpu.memory_space<vmem>>, vector<16x128xbf16>,
    %c5_i32_120 = arith.constant 5 : i32
    %c16_i32_121 = arith.constant 16 : i32
    %398 = arith.muli %c5_i32_120, %c16_i32_121 : i32
    %399 = tpu.assume_multiple %398, 16 : i32
    %400 = arith.index_cast %399 : i32 to index
    %c0_122 = arith.constant 0 : index
    %401 = vector.load %arg15[%400, %c0_122] : memref<128x512xf32, #tpu.memory_space<vmem>>, vector<16x512xf32>
    %402 = arith.truncf %391 : vector<16x128xf32> to vector<16x128xbf16>
    %cst_123 = arith.constant dense<0.000000e+00> : vector<16x512xf32>
    %403 = tpu.matmul %402, %243, %cst_123 {dimension_numbers = #tpu.dot_dimension_numbers<[1], [0], [0], [1], [0, 0, 1, 1], [], []>} : vector<16x128xbf16>, vector<128x512xbf16>, vector<16x512xf32> -> vector<16x512xf32>
    %404 = arith.addf %401, %403 : vector<16x512xf32>
    %405 = vector.extract_strided_slice %404 {offsets = [0, 0], sizes = [16, 384], strides = [1, 1]} : vector<16x512xf32> to vector<16x384xf32>
    %406 = arith.negf %405 : vector<16x384xf32>
    %407 = math.exp %406 : vector<16x384xf32>
    %cst_124 = arith.constant 1.000000e+00 : f32
    %408 = vector.broadcast %cst_124 : f32 to vector<16x384xf32>
    %409 = arith.addf %408, %407 : vector<16x384xf32>
    %410 = arith.divf %408, %409 : vector<16x384xf32>
    %411 = vector.extract_strided_slice %404 {offsets = [0, 384], sizes = [16, 128], strides = [1, 1]} : vector<16x512xf32> to vector<16x128xf32>
    %412 = math.tanh %411 : vector<16x128xf32>
    %413 = vector.extract_strided_slice %410 {offsets = [0, 128], sizes = [16, 128], strides = [1, 1]} : vector<16x384xf32> to vector<16x128xf32>
    %414 = arith.mulf %413, %388 : vector<16x128xf32>
    %415 = vector.extract_strided_slice %410 {offsets = [0, 0], sizes = [16, 128], strides = [1, 1]} : vector<16x384xf32> to vector<16x128xf32>
    %416 = arith.mulf %415, %412 : vector<16x128xf32>
    %417 = arith.addf %414, %416 : vector<16x128xf32>
    %418 = vector.extract_strided_slice %410 {offsets = [0, 256], sizes = [16, 128], strides = [1, 1]} : vector<16x384xf32> to vector<16x128xf32>
    %419 = math.tanh %417 : vector<16x128xf32>
    %420 = arith.mulf %418, %419 : vector<16x128xf32>
    %c16_i32_125 = arith.constant 16 : i32
    %421 = arith.muli %c5_i32_120, %c16_i32_125 : i32
    %c0_i32_126 = arith.constant 0 : i32
    %422 = arith.addi %c0_i32_126, %421 : i32
    %423 = tpu.assume_multiple %422, 16 : i32
    %424 = arith.truncf %420 : vector<16x128xf32> to vector<16x128xbf16>
    %425 = arith.index_cast %423 : i32 to index
    %c0_127 = arith.constant 0 : index
    %426 = vector.load %arg14[%425, %c0_127] : memref<128x128xbf16, #tpu.memory_space<vmem>>, vector<16x128xbf16>
    tpu.vector_store %arg14[%425, %c0_127], %424 {strides = array<i32>} : memref<128x128xbf16, #tpu.memory_space<vmem>>, vector<16x128xbf16>,
    %c6_i32_128 = arith.constant 6 : i32
    %c16_i32_129 = arith.constant 16 : i32
    %427 = arith.muli %c6_i32_128, %c16_i32_129 : i32
    %428 = tpu.assume_multiple %427, 16 : i32
    %429 = arith.index_cast %428 : i32 to index
    %c0_130 = arith.constant 0 : index
    %430 = vector.load %arg15[%429, %c0_130] : memref<128x512xf32, #tpu.memory_space<vmem>>, vector<16x512xf32>
    %431 = arith.truncf %420 : vector<16x128xf32> to vector<16x128xbf16>
    %cst_131 = arith.constant dense<0.000000e+00> : vector<16x512xf32>
    %432 = tpu.matmul %431, %243, %cst_131 {dimension_numbers = #tpu.dot_dimension_numbers<[1], [0], [0], [1], [0, 0, 1, 1], [], []>} : vector<16x128xbf16>, vector<128x512xbf16>, vector<16x512xf32> -> vector<16x512xf32>
    %433 = arith.addf %430, %432 : vector<16x512xf32>
    %434 = vector.extract_strided_slice %433 {offsets = [0, 0], sizes = [16, 384], strides = [1, 1]} : vector<16x512xf32> to vector<16x384xf32>
    %435 = arith.negf %434 : vector<16x384xf32>
    %436 = math.exp %435 : vector<16x384xf32>
    %cst_132 = arith.constant 1.000000e+00 : f32
    %437 = vector.broadcast %cst_132 : f32 to vector<16x384xf32>
    %438 = arith.addf %437, %436 : vector<16x384xf32>
    %439 = arith.divf %437, %438 : vector<16x384xf32>
    %440 = vector.extract_strided_slice %433 {offsets = [0, 384], sizes = [16, 128], strides = [1, 1]} : vector<16x512xf32> to vector<16x128xf32>
    %441 = math.tanh %440 : vector<16x128xf32>
    %442 = vector.extract_strided_slice %439 {offsets = [0, 128], sizes = [16, 128], strides = [1, 1]} : vector<16x384xf32> to vector<16x128xf32>
    %443 = arith.mulf %442, %417 : vector<16x128xf32>
    %444 = vector.extract_strided_slice %439 {offsets = [0, 0], sizes = [16, 128], strides = [1, 1]} : vector<16x384xf32> to vector<16x128xf32>
    %445 = arith.mulf %444, %441 : vector<16x128xf32>
    %446 = arith.addf %443, %445 : vector<16x128xf32>
    %447 = vector.extract_strided_slice %439 {offsets = [0, 256], sizes = [16, 128], strides = [1, 1]} : vector<16x384xf32> to vector<16x128xf32>
    %448 = math.tanh %446 : vector<16x128xf32>
    %449 = arith.mulf %447, %448 : vector<16x128xf32>
    %c16_i32_133 = arith.constant 16 : i32
    %450 = arith.muli %c6_i32_128, %c16_i32_133 : i32
    %c0_i32_134 = arith.constant 0 : i32
    %451 = arith.addi %c0_i32_134, %450 : i32
    %452 = tpu.assume_multiple %451, 16 : i32
    %453 = arith.truncf %449 : vector<16x128xf32> to vector<16x128xbf16>
    %454 = arith.index_cast %452 : i32 to index
    %c0_135 = arith.constant 0 : index
    %455 = vector.load %arg14[%454, %c0_135] : memref<128x128xbf16, #tpu.memory_space<vmem>>, vector<16x128xbf16>
    tpu.vector_store %arg14[%454, %c0_135], %453 {strides = array<i32>} : memref<128x128xbf16, #tpu.memory_space<vmem>>, vector<16x128xbf16>,
    %c7_i32_136 = arith.constant 7 : i32
    %c16_i32_137 = arith.constant 16 : i32
    %456 = arith.muli %c7_i32_136, %c16_i32_137 : i32
    %457 = tpu.assume_multiple %456, 16 : i32
    %458 = arith.index_cast %457 : i32 to index
    %c0_138 = arith.constant 0 : index
    %459 = vector.load %arg15[%458, %c0_138] : memref<128x512xf32, #tpu.memory_space<vmem>>, vector<16x512xf32>
    %460 = arith.truncf %449 : vector<16x128xf32> to vector<16x128xbf16>
    %cst_139 = arith.constant dense<0.000000e+00> : vector<16x512xf32>
    %461 = tpu.matmul %460, %243, %cst_139 {dimension_numbers = #tpu.dot_dimension_numbers<[1], [0], [0], [1], [0, 0, 1, 1], [], []>} : vector<16x128xbf16>, vector<128x512xbf16>, vector<16x512xf32> -> vector<16x512xf32>
    %462 = arith.addf %459, %461 : vector<16x512xf32>
    %463 = vector.extract_strided_slice %462 {offsets = [0, 0], sizes = [16, 384], strides = [1, 1]} : vector<16x512xf32> to vector<16x384xf32>
    %464 = arith.negf %463 : vector<16x384xf32>
    %465 = math.exp %464 : vector<16x384xf32>
    %cst_140 = arith.constant 1.000000e+00 : f32
    %466 = vector.broadcast %cst_140 : f32 to vector<16x384xf32>
    %467 = arith.addf %466, %465 : vector<16x384xf32>
    %468 = arith.divf %466, %467 : vector<16x384xf32>
    %469 = vector.extract_strided_slice %462 {offsets = [0, 384], sizes = [16, 128], strides = [1, 1]} : vector<16x512xf32> to vector<16x128xf32>
    %470 = math.tanh %469 : vector<16x128xf32>
    %471 = vector.extract_strided_slice %468 {offsets = [0, 128], sizes = [16, 128], strides = [1, 1]} : vector<16x384xf32> to vector<16x128xf32>
    %472 = arith.mulf %471, %446 : vector<16x128xf32>
    %473 = vector.extract_strided_slice %468 {offsets = [0, 0], sizes = [16, 128], strides = [1, 1]} : vector<16x384xf32> to vector<16x128xf32>
    %474 = arith.mulf %473, %470 : vector<16x128xf32>
    %475 = arith.addf %472, %474 : vector<16x128xf32>
    %476 = vector.extract_strided_slice %468 {offsets = [0, 256], sizes = [16, 128], strides = [1, 1]} : vector<16x384xf32> to vector<16x128xf32>
    %477 = math.tanh %475 : vector<16x128xf32>
    %478 = arith.mulf %476, %477 : vector<16x128xf32>
    %c16_i32_141 = arith.constant 16 : i32
    %479 = arith.muli %c7_i32_136, %c16_i32_141 : i32
    %c0_i32_142 = arith.constant 0 : i32
    %480 = arith.addi %c0_i32_142, %479 : i32
    %481 = tpu.assume_multiple %480, 16 : i32
    %482 = arith.truncf %478 : vector<16x128xf32> to vector<16x128xbf16>
    %483 = arith.index_cast %481 : i32 to index
    %c0_143 = arith.constant 0 : index
    %484 = vector.load %arg14[%483, %c0_143] : memref<128x128xbf16, #tpu.memory_space<vmem>>, vector<16x128xbf16>
    tpu.vector_store %arg14[%483, %c0_143], %482 {strides = array<i32>} : memref<128x128xbf16, #tpu.memory_space<vmem>>, vector<16x128xbf16>,
    %c8_i32_144 = arith.constant 8 : i32
    %c0_145 = arith.constant 0 : index
    %c0_146 = arith.constant 0 : index
    %485 = vector.load %arg9[%c0_145, %c0_146] : memref<128x512xbf16, #tpu.memory_space<vmem>>, vector<128x512xbf16>
    %c0_147 = arith.constant 0 : index
    %c0_148 = arith.constant 0 : index
    %486 = vector.load %arg10[%c0_147, %c0_148] : memref<1x512xf32, #tpu.memory_space<vmem>>, vector<1x512xf32>
    %cst_149 = arith.constant 0.000000e+00 : f32
    %487 = vector.broadcast %cst_149 : f32 to vector<16x128xf32>
    %cst_150 = arith.constant 0.000000e+00 : f32
    %488 = vector.broadcast %cst_150 : f32 to vector<16x128xf32>
    %c0_151 = arith.constant 0 : index
    %c0_152 = arith.constant 0 : index
    %489 = vector.load %arg14[%c0_151, %c0_152] : memref<128x128xbf16, #tpu.memory_space<vmem>>, vector<128x128xbf16>
    %c0_153 = arith.constant 0 : index
    %c0_154 = arith.constant 0 : index
    %490 = vector.load %arg8[%c0_153, %c0_154] : memref<128x512xbf16, #tpu.memory_space<vmem>>, vector<128x512xbf16>
    %cst_155 = arith.constant dense<0.000000e+00> : vector<128x512xf32>
    %491 = tpu.matmul %489, %490, %cst_155 {dimension_numbers = #tpu.dot_dimension_numbers<[1], [0], [0], [1], [0, 0, 1, 1], [], []>} : vector<128x128xbf16>, vector<128x512xbf16>, vector<128x512xf32> -> vector<128x512xf32>
    %492 = vector.broadcast %486 : vector<1x512xf32> to vector<128x512xf32>
    %493 = arith.addf %491, %492 : vector<128x512xf32>
    %c0_156 = arith.constant 0 : index
    %c0_157 = arith.constant 0 : index
    %494 = vector.load %arg15[%c0_156, %c0_157] : memref<128x512xf32, #tpu.memory_space<vmem>>, vector<128x512xf32>
    tpu.vector_store %arg15[%c0_156, %c0_157], %493 {strides = array<i32>} : memref<128x512xf32, #tpu.memory_space<vmem>>, vector<128x512xf32>,
    %c0_i32_158 = arith.constant 0 : i32
    %c16_i32_159 = arith.constant 16 : i32
    %495 = arith.muli %c0_i32_158, %c16_i32_159 : i32
    %496 = tpu.assume_multiple %495, 16 : i32
    %497 = arith.index_cast %496 : i32 to index
    %c0_160 = arith.constant 0 : index
    %498 = vector.load %arg15[%497, %c0_160] : memref<128x512xf32, #tpu.memory_space<vmem>>, vector<16x512xf32>
    %499 = arith.truncf %487 : vector<16x128xf32> to vector<16x128xbf16>
    %cst_161 = arith.constant dense<0.000000e+00> : vector<16x512xf32>
    %500 = tpu.matmul %499, %485, %cst_161 {dimension_numbers = #tpu.dot_dimension_numbers<[1], [0], [0], [1], [0, 0, 1, 1], [], []>} : vector<16x128xbf16>, vector<128x512xbf16>, vector<16x512xf32> -> vector<16x512xf32>
    %501 = arith.addf %498, %500 : vector<16x512xf32>
    %502 = vector.extract_strided_slice %501 {offsets = [0, 0], sizes = [16, 384], strides = [1, 1]} : vector<16x512xf32> to vector<16x384xf32>
    %503 = arith.negf %502 : vector<16x384xf32>
    %504 = math.exp %503 : vector<16x384xf32>
    %cst_162 = arith.constant 1.000000e+00 : f32
    %505 = vector.broadcast %cst_162 : f32 to vector<16x384xf32>
    %506 = arith.addf %505, %504 : vector<16x384xf32>
    %507 = arith.divf %505, %506 : vector<16x384xf32>
    %508 = vector.extract_strided_slice %501 {offsets = [0, 384], sizes = [16, 128], strides = [1, 1]} : vector<16x512xf32> to vector<16x128xf32>
    %509 = math.tanh %508 : vector<16x128xf32>
    %510 = vector.extract_strided_slice %507 {offsets = [0, 128], sizes = [16, 128], strides = [1, 1]} : vector<16x384xf32> to vector<16x128xf32>
    %511 = arith.mulf %510, %488 : vector<16x128xf32>
    %512 = vector.extract_strided_slice %507 {offsets = [0, 0], sizes = [16, 128], strides = [1, 1]} : vector<16x384xf32> to vector<16x128xf32>
    %513 = arith.mulf %512, %509 : vector<16x128xf32>
    %514 = arith.addf %511, %513 : vector<16x128xf32>
    %515 = vector.extract_strided_slice %507 {offsets = [0, 256], sizes = [16, 128], strides = [1, 1]} : vector<16x384xf32> to vector<16x128xf32>
    %516 = math.tanh %514 : vector<16x128xf32>
    %517 = arith.mulf %515, %516 : vector<16x128xf32>
    %c1_i32_163 = arith.constant 1 : i32
    %c16_i32_164 = arith.constant 16 : i32
    %518 = arith.muli %c1_i32_163, %c16_i32_164 : i32
    %519 = tpu.assume_multiple %518, 16 : i32
    %520 = arith.index_cast %519 : i32 to index
    %c0_165 = arith.constant 0 : index
    %521 = vector.load %arg15[%520, %c0_165] : memref<128x512xf32, #tpu.memory_space<vmem>>, vector<16x512xf32>
    %522 = arith.truncf %517 : vector<16x128xf32> to vector<16x128xbf16>
    %cst_166 = arith.constant dense<0.000000e+00> : vector<16x512xf32>
    %523 = tpu.matmul %522, %485, %cst_166 {dimension_numbers = #tpu.dot_dimension_numbers<[1], [0], [0], [1], [0, 0, 1, 1], [], []>} : vector<16x128xbf16>, vector<128x512xbf16>, vector<16x512xf32> -> vector<16x512xf32>
    %524 = arith.addf %521, %523 : vector<16x512xf32>
    %525 = vector.extract_strided_slice %524 {offsets = [0, 0], sizes = [16, 384], strides = [1, 1]} : vector<16x512xf32> to vector<16x384xf32>
    %526 = arith.negf %525 : vector<16x384xf32>
    %527 = math.exp %526 : vector<16x384xf32>
    %cst_167 = arith.constant 1.000000e+00 : f32
    %528 = vector.broadcast %cst_167 : f32 to vector<16x384xf32>
    %529 = arith.addf %528, %527 : vector<16x384xf32>
    %530 = arith.divf %528, %529 : vector<16x384xf32>
    %531 = vector.extract_strided_slice %524 {offsets = [0, 384], sizes = [16, 128], strides = [1, 1]} : vector<16x512xf32> to vector<16x128xf32>
    %532 = math.tanh %531 : vector<16x128xf32>
    %533 = vector.extract_strided_slice %530 {offsets = [0, 128], sizes = [16, 128], strides = [1, 1]} : vector<16x384xf32> to vector<16x128xf32>
    %534 = arith.mulf %533, %514 : vector<16x128xf32>
    %535 = vector.extract_strided_slice %530 {offsets = [0, 0], sizes = [16, 128], strides = [1, 1]} : vector<16x384xf32> to vector<16x128xf32>
    %536 = arith.mulf %535, %532 : vector<16x128xf32>
    %537 = arith.addf %534, %536 : vector<16x128xf32>
    %538 = vector.extract_strided_slice %530 {offsets = [0, 256], sizes = [16, 128], strides = [1, 1]} : vector<16x384xf32> to vector<16x128xf32>
    %539 = math.tanh %537 : vector<16x128xf32>
    %540 = arith.mulf %538, %539 : vector<16x128xf32>
    %c2_i32_168 = arith.constant 2 : i32
    %c16_i32_169 = arith.constant 16 : i32
    %541 = arith.muli %c2_i32_168, %c16_i32_169 : i32
    %542 = tpu.assume_multiple %541, 16 : i32
    %543 = arith.index_cast %542 : i32 to index
    %c0_170 = arith.constant 0 : index
    %544 = vector.load %arg15[%543, %c0_170] : memref<128x512xf32, #tpu.memory_space<vmem>>, vector<16x512xf32>
    %545 = arith.truncf %540 : vector<16x128xf32> to vector<16x128xbf16>
    %cst_171 = arith.constant dense<0.000000e+00> : vector<16x512xf32>
    %546 = tpu.matmul %545, %485, %cst_171 {dimension_numbers = #tpu.dot_dimension_numbers<[1], [0], [0], [1], [0, 0, 1, 1], [], []>} : vector<16x128xbf16>, vector<128x512xbf16>, vector<16x512xf32> -> vector<16x512xf32>
    %547 = arith.addf %544, %546 : vector<16x512xf32>
    %548 = vector.extract_strided_slice %547 {offsets = [0, 0], sizes = [16, 384], strides = [1, 1]} : vector<16x512xf32> to vector<16x384xf32>
    %549 = arith.negf %548 : vector<16x384xf32>
    %550 = math.exp %549 : vector<16x384xf32>
    %cst_172 = arith.constant 1.000000e+00 : f32
    %551 = vector.broadcast %cst_172 : f32 to vector<16x384xf32>
    %552 = arith.addf %551, %550 : vector<16x384xf32>
    %553 = arith.divf %551, %552 : vector<16x384xf32>
    %554 = vector.extract_strided_slice %547 {offsets = [0, 384], sizes = [16, 128], strides = [1, 1]} : vector<16x512xf32> to vector<16x128xf32>
    %555 = math.tanh %554 : vector<16x128xf32>
    %556 = vector.extract_strided_slice %553 {offsets = [0, 128], sizes = [16, 128], strides = [1, 1]} : vector<16x384xf32> to vector<16x128xf32>
    %557 = arith.mulf %556, %537 : vector<16x128xf32>
    %558 = vector.extract_strided_slice %553 {offsets = [0, 0], sizes = [16, 128], strides = [1, 1]} : vector<16x384xf32> to vector<16x128xf32>
    %559 = arith.mulf %558, %555 : vector<16x128xf32>
    %560 = arith.addf %557, %559 : vector<16x128xf32>
    %561 = vector.extract_strided_slice %553 {offsets = [0, 256], sizes = [16, 128], strides = [1, 1]} : vector<16x384xf32> to vector<16x128xf32>
    %562 = math.tanh %560 : vector<16x128xf32>
    %563 = arith.mulf %561, %562 : vector<16x128xf32>
    %c3_i32_173 = arith.constant 3 : i32
    %c16_i32_174 = arith.constant 16 : i32
    %564 = arith.muli %c3_i32_173, %c16_i32_174 : i32
    %565 = tpu.assume_multiple %564, 16 : i32
    %566 = arith.index_cast %565 : i32 to index
    %c0_175 = arith.constant 0 : index
    %567 = vector.load %arg15[%566, %c0_175] : memref<128x512xf32, #tpu.memory_space<vmem>>, vector<16x512xf32>
    %568 = arith.truncf %563 : vector<16x128xf32> to vector<16x128xbf16>
    %cst_176 = arith.constant dense<0.000000e+00> : vector<16x512xf32>
    %569 = tpu.matmul %568, %485, %cst_176 {dimension_numbers = #tpu.dot_dimension_numbers<[1], [0], [0], [1], [0, 0, 1, 1], [], []>} : vector<16x128xbf16>, vector<128x512xbf16>, vector<16x512xf32> -> vector<16x512xf32>
    %570 = arith.addf %567, %569 : vector<16x512xf32>
    %571 = vector.extract_strided_slice %570 {offsets = [0, 0], sizes = [16, 384], strides = [1, 1]} : vector<16x512xf32> to vector<16x384xf32>
    %572 = arith.negf %571 : vector<16x384xf32>
    %573 = math.exp %572 : vector<16x384xf32>
    %cst_177 = arith.constant 1.000000e+00 : f32
    %574 = vector.broadcast %cst_177 : f32 to vector<16x384xf32>
    %575 = arith.addf %574, %573 : vector<16x384xf32>
    %576 = arith.divf %574, %575 : vector<16x384xf32>
    %577 = vector.extract_strided_slice %570 {offsets = [0, 384], sizes = [16, 128], strides = [1, 1]} : vector<16x512xf32> to vector<16x128xf32>
    %578 = math.tanh %577 : vector<16x128xf32>
    %579 = vector.extract_strided_slice %576 {offsets = [0, 128], sizes = [16, 128], strides = [1, 1]} : vector<16x384xf32> to vector<16x128xf32>
    %580 = arith.mulf %579, %560 : vector<16x128xf32>
    %581 = vector.extract_strided_slice %576 {offsets = [0, 0], sizes = [16, 128], strides = [1, 1]} : vector<16x384xf32> to vector<16x128xf32>
    %582 = arith.mulf %581, %578 : vector<16x128xf32>
    %583 = arith.addf %580, %582 : vector<16x128xf32>
    %584 = vector.extract_strided_slice %576 {offsets = [0, 256], sizes = [16, 128], strides = [1, 1]} : vector<16x384xf32> to vector<16x128xf32>
    %585 = math.tanh %583 : vector<16x128xf32>
    %586 = arith.mulf %584, %585 : vector<16x128xf32>
    %c4_i32_178 = arith.constant 4 : i32
    %c16_i32_179 = arith.constant 16 : i32
    %587 = arith.muli %c4_i32_178, %c16_i32_179 : i32
    %588 = tpu.assume_multiple %587, 16 : i32
    %589 = arith.index_cast %588 : i32 to index
    %c0_180 = arith.constant 0 : index
    %590 = vector.load %arg15[%589, %c0_180] : memref<128x512xf32, #tpu.memory_space<vmem>>, vector<16x512xf32>
    %591 = arith.truncf %586 : vector<16x128xf32> to vector<16x128xbf16>
    %cst_181 = arith.constant dense<0.000000e+00> : vector<16x512xf32>
    %592 = tpu.matmul %591, %485, %cst_181 {dimension_numbers = #tpu.dot_dimension_numbers<[1], [0], [0], [1], [0, 0, 1, 1], [], []>} : vector<16x128xbf16>, vector<128x512xbf16>, vector<16x512xf32> -> vector<16x512xf32>
    %593 = arith.addf %590, %592 : vector<16x512xf32>
    %594 = vector.extract_strided_slice %593 {offsets = [0, 0], sizes = [16, 384], strides = [1, 1]} : vector<16x512xf32> to vector<16x384xf32>
    %595 = arith.negf %594 : vector<16x384xf32>
    %596 = math.exp %595 : vector<16x384xf32>
    %cst_182 = arith.constant 1.000000e+00 : f32
    %597 = vector.broadcast %cst_182 : f32 to vector<16x384xf32>
    %598 = arith.addf %597, %596 : vector<16x384xf32>
    %599 = arith.divf %597, %598 : vector<16x384xf32>
    %600 = vector.extract_strided_slice %593 {offsets = [0, 384], sizes = [16, 128], strides = [1, 1]} : vector<16x512xf32> to vector<16x128xf32>
    %601 = math.tanh %600 : vector<16x128xf32>
    %602 = vector.extract_strided_slice %599 {offsets = [0, 128], sizes = [16, 128], strides = [1, 1]} : vector<16x384xf32> to vector<16x128xf32>
    %603 = arith.mulf %602, %583 : vector<16x128xf32>
    %604 = vector.extract_strided_slice %599 {offsets = [0, 0], sizes = [16, 128], strides = [1, 1]} : vector<16x384xf32> to vector<16x128xf32>
    %605 = arith.mulf %604, %601 : vector<16x128xf32>
    %606 = arith.addf %603, %605 : vector<16x128xf32>
    %607 = vector.extract_strided_slice %599 {offsets = [0, 256], sizes = [16, 128], strides = [1, 1]} : vector<16x384xf32> to vector<16x128xf32>
    %608 = math.tanh %606 : vector<16x128xf32>
    %609 = arith.mulf %607, %608 : vector<16x128xf32>
    %c5_i32_183 = arith.constant 5 : i32
    %c16_i32_184 = arith.constant 16 : i32
    %610 = arith.muli %c5_i32_183, %c16_i32_184 : i32
    %611 = tpu.assume_multiple %610, 16 : i32
    %612 = arith.index_cast %611 : i32 to index
    %c0_185 = arith.constant 0 : index
    %613 = vector.load %arg15[%612, %c0_185] : memref<128x512xf32, #tpu.memory_space<vmem>>, vector<16x512xf32>
    %614 = arith.truncf %609 : vector<16x128xf32> to vector<16x128xbf16>
    %cst_186 = arith.constant dense<0.000000e+00> : vector<16x512xf32>
    %615 = tpu.matmul %614, %485, %cst_186 {dimension_numbers = #tpu.dot_dimension_numbers<[1], [0], [0], [1], [0, 0, 1, 1], [], []>} : vector<16x128xbf16>, vector<128x512xbf16>, vector<16x512xf32> -> vector<16x512xf32>
    %616 = arith.addf %613, %615 : vector<16x512xf32>
    %617 = vector.extract_strided_slice %616 {offsets = [0, 0], sizes = [16, 384], strides = [1, 1]} : vector<16x512xf32> to vector<16x384xf32>
    %618 = arith.negf %617 : vector<16x384xf32>
    %619 = math.exp %618 : vector<16x384xf32>
    %cst_187 = arith.constant 1.000000e+00 : f32
    %620 = vector.broadcast %cst_187 : f32 to vector<16x384xf32>
    %621 = arith.addf %620, %619 : vector<16x384xf32>
    %622 = arith.divf %620, %621 : vector<16x384xf32>
    %623 = vector.extract_strided_slice %616 {offsets = [0, 384], sizes = [16, 128], strides = [1, 1]} : vector<16x512xf32> to vector<16x128xf32>
    %624 = math.tanh %623 : vector<16x128xf32>
    %625 = vector.extract_strided_slice %622 {offsets = [0, 128], sizes = [16, 128], strides = [1, 1]} : vector<16x384xf32> to vector<16x128xf32>
    %626 = arith.mulf %625, %606 : vector<16x128xf32>
    %627 = vector.extract_strided_slice %622 {offsets = [0, 0], sizes = [16, 128], strides = [1, 1]} : vector<16x384xf32> to vector<16x128xf32>
    %628 = arith.mulf %627, %624 : vector<16x128xf32>
    %629 = arith.addf %626, %628 : vector<16x128xf32>
    %630 = vector.extract_strided_slice %622 {offsets = [0, 256], sizes = [16, 128], strides = [1, 1]} : vector<16x384xf32> to vector<16x128xf32>
    %631 = math.tanh %629 : vector<16x128xf32>
    %632 = arith.mulf %630, %631 : vector<16x128xf32>
    %c6_i32_188 = arith.constant 6 : i32
    %c16_i32_189 = arith.constant 16 : i32
    %633 = arith.muli %c6_i32_188, %c16_i32_189 : i32
    %634 = tpu.assume_multiple %633, 16 : i32
    %635 = arith.index_cast %634 : i32 to index
    %c0_190 = arith.constant 0 : index
    %636 = vector.load %arg15[%635, %c0_190] : memref<128x512xf32, #tpu.memory_space<vmem>>, vector<16x512xf32>
    %637 = arith.truncf %632 : vector<16x128xf32> to vector<16x128xbf16>
    %cst_191 = arith.constant dense<0.000000e+00> : vector<16x512xf32>
    %638 = tpu.matmul %637, %485, %cst_191 {dimension_numbers = #tpu.dot_dimension_numbers<[1], [0], [0], [1], [0, 0, 1, 1], [], []>} : vector<16x128xbf16>, vector<128x512xbf16>, vector<16x512xf32> -> vector<16x512xf32>
    %639 = arith.addf %636, %638 : vector<16x512xf32>
    %640 = vector.extract_strided_slice %639 {offsets = [0, 0], sizes = [16, 384], strides = [1, 1]} : vector<16x512xf32> to vector<16x384xf32>
    %641 = arith.negf %640 : vector<16x384xf32>
    %642 = math.exp %641 : vector<16x384xf32>
    %cst_192 = arith.constant 1.000000e+00 : f32
    %643 = vector.broadcast %cst_192 : f32 to vector<16x384xf32>
    %644 = arith.addf %643, %642 : vector<16x384xf32>
    %645 = arith.divf %643, %644 : vector<16x384xf32>
    %646 = vector.extract_strided_slice %639 {offsets = [0, 384], sizes = [16, 128], strides = [1, 1]} : vector<16x512xf32> to vector<16x128xf32>
    %647 = math.tanh %646 : vector<16x128xf32>
    %648 = vector.extract_strided_slice %645 {offsets = [0, 128], sizes = [16, 128], strides = [1, 1]} : vector<16x384xf32> to vector<16x128xf32>
    %649 = arith.mulf %648, %629 : vector<16x128xf32>
    %650 = vector.extract_strided_slice %645 {offsets = [0, 0], sizes = [16, 128], strides = [1, 1]} : vector<16x384xf32> to vector<16x128xf32>
    %651 = arith.mulf %650, %647 : vector<16x128xf32>
    %652 = arith.addf %649, %651 : vector<16x128xf32>
    %653 = vector.extract_strided_slice %645 {offsets = [0, 256], sizes = [16, 128], strides = [1, 1]} : vector<16x384xf32> to vector<16x128xf32>
    %654 = math.tanh %652 : vector<16x128xf32>
    %655 = arith.mulf %653, %654 : vector<16x128xf32>
    %c7_i32_193 = arith.constant 7 : i32
    %c16_i32_194 = arith.constant 16 : i32
    %656 = arith.muli %c7_i32_193, %c16_i32_194 : i32
    %657 = tpu.assume_multiple %656, 16 : i32
    %658 = arith.index_cast %657 : i32 to index
    %c0_195 = arith.constant 0 : index
    %659 = vector.load %arg15[%658, %c0_195] : memref<128x512xf32, #tpu.memory_space<vmem>>, vector<16x512xf32>
    %660 = arith.truncf %655 : vector<16x128xf32> to vector<16x128xbf16>
    %cst_196 = arith.constant dense<0.000000e+00> : vector<16x512xf32>
    %661 = tpu.matmul %660, %485, %cst_196 {dimension_numbers = #tpu.dot_dimension_numbers<[1], [0], [0], [1], [0, 0, 1, 1], [], []>} : vector<16x128xbf16>, vector<128x512xbf16>, vector<16x512xf32> -> vector<16x512xf32>
    %662 = arith.addf %659, %661 : vector<16x512xf32>
    %663 = vector.extract_strided_slice %662 {offsets = [0, 0], sizes = [16, 384], strides = [1, 1]} : vector<16x512xf32> to vector<16x384xf32>
    %664 = arith.negf %663 : vector<16x384xf32>
    %665 = math.exp %664 : vector<16x384xf32>
    %cst_197 = arith.constant 1.000000e+00 : f32
    %666 = vector.broadcast %cst_197 : f32 to vector<16x384xf32>
    %667 = arith.addf %666, %665 : vector<16x384xf32>
    %668 = arith.divf %666, %667 : vector<16x384xf32>
    %669 = vector.extract_strided_slice %662 {offsets = [0, 384], sizes = [16, 128], strides = [1, 1]} : vector<16x512xf32> to vector<16x128xf32>
    %670 = math.tanh %669 : vector<16x128xf32>
    %671 = vector.extract_strided_slice %668 {offsets = [0, 128], sizes = [16, 128], strides = [1, 1]} : vector<16x384xf32> to vector<16x128xf32>
    %672 = arith.mulf %671, %652 : vector<16x128xf32>
    %673 = vector.extract_strided_slice %668 {offsets = [0, 0], sizes = [16, 128], strides = [1, 1]} : vector<16x384xf32> to vector<16x128xf32>
    %674 = arith.mulf %673, %670 : vector<16x128xf32>
    %675 = arith.addf %672, %674 : vector<16x128xf32>
    %676 = vector.extract_strided_slice %668 {offsets = [0, 256], sizes = [16, 128], strides = [1, 1]} : vector<16x384xf32> to vector<16x128xf32>
    %677 = math.tanh %675 : vector<16x128xf32>
    %678 = arith.mulf %676, %677 : vector<16x128xf32>
    %c8_i32_198 = arith.constant 8 : i32
    %679 = arith.truncf %678 : vector<16x128xf32> to vector<16x128xbf16>
    %c0_199 = arith.constant 0 : index
    %c0_200 = arith.constant 0 : index
    %680 = vector.load %arg11[%c0_199, %c0_200] : memref<128x128xbf16, #tpu.memory_space<vmem>>, vector<128x128xbf16>
    %cst_201 = arith.constant dense<0.000000e+00> : vector<16x128xf32>
    %681 = tpu.matmul %679, %680, %cst_201 {dimension_numbers = #tpu.dot_dimension_numbers<[1], [0], [0], [1], [0, 0, 1, 1], [], []>} : vector<16x128xbf16>, vector<128x128xbf16>, vector<16x128xf32> -> vector<16x128xf32>
    %c0_202 = arith.constant 0 : index
    %c0_203 = arith.constant 0 : index
    %682 = vector.load %arg12[%c0_202, %c0_203] : memref<1x128xf32, #tpu.memory_space<vmem>>, vector<1x128xf32>
    %683 = vector.broadcast %682 : vector<1x128xf32> to vector<16x128xf32>
    %684 = arith.addf %681, %683 : vector<16x128xf32>
    %c0_204 = arith.constant 0 : index
    %c0_205 = arith.constant 0 : index
    %685 = vector.load %arg13[%c0_204, %c0_205] : memref<16x128xf32, #tpu.memory_space<vmem>>, vector<16x128xf32>
    tpu.vector_store %arg13[%c0_204, %c0_205], %684 {strides = array<i32>} : memref<16x128xf32, #tpu.memory_space<vmem>>, vector<16x128xf32>,
    return
  }
  func.func @transform_0(%arg0: i32) -> (i32, i32, i32) {
    %c0_i32 = arith.constant 0 : i32
    %c0_i32_0 = arith.constant 0 : i32
    %c0_i32_1 = arith.constant 0 : i32
    return %arg0, %c0_i32, %c0_i32_0 : i32, i32, i32
  }
  func.func @transform_1(%arg0: i32) -> (i32, i32) {
    %c0_i32 = arith.constant 0 : i32
    %c0_i32_0 = arith.constant 0 : i32
    %c0_i32_1 = arith.constant 0 : i32
    return %c0_i32, %c0_i32_0 : i32, i32
  }
  func.func @transform_2(%arg0: i32) -> (i32, i32) {
    %c0_i32 = arith.constant 0 : i32
    %c0_i32_0 = arith.constant 0 : i32
    %c0_i32_1 = arith.constant 0 : i32
    return %c0_i32, %c0_i32_0 : i32, i32
  }
  func.func @transform_3(%arg0: i32) -> (i32, i32) {
    %c0_i32 = arith.constant 0 : i32
    %c0_i32_0 = arith.constant 0 : i32
    %c0_i32_1 = arith.constant 0 : i32
    return %c0_i32, %c0_i32_0 : i32, i32
  }
  func.func @transform_4(%arg0: i32) -> (i32, i32) {
    %c0_i32 = arith.constant 0 : i32
    %c0_i32_0 = arith.constant 0 : i32
    %c0_i32_1 = arith.constant 0 : i32
    return %c0_i32, %c0_i32_0 : i32, i32
  }
  func.func @transform_5(%arg0: i32) -> (i32, i32) {
    %c0_i32 = arith.constant 0 : i32
    %c0_i32_0 = arith.constant 0 : i32
    %c0_i32_1 = arith.constant 0 : i32
    return %c0_i32, %c0_i32_0 : i32, i32
  }
  func.func @transform_6(%arg0: i32) -> (i32, i32) {
    %c0_i32 = arith.constant 0 : i32
    %c0_i32_0 = arith.constant 0 : i32
    %c0_i32_1 = arith.constant 0 : i32
    return %c0_i32, %c0_i32_0 : i32, i32
  }
  func.func @transform_7(%arg0: i32) -> (i32, i32) {
    %c0_i32 = arith.constant 0 : i32
    %c0_i32_0 = arith.constant 0 : i32
    %c0_i32_1 = arith.constant 0 : i32
    return %c0_i32, %c0_i32_0 : i32, i32
  }
  func.func @transform_8(%arg0: i32) -> (i32, i32) {
    %c0_i32 = arith.constant 0 : i32
    %c0_i32_0 = arith.constant 0 : i32
    %c0_i32_1 = arith.constant 0 : i32
    return %c0_i32, %c0_i32_0 : i32, i32
  }
  func.func @transform_9(%arg0: i32) -> (i32, i32) {
    %c0_i32 = arith.constant 0 : i32
    %c0_i32_0 = arith.constant 0 : i32
    %c0_i32_1 = arith.constant 0 : i32
    return %c0_i32, %c0_i32_0 : i32, i32
  }
  func.func @transform_10(%arg0: i32) -> (i32, i32) {
    %c0_i32 = arith.constant 0 : i32
    %c0_i32_0 = arith.constant 0 : i32
    %c0_i32_1 = arith.constant 0 : i32
    return %c0_i32, %c0_i32_0 : i32, i32
  }
  func.func @transform_11(%arg0: i32) -> (i32, i32) {
    %c0_i32 = arith.constant 0 : i32
    %c0_i32_0 = arith.constant 0 : i32
    %c0_i32_1 = arith.constant 0 : i32
    return %c0_i32, %c0_i32_0 : i32, i32
  }
  func.func @transform_12(%arg0: i32) -> (i32, i32) {
    %c0_i32 = arith.constant 0 : i32
    %c0_i32_0 = arith.constant 0 : i32
    return %arg0, %c0_i32 : i32, i32
  }
}

</mosaic_0001>

<llo_original>
// kernel: lstm_model_forward.1
$region0: #{lstm_model_forward.1}
  #allocation0 [shape = 'u32[]', space=smem, size = 0x4, offset = 0x4, fixed_abs, tag = 'smem constant byte address 0x4 - core index']
  #allocation1 [shape = 'u32[144,128]{1,0:T(1,128)}', space=vmem, size = 0x12000, scoped, tag = 'internal scratch']
  #allocation2 [shape = 'bf16[128,128]{1,0:T(16,128)(2,1)}', space=vmem, size = 0x8000, scoped, tag = 'scratch operand']
  #allocation3 [shape = 'f32[128,512]{1,0:T(8,128)}', space=vmem, size = 0x40000, scoped, tag = 'scratch operand']
  %s0 = inlined_call_operand.vmem [shape: bf16[1,128,8], index: 0, kind: input, shape index: {}]
  %s1 = inlined_call_operand.vmem [shape: bf16[8,512], index: 1, kind: input, shape index: {}]
  %s2 = inlined_call_operand.vmem [shape: bf16[128,512], index: 2, kind: input, shape index: {}]
  %s3 = inlined_call_operand.vmem [shape: f32[1,512], index: 3, kind: input, shape index: {}]
  %s4 = inlined_call_operand.vmem [shape: bf16[128,512], index: 4, kind: input, shape index: {}]
  %s5 = inlined_call_operand.vmem [shape: bf16[128,512], index: 5, kind: input, shape index: {}]
  %s6 = inlined_call_operand.vmem [shape: f32[1,512], index: 6, kind: input, shape index: {}]
  %s7 = inlined_call_operand.vmem [shape: bf16[128,512], index: 7, kind: input, shape index: {}]
  %s8 = inlined_call_operand.vmem [shape: bf16[128,512], index: 8, kind: input, shape index: {}]
  %s9 = inlined_call_operand.vmem [shape: f32[1,512], index: 9, kind: input, shape index: {}]
  %s10 = inlined_call_operand.vmem [shape: bf16[128,128], index: 10, kind: input, shape index: {}]
  %s11 = inlined_call_operand.vmem [shape: f32[1,128], index: 11, kind: input, shape index: {}]
  %s12 = inlined_call_operand.vmem [shape: f32[16,128], index: 12, kind: output, shape index: {}]
  %s13 = sld [smem:[#allocation0]]
  $region58: #{lstm_model_forward.1} parent=0
    _
  %s15 = ssub.s32 1, %s13
  %s16 = scalar_select 0, %s15, %s13
  // Predicated region
  $region2: #{lstm_model_forward.1} parent=0 // pred_check
    _
  $region3: #{lstm_model_forward.1} parent=0 // pred_check_branch
    %18 = sbr.rel (0) target = $region5
  $region4: #{lstm_model_forward.1} parent=0 // pred_region
    _
  $region5: #{lstm_model_forward.1} parent=0 // pred_fallthru
    _
  // Predicated region
  $region6: #{lstm_model_forward.1} parent=0 // pred_check
    _
  $region7: #{lstm_model_forward.1} parent=0 // pred_check_branch
    %20 = sbr.rel (0) target = $region9
  $region8: #{lstm_model_forward.1} parent=0 // pred_region
    _
  $region9: #{lstm_model_forward.1} parent=0 // pred_fallthru
    _
  // Predicated region
  $region10: #{lstm_model_forward.1} parent=0 // pred_check
    _
  $region11: #{lstm_model_forward.1} parent=0 // pred_check_branch
    %22 = sbr.rel (0) target = $region13
  $region12: #{lstm_model_forward.1} parent=0 // pred_region
    _
  $region13: #{lstm_model_forward.1} parent=0 // pred_fallthru
    _
  // Predicated region
  $region14: #{lstm_model_forward.1} parent=0 // pred_check
    _
  $region15: #{lstm_model_forward.1} parent=0 // pred_check_branch
    %24 = sbr.rel (0) target = $region17
  $region16: #{lstm_model_forward.1} parent=0 // pred_region
    _
  $region17: #{lstm_model_forward.1} parent=0 // pred_fallthru
    _
  // Predicated region
  $region18: #{lstm_model_forward.1} parent=0 // pred_check
    _
  $region19: #{lstm_model_forward.1} parent=0 // pred_check_branch
    %26 = sbr.rel (0) target = $region21
  $region20: #{lstm_model_forward.1} parent=0 // pred_region
    _
  $region21: #{lstm_model_forward.1} parent=0 // pred_fallthru
    _
  // Predicated region
  $region22: #{lstm_model_forward.1} parent=0 // pred_check
    _
  $region23: #{lstm_model_forward.1} parent=0 // pred_check_branch
    %28 = sbr.rel (0) target = $region25
  $region24: #{lstm_model_forward.1} parent=0 // pred_region
    _
  $region25: #{lstm_model_forward.1} parent=0 // pred_fallthru
    _
  // Predicated region
  $region26: #{lstm_model_forward.1} parent=0 // pred_check
    _
  $region27: #{lstm_model_forward.1} parent=0 // pred_check_branch
    %30 = sbr.rel (0) target = $region29
  $region28: #{lstm_model_forward.1} parent=0 // pred_region
    _
  $region29: #{lstm_model_forward.1} parent=0 // pred_fallthru
    _
  // Predicated region
  $region30: #{lstm_model_forward.1} parent=0 // pred_check
    _
  $region31: #{lstm_model_forward.1} parent=0 // pred_check_branch
    %32 = sbr.rel (0) target = $region33
  $region32: #{lstm_model_forward.1} parent=0 // pred_region
    _
  $region33: #{lstm_model_forward.1} parent=0 // pred_fallthru
    _
  // Predicated region
  $region34: #{lstm_model_forward.1} parent=0 // pred_check
    _
  $region35: #{lstm_model_forward.1} parent=0 // pred_check_branch
    %34 = sbr.rel (0) target = $region37
  $region36: #{lstm_model_forward.1} parent=0 // pred_region
    _
  $region37: #{lstm_model_forward.1} parent=0 // pred_fallthru
    _
  // Predicated region
  $region38: #{lstm_model_forward.1} parent=0 // pred_check
    _
  $region39: #{lstm_model_forward.1} parent=0 // pred_check_branch
    %36 = sbr.rel (0) target = $region41
  $region40: #{lstm_model_forward.1} parent=0 // pred_region
    _
  $region41: #{lstm_model_forward.1} parent=0 // pred_fallthru
    _
  // Predicated region
  $region42: #{lstm_model_forward.1} parent=0 // pred_check
    _
  $region43: #{lstm_model_forward.1} parent=0 // pred_check_branch
    %38 = sbr.rel (0) target = $region45
  $region44: #{lstm_model_forward.1} parent=0 // pred_region
    _
  $region45: #{lstm_model_forward.1} parent=0 // pred_fallthru
    _
  // Predicated region
  $region46: #{lstm_model_forward.1} parent=0 // pred_check
    _
  $region47: #{lstm_model_forward.1} parent=0 // pred_check_branch
    %40 = sbr.rel (0) target = $region49
  $region48: #{lstm_model_forward.1} parent=0 // pred_region
    _
  $region49: #{lstm_model_forward.1} parent=0 // pred_fallthru
    _
  %v42 = vld [vmem:[%s2] sm:$0xff]
  %v43 = vld [vmem:[%s2 + $0x8] sm:$0xff]
  %v44 = vld [vmem:[%s2 + $0x10] sm:$0xff]
  %v45 = vld [vmem:[%s2 + $0x18] sm:$0xff]
  %v46 = vld [vmem:[%s2 + $0x20] sm:$0xff]
  %v47 = vld [vmem:[%s2 + $0x28] sm:$0xff]
  %v48 = vld [vmem:[%s2 + $0x30] sm:$0xff]
  %v49 = vld [vmem:[%s2 + $0x38] sm:$0xff]
  %v50 = vld [vmem:[%s2 + $0x40] sm:$0xff]
  %v51 = vld [vmem:[%s2 + $0x48] sm:$0xff]
  %v52 = vld [vmem:[%s2 + $0x50] sm:$0xff]
  %v53 = vld [vmem:[%s2 + $0x58] sm:$0xff]
  %v54 = vld [vmem:[%s2 + $0x60] sm:$0xff]
  %v55 = vld [vmem:[%s2 + $0x68] sm:$0xff]
  %v56 = vld [vmem:[%s2 + $0x70] sm:$0xff]
  %v57 = vld [vmem:[%s2 + $0x78] sm:$0xff]
  %v58 = vld [vmem:[%s2 + $0x80] sm:$0xff]
  %v59 = vld [vmem:[%s2 + $0x88] sm:$0xff]
  %v60 = vld [vmem:[%s2 + $0x90] sm:$0xff]
  %v61 = vld [vmem:[%s2 + $0x98] sm:$0xff]
  %v62 = vld [vmem:[%s2 + $0xa0] sm:$0xff]
  %v63 = vld [vmem:[%s2 + $0xa8] sm:$0xff]
  %v64 = vld [vmem:[%s2 + $0xb0] sm:$0xff]
  %v65 = vld [vmem:[%s2 + $0xb8] sm:$0xff]
  %v66 = vld [vmem:[%s2 + $0xc0] sm:$0xff]
  %v67 = vld [vmem:[%s2 + $0xc8] sm:$0xff]
  %v68 = vld [vmem:[%s2 + $0xd0] sm:$0xff]
  %v69 = vld [vmem:[%s2 + $0xd8] sm:$0xff]
  %v70 = vld [vmem:[%s2 + $0xe0] sm:$0xff]
  %v71 = vld [vmem:[%s2 + $0xe8] sm:$0xff]
  %v72 = vld [vmem:[%s2 + $0xf0] sm:$0xff]
  %v73 = vld [vmem:[%s2 + $0xf8] sm:$0xff]
  %v74 = vld [vmem:[%s3] sm:$0xf]
  %v75 = vld [vmem:[%s0] sm:$0xf]
  %v76 = vld [vmem:[%s0 + $0x4] sm:$0xf]
  %v77 = vld [vmem:[%s0 + $0x8] sm:$0xf]
  %v78 = vld [vmem:[%s0 + $0xc] sm:$0xf]
  %v79 = vld [vmem:[%s0 + $0x10] sm:$0xf]
  %v80 = vld [vmem:[%s0 + $0x14] sm:$0xf]
  %v81 = vld [vmem:[%s0 + $0x18] sm:$0xf]
  %v82 = vld [vmem:[%s0 + $0x1c] sm:$0xf]
  %v83 = vld [vmem:[%s0 + $0x20] sm:$0xf]
  %v84 = vld [vmem:[%s0 + $0x24] sm:$0xf]
  %v85 = vld [vmem:[%s0 + $0x28] sm:$0xf]
  %v86 = vld [vmem:[%s0 + $0x2c] sm:$0xf]
  %v87 = vld [vmem:[%s0 + $0x30] sm:$0xf]
  %v88 = vld [vmem:[%s0 + $0x34] sm:$0xf]
  %v89 = vld [vmem:[%s0 + $0x38] sm:$0xf]
  %v90 = vld [vmem:[%s0 + $0x3c] sm:$0xf]
  %v91 = vld [vmem:[%s1] sm:$0xff]
  %v92 = vld [vmem:[%s1 + $0x8] sm:$0xff]
  %v94 = vlaneseq
  %v95 = vshrl.u32 %v94, 7
  %v96 = vsub.s32 0, %v95
  %v97 = vrot.slane %v74, %v96
  %v98 = vlaneseq
  %v99 = vshrl.u32 %v98, 7
  %v100 = vsub.s32 1, %v99
  %v101 = vrot.slane %v74, %v100
  %v102 = vlaneseq
  %v103 = vshrl.u32 %v102, 7
  %v104 = vsub.s32 2, %v103
  %v105 = vrot.slane %v74, %v104
  %v106 = vlaneseq
  %v107 = vshrl.u32 %v106, 7
  %v108 = vsub.s32 3, %v107
  %v109 = vrot.slane %v74, %v108
  %v130 = vunpack.c.l.b16 %v75
  %v131 = vunpack.c.l.b16 %v76
  %v132 = vunpack.c.l.b16 %v77
  %v133 = vunpack.c.l.b16 %v78
  %v134 = vunpack.c.l.b16 %v79
  %v135 = vunpack.c.l.b16 %v80
  %v136 = vunpack.c.l.b16 %v81
  %v137 = vunpack.c.l.b16 %v82
  %v138 = vunpack.c.l.b16 %v83
  %v139 = vunpack.c.l.b16 %v84
  %v140 = vunpack.c.l.b16 %v85
  %v141 = vunpack.c.l.b16 %v86
  %v142 = vunpack.c.l.b16 %v87
  %v143 = vunpack.c.l.b16 %v88
  %v144 = vunpack.c.l.b16 %v89
  %v145 = vunpack.c.l.b16 %v90
  %v146 = vpack.c.b16 %v131, %v130
  %v147 = vpack.c.b16 %v133, %v132
  %v148 = vpack.c.b16 %v135, %v134
  %v149 = vpack.c.b16 %v137, %v136
  %v150 = vpack.c.b16 %v139, %v138
  %v151 = vpack.c.b16 %v141, %v140
  %v152 = vpack.c.b16 %v143, %v142
  %v153 = vpack.c.b16 %v145, %v144
  %v156 = vunpack.c.l.b16 %v91
  %v157 = vunpack.c.h.b16 %v91
  %v158 = vunpack.c.l.b16 %v92
  %v159 = vunpack.c.h.b16 %v92
  %v160 = vpack.c.b16 %v156, %v156
  %v161 = vpack.c.b16 %v157, %v157
  %v162 = vpack.c.b16 %v158, %v158
  %v163 = vpack.c.b16 %v159, %v159
  %vm164 = vcmask 64512
  %v166 = vsel %vm164, %v146, 0
  %v169 = vsel %vm164, %v147, 0
  %v172 = vsel %vm164, %v148, 0
  %v175 = vsel %vm164, %v149, 0
  %v178 = vsel %vm164, %v150, 0
  %v181 = vsel %vm164, %v151, 0
  %v184 = vsel %vm164, %v152, 0
  %v187 = vsel %vm164, %v153, 0
  %vm189 = vcmask 1043456
  %v191 = vsel %vm189, %v160, 0
  %v194 = vsel %vm189, %v161, 0
  %v197 = vsel %vm189, %v162, 0
  %v200 = vsel %vm189, %v163, 0
  %202 = vmatprep.subr.bf16.mxu0 %v194
  %203 = vmatpush1.bf16.msra.mxu0 %v191
  %204 = vmatprep.subr.bf16.mxu0 0
  %205 = vmatpush1.bf16.msra.mxu0 0
  %206 = vmatprep.subr.bf16.mxu0 0
  %207 = vmatpush1.bf16.msra.mxu0 0
  %208 = vmatprep.subr.bf16.mxu0 0
  %209 = vmatpush1.bf16.msra.mxu0 0
  %210 = vmatprep.subr.bf16.mxu0 0
  %211 = vmatpush1.bf16.msra.mxu0 0
  %212 = vmatprep.subr.bf16.mxu0 0
  %213 = vmatpush1.bf16.msra.mxu0 0
  %214 = vmatprep.subr.bf16.mxu0 0
  %215 = vmatpush1.bf16.msra.mxu0 0
  %216 = vmatprep.subr.bf16.mxu0 0
  %217 = vmatpush1.bf16.msra.mxu0 0
  %218 = vmatprep.subr.bf16.mxu0 0
  %219 = vmatpush1.bf16.msra.mxu0 0
  %220 = vmatprep.subr.bf16.mxu0 0
  %221 = vmatpush1.bf16.msra.mxu0 0
  %222 = vmatprep.subr.bf16.mxu0 0
  %223 = vmatpush1.bf16.msra.mxu0 0
  %224 = vmatprep.subr.bf16.mxu0 0
  %225 = vmatpush1.bf16.msra.mxu0 0
  %226 = vmatprep.subr.bf16.mxu0 0
  %227 = vmatpush1.bf16.msra.mxu0 0
  %228 = vmatprep.subr.bf16.mxu0 0
  %229 = vmatpush1.bf16.msra.mxu0 0
  %230 = vmatprep.subr.bf16.mxu0 0
  %231 = vmatpush1.bf16.msra.mxu0 0
  %232 = vmatprep.subr.bf16.mxu0 0
  %233 = vmatpush1.bf16.msra.mxu0 0
  %234 = vmatprep.mubr.bf16.mxu0 0
  %235 = vmatmul.mubr.bf16.gmra.mrb[0].mxu0 %v166
  %v236 = vpop.f32.mrb[0].mxu0
  %v237 = vadd.f32 %v97, %v236
  %v238 = vpop.f32.mrb[0].mxu0
  %v239 = vadd.f32 %v101, %v238
  %v240 = vpop.f32.mrb[0].mxu0
  %v241 = vadd.f32 %v97, %v240
  %v242 = vpop.f32.mrb[0].mxu0
  %v243 = vadd.f32 %v101, %v242
  %244 = vmatprep.mubr.bf16.mxu0 0
  %245 = vmatmul.mubr.bf16.gmra.mrb[0].mxu0 %v169
  %v246 = vpop.f32.mrb[0].mxu0
  %v247 = vadd.f32 %v97, %v246
  %v248 = vpop.f32.mrb[0].mxu0
  %v249 = vadd.f32 %v101, %v248
  %v250 = vpop.f32.mrb[0].mxu0
  %v251 = vadd.f32 %v97, %v250
  %v252 = vpop.f32.mrb[0].mxu0
  %v253 = vadd.f32 %v101, %v252
  %254 = vmatprep.mubr.bf16.mxu0 0
  %255 = vmatmul.mubr.bf16.gmra.mrb[0].mxu0 %v172
  %v256 = vpop.f32.mrb[0].mxu0
  %v257 = vadd.f32 %v97, %v256
  %v258 = vpop.f32.mrb[0].mxu0
  %v259 = vadd.f32 %v101, %v258
  %v260 = vpop.f32.mrb[0].mxu0
  %v261 = vadd.f32 %v97, %v260
  %v262 = vpop.f32.mrb[0].mxu0
  %v263 = vadd.f32 %v101, %v262
  %264 = vmatprep.mubr.bf16.mxu0 0
  %265 = vmatmul.mubr.bf16.gmra.mrb[0].mxu0 %v175
  %v266 = vpop.f32.mrb[0].mxu0
  %v267 = vadd.f32 %v97, %v266
  %v268 = vpop.f32.mrb[0].mxu0
  %v269 = vadd.f32 %v101, %v268
  %v270 = vpop.f32.mrb[0].mxu0
  %v271 = vadd.f32 %v97, %v270
  %v272 = vpop.f32.mrb[0].mxu0
  %v273 = vadd.f32 %v101, %v272
  %274 = vmatprep.mubr.bf16.mxu0 0
  %275 = vmatmul.mubr.bf16.gmra.mrb[0].mxu0 %v178
  %v276 = vpop.f32.mrb[0].mxu0
  %v277 = vadd.f32 %v97, %v276
  %v278 = vpop.f32.mrb[0].mxu0
  %v279 = vadd.f32 %v101, %v278
  %v280 = vpop.f32.mrb[0].mxu0
  %v281 = vadd.f32 %v97, %v280
  %v282 = vpop.f32.mrb[0].mxu0
  %v283 = vadd.f32 %v101, %v282
  %284 = vmatprep.mubr.bf16.mxu0 0
  %285 = vmatmul.mubr.bf16.gmra.mrb[0].mxu0 %v181
  %v286 = vpop.f32.mrb[0].mxu0
  %v287 = vadd.f32 %v97, %v286
  %v288 = vpop.f32.mrb[0].mxu0
  %v289 = vadd.f32 %v101, %v288
  %v290 = vpop.f32.mrb[0].mxu0
  %v291 = vadd.f32 %v97, %v290
  %v292 = vpop.f32.mrb[0].mxu0
  %v293 = vadd.f32 %v101, %v292
  %294 = vmatprep.mubr.bf16.mxu0 0
  %295 = vmatmul.mubr.bf16.gmra.mrb[0].mxu0 %v184
  %v296 = vpop.f32.mrb[0].mxu0
  %v297 = vadd.f32 %v97, %v296
  %v298 = vpop.f32.mrb[0].mxu0
  %v299 = vadd.f32 %v101, %v298
  %v300 = vpop.f32.mrb[0].mxu0
  %v301 = vadd.f32 %v97, %v300
  %v302 = vpop.f32.mrb[0].mxu0
  %v303 = vadd.f32 %v101, %v302
  %304 = vmatprep.mubr.bf16.mxu0 0
  %305 = vmatmul.mubr.bf16.gmra.mrb[0].mxu0 %v187
  %v306 = vpop.f32.mrb[0].mxu0
  %v307 = vadd.f32 %v97, %v306
  %v308 = vpop.f32.mrb[0].mxu0
  %v309 = vadd.f32 %v101, %v308
  %v310 = vpop.f32.mrb[0].mxu0
  %v311 = vadd.f32 %v97, %v310
  %v312 = vpop.f32.mrb[0].mxu0
  %v313 = vadd.f32 %v101, %v312
  %314 = vdwg.mxu0
  %315 = vmatprep.subr.bf16.mxu0 %v200
  %316 = vmatpush1.bf16.msra.mxu0 %v197
  %317 = vmatprep.subr.bf16.mxu0 0
  %318 = vmatpush1.bf16.msra.mxu0 0
  %319 = vmatprep.subr.bf16.mxu0 0
  %320 = vmatpush1.bf16.msra.mxu0 0
  %321 = vmatprep.subr.bf16.mxu0 0
  %322 = vmatpush1.bf16.msra.mxu0 0
  %323 = vmatprep.subr.bf16.mxu0 0
  %324 = vmatpush1.bf16.msra.mxu0 0
  %325 = vmatprep.subr.bf16.mxu0 0
  %326 = vmatpush1.bf16.msra.mxu0 0
  %327 = vmatprep.subr.bf16.mxu0 0
  %328 = vmatpush1.bf16.msra.mxu0 0
  %329 = vmatprep.subr.bf16.mxu0 0
  %330 = vmatpush1.bf16.msra.mxu0 0
  %331 = vmatprep.subr.bf16.mxu0 0
  %332 = vmatpush1.bf16.msra.mxu0 0
  %333 = vmatprep.subr.bf16.mxu0 0
  %334 = vmatpush1.bf16.msra.mxu0 0
  %335 = vmatprep.subr.bf16.mxu0 0
  %336 = vmatpush1.bf16.msra.mxu0 0
  %337 = vmatprep.subr.bf16.mxu0 0
  %338 = vmatpush1.bf16.msra.mxu0 0
  %339 = vmatprep.subr.bf16.mxu0 0
  %340 = vmatpush1.bf16.msra.mxu0 0
  %341 = vmatprep.subr.bf16.mxu0 0
  %342 = vmatpush1.bf16.msra.mxu0 0
  %343 = vmatprep.subr.bf16.mxu0 0
  %344 = vmatpush1.bf16.msra.mxu0 0
  %345 = vmatprep.subr.bf16.mxu0 0
  %346 = vmatpush1.bf16.msra.mxu0 0
  %347 = vmatprep.mubr.bf16.mxu0 0
  %348 = vmatmul.mubr.bf16.gmra.mrb[0].mxu0 %v166
  %v349 = vpop.f32.mrb[0].mxu0
  %v350 = vadd.f32 %v105, %v349
  %v351 = vpop.f32.mrb[0].mxu0
  %v352 = vadd.f32 %v109, %v351
  %v353 = vpop.f32.mrb[0].mxu0
  %v354 = vadd.f32 %v105, %v353
  %v355 = vpop.f32.mrb[0].mxu0
  %v356 = vadd.f32 %v109, %v355
  %357 = vmatprep.mubr.bf16.mxu0 0
  %358 = vmatmul.mubr.bf16.gmra.mrb[0].mxu0 %v169
  %v359 = vpop.f32.mrb[0].mxu0
  %v360 = vadd.f32 %v105, %v359
  %v361 = vpop.f32.mrb[0].mxu0
  %v362 = vadd.f32 %v109, %v361
  %v363 = vpop.f32.mrb[0].mxu0
  %v364 = vadd.f32 %v105, %v363
  %v365 = vpop.f32.mrb[0].mxu0
  %v366 = vadd.f32 %v109, %v365
  %367 = vmatprep.mubr.bf16.mxu0 0
  %368 = vmatmul.mubr.bf16.gmra.mrb[0].mxu0 %v172
  %v369 = vpop.f32.mrb[0].mxu0
  %v370 = vadd.f32 %v105, %v369
  %v371 = vpop.f32.mrb[0].mxu0
  %v372 = vadd.f32 %v109, %v371
  %v373 = vpop.f32.mrb[0].mxu0
  %v374 = vadd.f32 %v105, %v373
  %v375 = vpop.f32.mrb[0].mxu0
  %v376 = vadd.f32 %v109, %v375
  %377 = vmatprep.mubr.bf16.mxu0 0
  %378 = vmatmul.mubr.bf16.gmra.mrb[0].mxu0 %v175
  %v379 = vpop.f32.mrb[0].mxu0
  %v380 = vadd.f32 %v105, %v379
  %v381 = vpop.f32.mrb[0].mxu0
  %v382 = vadd.f32 %v109, %v381
  %v383 = vpop.f32.mrb[0].mxu0
  %v384 = vadd.f32 %v105, %v383
  %v385 = vpop.f32.mrb[0].mxu0
  %v386 = vadd.f32 %v109, %v385
  %387 = vmatprep.mubr.bf16.mxu0 0
  %388 = vmatmul.mubr.bf16.gmra.mrb[0].mxu0 %v178
  %v389 = vpop.f32.mrb[0].mxu0
  %v390 = vadd.f32 %v105, %v389
  %v391 = vpop.f32.mrb[0].mxu0
  %v392 = vadd.f32 %v109, %v391
  %v393 = vpop.f32.mrb[0].mxu0
  %v394 = vadd.f32 %v105, %v393
  %v395 = vpop.f32.mrb[0].mxu0
  %v396 = vadd.f32 %v109, %v395
  %397 = vmatprep.mubr.bf16.mxu0 0
  %398 = vmatmul.mubr.bf16.gmra.mrb[0].mxu0 %v181
  %v399 = vpop.f32.mrb[0].mxu0
  %v400 = vadd.f32 %v105, %v399
  %v401 = vpop.f32.mrb[0].mxu0
  %v402 = vadd.f32 %v109, %v401
  %v403 = vpop.f32.mrb[0].mxu0
  %v404 = vadd.f32 %v105, %v403
  %v405 = vpop.f32.mrb[0].mxu0
  %v406 = vadd.f32 %v109, %v405
  %407 = vmatprep.mubr.bf16.mxu0 0
  %408 = vmatmul.mubr.bf16.gmra.mrb[0].mxu0 %v184
  %v409 = vpop.f32.mrb[0].mxu0
  %v410 = vadd.f32 %v105, %v409
  %v411 = vpop.f32.mrb[0].mxu0
  %v412 = vadd.f32 %v109, %v411
  %v413 = vpop.f32.mrb[0].mxu0
  %v414 = vadd.f32 %v105, %v413
  %v415 = vpop.f32.mrb[0].mxu0
  %v416 = vadd.f32 %v109, %v415
  %417 = vmatprep.mubr.bf16.mxu0 0
  %418 = vmatmul.mubr.bf16.gmra.mrb[0].mxu0 %v187
  %v419 = vpop.f32.mrb[0].mxu0
  %v420 = vadd.f32 %v105, %v419
  %v421 = vpop.f32.mrb[0].mxu0
  %v422 = vadd.f32 %v109, %v421
  %v423 = vpop.f32.mrb[0].mxu0
  %v424 = vadd.f32 %v105, %v423
  %v425 = vpop.f32.mrb[0].mxu0
  %v426 = vadd.f32 %v109, %v425
  %427 = vdwg.mxu0
  %428 = vst [vmem:[#allocation3] sm:$0xff] %v237
  %429 = vst [vmem:[#allocation3 + $0x8] sm:$0xff] %v239
  %430 = vst [vmem:[#allocation3 + $0x10] sm:$0xff] %v350
  %431 = vst [vmem:[#allocation3 + $0x18] sm:$0xff] %v352
  %432 = vst [vmem:[#allocation3 + $0x20] sm:$0xff] %v241
  %433 = vst [vmem:[#allocation3 + $0x28] sm:$0xff] %v243
  %434 = vst [vmem:[#allocation3 + $0x30] sm:$0xff] %v354
  %435 = vst [vmem:[#allocation3 + $0x38] sm:$0xff] %v356
  %436 = vst [vmem:[#allocation3 + $0x40] sm:$0xff] %v247
  %437 = vst [vmem:[#allocation3 + $0x48] sm:$0xff] %v249
  %438 = vst [vmem:[#allocation3 + $0x50] sm:$0xff] %v360
  %439 = vst [vmem:[#allocation3 + $0x58] sm:$0xff] %v362
  %440 = vst [vmem:[#allocation3 + $0x60] sm:$0xff] %v251
  %441 = vst [vmem:[#allocation3 + $0x68] sm:$0xff] %v253
  %442 = vst [vmem:[#allocation3 + $0x70] sm:$0xff] %v364
  %443 = vst [vmem:[#allocation3 + $0x78] sm:$0xff] %v366
  %444 = vst [vmem:[#allocation3 + $0x80] sm:$0xff] %v257
  %445 = vst [vmem:[#allocation3 + $0x88] sm:$0xff] %v259
  %446 = vst [vmem:[#allocation3 + $0x90] sm:$0xff] %v370
  %447 = vst [vmem:[#allocation3 + $0x98] sm:$0xff] %v372
  %448 = vst [vmem:[#allocation3 + $0xa0] sm:$0xff] %v261
  %449 = vst [vmem:[#allocation3 + $0xa8] sm:$0xff] %v263
  %450 = vst [vmem:[#allocation3 + $0xb0] sm:$0xff] %v374
  %451 = vst [vmem:[#allocation3 + $0xb8] sm:$0xff] %v376
  %452 = vst [vmem:[#allocation3 + $0xc0] sm:$0xff] %v267
  %453 = vst [vmem:[#allocation3 + $0xc8] sm:$0xff] %v269
  %454 = vst [vmem:[#allocation3 + $0xd0] sm:$0xff] %v380
  %455 = vst [vmem:[#allocation3 + $0xd8] sm:$0xff] %v382
  %456 = vst [vmem:[#allocation3 + $0xe0] sm:$0xff] %v271
  %457 = vst [vmem:[#allocation3 + $0xe8] sm:$0xff] %v273
  %458 = vst [vmem:[#allocation3 + $0xf0] sm:$0xff] %v384
  %459 = vst [vmem:[#allocation3 + $0xf8] sm:$0xff] %v386
  %460 = vst [vmem:[#allocation3 + $0x100] sm:$0xff] %v277
  %461 = vst [vmem:[#allocation3 + $0x108] sm:$0xff] %v279
  %462 = vst [vmem:[#allocation3 + $0x110] sm:$0xff] %v390
  %463 = vst [vmem:[#allocation3 + $0x118] sm:$0xff] %v392
  %464 = vst [vmem:[#allocation3 + $0x120] sm:$0xff] %v281
  %465 = vst [vmem:[#allocation3 + $0x128] sm:$0xff] %v283
  %466 = vst [vmem:[#allocation3 + $0x130] sm:$0xff] %v394
  %467 = vst [vmem:[#allocation3 + $0x138] sm:$0xff] %v396
  %468 = vst [vmem:[#allocation3 + $0x140] sm:$0xff] %v287
  %469 = vst [vmem:[#allocation3 + $0x148] sm:$0xff] %v289
  %470 = vst [vmem:[#allocation3 + $0x150] sm:$0xff] %v400
  %471 = vst [vmem:[#allocation3 + $0x158] sm:$0xff] %v402
  %472 = vst [vmem:[#allocation3 + $0x160] sm:$0xff] %v291
  %473 = vst [vmem:[#allocation3 + $0x168] sm:$0xff] %v293
  %474 = vst [vmem:[#allocation3 + $0x170] sm:$0xff] %v404
  %475 = vst [vmem:[#allocation3 + $0x178] sm:$0xff] %v406
  %476 = vst [vmem:[#allocation3 + $0x180] sm:$0xff] %v297
  %477 = vst [vmem:[#allocation3 + $0x188] sm:$0xff] %v299
  %478 = vst [vmem:[#allocation3 + $0x190] sm:$0xff] %v410
  %479 = vst [vmem:[#allocation3 + $0x198] sm:$0xff] %v412
  %480 = vst [vmem:[#allocation3 + $0x1a0] sm:$0xff] %v301
  %481 = vst [vmem:[#allocation3 + $0x1a8] sm:$0xff] %v303
  %482 = vst [vmem:[#allocation3 + $0x1b0] sm:$0xff] %v414
  %483 = vst [vmem:[#allocation3 + $0x1b8] sm:$0xff] %v416
  %484 = vst [vmem:[#allocation3 + $0x1c0] sm:$0xff] %v307
  %485 = vst [vmem:[#allocation3 + $0x1c8] sm:$0xff] %v309
  %486 = vst [vmem:[#allocation3 + $0x1d0] sm:$0xff] %v420
  %487 = vst [vmem:[#allocation3 + $0x1d8] sm:$0xff] %v422
  %488 = vst [vmem:[#allocation3 + $0x1e0] sm:$0xff] %v311
  %489 = vst [vmem:[#allocation3 + $0x1e8] sm:$0xff] %v313
  %490 = vst [vmem:[#allocation3 + $0x1f0] sm:$0xff] %v424
  %491 = vst [vmem:[#allocation3 + $0x1f8] sm:$0xff] %v426
  %s492 = smul.u32 0, 4
  %s493 = smul.addr %s492, 8
  %s494 = scalar_lea.vmem [#allocation3], %s493
  %v495 = vld [vmem:[%s494] sm:$0xff]
  %v496 = vld [vmem:[%s494 + $0x8] sm:$0xff]
  %v497 = vld [vmem:[%s494 + $0x10] sm:$0xff]
  %v498 = vld [vmem:[%s494 + $0x18] sm:$0xff]
  %v499 = vld [vmem:[%s494 + $0x20] sm:$0xff]
  %v500 = vld [vmem:[%s494 + $0x28] sm:$0xff]
  %v501 = vld [vmem:[%s494 + $0x30] sm:$0xff]
  %v502 = vld [vmem:[%s494 + $0x38] sm:$0xff]
  %v535 = vunpack.c.l.b16 %v42
  %v536 = vunpack.c.h.b16 %v42
  %v537 = vunpack.c.l.b16 %v43
  %v538 = vunpack.c.h.b16 %v43
  %v539 = vunpack.c.l.b16 %v44
  %v540 = vunpack.c.h.b16 %v44
  %v541 = vunpack.c.l.b16 %v45
  %v542 = vunpack.c.h.b16 %v45
  %v543 = vunpack.c.l.b16 %v46
  %v544 = vunpack.c.h.b16 %v46
  %v545 = vunpack.c.l.b16 %v47
  %v546 = vunpack.c.h.b16 %v47
  %v547 = vunpack.c.l.b16 %v48
  %v548 = vunpack.c.h.b16 %v48
  %v549 = vunpack.c.l.b16 %v49
  %v550 = vunpack.c.h.b16 %v49
  %v551 = vunpack.c.l.b16 %v50
  %v552 = vunpack.c.h.b16 %v50
  %v553 = vunpack.c.l.b16 %v51
  %v554 = vunpack.c.h.b16 %v51
  %v555 = vunpack.c.l.b16 %v52
  %v556 = vunpack.c.h.b16 %v52
  %v557 = vunpack.c.l.b16 %v53
  %v558 = vunpack.c.h.b16 %v53
  %v559 = vunpack.c.l.b16 %v54
  %v560 = vunpack.c.h.b16 %v54
  %v561 = vunpack.c.l.b16 %v55
  %v562 = vunpack.c.h.b16 %v55
  %v563 = vunpack.c.l.b16 %v56
  %v564 = vunpack.c.h.b16 %v56
  %v565 = vunpack.c.l.b16 %v57
  %v566 = vunpack.c.h.b16 %v57
  %v567 = vunpack.c.l.b16 %v58
  %v568 = vunpack.c.h.b16 %v58
  %v569 = vunpack.c.l.b16 %v59
  %v570 = vunpack.c.h.b16 %v59
  %v571 = vunpack.c.l.b16 %v60
  %v572 = vunpack.c.h.b16 %v60
  %v573 = vunpack.c.l.b16 %v61
  %v574 = vunpack.c.h.b16 %v61
  %v575 = vunpack.c.l.b16 %v62
  %v576 = vunpack.c.h.b16 %v62
  %v577 = vunpack.c.l.b16 %v63
  %v578 = vunpack.c.h.b16 %v63
  %v579 = vunpack.c.l.b16 %v64
  %v580 = vunpack.c.h.b16 %v64
  %v581 = vunpack.c.l.b16 %v65
  %v582 = vunpack.c.h.b16 %v65
  %v583 = vunpack.c.l.b16 %v66
  %v584 = vunpack.c.h.b16 %v66
  %v585 = vunpack.c.l.b16 %v67
  %v586 = vunpack.c.h.b16 %v67
  %v587 = vunpack.c.l.b16 %v68
  %v588 = vunpack.c.h.b16 %v68
  %v589 = vunpack.c.l.b16 %v69
  %v590 = vunpack.c.h.b16 %v69
  %v591 = vunpack.c.l.b16 %v70
  %v592 = vunpack.c.h.b16 %v70
  %v593 = vunpack.c.l.b16 %v71
  %v594 = vunpack.c.h.b16 %v71
  %v595 = vunpack.c.l.b16 %v72
  %v596 = vunpack.c.h.b16 %v72
  %v597 = vunpack.c.l.b16 %v73
  %v598 = vunpack.c.h.b16 %v73
  %v599 = vpack.c.b16 %v539, %v535
  %v600 = vpack.c.b16 %v540, %v536
  %v601 = vpack.c.b16 %v541, %v537
  %v602 = vpack.c.b16 %v542, %v538
  %v603 = vpack.c.b16 %v547, %v543
  %v604 = vpack.c.b16 %v548, %v544
  %v605 = vpack.c.b16 %v549, %v545
  %v606 = vpack.c.b16 %v550, %v546
  %v607 = vpack.c.b16 %v555, %v551
  %v608 = vpack.c.b16 %v556, %v552
  %v609 = vpack.c.b16 %v557, %v553
  %v610 = vpack.c.b16 %v558, %v554
  %v611 = vpack.c.b16 %v563, %v559
  %v612 = vpack.c.b16 %v564, %v560
  %v613 = vpack.c.b16 %v565, %v561
  %v614 = vpack.c.b16 %v566, %v562
  %v615 = vpack.c.b16 %v571, %v567
  %v616 = vpack.c.b16 %v572, %v568
  %v617 = vpack.c.b16 %v573, %v569
  %v618 = vpack.c.b16 %v574, %v570
  %v619 = vpack.c.b16 %v579, %v575
  %v620 = vpack.c.b16 %v580, %v576
  %v621 = vpack.c.b16 %v581, %v577
  %v622 = vpack.c.b16 %v582, %v578
  %v623 = vpack.c.b16 %v587, %v583
  %v624 = vpack.c.b16 %v588, %v584
  %v625 = vpack.c.b16 %v589, %v585
  %v626 = vpack.c.b16 %v590, %v586
  %v627 = vpack.c.b16 %v595, %v591
  %v628 = vpack.c.b16 %v596, %v592
  %v629 = vpack.c.b16 %v597, %v593
  %v630 = vpack.c.b16 %v598, %v594
  %663 = vmatprep.subr.bf16.mxu0 %v600
  %664 = vmatpush1.bf16.msra.mxu0 %v599
  %665 = vmatprep.subr.bf16.mxu0 %v604
  %666 = vmatpush1.bf16.msra.mxu0 %v603
  %667 = vmatprep.subr.bf16.mxu0 %v608
  %668 = vmatpush1.bf16.msra.mxu0 %v607
  %669 = vmatprep.subr.bf16.mxu0 %v612
  %670 = vmatpush1.bf16.msra.mxu0 %v611
  %671 = vmatprep.subr.bf16.mxu0 %v616
  %672 = vmatpush1.bf16.msra.mxu0 %v615
  %673 = vmatprep.subr.bf16.mxu0 %v620
  %674 = vmatpush1.bf16.msra.mxu0 %v619
  %675 = vmatprep.subr.bf16.mxu0 %v624
  %676 = vmatpush1.bf16.msra.mxu0 %v623
  %677 = vmatprep.subr.bf16.mxu0 %v628
  %678 = vmatpush1.bf16.msra.mxu0 %v627
  %679 = vmatprep.subr.bf16.mxu0 0
  %680 = vmatpush1.bf16.msra.mxu0 0
  %681 = vmatprep.subr.bf16.mxu0 0
  %682 = vmatpush1.bf16.msra.mxu0 0
  %683 = vmatprep.subr.bf16.mxu0 0
  %684 = vmatpush1.bf16.msra.mxu0 0
  %685 = vmatprep.subr.bf16.mxu0 0
  %686 = vmatpush1.bf16.msra.mxu0 0
  %687 = vmatprep.subr.bf16.mxu0 0
  %688 = vmatpush1.bf16.msra.mxu0 0
  %689 = vmatprep.subr.bf16.mxu0 0
  %690 = vmatpush1.bf16.msra.mxu0 0
  %691 = vmatprep.subr.bf16.mxu0 0
  %692 = vmatpush1.bf16.msra.mxu0 0
  %693 = vmatprep.subr.bf16.mxu0 0
  %694 = vmatpush1.bf16.msra.mxu0 0
  %695 = vmatprep.mubr.bf16.mxu0 0
  %696 = vmatmul.mubr.bf16.gmra.mrb[0].mxu0 0
  %v697 = vpop.f32.mrb[0].mxu0
  %v698 = vadd.f32 0.0, %v697
  %v699 = vpop.f32.mrb[0].mxu0
  %v700 = vadd.f32 0.0, %v699
  %v701 = vpop.f32.mrb[0].mxu0
  %v702 = vadd.f32 0.0, %v701
  %v703 = vpop.f32.mrb[0].mxu0
  %v704 = vadd.f32 0.0, %v703
  %705 = vdwg.mxu0
  %706 = vmatprep.subr.bf16.mxu0 %v602
  %707 = vmatpush1.bf16.msra.mxu0 %v601
  %708 = vmatprep.subr.bf16.mxu0 %v606
  %709 = vmatpush1.bf16.msra.mxu0 %v605
  %710 = vmatprep.subr.bf16.mxu0 %v610
  %711 = vmatpush1.bf16.msra.mxu0 %v609
  %712 = vmatprep.subr.bf16.mxu0 %v614
  %713 = vmatpush1.bf16.msra.mxu0 %v613
  %714 = vmatprep.subr.bf16.mxu0 %v618
  %715 = vmatpush1.bf16.msra.mxu0 %v617
  %716 = vmatprep.subr.bf16.mxu0 %v622
  %717 = vmatpush1.bf16.msra.mxu0 %v621
  %718 = vmatprep.subr.bf16.mxu0 %v626
  %719 = vmatpush1.bf16.msra.mxu0 %v625
  %720 = vmatprep.subr.bf16.mxu0 %v630
  %721 = vmatpush1.bf16.msra.mxu0 %v629
  %722 = vmatprep.subr.bf16.mxu0 0
  %723 = vmatpush1.bf16.msra.mxu0 0
  %724 = vmatprep.subr.bf16.mxu0 0
  %725 = vmatpush1.bf16.msra.mxu0 0
  %726 = vmatprep.subr.bf16.mxu0 0
  %727 = vmatpush1.bf16.msra.mxu0 0
  %728 = vmatprep.subr.bf16.mxu0 0
  %729 = vmatpush1.bf16.msra.mxu0 0
  %730 = vmatprep.subr.bf16.mxu0 0
  %731 = vmatpush1.bf16.msra.mxu0 0
  %732 = vmatprep.subr.bf16.mxu0 0
  %733 = vmatpush1.bf16.msra.mxu0 0
  %734 = vmatprep.subr.bf16.mxu0 0
  %735 = vmatpush1.bf16.msra.mxu0 0
  %736 = vmatprep.subr.bf16.mxu0 0
  %737 = vmatpush1.bf16.msra.mxu0 0
  %738 = vmatprep.mubr.bf16.mxu0 0
  %739 = vmatmul.mubr.bf16.gmra.mrb[0].mxu0 0
  %v740 = vpop.f32.mrb[0].mxu0
  %v741 = vadd.f32 0.0, %v740
  %v742 = vpop.f32.mrb[0].mxu0
  %v743 = vadd.f32 0.0, %v742
  %v744 = vpop.f32.mrb[0].mxu0
  %v745 = vadd.f32 0.0, %v744
  %v746 = vpop.f32.mrb[0].mxu0
  %v747 = vadd.f32 0.0, %v746
  %748 = vdwg.mxu0
  %v749 = vadd.f32 %v495, %v698
  %v750 = vadd.f32 %v496, %v700
  %v751 = vadd.f32 %v497, %v741
  %v752 = vadd.f32 %v498, %v743
  %v753 = vadd.f32 %v499, %v702
  %v754 = vadd.f32 %v500, %v704
  %v755 = vadd.f32 %v501, %v745
  %v756 = vadd.f32 %v502, %v747
  %v757 = vxor.u32 %v749, 2147483648
  %v758 = vxor.u32 %v750, 2147483648
  %v759 = vxor.u32 %v751, 2147483648
  %v760 = vxor.u32 %v753, 2147483648
  %v761 = vxor.u32 %v754, 2147483648
  %v762 = vxor.u32 %v755, 2147483648
  %v763 = vmul.f32 %v757, 1.442695
  %v764 = vpow.pop %v763
  %v765 = vmul.f32 %v758, 1.442695
  %v766 = vpow.pop %v765
  %v767 = vmul.f32 %v759, 1.442695
  %v768 = vpow.pop %v767
  %v769 = vmul.f32 %v760, 1.442695
  %v770 = vpow.pop %v769
  %v771 = vmul.f32 %v761, 1.442695
  %v772 = vpow.pop %v771
  %v773 = vmul.f32 %v762, 1.442695
  %v774 = vpow.pop %v773
  %v775 = vadd.f32 %v764, 1.0
  %v776 = vadd.f32 %v766, 1.0
  %v777 = vadd.f32 %v768, 1.0
  %v778 = vadd.f32 %v770, 1.0
  %v779 = vadd.f32 %v772, 1.0
  %v780 = vadd.f32 %v774, 1.0
  %v781 = vrcp.pop %v775
  %v782 = vmul.f32 1.0, %v781
  %v783 = vrcp.pop %v776
  %v784 = vmul.f32 1.0, %v783
  %v785 = vrcp.pop %v777
  %v786 = vmul.f32 1.0, %v785
  %v787 = vrcp.pop %v778
  %v788 = vmul.f32 1.0, %v787
  %v789 = vrcp.pop %v779
  %v790 = vmul.f32 1.0, %v789
  %v791 = vrcp.pop %v780
  %v792 = vmul.f32 1.0, %v791
  %v793 = vtanh.pop %v752
  %v794 = vtanh.pop %v756
  %v795 = vmul.f32 %v784, 0.0
  %v796 = vmul.f32 %v790, 0.0
  %v797 = vmul.f32 %v782, %v793
  %v798 = vmul.f32 %v788, %v794
  %v799 = vadd.f32 %v795, %v797
  %v800 = vadd.f32 %v796, %v798
  %v801 = vtanh.pop %v799
  %v802 = vtanh.pop %v800
  %v803 = vmul.f32 %v786, %v801
  %v804 = vmul.f32 %v792, %v802
  %v805 = vpack.c.bf16 %v804, %v803
  %806 = vst [vmem:[#allocation2] sm:$0xff] %v805
  %s807 = smul.u32 2, 4
  %s808 = smul.addr %s807, 8
  %s809 = scalar_lea.vmem [#allocation3], %s808
  %v810 = vld [vmem:[%s809] sm:$0xff]
  %v811 = vld [vmem:[%s809 + $0x8] sm:$0xff]
  %v812 = vld [vmem:[%s809 + $0x10] sm:$0xff]
  %v813 = vld [vmem:[%s809 + $0x18] sm:$0xff]
  %v814 = vld [vmem:[%s809 + $0x20] sm:$0xff]
  %v815 = vld [vmem:[%s809 + $0x28] sm:$0xff]
  %v816 = vld [vmem:[%s809 + $0x30] sm:$0xff]
  %v817 = vld [vmem:[%s809 + $0x38] sm:$0xff]
  %818 = vmatprep.subr.bf16.mxu0 %v600
  %819 = vmatpush1.bf16.msra.mxu0 %v599
  %820 = vmatprep.subr.bf16.mxu0 %v604
  %821 = vmatpush1.bf16.msra.mxu0 %v603
  %822 = vmatprep.subr.bf16.mxu0 %v608
  %823 = vmatpush1.bf16.msra.mxu0 %v607
  %824 = vmatprep.subr.bf16.mxu0 %v612
  %825 = vmatpush1.bf16.msra.mxu0 %v611
  %826 = vmatprep.subr.bf16.mxu0 %v616
  %827 = vmatpush1.bf16.msra.mxu0 %v615
  %828 = vmatprep.subr.bf16.mxu0 %v620
  %829 = vmatpush1.bf16.msra.mxu0 %v619
  %830 = vmatprep.subr.bf16.mxu0 %v624
  %831 = vmatpush1.bf16.msra.mxu0 %v623
  %832 = vmatprep.subr.bf16.mxu0 %v628
  %833 = vmatpush1.bf16.msra.mxu0 %v627
  %834 = vmatprep.subr.bf16.mxu0 0
  %835 = vmatpush1.bf16.msra.mxu0 0
  %836 = vmatprep.subr.bf16.mxu0 0
  %837 = vmatpush1.bf16.msra.mxu0 0
  %838 = vmatprep.subr.bf16.mxu0 0
  %839 = vmatpush1.bf16.msra.mxu0 0
  %840 = vmatprep.subr.bf16.mxu0 0
  %841 = vmatpush1.bf16.msra.mxu0 0
  %842 = vmatprep.subr.bf16.mxu0 0
  %843 = vmatpush1.bf16.msra.mxu0 0
  %844 = vmatprep.subr.bf16.mxu0 0
  %845 = vmatpush1.bf16.msra.mxu0 0
  %846 = vmatprep.subr.bf16.mxu0 0
  %847 = vmatpush1.bf16.msra.mxu0 0
  %848 = vmatprep.subr.bf16.mxu0 0
  %849 = vmatpush1.bf16.msra.mxu0 0
  %850 = vmatprep.mubr.bf16.mxu0 0
  %851 = vmatmul.mubr.bf16.gmra.mrb[0].mxu0 %v805
  %v852 = vpop.f32.mrb[0].mxu0
  %v853 = vadd.f32 0.0, %v852
  %v854 = vpop.f32.mrb[0].mxu0
  %v855 = vadd.f32 0.0, %v854
  %v856 = vpop.f32.mrb[0].mxu0
  %v857 = vadd.f32 0.0, %v856
  %v858 = vpop.f32.mrb[0].mxu0
  %v859 = vadd.f32 0.0, %v858
  %860 = vdwg.mxu0
  %861 = vmatprep.subr.bf16.mxu0 %v602
  %862 = vmatpush1.bf16.msra.mxu0 %v601
  %863 = vmatprep.subr.bf16.mxu0 %v606
  %864 = vmatpush1.bf16.msra.mxu0 %v605
  %865 = vmatprep.subr.bf16.mxu0 %v610
  %866 = vmatpush1.bf16.msra.mxu0 %v609
  %867 = vmatprep.subr.bf16.mxu0 %v614
  %868 = vmatpush1.bf16.msra.mxu0 %v613
  %869 = vmatprep.subr.bf16.mxu0 %v618
  %870 = vmatpush1.bf16.msra.mxu0 %v617
  %871 = vmatprep.subr.bf16.mxu0 %v622
  %872 = vmatpush1.bf16.msra.mxu0 %v621
  %873 = vmatprep.subr.bf16.mxu0 %v626
  %874 = vmatpush1.bf16.msra.mxu0 %v625
  %875 = vmatprep.subr.bf16.mxu0 %v630
  %876 = vmatpush1.bf16.msra.mxu0 %v629
  %877 = vmatprep.subr.bf16.mxu0 0
  %878 = vmatpush1.bf16.msra.mxu0 0
  %879 = vmatprep.subr.bf16.mxu0 0
  %880 = vmatpush1.bf16.msra.mxu0 0
  %881 = vmatprep.subr.bf16.mxu0 0
  %882 = vmatpush1.bf16.msra.mxu0 0
  %883 = vmatprep.subr.bf16.mxu0 0
  %884 = vmatpush1.bf16.msra.mxu0 0
  %885 = vmatprep.subr.bf16.mxu0 0
  %886 = vmatpush1.bf16.msra.mxu0 0
  %887 = vmatprep.subr.bf16.mxu0 0
  %888 = vmatpush1.bf16.msra.mxu0 0
  %889 = vmatprep.subr.bf16.mxu0 0
  %890 = vmatpush1.bf16.msra.mxu0 0
  %891 = vmatprep.subr.bf16.mxu0 0
  %892 = vmatpush1.bf16.msra.mxu0 0
  %893 = vmatprep.mubr.bf16.mxu0 0
  %894 = vmatmul.mubr.bf16.gmra.mrb[0].mxu0 %v805
  %v895 = vpop.f32.mrb[0].mxu0
  %v896 = vadd.f32 0.0, %v895
  %v897 = vpop.f32.mrb[0].mxu0
  %v898 = vadd.f32 0.0, %v897
  %v899 = vpop.f32.mrb[0].mxu0
  %v900 = vadd.f32 0.0, %v899
  %v901 = vpop.f32.mrb[0].mxu0
  %v902 = vadd.f32 0.0, %v901
  %903 = vdwg.mxu0
  %v904 = vadd.f32 %v810, %v853
  %v905 = vadd.f32 %v811, %v855
  %v906 = vadd.f32 %v812, %v896
  %v907 = vadd.f32 %v813, %v898
  %v908 = vadd.f32 %v814, %v857
  %v909 = vadd.f32 %v815, %v859
  %v910 = vadd.f32 %v816, %v900
  %v911 = vadd.f32 %v817, %v902
  %v912 = vxor.u32 %v904, 2147483648
  %v913 = vxor.u32 %v905, 2147483648
  %v914 = vxor.u32 %v906, 2147483648
  %v915 = vxor.u32 %v908, 2147483648
  %v916 = vxor.u32 %v909, 2147483648
  %v917 = vxor.u32 %v910, 2147483648
  %v918 = vmul.f32 %v912, 1.442695
  %v919 = vpow.pop %v918
  %v920 = vmul.f32 %v913, 1.442695
  %v921 = vpow.pop %v920
  %v922 = vmul.f32 %v914, 1.442695
  %v923 = vpow.pop %v922
  %v924 = vmul.f32 %v915, 1.442695
  %v925 = vpow.pop %v924
  %v926 = vmul.f32 %v916, 1.442695
  %v927 = vpow.pop %v926
  %v928 = vmul.f32 %v917, 1.442695
  %v929 = vpow.pop %v928
  %v930 = vadd.f32 %v919, 1.0
  %v931 = vadd.f32 %v921, 1.0
  %v932 = vadd.f32 %v923, 1.0
  %v933 = vadd.f32 %v925, 1.0
  %v934 = vadd.f32 %v927, 1.0
  %v935 = vadd.f32 %v929, 1.0
  %v936 = vrcp.pop %v930
  %v937 = vmul.f32 1.0, %v936
  %v938 = vrcp.pop %v931
  %v939 = vmul.f32 1.0, %v938
  %v940 = vrcp.pop %v932
  %v941 = vmul.f32 1.0, %v940
  %v942 = vrcp.pop %v933
  %v943 = vmul.f32 1.0, %v942
  %v944 = vrcp.pop %v934
  %v945 = vmul.f32 1.0, %v944
  %v946 = vrcp.pop %v935
  %v947 = vmul.f32 1.0, %v946
  %v948 = vtanh.pop %v907
  %v949 = vtanh.pop %v911
  %v950 = vmul.f32 %v939, %v799
  %v951 = vmul.f32 %v945, %v800
  %v952 = vmul.f32 %v937, %v948
  %v953 = vmul.f32 %v943, %v949
  %v954 = vadd.f32 %v950, %v952
  %v955 = vadd.f32 %v951, %v953
  %v956 = vtanh.pop %v954
  %v957 = vtanh.pop %v955
  %v958 = vmul.f32 %v941, %v956
  %v959 = vmul.f32 %v947, %v957
  %v960 = vpack.c.bf16 %v959, %v958
  %s961 = scalar_lea.vmem [#allocation2], 8
  %962 = vst [vmem:[%s961] sm:$0xff] %v960
  %s963 = smul.u32 4, 4
  %s964 = smul.addr %s963, 8
  %s965 = scalar_lea.vmem [#allocation3], %s964
  %v966 = vld [vmem:[%s965] sm:$0xff]
  %v967 = vld [vmem:[%s965 + $0x8] sm:$0xff]
  %v968 = vld [vmem:[%s965 + $0x10] sm:$0xff]
  %v969 = vld [vmem:[%s965 + $0x18] sm:$0xff]
  %v970 = vld [vmem:[%s965 + $0x20] sm:$0xff]
  %v971 = vld [vmem:[%s965 + $0x28] sm:$0xff]
  %v972 = vld [vmem:[%s965 + $0x30] sm:$0xff]
  %v973 = vld [vmem:[%s965 + $0x38] sm:$0xff]
  %974 = vmatprep.subr.bf16.mxu0 %v600
  %975 = vmatpush1.bf16.msra.mxu0 %v599
  %976 = vmatprep.subr.bf16.mxu0 %v604
  %977 = vmatpush1.bf16.msra.mxu0 %v603
  %978 = vmatprep.subr.bf16.mxu0 %v608
  %979 = vmatpush1.bf16.msra.mxu0 %v607
  %980 = vmatprep.subr.bf16.mxu0 %v612
  %981 = vmatpush1.bf16.msra.mxu0 %v611
  %982 = vmatprep.subr.bf16.mxu0 %v616
  %983 = vmatpush1.bf16.msra.mxu0 %v615
  %984 = vmatprep.subr.bf16.mxu0 %v620
  %985 = vmatpush1.bf16.msra.mxu0 %v619
  %986 = vmatprep.subr.bf16.mxu0 %v624
  %987 = vmatpush1.bf16.msra.mxu0 %v623
  %988 = vmatprep.subr.bf16.mxu0 %v628
  %989 = vmatpush1.bf16.msra.mxu0 %v627
  %990 = vmatprep.subr.bf16.mxu0 0
  %991 = vmatpush1.bf16.msra.mxu0 0
  %992 = vmatprep.subr.bf16.mxu0 0
  %993 = vmatpush1.bf16.msra.mxu0 0
  %994 = vmatprep.subr.bf16.mxu0 0
  %995 = vmatpush1.bf16.msra.mxu0 0
  %996 = vmatprep.subr.bf16.mxu0 0
  %997 = vmatpush1.bf16.msra.mxu0 0
  %998 = vmatprep.subr.bf16.mxu0 0
  %999 = vmatpush1.bf16.msra.mxu0 0
  %1000 = vmatprep.subr.bf16.mxu0 0
  %1001 = vmatpush1.bf16.msra.mxu0 0
  %1002 = vmatprep.subr.bf16.mxu0 0
  %1003 = vmatpush1.bf16.msra.mxu0 0
  %1004 = vmatprep.subr.bf16.mxu0 0
  %1005 = vmatpush1.bf16.msra.mxu0 0
  %1006 = vmatprep.mubr.bf16.mxu0 0
  %1007 = vmatmul.mubr.bf16.gmra.mrb[0].mxu0 %v960
  %v1008 = vpop.f32.mrb[0].mxu0
  %v1009 = vadd.f32 0.0, %v1008
  %v1010 = vpop.f32.mrb[0].mxu0
  %v1011 = vadd.f32 0.0, %v1010
  %v1012 = vpop.f32.mrb[0].mxu0
  %v1013 = vadd.f32 0.0, %v1012
  %v1014 = vpop.f32.mrb[0].mxu0
  %v1015 = vadd.f32 0.0, %v1014
  %1016 = vdwg.mxu0
  %1017 = vmatprep.subr.bf16.mxu0 %v602
  %1018 = vmatpush1.bf16.msra.mxu0 %v601
  %1019 = vmatprep.subr.bf16.mxu0 %v606
  %1020 = vmatpush1.bf16.msra.mxu0 %v605
  %1021 = vmatprep.subr.bf16.mxu0 %v610
  %1022 = vmatpush1.bf16.msra.mxu0 %v609
  %1023 = vmatprep.subr.bf16.mxu0 %v614
  %1024 = vmatpush1.bf16.msra.mxu0 %v613
  %1025 = vmatprep.subr.bf16.mxu0 %v618
  %1026 = vmatpush1.bf16.msra.mxu0 %v617
  %1027 = vmatprep.subr.bf16.mxu0 %v622
  %1028 = vmatpush1.bf16.msra.mxu0 %v621
  %1029 = vmatprep.subr.bf16.mxu0 %v626
  %1030 = vmatpush1.bf16.msra.mxu0 %v625
  %1031 = vmatprep.subr.bf16.mxu0 %v630
  %1032 = vmatpush1.bf16.msra.mxu0 %v629
  %1033 = vmatprep.subr.bf16.mxu0 0
  %1034 = vmatpush1.bf16.msra.mxu0 0
  %1035 = vmatprep.subr.bf16.mxu0 0
  %1036 = vmatpush1.bf16.msra.mxu0 0
  %1037 = vmatprep.subr.bf16.mxu0 0
  %1038 = vmatpush1.bf16.msra.mxu0 0
  %1039 = vmatprep.subr.bf16.mxu0 0
  %1040 = vmatpush1.bf16.msra.mxu0 0
  %1041 = vmatprep.subr.bf16.mxu0 0
  %1042 = vmatpush1.bf16.msra.mxu0 0
  %1043 = vmatprep.subr.bf16.mxu0 0
  %1044 = vmatpush1.bf16.msra.mxu0 0
  %1045 = vmatprep.subr.bf16.mxu0 0
  %1046 = vmatpush1.bf16.msra.mxu0 0
  %1047 = vmatprep.subr.bf16.mxu0 0
  %1048 = vmatpush1.bf16.msra.mxu0 0
  %1049 = vmatprep.mubr.bf16.mxu0 0
  %1050 = vmatmul.mubr.bf16.gmra.mrb[0].mxu0 %v960
  %v1051 = vpop.f32.mrb[0].mxu0
  %v1052 = vadd.f32 0.0, %v1051
  %v1053 = vpop.f32.mrb[0].mxu0
  %v1054 = vadd.f32 0.0, %v1053
  %v1055 = vpop.f32.mrb[0].mxu0
  %v1056 = vadd.f32 0.0, %v1055
  %v1057 = vpop.f32.mrb[0].mxu0
  %v1058 = vadd.f32 0.0, %v1057
  %1059 = vdwg.mxu0
  %v1060 = vadd.f32 %v966, %v1009
  %v1061 = vadd.f32 %v967, %v1011
  %v1062 = vadd.f32 %v968, %v1052
  %v1063 = vadd.f32 %v969, %v1054
  %v1064 = vadd.f32 %v970, %v1013
  %v1065 = vadd.f32 %v971, %v1015
  %v1066 = vadd.f32 %v972, %v1056
  %v1067 = vadd.f32 %v973, %v1058
  %v1068 = vxor.u32 %v1060, 2147483648
  %v1069 = vxor.u32 %v1061, 2147483648
  %v1070 = vxor.u32 %v1062, 2147483648
  %v1071 = vxor.u32 %v1064, 2147483648
  %v1072 = vxor.u32 %v1065, 2147483648
  %v1073 = vxor.u32 %v1066, 2147483648
  %v1074 = vmul.f32 %v1068, 1.442695
  %v1075 = vpow.pop %v1074
  %v1076 = vmul.f32 %v1069, 1.442695
  %v1077 = vpow.pop %v1076
  %v1078 = vmul.f32 %v1070, 1.442695
  %v1079 = vpow.pop %v1078
  %v1080 = vmul.f32 %v1071, 1.442695
  %v1081 = vpow.pop %v1080
  %v1082 = vmul.f32 %v1072, 1.442695
  %v1083 = vpow.pop %v1082
  %v1084 = vmul.f32 %v1073, 1.442695
  %v1085 = vpow.pop %v1084
  %v1086 = vadd.f32 %v1075, 1.0
  %v1087 = vadd.f32 %v1077, 1.0
  %v1088 = vadd.f32 %v1079, 1.0
  %v1089 = vadd.f32 %v1081, 1.0
  %v1090 = vadd.f32 %v1083, 1.0
  %v1091 = vadd.f32 %v1085, 1.0
  %v1092 = vrcp.pop %v1086
  %v1093 = vmul.f32 1.0, %v1092
  %v1094 = vrcp.pop %v1087
  %v1095 = vmul.f32 1.0, %v1094
  %v1096 = vrcp.pop %v1088
  %v1097 = vmul.f32 1.0, %v1096
  %v1098 = vrcp.pop %v1089
  %v1099 = vmul.f32 1.0, %v1098
  %v1100 = vrcp.pop %v1090
  %v1101 = vmul.f32 1.0, %v1100
  %v1102 = vrcp.pop %v1091
  %v1103 = vmul.f32 1.0, %v1102
  %v1104 = vtanh.pop %v1063
  %v1105 = vtanh.pop %v1067
  %v1106 = vmul.f32 %v1095, %v954
  %v1107 = vmul.f32 %v1101, %v955
  %v1108 = vmul.f32 %v1093, %v1104
  %v1109 = vmul.f32 %v1099, %v1105
  %v1110 = vadd.f32 %v1106, %v1108
  %v1111 = vadd.f32 %v1107, %v1109
  %v1112 = vtanh.pop %v1110
  %v1113 = vtanh.pop %v1111
  %v1114 = vmul.f32 %v1097, %v1112
  %v1115 = vmul.f32 %v1103, %v1113
  %v1116 = vpack.c.bf16 %v1115, %v1114
  %s1117 = scalar_lea.vmem [#allocation2], 16
  %1118 = vst [vmem:[%s1117] sm:$0xff] %v1116
  %s1119 = smul.u32 6, 4
  %s1120 = smul.addr %s1119, 8
  %s1121 = scalar_lea.vmem [#allocation3], %s1120
  %v1122 = vld [vmem:[%s1121] sm:$0xff]
  %v1123 = vld [vmem:[%s1121 + $0x8] sm:$0xff]
  %v1124 = vld [vmem:[%s1121 + $0x10] sm:$0xff]
  %v1125 = vld [vmem:[%s1121 + $0x18] sm:$0xff]
  %v1126 = vld [vmem:[%s1121 + $0x20] sm:$0xff]
  %v1127 = vld [vmem:[%s1121 + $0x28] sm:$0xff]
  %v1128 = vld [vmem:[%s1121 + $0x30] sm:$0xff]
  %v1129 = vld [vmem:[%s1121 + $0x38] sm:$0xff]
  %1130 = vmatprep.subr.bf16.mxu0 %v600
  %1131 = vmatpush1.bf16.msra.mxu0 %v599
  %1132 = vmatprep.subr.bf16.mxu0 %v604
  %1133 = vmatpush1.bf16.msra.mxu0 %v603
  %1134 = vmatprep.subr.bf16.mxu0 %v608
  %1135 = vmatpush1.bf16.msra.mxu0 %v607
  %1136 = vmatprep.subr.bf16.mxu0 %v612
  %1137 = vmatpush1.bf16.msra.mxu0 %v611
  %1138 = vmatprep.subr.bf16.mxu0 %v616
  %1139 = vmatpush1.bf16.msra.mxu0 %v615
  %1140 = vmatprep.subr.bf16.mxu0 %v620
  %1141 = vmatpush1.bf16.msra.mxu0 %v619
  %1142 = vmatprep.subr.bf16.mxu0 %v624
  %1143 = vmatpush1.bf16.msra.mxu0 %v623
  %1144 = vmatprep.subr.bf16.mxu0 %v628
  %1145 = vmatpush1.bf16.msra.mxu0 %v627
  %1146 = vmatprep.subr.bf16.mxu0 0
  %1147 = vmatpush1.bf16.msra.mxu0 0
  %1148 = vmatprep.subr.bf16.mxu0 0
  %1149 = vmatpush1.bf16.msra.mxu0 0
  %1150 = vmatprep.subr.bf16.mxu0 0
  %1151 = vmatpush1.bf16.msra.mxu0 0
  %1152 = vmatprep.subr.bf16.mxu0 0
  %1153 = vmatpush1.bf16.msra.mxu0 0
  %1154 = vmatprep.subr.bf16.mxu0 0
  %1155 = vmatpush1.bf16.msra.mxu0 0
  %1156 = vmatprep.subr.bf16.mxu0 0
  %1157 = vmatpush1.bf16.msra.mxu0 0
  %1158 = vmatprep.subr.bf16.mxu0 0
  %1159 = vmatpush1.bf16.msra.mxu0 0
  %1160 = vmatprep.subr.bf16.mxu0 0
  %1161 = vmatpush1.bf16.msra.mxu0 0
  %1162 = vmatprep.mubr.bf16.mxu0 0
  %1163 = vmatmul.mubr.bf16.gmra.mrb[0].mxu0 %v1116
  %v1164 = vpop.f32.mrb[0].mxu0
  %v1165 = vadd.f32 0.0, %v1164
  %v1166 = vpop.f32.mrb[0].mxu0
  %v1167 = vadd.f32 0.0, %v1166
  %v1168 = vpop.f32.mrb[0].mxu0
  %v1169 = vadd.f32 0.0, %v1168
  %v1170 = vpop.f32.mrb[0].mxu0
  %v1171 = vadd.f32 0.0, %v1170
  %1172 = vdwg.mxu0
  %1173 = vmatprep.subr.bf16.mxu0 %v602
  %1174 = vmatpush1.bf16.msra.mxu0 %v601
  %1175 = vmatprep.subr.bf16.mxu0 %v606
  %1176 = vmatpush1.bf16.msra.mxu0 %v605
  %1177 = vmatprep.subr.bf16.mxu0 %v610
  %1178 = vmatpush1.bf16.msra.mxu0 %v609
  %1179 = vmatprep.subr.bf16.mxu0 %v614
  %1180 = vmatpush1.bf16.msra.mxu0 %v613
  %1181 = vmatprep.subr.bf16.mxu0 %v618
  %1182 = vmatpush1.bf16.msra.mxu0 %v617
  %1183 = vmatprep.subr.bf16.mxu0 %v622
  %1184 = vmatpush1.bf16.msra.mxu0 %v621
  %1185 = vmatprep.subr.bf16.mxu0 %v626
  %1186 = vmatpush1.bf16.msra.mxu0 %v625
  %1187 = vmatprep.subr.bf16.mxu0 %v630
  %1188 = vmatpush1.bf16.msra.mxu0 %v629
  %1189 = vmatprep.subr.bf16.mxu0 0
  %1190 = vmatpush1.bf16.msra.mxu0 0
  %1191 = vmatprep.subr.bf16.mxu0 0
  %1192 = vmatpush1.bf16.msra.mxu0 0
  %1193 = vmatprep.subr.bf16.mxu0 0
  %1194 = vmatpush1.bf16.msra.mxu0 0
  %1195 = vmatprep.subr.bf16.mxu0 0
  %1196 = vmatpush1.bf16.msra.mxu0 0
  %1197 = vmatprep.subr.bf16.mxu0 0
  %1198 = vmatpush1.bf16.msra.mxu0 0
  %1199 = vmatprep.subr.bf16.mxu0 0
  %1200 = vmatpush1.bf16.msra.mxu0 0
  %1201 = vmatprep.subr.bf16.mxu0 0
  %1202 = vmatpush1.bf16.msra.mxu0 0
  %1203 = vmatprep.subr.bf16.mxu0 0
  %1204 = vmatpush1.bf16.msra.mxu0 0
  %1205 = vmatprep.mubr.bf16.mxu0 0
  %1206 = vmatmul.mubr.bf16.gmra.mrb[0].mxu0 %v1116
  %v1207 = vpop.f32.mrb[0].mxu0
  %v1208 = vadd.f32 0.0, %v1207
  %v1209 = vpop.f32.mrb[0].mxu0
  %v1210 = vadd.f32 0.0, %v1209
  %v1211 = vpop.f32.mrb[0].mxu0
  %v1212 = vadd.f32 0.0, %v1211
  %v1213 = vpop.f32.mrb[0].mxu0
  %v1214 = vadd.f32 0.0, %v1213
  %1215 = vdwg.mxu0
  %v1216 = vadd.f32 %v1122, %v1165
  %v1217 = vadd.f32 %v1123, %v1167
  %v1218 = vadd.f32 %v1124, %v1208
  %v1219 = vadd.f32 %v1125, %v1210
  %v1220 = vadd.f32 %v1126, %v1169
  %v1221 = vadd.f32 %v1127, %v1171
  %v1222 = vadd.f32 %v1128, %v1212
  %v1223 = vadd.f32 %v1129, %v1214
  %v1224 = vxor.u32 %v1216, 2147483648
  %v1225 = vxor.u32 %v1217, 2147483648
  %v1226 = vxor.u32 %v1218, 2147483648
  %v1227 = vxor.u32 %v1220, 2147483648
  %v1228 = vxor.u32 %v1221, 2147483648
  %v1229 = vxor.u32 %v1222, 2147483648
  %v1230 = vmul.f32 %v1224, 1.442695
  %v1231 = vpow.pop %v1230
  %v1232 = vmul.f32 %v1225, 1.442695
  %v1233 = vpow.pop %v1232
  %v1234 = vmul.f32 %v1226, 1.442695
  %v1235 = vpow.pop %v1234
  %v1236 = vmul.f32 %v1227, 1.442695
  %v1237 = vpow.pop %v1236
  %v1238 = vmul.f32 %v1228, 1.442695
  %v1239 = vpow.pop %v1238
  %v1240 = vmul.f32 %v1229, 1.442695
  %v1241 = vpow.pop %v1240
  %v1242 = vadd.f32 %v1231, 1.0
  %v1243 = vadd.f32 %v1233, 1.0
  %v1244 = vadd.f32 %v1235, 1.0
  %v1245 = vadd.f32 %v1237, 1.0
  %v1246 = vadd.f32 %v1239, 1.0
  %v1247 = vadd.f32 %v1241, 1.0
  %v1248 = vrcp.pop %v1242
  %v1249 = vmul.f32 1.0, %v1248
  %v1250 = vrcp.pop %v1243
  %v1251 = vmul.f32 1.0, %v1250
  %v1252 = vrcp.pop %v1244
  %v1253 = vmul.f32 1.0, %v1252
  %v1254 = vrcp.pop %v1245
  %v1255 = vmul.f32 1.0, %v1254
  %v1256 = vrcp.pop %v1246
  %v1257 = vmul.f32 1.0, %v1256
  %v1258 = vrcp.pop %v1247
  %v1259 = vmul.f32 1.0, %v1258
  %v1260 = vtanh.pop %v1219
  %v1261 = vtanh.pop %v1223
  %v1262 = vmul.f32 %v1251, %v1110
  %v1263 = vmul.f32 %v1257, %v1111
  %v1264 = vmul.f32 %v1249, %v1260
  %v1265 = vmul.f32 %v1255, %v1261
  %v1266 = vadd.f32 %v1262, %v1264
  %v1267 = vadd.f32 %v1263, %v1265
  %v1268 = vtanh.pop %v1266
  %v1269 = vtanh.pop %v1267
  %v1270 = vmul.f32 %v1253, %v1268
  %v1271 = vmul.f32 %v1259, %v1269
  %v1272 = vpack.c.bf16 %v1271, %v1270
  %s1273 = scalar_lea.vmem [#allocation2], 24
  %1274 = vst [vmem:[%s1273] sm:$0xff] %v1272
  %s1275 = smul.u32 8, 4
  %s1276 = smul.addr %s1275, 8
  %s1277 = scalar_lea.vmem [#allocation3], %s1276
  %v1278 = vld [vmem:[%s1277] sm:$0xff]
  %v1279 = vld [vmem:[%s1277 + $0x8] sm:$0xff]
  %v1280 = vld [vmem:[%s1277 + $0x10] sm:$0xff]
  %v1281 = vld [vmem:[%s1277 + $0x18] sm:$0xff]
  %v1282 = vld [vmem:[%s1277 + $0x20] sm:$0xff]
  %v1283 = vld [vmem:[%s1277 + $0x28] sm:$0xff]
  %v1284 = vld [vmem:[%s1277 + $0x30] sm:$0xff]
  %v1285 = vld [vmem:[%s1277 + $0x38] sm:$0xff]
  %1286 = vmatprep.subr.bf16.mxu0 %v600
  %1287 = vmatpush1.bf16.msra.mxu0 %v599
  %1288 = vmatprep.subr.bf16.mxu0 %v604
  %1289 = vmatpush1.bf16.msra.mxu0 %v603
  %1290 = vmatprep.subr.bf16.mxu0 %v608
  %1291 = vmatpush1.bf16.msra.mxu0 %v607
  %1292 = vmatprep.subr.bf16.mxu0 %v612
  %1293 = vmatpush1.bf16.msra.mxu0 %v611
  %1294 = vmatprep.subr.bf16.mxu0 %v616
  %1295 = vmatpush1.bf16.msra.mxu0 %v615
  %1296 = vmatprep.subr.bf16.mxu0 %v620
  %1297 = vmatpush1.bf16.msra.mxu0 %v619
  %1298 = vmatprep.subr.bf16.mxu0 %v624
  %1299 = vmatpush1.bf16.msra.mxu0 %v623
  %1300 = vmatprep.subr.bf16.mxu0 %v628
  %1301 = vmatpush1.bf16.msra.mxu0 %v627
  %1302 = vmatprep.subr.bf16.mxu0 0
  %1303 = vmatpush1.bf16.msra.mxu0 0
  %1304 = vmatprep.subr.bf16.mxu0 0
  %1305 = vmatpush1.bf16.msra.mxu0 0
  %1306 = vmatprep.subr.bf16.mxu0 0
  %1307 = vmatpush1.bf16.msra.mxu0 0
  %1308 = vmatprep.subr.bf16.mxu0 0
  %1309 = vmatpush1.bf16.msra.mxu0 0
  %1310 = vmatprep.subr.bf16.mxu0 0
  %1311 = vmatpush1.bf16.msra.mxu0 0
  %1312 = vmatprep.subr.bf16.mxu0 0
  %1313 = vmatpush1.bf16.msra.mxu0 0
  %1314 = vmatprep.subr.bf16.mxu0 0
  %1315 = vmatpush1.bf16.msra.mxu0 0
  %1316 = vmatprep.subr.bf16.mxu0 0
  %1317 = vmatpush1.bf16.msra.mxu0 0
  %1318 = vmatprep.mubr.bf16.mxu0 0
  %1319 = vmatmul.mubr.bf16.gmra.mrb[0].mxu0 %v1272
  %v1320 = vpop.f32.mrb[0].mxu0
  %v1321 = vadd.f32 0.0, %v1320
  %v1322 = vpop.f32.mrb[0].mxu0
  %v1323 = vadd.f32 0.0, %v1322
  %v1324 = vpop.f32.mrb[0].mxu0
  %v1325 = vadd.f32 0.0, %v1324
  %v1326 = vpop.f32.mrb[0].mxu0
  %v1327 = vadd.f32 0.0, %v1326
  %1328 = vdwg.mxu0
  %1329 = vmatprep.subr.bf16.mxu0 %v602
  %1330 = vmatpush1.bf16.msra.mxu0 %v601
  %1331 = vmatprep.subr.bf16.mxu0 %v606
  %1332 = vmatpush1.bf16.msra.mxu0 %v605
  %1333 = vmatprep.subr.bf16.mxu0 %v610
  %1334 = vmatpush1.bf16.msra.mxu0 %v609
  %1335 = vmatprep.subr.bf16.mxu0 %v614
  %1336 = vmatpush1.bf16.msra.mxu0 %v613
  %1337 = vmatprep.subr.bf16.mxu0 %v618
  %1338 = vmatpush1.bf16.msra.mxu0 %v617
  %1339 = vmatprep.subr.bf16.mxu0 %v622
  %1340 = vmatpush1.bf16.msra.mxu0 %v621
  %1341 = vmatprep.subr.bf16.mxu0 %v626
  %1342 = vmatpush1.bf16.msra.mxu0 %v625
  %1343 = vmatprep.subr.bf16.mxu0 %v630
  %1344 = vmatpush1.bf16.msra.mxu0 %v629
  %1345 = vmatprep.subr.bf16.mxu0 0
  %1346 = vmatpush1.bf16.msra.mxu0 0
  %1347 = vmatprep.subr.bf16.mxu0 0
  %1348 = vmatpush1.bf16.msra.mxu0 0
  %1349 = vmatprep.subr.bf16.mxu0 0
  %1350 = vmatpush1.bf16.msra.mxu0 0
  %1351 = vmatprep.subr.bf16.mxu0 0
  %1352 = vmatpush1.bf16.msra.mxu0 0
  %1353 = vmatprep.subr.bf16.mxu0 0
  %1354 = vmatpush1.bf16.msra.mxu0 0
  %1355 = vmatprep.subr.bf16.mxu0 0
  %1356 = vmatpush1.bf16.msra.mxu0 0
  %1357 = vmatprep.subr.bf16.mxu0 0
  %1358 = vmatpush1.bf16.msra.mxu0 0
  %1359 = vmatprep.subr.bf16.mxu0 0
  %1360 = vmatpush1.bf16.msra.mxu0 0
  %1361 = vmatprep.mubr.bf16.mxu0 0
  %1362 = vmatmul.mubr.bf16.gmra.mrb[0].mxu0 %v1272
  %v1363 = vpop.f32.mrb[0].mxu0
  %v1364 = vadd.f32 0.0, %v1363
  %v1365 = vpop.f32.mrb[0].mxu0
  %v1366 = vadd.f32 0.0, %v1365
  %v1367 = vpop.f32.mrb[0].mxu0
  %v1368 = vadd.f32 0.0, %v1367
  %v1369 = vpop.f32.mrb[0].mxu0
  %v1370 = vadd.f32 0.0, %v1369
  %1371 = vdwg.mxu0
  %v1372 = vadd.f32 %v1278, %v1321
  %v1373 = vadd.f32 %v1279, %v1323
  %v1374 = vadd.f32 %v1280, %v1364
  %v1375 = vadd.f32 %v1281, %v1366
  %v1376 = vadd.f32 %v1282, %v1325
  %v1377 = vadd.f32 %v1283, %v1327
  %v1378 = vadd.f32 %v1284, %v1368
  %v1379 = vadd.f32 %v1285, %v1370
  %v1380 = vxor.u32 %v1372, 2147483648
  %v1381 = vxor.u32 %v1373, 2147483648
  %v1382 = vxor.u32 %v1374, 2147483648
  %v1383 = vxor.u32 %v1376, 2147483648
  %v1384 = vxor.u32 %v1377, 2147483648
  %v1385 = vxor.u32 %v1378, 2147483648
  %v1386 = vmul.f32 %v1380, 1.442695
  %v1387 = vpow.pop %v1386
  %v1388 = vmul.f32 %v1381, 1.442695
  %v1389 = vpow.pop %v1388
  %v1390 = vmul.f32 %v1382, 1.442695
  %v1391 = vpow.pop %v1390
  %v1392 = vmul.f32 %v1383, 1.442695
  %v1393 = vpow.pop %v1392
  %v1394 = vmul.f32 %v1384, 1.442695
  %v1395 = vpow.pop %v1394
  %v1396 = vmul.f32 %v1385, 1.442695
  %v1397 = vpow.pop %v1396
  %v1398 = vadd.f32 %v1387, 1.0
  %v1399 = vadd.f32 %v1389, 1.0
  %v1400 = vadd.f32 %v1391, 1.0
  %v1401 = vadd.f32 %v1393, 1.0
  %v1402 = vadd.f32 %v1395, 1.0
  %v1403 = vadd.f32 %v1397, 1.0
  %v1404 = vrcp.pop %v1398
  %v1405 = vmul.f32 1.0, %v1404
  %v1406 = vrcp.pop %v1399
  %v1407 = vmul.f32 1.0, %v1406
  %v1408 = vrcp.pop %v1400
  %v1409 = vmul.f32 1.0, %v1408
  %v1410 = vrcp.pop %v1401
  %v1411 = vmul.f32 1.0, %v1410
  %v1412 = vrcp.pop %v1402
  %v1413 = vmul.f32 1.0, %v1412
  %v1414 = vrcp.pop %v1403
  %v1415 = vmul.f32 1.0, %v1414
  %v1416 = vtanh.pop %v1375
  %v1417 = vtanh.pop %v1379
  %v1418 = vmul.f32 %v1407, %v1266
  %v1419 = vmul.f32 %v1413, %v1267
  %v1420 = vmul.f32 %v1405, %v1416
  %v1421 = vmul.f32 %v1411, %v1417
  %v1422 = vadd.f32 %v1418, %v1420
  %v1423 = vadd.f32 %v1419, %v1421
  %v1424 = vtanh.pop %v1422
  %v1425 = vtanh.pop %v1423
  %v1426 = vmul.f32 %v1409, %v1424
  %v1427 = vmul.f32 %v1415, %v1425
  %v1428 = vpack.c.bf16 %v1427, %v1426
  %s1429 = scalar_lea.vmem [#allocation2], 32
  %1430 = vst [vmem:[%s1429] sm:$0xff] %v1428
  %s1431 = smul.u32 10, 4
  %s1432 = smul.addr %s1431, 8
  %s1433 = scalar_lea.vmem [#allocation3], %s1432
  %v1434 = vld [vmem:[%s1433] sm:$0xff]
  %v1435 = vld [vmem:[%s1433 + $0x8] sm:$0xff]
  %v1436 = vld [vmem:[%s1433 + $0x10] sm:$0xff]
  %v1437 = vld [vmem:[%s1433 + $0x18] sm:$0xff]
  %v1438 = vld [vmem:[%s1433 + $0x20] sm:$0xff]
  %v1439 = vld [vmem:[%s1433 + $0x28] sm:$0xff]
  %v1440 = vld [vmem:[%s1433 + $0x30] sm:$0xff]
  %v1441 = vld [vmem:[%s1433 + $0x38] sm:$0xff]
  %1442 = vmatprep.subr.bf16.mxu0 %v600
  %1443 = vmatpush1.bf16.msra.mxu0 %v599
  %1444 = vmatprep.subr.bf16.mxu0 %v604
  %1445 = vmatpush1.bf16.msra.mxu0 %v603
  %1446 = vmatprep.subr.bf16.mxu0 %v608
  %1447 = vmatpush1.bf16.msra.mxu0 %v607
  %1448 = vmatprep.subr.bf16.mxu0 %v612
  %1449 = vmatpush1.bf16.msra.mxu0 %v611
  %1450 = vmatprep.subr.bf16.mxu0 %v616
  %1451 = vmatpush1.bf16.msra.mxu0 %v615
  %1452 = vmatprep.subr.bf16.mxu0 %v620
  %1453 = vmatpush1.bf16.msra.mxu0 %v619
  %1454 = vmatprep.subr.bf16.mxu0 %v624
  %1455 = vmatpush1.bf16.msra.mxu0 %v623
  %1456 = vmatprep.subr.bf16.mxu0 %v628
  %1457 = vmatpush1.bf16.msra.mxu0 %v627
  %1458 = vmatprep.subr.bf16.mxu0 0
  %1459 = vmatpush1.bf16.msra.mxu0 0
  %1460 = vmatprep.subr.bf16.mxu0 0
  %1461 = vmatpush1.bf16.msra.mxu0 0
  %1462 = vmatprep.subr.bf16.mxu0 0
  %1463 = vmatpush1.bf16.msra.mxu0 0
  %1464 = vmatprep.subr.bf16.mxu0 0
  %1465 = vmatpush1.bf16.msra.mxu0 0
  %1466 = vmatprep.subr.bf16.mxu0 0
  %1467 = vmatpush1.bf16.msra.mxu0 0
  %1468 = vmatprep.subr.bf16.mxu0 0
  %1469 = vmatpush1.bf16.msra.mxu0 0
  %1470 = vmatprep.subr.bf16.mxu0 0
  %1471 = vmatpush1.bf16.msra.mxu0 0
  %1472 = vmatprep.subr.bf16.mxu0 0
  %1473 = vmatpush1.bf16.msra.mxu0 0
  %1474 = vmatprep.mubr.bf16.mxu0 0
  %1475 = vmatmul.mubr.bf16.gmra.mrb[0].mxu0 %v1428
  %v1476 = vpop.f32.mrb[0].mxu0
  %v1477 = vadd.f32 0.0, %v1476
  %v1478 = vpop.f32.mrb[0].mxu0
  %v1479 = vadd.f32 0.0, %v1478
  %v1480 = vpop.f32.mrb[0].mxu0
  %v1481 = vadd.f32 0.0, %v1480
  %v1482 = vpop.f32.mrb[0].mxu0
  %v1483 = vadd.f32 0.0, %v1482
  %1484 = vdwg.mxu0
  %1485 = vmatprep.subr.bf16.mxu0 %v602
  %1486 = vmatpush1.bf16.msra.mxu0 %v601
  %1487 = vmatprep.subr.bf16.mxu0 %v606
  %1488 = vmatpush1.bf16.msra.mxu0 %v605
  %1489 = vmatprep.subr.bf16.mxu0 %v610
  %1490 = vmatpush1.bf16.msra.mxu0 %v609
  %1491 = vmatprep.subr.bf16.mxu0 %v614
  %1492 = vmatpush1.bf16.msra.mxu0 %v613
  %1493 = vmatprep.subr.bf16.mxu0 %v618
  %1494 = vmatpush1.bf16.msra.mxu0 %v617
  %1495 = vmatprep.subr.bf16.mxu0 %v622
  %1496 = vmatpush1.bf16.msra.mxu0 %v621
  %1497 = vmatprep.subr.bf16.mxu0 %v626
  %1498 = vmatpush1.bf16.msra.mxu0 %v625
  %1499 = vmatprep.subr.bf16.mxu0 %v630
  %1500 = vmatpush1.bf16.msra.mxu0 %v629
  %1501 = vmatprep.subr.bf16.mxu0 0
  %1502 = vmatpush1.bf16.msra.mxu0 0
  %1503 = vmatprep.subr.bf16.mxu0 0
  %1504 = vmatpush1.bf16.msra.mxu0 0
  %1505 = vmatprep.subr.bf16.mxu0 0
  %1506 = vmatpush1.bf16.msra.mxu0 0
  %1507 = vmatprep.subr.bf16.mxu0 0
  %1508 = vmatpush1.bf16.msra.mxu0 0
  %1509 = vmatprep.subr.bf16.mxu0 0
  %1510 = vmatpush1.bf16.msra.mxu0 0
  %1511 = vmatprep.subr.bf16.mxu0 0
  %1512 = vmatpush1.bf16.msra.mxu0 0
  %1513 = vmatprep.subr.bf16.mxu0 0
  %1514 = vmatpush1.bf16.msra.mxu0 0
  %1515 = vmatprep.subr.bf16.mxu0 0
  %1516 = vmatpush1.bf16.msra.mxu0 0
  %1517 = vmatprep.mubr.bf16.mxu0 0
  %1518 = vmatmul.mubr.bf16.gmra.mrb[0].mxu0 %v1428
  %v1519 = vpop.f32.mrb[0].mxu0
  %v1520 = vadd.f32 0.0, %v1519
  %v1521 = vpop.f32.mrb[0].mxu0
  %v1522 = vadd.f32 0.0, %v1521
  %v1523 = vpop.f32.mrb[0].mxu0
  %v1524 = vadd.f32 0.0, %v1523
  %v1525 = vpop.f32.mrb[0].mxu0
  %v1526 = vadd.f32 0.0, %v1525
  %1527 = vdwg.mxu0
  %v1528 = vadd.f32 %v1434, %v1477
  %v1529 = vadd.f32 %v1435, %v1479
  %v1530 = vadd.f32 %v1436, %v1520
  %v1531 = vadd.f32 %v1437, %v1522
  %v1532 = vadd.f32 %v1438, %v1481
  %v1533 = vadd.f32 %v1439, %v1483
  %v1534 = vadd.f32 %v1440, %v1524
  %v1535 = vadd.f32 %v1441, %v1526
  %v1536 = vxor.u32 %v1528, 2147483648
  %v1537 = vxor.u32 %v1529, 2147483648
  %v1538 = vxor.u32 %v1530, 2147483648
  %v1539 = vxor.u32 %v1532, 2147483648
  %v1540 = vxor.u32 %v1533, 2147483648
  %v1541 = vxor.u32 %v1534, 2147483648
  %v1542 = vmul.f32 %v1536, 1.442695
  %v1543 = vpow.pop %v1542
  %v1544 = vmul.f32 %v1537, 1.442695
  %v1545 = vpow.pop %v1544
  %v1546 = vmul.f32 %v1538, 1.442695
  %v1547 = vpow.pop %v1546
  %v1548 = vmul.f32 %v1539, 1.442695
  %v1549 = vpow.pop %v1548
  %v1550 = vmul.f32 %v1540, 1.442695
  %v1551 = vpow.pop %v1550
  %v1552 = vmul.f32 %v1541, 1.442695
  %v1553 = vpow.pop %v1552
  %v1554 = vadd.f32 %v1543, 1.0
  %v1555 = vadd.f32 %v1545, 1.0
  %v1556 = vadd.f32 %v1547, 1.0
  %v1557 = vadd.f32 %v1549, 1.0
  %v1558 = vadd.f32 %v1551, 1.0
  %v1559 = vadd.f32 %v1553, 1.0
  %v1560 = vrcp.pop %v1554
  %v1561 = vmul.f32 1.0, %v1560
  %v1562 = vrcp.pop %v1555
  %v1563 = vmul.f32 1.0, %v1562
  %v1564 = vrcp.pop %v1556
  %v1565 = vmul.f32 1.0, %v1564
  %v1566 = vrcp.pop %v1557
  %v1567 = vmul.f32 1.0, %v1566
  %v1568 = vrcp.pop %v1558
  %v1569 = vmul.f32 1.0, %v1568
  %v1570 = vrcp.pop %v1559
  %v1571 = vmul.f32 1.0, %v1570
  %v1572 = vtanh.pop %v1531
  %v1573 = vtanh.pop %v1535
  %v1574 = vmul.f32 %v1563, %v1422
  %v1575 = vmul.f32 %v1569, %v1423
  %v1576 = vmul.f32 %v1561, %v1572
  %v1577 = vmul.f32 %v1567, %v1573
  %v1578 = vadd.f32 %v1574, %v1576
  %v1579 = vadd.f32 %v1575, %v1577
  %v1580 = vtanh.pop %v1578
  %v1581 = vtanh.pop %v1579
  %v1582 = vmul.f32 %v1565, %v1580
  %v1583 = vmul.f32 %v1571, %v1581
  %v1584 = vpack.c.bf16 %v1583, %v1582
  %s1585 = scalar_lea.vmem [#allocation2], 40
  %1586 = vst [vmem:[%s1585] sm:$0xff] %v1584
  %s1587 = smul.u32 12, 4
  %s1588 = smul.addr %s1587, 8
  %s1589 = scalar_lea.vmem [#allocation3], %s1588
  %v1590 = vld [vmem:[%s1589] sm:$0xff]
  %v1591 = vld [vmem:[%s1589 + $0x8] sm:$0xff]
  %v1592 = vld [vmem:[%s1589 + $0x10] sm:$0xff]
  %v1593 = vld [vmem:[%s1589 + $0x18] sm:$0xff]
  %v1594 = vld [vmem:[%s1589 + $0x20] sm:$0xff]
  %v1595 = vld [vmem:[%s1589 + $0x28] sm:$0xff]
  %v1596 = vld [vmem:[%s1589 + $0x30] sm:$0xff]
  %v1597 = vld [vmem:[%s1589 + $0x38] sm:$0xff]
  %1598 = vmatprep.subr.bf16.mxu0 %v600
  %1599 = vmatpush1.bf16.msra.mxu0 %v599
  %1600 = vmatprep.subr.bf16.mxu0 %v604
  %1601 = vmatpush1.bf16.msra.mxu0 %v603
  %1602 = vmatprep.subr.bf16.mxu0 %v608
  %1603 = vmatpush1.bf16.msra.mxu0 %v607
  %1604 = vmatprep.subr.bf16.mxu0 %v612
  %1605 = vmatpush1.bf16.msra.mxu0 %v611
  %1606 = vmatprep.subr.bf16.mxu0 %v616
  %1607 = vmatpush1.bf16.msra.mxu0 %v615
  %1608 = vmatprep.subr.bf16.mxu0 %v620
  %1609 = vmatpush1.bf16.msra.mxu0 %v619
  %1610 = vmatprep.subr.bf16.mxu0 %v624
  %1611 = vmatpush1.bf16.msra.mxu0 %v623
  %1612 = vmatprep.subr.bf16.mxu0 %v628
  %1613 = vmatpush1.bf16.msra.mxu0 %v627
  %1614 = vmatprep.subr.bf16.mxu0 0
  %1615 = vmatpush1.bf16.msra.mxu0 0
  %1616 = vmatprep.subr.bf16.mxu0 0
  %1617 = vmatpush1.bf16.msra.mxu0 0
  %1618 = vmatprep.subr.bf16.mxu0 0
  %1619 = vmatpush1.bf16.msra.mxu0 0
  %1620 = vmatprep.subr.bf16.mxu0 0
  %1621 = vmatpush1.bf16.msra.mxu0 0
  %1622 = vmatprep.subr.bf16.mxu0 0
  %1623 = vmatpush1.bf16.msra.mxu0 0
  %1624 = vmatprep.subr.bf16.mxu0 0
  %1625 = vmatpush1.bf16.msra.mxu0 0
  %1626 = vmatprep.subr.bf16.mxu0 0
  %1627 = vmatpush1.bf16.msra.mxu0 0
  %1628 = vmatprep.subr.bf16.mxu0 0
  %1629 = vmatpush1.bf16.msra.mxu0 0
  %1630 = vmatprep.mubr.bf16.mxu0 0
  %1631 = vmatmul.mubr.bf16.gmra.mrb[0].mxu0 %v1584
  %v1632 = vpop.f32.mrb[0].mxu0
  %v1633 = vadd.f32 0.0, %v1632
  %v1634 = vpop.f32.mrb[0].mxu0
  %v1635 = vadd.f32 0.0, %v1634
  %v1636 = vpop.f32.mrb[0].mxu0
  %v1637 = vadd.f32 0.0, %v1636
  %v1638 = vpop.f32.mrb[0].mxu0
  %v1639 = vadd.f32 0.0, %v1638
  %1640 = vdwg.mxu0
  %1641 = vmatprep.subr.bf16.mxu0 %v602
  %1642 = vmatpush1.bf16.msra.mxu0 %v601
  %1643 = vmatprep.subr.bf16.mxu0 %v606
  %1644 = vmatpush1.bf16.msra.mxu0 %v605
  %1645 = vmatprep.subr.bf16.mxu0 %v610
  %1646 = vmatpush1.bf16.msra.mxu0 %v609
  %1647 = vmatprep.subr.bf16.mxu0 %v614
  %1648 = vmatpush1.bf16.msra.mxu0 %v613
  %1649 = vmatprep.subr.bf16.mxu0 %v618
  %1650 = vmatpush1.bf16.msra.mxu0 %v617
  %1651 = vmatprep.subr.bf16.mxu0 %v622
  %1652 = vmatpush1.bf16.msra.mxu0 %v621
  %1653 = vmatprep.subr.bf16.mxu0 %v626
  %1654 = vmatpush1.bf16.msra.mxu0 %v625
  %1655 = vmatprep.subr.bf16.mxu0 %v630
  %1656 = vmatpush1.bf16.msra.mxu0 %v629
  %1657 = vmatprep.subr.bf16.mxu0 0
  %1658 = vmatpush1.bf16.msra.mxu0 0
  %1659 = vmatprep.subr.bf16.mxu0 0
  %1660 = vmatpush1.bf16.msra.mxu0 0
  %1661 = vmatprep.subr.bf16.mxu0 0
  %1662 = vmatpush1.bf16.msra.mxu0 0
  %1663 = vmatprep.subr.bf16.mxu0 0
  %1664 = vmatpush1.bf16.msra.mxu0 0
  %1665 = vmatprep.subr.bf16.mxu0 0
  %1666 = vmatpush1.bf16.msra.mxu0 0
  %1667 = vmatprep.subr.bf16.mxu0 0
  %1668 = vmatpush1.bf16.msra.mxu0 0
  %1669 = vmatprep.subr.bf16.mxu0 0
  %1670 = vmatpush1.bf16.msra.mxu0 0
  %1671 = vmatprep.subr.bf16.mxu0 0
  %1672 = vmatpush1.bf16.msra.mxu0 0
  %1673 = vmatprep.mubr.bf16.mxu0 0
  %1674 = vmatmul.mubr.bf16.gmra.mrb[0].mxu0 %v1584
  %v1675 = vpop.f32.mrb[0].mxu0
  %v1676 = vadd.f32 0.0, %v1675
  %v1677 = vpop.f32.mrb[0].mxu0
  %v1678 = vadd.f32 0.0, %v1677
  %v1679 = vpop.f32.mrb[0].mxu0
  %v1680 = vadd.f32 0.0, %v1679
  %v1681 = vpop.f32.mrb[0].mxu0
  %v1682 = vadd.f32 0.0, %v1681
  %1683 = vdwg.mxu0
  %v1684 = vadd.f32 %v1590, %v1633
  %v1685 = vadd.f32 %v1591, %v1635
  %v1686 = vadd.f32 %v1592, %v1676
  %v1687 = vadd.f32 %v1593, %v1678
  %v1688 = vadd.f32 %v1594, %v1637
  %v1689 = vadd.f32 %v1595, %v1639
  %v1690 = vadd.f32 %v1596, %v1680
  %v1691 = vadd.f32 %v1597, %v1682
  %v1692 = vxor.u32 %v1684, 2147483648
  %v1693 = vxor.u32 %v1685, 2147483648
  %v1694 = vxor.u32 %v1686, 2147483648
  %v1695 = vxor.u32 %v1688, 2147483648
  %v1696 = vxor.u32 %v1689, 2147483648
  %v1697 = vxor.u32 %v1690, 2147483648
  %v1698 = vmul.f32 %v1692, 1.442695
  %v1699 = vpow.pop %v1698
  %v1700 = vmul.f32 %v1693, 1.442695
  %v1701 = vpow.pop %v1700
  %v1702 = vmul.f32 %v1694, 1.442695
  %v1703 = vpow.pop %v1702
  %v1704 = vmul.f32 %v1695, 1.442695
  %v1705 = vpow.pop %v1704
  %v1706 = vmul.f32 %v1696, 1.442695
  %v1707 = vpow.pop %v1706
  %v1708 = vmul.f32 %v1697, 1.442695
  %v1709 = vpow.pop %v1708
  %v1710 = vadd.f32 %v1699, 1.0
  %v1711 = vadd.f32 %v1701, 1.0
  %v1712 = vadd.f32 %v1703, 1.0
  %v1713 = vadd.f32 %v1705, 1.0
  %v1714 = vadd.f32 %v1707, 1.0
  %v1715 = vadd.f32 %v1709, 1.0
  %v1716 = vrcp.pop %v1710
  %v1717 = vmul.f32 1.0, %v1716
  %v1718 = vrcp.pop %v1711
  %v1719 = vmul.f32 1.0, %v1718
  %v1720 = vrcp.pop %v1712
  %v1721 = vmul.f32 1.0, %v1720
  %v1722 = vrcp.pop %v1713
  %v1723 = vmul.f32 1.0, %v1722
  %v1724 = vrcp.pop %v1714
  %v1725 = vmul.f32 1.0, %v1724
  %v1726 = vrcp.pop %v1715
  %v1727 = vmul.f32 1.0, %v1726
  %v1728 = vtanh.pop %v1687
  %v1729 = vtanh.pop %v1691
  %v1730 = vmul.f32 %v1719, %v1578
  %v1731 = vmul.f32 %v1725, %v1579
  %v1732 = vmul.f32 %v1717, %v1728
  %v1733 = vmul.f32 %v1723, %v1729
  %v1734 = vadd.f32 %v1730, %v1732
  %v1735 = vadd.f32 %v1731, %v1733
  %v1736 = vtanh.pop %v1734
  %v1737 = vtanh.pop %v1735
  %v1738 = vmul.f32 %v1721, %v1736
  %v1739 = vmul.f32 %v1727, %v1737
  %v1740 = vpack.c.bf16 %v1739, %v1738
  %s1741 = scalar_lea.vmem [#allocation2], 48
  %1742 = vst [vmem:[%s1741] sm:$0xff] %v1740
  %s1743 = smul.u32 14, 4
  %s1744 = smul.addr %s1743, 8
  %s1745 = scalar_lea.vmem [#allocation3], %s1744
  %v1746 = vld [vmem:[%s1745] sm:$0xff]
  %v1747 = vld [vmem:[%s1745 + $0x8] sm:$0xff]
  %v1748 = vld [vmem:[%s1745 + $0x10] sm:$0xff]
  %v1749 = vld [vmem:[%s1745 + $0x18] sm:$0xff]
  %v1750 = vld [vmem:[%s1745 + $0x20] sm:$0xff]
  %v1751 = vld [vmem:[%s1745 + $0x28] sm:$0xff]
  %v1752 = vld [vmem:[%s1745 + $0x30] sm:$0xff]
  %v1753 = vld [vmem:[%s1745 + $0x38] sm:$0xff]
  %1754 = vmatprep.subr.bf16.mxu0 %v600
  %1755 = vmatpush1.bf16.msra.mxu0 %v599
  %1756 = vmatprep.subr.bf16.mxu0 %v604
  %1757 = vmatpush1.bf16.msra.mxu0 %v603
  %1758 = vmatprep.subr.bf16.mxu0 %v608
  %1759 = vmatpush1.bf16.msra.mxu0 %v607
  %1760 = vmatprep.subr.bf16.mxu0 %v612
  %1761 = vmatpush1.bf16.msra.mxu0 %v611
  %1762 = vmatprep.subr.bf16.mxu0 %v616
  %1763 = vmatpush1.bf16.msra.mxu0 %v615
  %1764 = vmatprep.subr.bf16.mxu0 %v620
  %1765 = vmatpush1.bf16.msra.mxu0 %v619
  %1766 = vmatprep.subr.bf16.mxu0 %v624
  %1767 = vmatpush1.bf16.msra.mxu0 %v623
  %1768 = vmatprep.subr.bf16.mxu0 %v628
  %1769 = vmatpush1.bf16.msra.mxu0 %v627
  %1770 = vmatprep.subr.bf16.mxu0 0
  %1771 = vmatpush1.bf16.msra.mxu0 0
  %1772 = vmatprep.subr.bf16.mxu0 0
  %1773 = vmatpush1.bf16.msra.mxu0 0
  %1774 = vmatprep.subr.bf16.mxu0 0
  %1775 = vmatpush1.bf16.msra.mxu0 0
  %1776 = vmatprep.subr.bf16.mxu0 0
  %1777 = vmatpush1.bf16.msra.mxu0 0
  %1778 = vmatprep.subr.bf16.mxu0 0
  %1779 = vmatpush1.bf16.msra.mxu0 0
  %1780 = vmatprep.subr.bf16.mxu0 0
  %1781 = vmatpush1.bf16.msra.mxu0 0
  %1782 = vmatprep.subr.bf16.mxu0 0
  %1783 = vmatpush1.bf16.msra.mxu0 0
  %1784 = vmatprep.subr.bf16.mxu0 0
  %1785 = vmatpush1.bf16.msra.mxu0 0
  %1786 = vmatprep.mubr.bf16.mxu0 0
  %1787 = vmatmul.mubr.bf16.gmra.mrb[0].mxu0 %v1740
  %v1788 = vpop.f32.mrb[0].mxu0
  %v1789 = vadd.f32 0.0, %v1788
  %v1790 = vpop.f32.mrb[0].mxu0
  %v1791 = vadd.f32 0.0, %v1790
  %v1792 = vpop.f32.mrb[0].mxu0
  %v1793 = vadd.f32 0.0, %v1792
  %v1794 = vpop.f32.mrb[0].mxu0
  %v1795 = vadd.f32 0.0, %v1794
  %1796 = vdwg.mxu0
  %1797 = vmatprep.subr.bf16.mxu0 %v602
  %1798 = vmatpush1.bf16.msra.mxu0 %v601
  %1799 = vmatprep.subr.bf16.mxu0 %v606
  %1800 = vmatpush1.bf16.msra.mxu0 %v605
  %1801 = vmatprep.subr.bf16.mxu0 %v610
  %1802 = vmatpush1.bf16.msra.mxu0 %v609
  %1803 = vmatprep.subr.bf16.mxu0 %v614
  %1804 = vmatpush1.bf16.msra.mxu0 %v613
  %1805 = vmatprep.subr.bf16.mxu0 %v618
  %1806 = vmatpush1.bf16.msra.mxu0 %v617
  %1807 = vmatprep.subr.bf16.mxu0 %v622
  %1808 = vmatpush1.bf16.msra.mxu0 %v621
  %1809 = vmatprep.subr.bf16.mxu0 %v626
  %1810 = vmatpush1.bf16.msra.mxu0 %v625
  %1811 = vmatprep.subr.bf16.mxu0 %v630
  %1812 = vmatpush1.bf16.msra.mxu0 %v629
  %1813 = vmatprep.subr.bf16.mxu0 0
  %1814 = vmatpush1.bf16.msra.mxu0 0
  %1815 = vmatprep.subr.bf16.mxu0 0
  %1816 = vmatpush1.bf16.msra.mxu0 0
  %1817 = vmatprep.subr.bf16.mxu0 0
  %1818 = vmatpush1.bf16.msra.mxu0 0
  %1819 = vmatprep.subr.bf16.mxu0 0
  %1820 = vmatpush1.bf16.msra.mxu0 0
  %1821 = vmatprep.subr.bf16.mxu0 0
  %1822 = vmatpush1.bf16.msra.mxu0 0
  %1823 = vmatprep.subr.bf16.mxu0 0
  %1824 = vmatpush1.bf16.msra.mxu0 0
  %1825 = vmatprep.subr.bf16.mxu0 0
  %1826 = vmatpush1.bf16.msra.mxu0 0
  %1827 = vmatprep.subr.bf16.mxu0 0
  %1828 = vmatpush1.bf16.msra.mxu0 0
  %1829 = vmatprep.mubr.bf16.mxu0 0
  %1830 = vmatmul.mubr.bf16.gmra.mrb[0].mxu0 %v1740
  %v1831 = vpop.f32.mrb[0].mxu0
  %v1832 = vadd.f32 0.0, %v1831
  %v1833 = vpop.f32.mrb[0].mxu0
  %v1834 = vadd.f32 0.0, %v1833
  %v1835 = vpop.f32.mrb[0].mxu0
  %v1836 = vadd.f32 0.0, %v1835
  %v1837 = vpop.f32.mrb[0].mxu0
  %v1838 = vadd.f32 0.0, %v1837
  %1839 = vdwg.mxu0
  %v1840 = vadd.f32 %v1746, %v1789
  %v1841 = vadd.f32 %v1747, %v1791
  %v1842 = vadd.f32 %v1748, %v1832
  %v1843 = vadd.f32 %v1749, %v1834
  %v1844 = vadd.f32 %v1750, %v1793
  %v1845 = vadd.f32 %v1751, %v1795
  %v1846 = vadd.f32 %v1752, %v1836
  %v1847 = vadd.f32 %v1753, %v1838
  %v1848 = vxor.u32 %v1840, 2147483648
  %v1849 = vxor.u32 %v1841, 2147483648
  %v1850 = vxor.u32 %v1842, 2147483648
  %v1851 = vxor.u32 %v1844, 2147483648
  %v1852 = vxor.u32 %v1845, 2147483648
  %v1853 = vxor.u32 %v1846, 2147483648
  %v1854 = vmul.f32 %v1848, 1.442695
  %v1855 = vpow.pop %v1854
  %v1856 = vmul.f32 %v1849, 1.442695
  %v1857 = vpow.pop %v1856
  %v1858 = vmul.f32 %v1850, 1.442695
  %v1859 = vpow.pop %v1858
  %v1860 = vmul.f32 %v1851, 1.442695
  %v1861 = vpow.pop %v1860
  %v1862 = vmul.f32 %v1852, 1.442695
  %v1863 = vpow.pop %v1862
  %v1864 = vmul.f32 %v1853, 1.442695
  %v1865 = vpow.pop %v1864
  %v1866 = vadd.f32 %v1855, 1.0
  %v1867 = vadd.f32 %v1857, 1.0
  %v1868 = vadd.f32 %v1859, 1.0
  %v1869 = vadd.f32 %v1861, 1.0
  %v1870 = vadd.f32 %v1863, 1.0
  %v1871 = vadd.f32 %v1865, 1.0
  %v1872 = vrcp.pop %v1866
  %v1873 = vmul.f32 1.0, %v1872
  %v1874 = vrcp.pop %v1867
  %v1875 = vmul.f32 1.0, %v1874
  %v1876 = vrcp.pop %v1868
  %v1877 = vmul.f32 1.0, %v1876
  %v1878 = vrcp.pop %v1869
  %v1879 = vmul.f32 1.0, %v1878
  %v1880 = vrcp.pop %v1870
  %v1881 = vmul.f32 1.0, %v1880
  %v1882 = vrcp.pop %v1871
  %v1883 = vmul.f32 1.0, %v1882
  %v1884 = vtanh.pop %v1843
  %v1885 = vtanh.pop %v1847
  %v1886 = vmul.f32 %v1875, %v1734
  %v1887 = vmul.f32 %v1881, %v1735
  %v1888 = vmul.f32 %v1873, %v1884
  %v1889 = vmul.f32 %v1879, %v1885
  %v1890 = vadd.f32 %v1886, %v1888
  %v1891 = vadd.f32 %v1887, %v1889
  %v1892 = vtanh.pop %v1890
  %v1893 = vtanh.pop %v1891
  %v1894 = vmul.f32 %v1877, %v1892
  %v1895 = vmul.f32 %v1883, %v1893
  %v1896 = vpack.c.bf16 %v1895, %v1894
  %s1897 = scalar_lea.vmem [#allocation2], 56
  %1898 = vst [vmem:[%s1897] sm:$0xff] %v1896
  %v1899 = vld [vmem:[%s5] sm:$0xff]
  %v1900 = vld [vmem:[%s5 + $0x8] sm:$0xff]
  %v1901 = vld [vmem:[%s5 + $0x10] sm:$0xff]
  %v1902 = vld [vmem:[%s5 + $0x18] sm:$0xff]
  %v1903 = vld [vmem:[%s5 + $0x20] sm:$0xff]
  %v1904 = vld [vmem:[%s5 + $0x28] sm:$0xff]
  %v1905 = vld [vmem:[%s5 + $0x30] sm:$0xff]
  %v1906 = vld [vmem:[%s5 + $0x38] sm:$0xff]
  %v1907 = vld [vmem:[%s5 + $0x40] sm:$0xff]
  %v1908 = vld [vmem:[%s5 + $0x48] sm:$0xff]
  %v1909 = vld [vmem:[%s5 + $0x50] sm:$0xff]
  %v1910 = vld [vmem:[%s5 + $0x58] sm:$0xff]
  %v1911 = vld [vmem:[%s5 + $0x60] sm:$0xff]
  %v1912 = vld [vmem:[%s5 + $0x68] sm:$0xff]
  %v1913 = vld [vmem:[%s5 + $0x70] sm:$0xff]
  %v1914 = vld [vmem:[%s5 + $0x78] sm:$0xff]
  %v1915 = vld [vmem:[%s5 + $0x80] sm:$0xff]
  %v1916 = vld [vmem:[%s5 + $0x88] sm:$0xff]
  %v1917 = vld [vmem:[%s5 + $0x90] sm:$0xff]
  %v1918 = vld [vmem:[%s5 + $0x98] sm:$0xff]
  %v1919 = vld [vmem:[%s5 + $0xa0] sm:$0xff]
  %v1920 = vld [vmem:[%s5 + $0xa8] sm:$0xff]
  %v1921 = vld [vmem:[%s5 + $0xb0] sm:$0xff]
  %v1922 = vld [vmem:[%s5 + $0xb8] sm:$0xff]
  %v1923 = vld [vmem:[%s5 + $0xc0] sm:$0xff]
  %v1924 = vld [vmem:[%s5 + $0xc8] sm:$0xff]
  %v1925 = vld [vmem:[%s5 + $0xd0] sm:$0xff]
  %v1926 = vld [vmem:[%s5 + $0xd8] sm:$0xff]
  %v1927 = vld [vmem:[%s5 + $0xe0] sm:$0xff]
  %v1928 = vld [vmem:[%s5 + $0xe8] sm:$0xff]
  %v1929 = vld [vmem:[%s5 + $0xf0] sm:$0xff]
  %v1930 = vld [vmem:[%s5 + $0xf8] sm:$0xff]
  %v1931 = vld [vmem:[%s6] sm:$0xf]
  %v1932 = vld [vmem:[#allocation2] sm:$0xff]
  %v1933 = vld [vmem:[#allocation2 + $0x8] sm:$0xff]
  %v1934 = vld [vmem:[#allocation2 + $0x10] sm:$0xff]
  %v1935 = vld [vmem:[#allocation2 + $0x18] sm:$0xff]
  %v1936 = vld [vmem:[#allocation2 + $0x20] sm:$0xff]
  %v1937 = vld [vmem:[#allocation2 + $0x28] sm:$0xff]
  %v1938 = vld [vmem:[#allocation2 + $0x30] sm:$0xff]
  %v1939 = vld [vmem:[#allocation2 + $0x38] sm:$0xff]
  %v1940 = vld [vmem:[%s4] sm:$0xff]
  %v1941 = vld [vmem:[%s4 + $0x8] sm:$0xff]
  %v1942 = vld [vmem:[%s4 + $0x10] sm:$0xff]
  %v1943 = vld [vmem:[%s4 + $0x18] sm:$0xff]
  %v1944 = vld [vmem:[%s4 + $0x20] sm:$0xff]
  %v1945 = vld [vmem:[%s4 + $0x28] sm:$0xff]
  %v1946 = vld [vmem:[%s4 + $0x30] sm:$0xff]
  %v1947 = vld [vmem:[%s4 + $0x38] sm:$0xff]
  %v1948 = vld [vmem:[%s4 + $0x40] sm:$0xff]
  %v1949 = vld [vmem:[%s4 + $0x48] sm:$0xff]
  %v1950 = vld [vmem:[%s4 + $0x50] sm:$0xff]
  %v1951 = vld [vmem:[%s4 + $0x58] sm:$0xff]
  %v1952 = vld [vmem:[%s4 + $0x60] sm:$0xff]
  %v1953 = vld [vmem:[%s4 + $0x68] sm:$0xff]
  %v1954 = vld [vmem:[%s4 + $0x70] sm:$0xff]
  %v1955 = vld [vmem:[%s4 + $0x78] sm:$0xff]
  %v1956 = vld [vmem:[%s4 + $0x80] sm:$0xff]
  %v1957 = vld [vmem:[%s4 + $0x88] sm:$0xff]
  %v1958 = vld [vmem:[%s4 + $0x90] sm:$0xff]
  %v1959 = vld [vmem:[%s4 + $0x98] sm:$0xff]
  %v1960 = vld [vmem:[%s4 + $0xa0] sm:$0xff]
  %v1961 = vld [vmem:[%s4 + $0xa8] sm:$0xff]
  %v1962 = vld [vmem:[%s4 + $0xb0] sm:$0xff]
  %v1963 = vld [vmem:[%s4 + $0xb8] sm:$0xff]
  %v1964 = vld [vmem:[%s4 + $0xc0] sm:$0xff]
  %v1965 = vld [vmem:[%s4 + $0xc8] sm:$0xff]
  %v1966 = vld [vmem:[%s4 + $0xd0] sm:$0xff]
  %v1967 = vld [vmem:[%s4 + $0xd8] sm:$0xff]
  %v1968 = vld [vmem:[%s4 + $0xe0] sm:$0xff]
  %v1969 = vld [vmem:[%s4 + $0xe8] sm:$0xff]
  %v1970 = vld [vmem:[%s4 + $0xf0] sm:$0xff]
  %v1971 = vld [vmem:[%s4 + $0xf8] sm:$0xff]
  %v1973 = vlaneseq
  %v1974 = vshrl.u32 %v1973, 7
  %v1975 = vsub.s32 0, %v1974
  %v1976 = vrot.slane %v1931, %v1975
  %v1977 = vlaneseq
  %v1978 = vshrl.u32 %v1977, 7
  %v1979 = vsub.s32 1, %v1978
  %v1980 = vrot.slane %v1931, %v1979
  %v1981 = vlaneseq
  %v1982 = vshrl.u32 %v1981, 7
  %v1983 = vsub.s32 2, %v1982
  %v1984 = vrot.slane %v1931, %v1983
  %v1985 = vlaneseq
  %v1986 = vshrl.u32 %v1985, 7
  %v1987 = vsub.s32 3, %v1986
  %v1988 = vrot.slane %v1931, %v1987
  %v2025 = vunpack.c.l.b16 %v1940
  %v2026 = vunpack.c.h.b16 %v1940
  %v2027 = vunpack.c.l.b16 %v1941
  %v2028 = vunpack.c.h.b16 %v1941
  %v2029 = vunpack.c.l.b16 %v1942
  %v2030 = vunpack.c.h.b16 %v1942
  %v2031 = vunpack.c.l.b16 %v1943
  %v2032 = vunpack.c.h.b16 %v1943
  %v2033 = vunpack.c.l.b16 %v1944
  %v2034 = vunpack.c.h.b16 %v1944
  %v2035 = vunpack.c.l.b16 %v1945
  %v2036 = vunpack.c.h.b16 %v1945
  %v2037 = vunpack.c.l.b16 %v1946
  %v2038 = vunpack.c.h.b16 %v1946
  %v2039 = vunpack.c.l.b16 %v1947
  %v2040 = vunpack.c.h.b16 %v1947
  %v2041 = vunpack.c.l.b16 %v1948
  %v2042 = vunpack.c.h.b16 %v1948
  %v2043 = vunpack.c.l.b16 %v1949
  %v2044 = vunpack.c.h.b16 %v1949
  %v2045 = vunpack.c.l.b16 %v1950
  %v2046 = vunpack.c.h.b16 %v1950
  %v2047 = vunpack.c.l.b16 %v1951
  %v2048 = vunpack.c.h.b16 %v1951
  %v2049 = vunpack.c.l.b16 %v1952
  %v2050 = vunpack.c.h.b16 %v1952
  %v2051 = vunpack.c.l.b16 %v1953
  %v2052 = vunpack.c.h.b16 %v1953
  %v2053 = vunpack.c.l.b16 %v1954
  %v2054 = vunpack.c.h.b16 %v1954
  %v2055 = vunpack.c.l.b16 %v1955
  %v2056 = vunpack.c.h.b16 %v1955
  %v2057 = vunpack.c.l.b16 %v1956
  %v2058 = vunpack.c.h.b16 %v1956
  %v2059 = vunpack.c.l.b16 %v1957
  %v2060 = vunpack.c.h.b16 %v1957
  %v2061 = vunpack.c.l.b16 %v1958
  %v2062 = vunpack.c.h.b16 %v1958
  %v2063 = vunpack.c.l.b16 %v1959
  %v2064 = vunpack.c.h.b16 %v1959
  %v2065 = vunpack.c.l.b16 %v1960
  %v2066 = vunpack.c.h.b16 %v1960
  %v2067 = vunpack.c.l.b16 %v1961
  %v2068 = vunpack.c.h.b16 %v1961
  %v2069 = vunpack.c.l.b16 %v1962
  %v2070 = vunpack.c.h.b16 %v1962
  %v2071 = vunpack.c.l.b16 %v1963
  %v2072 = vunpack.c.h.b16 %v1963
  %v2073 = vunpack.c.l.b16 %v1964
  %v2074 = vunpack.c.h.b16 %v1964
  %v2075 = vunpack.c.l.b16 %v1965
  %v2076 = vunpack.c.h.b16 %v1965
  %v2077 = vunpack.c.l.b16 %v1966
  %v2078 = vunpack.c.h.b16 %v1966
  %v2079 = vunpack.c.l.b16 %v1967
  %v2080 = vunpack.c.h.b16 %v1967
  %v2081 = vunpack.c.l.b16 %v1968
  %v2082 = vunpack.c.h.b16 %v1968
  %v2083 = vunpack.c.l.b16 %v1969
  %v2084 = vunpack.c.h.b16 %v1969
  %v2085 = vunpack.c.l.b16 %v1970
  %v2086 = vunpack.c.h.b16 %v1970
  %v2087 = vunpack.c.l.b16 %v1971
  %v2088 = vunpack.c.h.b16 %v1971
  %v2089 = vpack.c.b16 %v2029, %v2025
  %v2090 = vpack.c.b16 %v2030, %v2026
  %v2091 = vpack.c.b16 %v2031, %v2027
  %v2092 = vpack.c.b16 %v2032, %v2028
  %v2093 = vpack.c.b16 %v2037, %v2033
  %v2094 = vpack.c.b16 %v2038, %v2034
  %v2095 = vpack.c.b16 %v2039, %v2035
  %v2096 = vpack.c.b16 %v2040, %v2036
  %v2097 = vpack.c.b16 %v2045, %v2041
  %v2098 = vpack.c.b16 %v2046, %v2042
  %v2099 = vpack.c.b16 %v2047, %v2043
  %v2100 = vpack.c.b16 %v2048, %v2044
  %v2101 = vpack.c.b16 %v2053, %v2049
  %v2102 = vpack.c.b16 %v2054, %v2050
  %v2103 = vpack.c.b16 %v2055, %v2051
  %v2104 = vpack.c.b16 %v2056, %v2052
  %v2105 = vpack.c.b16 %v2061, %v2057
  %v2106 = vpack.c.b16 %v2062, %v2058
  %v2107 = vpack.c.b16 %v2063, %v2059
  %v2108 = vpack.c.b16 %v2064, %v2060
  %v2109 = vpack.c.b16 %v2069, %v2065
  %v2110 = vpack.c.b16 %v2070, %v2066
  %v2111 = vpack.c.b16 %v2071, %v2067
  %v2112 = vpack.c.b16 %v2072, %v2068
  %v2113 = vpack.c.b16 %v2077, %v2073
  %v2114 = vpack.c.b16 %v2078, %v2074
  %v2115 = vpack.c.b16 %v2079, %v2075
  %v2116 = vpack.c.b16 %v2080, %v2076
  %v2117 = vpack.c.b16 %v2085, %v2081
  %v2118 = vpack.c.b16 %v2086, %v2082
  %v2119 = vpack.c.b16 %v2087, %v2083
  %v2120 = vpack.c.b16 %v2088, %v2084
  %2153 = vmatprep.subr.bf16.mxu0 %v2090
  %2154 = vmatpush1.bf16.msra.mxu0 %v2089
  %2155 = vmatprep.subr.bf16.mxu0 %v2094
  %2156 = vmatpush1.bf16.msra.mxu0 %v2093
  %2157 = vmatprep.subr.bf16.mxu0 %v2098
  %2158 = vmatpush1.bf16.msra.mxu0 %v2097
  %2159 = vmatprep.subr.bf16.mxu0 %v2102
  %2160 = vmatpush1.bf16.msra.mxu0 %v2101
  %2161 = vmatprep.subr.bf16.mxu0 %v2106
  %2162 = vmatpush1.bf16.msra.mxu0 %v2105
  %2163 = vmatprep.subr.bf16.mxu0 %v2110
  %2164 = vmatpush1.bf16.msra.mxu0 %v2109
  %2165 = vmatprep.subr.bf16.mxu0 %v2114
  %2166 = vmatpush1.bf16.msra.mxu0 %v2113
  %2167 = vmatprep.subr.bf16.mxu0 %v2118
  %2168 = vmatpush1.bf16.msra.mxu0 %v2117
  %2169 = vmatprep.subr.bf16.mxu0 0
  %2170 = vmatpush1.bf16.msra.mxu0 0
  %2171 = vmatprep.subr.bf16.mxu0 0
  %2172 = vmatpush1.bf16.msra.mxu0 0
  %2173 = vmatprep.subr.bf16.mxu0 0
  %2174 = vmatpush1.bf16.msra.mxu0 0
  %2175 = vmatprep.subr.bf16.mxu0 0
  %2176 = vmatpush1.bf16.msra.mxu0 0
  %2177 = vmatprep.subr.bf16.mxu0 0
  %2178 = vmatpush1.bf16.msra.mxu0 0
  %2179 = vmatprep.subr.bf16.mxu0 0
  %2180 = vmatpush1.bf16.msra.mxu0 0
  %2181 = vmatprep.subr.bf16.mxu0 0
  %2182 = vmatpush1.bf16.msra.mxu0 0
  %2183 = vmatprep.subr.bf16.mxu0 0
  %2184 = vmatpush1.bf16.msra.mxu0 0
  %2185 = vmatprep.mubr.bf16.mxu0 0
  %2186 = vmatmul.mubr.bf16.gmra.mrb[0].mxu0 %v1932
  %v2187 = vpop.f32.mrb[0].mxu0
  %v2188 = vadd.f32 %v1976, %v2187
  %v2189 = vpop.f32.mrb[0].mxu0
  %v2190 = vadd.f32 %v1980, %v2189
  %v2191 = vpop.f32.mrb[0].mxu0
  %v2192 = vadd.f32 %v1976, %v2191
  %v2193 = vpop.f32.mrb[0].mxu0
  %v2194 = vadd.f32 %v1980, %v2193
  %2195 = vmatprep.mubr.bf16.mxu0 0
  %2196 = vmatmul.mubr.bf16.gmra.mrb[0].mxu0 %v1933
  %v2197 = vpop.f32.mrb[0].mxu0
  %v2198 = vadd.f32 %v1976, %v2197
  %v2199 = vpop.f32.mrb[0].mxu0
  %v2200 = vadd.f32 %v1980, %v2199
  %v2201 = vpop.f32.mrb[0].mxu0
  %v2202 = vadd.f32 %v1976, %v2201
  %v2203 = vpop.f32.mrb[0].mxu0
  %v2204 = vadd.f32 %v1980, %v2203
  %2205 = vmatprep.mubr.bf16.mxu0 0
  %2206 = vmatmul.mubr.bf16.gmra.mrb[0].mxu0 %v1934
  %v2207 = vpop.f32.mrb[0].mxu0
  %v2208 = vadd.f32 %v1976, %v2207
  %v2209 = vpop.f32.mrb[0].mxu0
  %v2210 = vadd.f32 %v1980, %v2209
  %v2211 = vpop.f32.mrb[0].mxu0
  %v2212 = vadd.f32 %v1976, %v2211
  %v2213 = vpop.f32.mrb[0].mxu0
  %v2214 = vadd.f32 %v1980, %v2213
  %2215 = vmatprep.mubr.bf16.mxu0 0
  %2216 = vmatmul.mubr.bf16.gmra.mrb[0].mxu0 %v1935
  %v2217 = vpop.f32.mrb[0].mxu0
  %v2218 = vadd.f32 %v1976, %v2217
  %v2219 = vpop.f32.mrb[0].mxu0
  %v2220 = vadd.f32 %v1980, %v2219
  %v2221 = vpop.f32.mrb[0].mxu0
  %v2222 = vadd.f32 %v1976, %v2221
  %v2223 = vpop.f32.mrb[0].mxu0
  %v2224 = vadd.f32 %v1980, %v2223
  %2225 = vmatprep.mubr.bf16.mxu0 0
  %2226 = vmatmul.mubr.bf16.gmra.mrb[0].mxu0 %v1936
  %v2227 = vpop.f32.mrb[0].mxu0
  %v2228 = vadd.f32 %v1976, %v2227
  %v2229 = vpop.f32.mrb[0].mxu0
  %v2230 = vadd.f32 %v1980, %v2229
  %v2231 = vpop.f32.mrb[0].mxu0
  %v2232 = vadd.f32 %v1976, %v2231
  %v2233 = vpop.f32.mrb[0].mxu0
  %v2234 = vadd.f32 %v1980, %v2233
  %2235 = vmatprep.mubr.bf16.mxu0 0
  %2236 = vmatmul.mubr.bf16.gmra.mrb[0].mxu0 %v1937
  %v2237 = vpop.f32.mrb[0].mxu0
  %v2238 = vadd.f32 %v1976, %v2237
  %v2239 = vpop.f32.mrb[0].mxu0
  %v2240 = vadd.f32 %v1980, %v2239
  %v2241 = vpop.f32.mrb[0].mxu0
  %v2242 = vadd.f32 %v1976, %v2241
  %v2243 = vpop.f32.mrb[0].mxu0
  %v2244 = vadd.f32 %v1980, %v2243
  %2245 = vmatprep.mubr.bf16.mxu0 0
  %2246 = vmatmul.mubr.bf16.gmra.mrb[0].mxu0 %v1938
  %v2247 = vpop.f32.mrb[0].mxu0
  %v2248 = vadd.f32 %v1976, %v2247
  %v2249 = vpop.f32.mrb[0].mxu0
  %v2250 = vadd.f32 %v1980, %v2249
  %v2251 = vpop.f32.mrb[0].mxu0
  %v2252 = vadd.f32 %v1976, %v2251
  %v2253 = vpop.f32.mrb[0].mxu0
  %v2254 = vadd.f32 %v1980, %v2253
  %2255 = vmatprep.mubr.bf16.mxu0 0
  %2256 = vmatmul.mubr.bf16.gmra.mrb[0].mxu0 %v1939
  %v2257 = vpop.f32.mrb[0].mxu0
  %v2258 = vadd.f32 %v1976, %v2257
  %v2259 = vpop.f32.mrb[0].mxu0
  %v2260 = vadd.f32 %v1980, %v2259
  %v2261 = vpop.f32.mrb[0].mxu0
  %v2262 = vadd.f32 %v1976, %v2261
  %v2263 = vpop.f32.mrb[0].mxu0
  %v2264 = vadd.f32 %v1980, %v2263
  %2265 = vdwg.mxu0
  %2266 = vmatprep.subr.bf16.mxu0 %v2092
  %2267 = vmatpush1.bf16.msra.mxu0 %v2091
  %2268 = vmatprep.subr.bf16.mxu0 %v2096
  %2269 = vmatpush1.bf16.msra.mxu0 %v2095
  %2270 = vmatprep.subr.bf16.mxu0 %v2100
  %2271 = vmatpush1.bf16.msra.mxu0 %v2099
  %2272 = vmatprep.subr.bf16.mxu0 %v2104
  %2273 = vmatpush1.bf16.msra.mxu0 %v2103
  %2274 = vmatprep.subr.bf16.mxu0 %v2108
  %2275 = vmatpush1.bf16.msra.mxu0 %v2107
  %2276 = vmatprep.subr.bf16.mxu0 %v2112
  %2277 = vmatpush1.bf16.msra.mxu0 %v2111
  %2278 = vmatprep.subr.bf16.mxu0 %v2116
  %2279 = vmatpush1.bf16.msra.mxu0 %v2115
  %2280 = vmatprep.subr.bf16.mxu0 %v2120
  %2281 = vmatpush1.bf16.msra.mxu0 %v2119
  %2282 = vmatprep.subr.bf16.mxu0 0
  %2283 = vmatpush1.bf16.msra.mxu0 0
  %2284 = vmatprep.subr.bf16.mxu0 0
  %2285 = vmatpush1.bf16.msra.mxu0 0
  %2286 = vmatprep.subr.bf16.mxu0 0
  %2287 = vmatpush1.bf16.msra.mxu0 0
  %2288 = vmatprep.subr.bf16.mxu0 0
  %2289 = vmatpush1.bf16.msra.mxu0 0
  %2290 = vmatprep.subr.bf16.mxu0 0
  %2291 = vmatpush1.bf16.msra.mxu0 0
  %2292 = vmatprep.subr.bf16.mxu0 0
  %2293 = vmatpush1.bf16.msra.mxu0 0
  %2294 = vmatprep.subr.bf16.mxu0 0
  %2295 = vmatpush1.bf16.msra.mxu0 0
  %2296 = vmatprep.subr.bf16.mxu0 0
  %2297 = vmatpush1.bf16.msra.mxu0 0
  %2298 = vmatprep.mubr.bf16.mxu0 0
  %2299 = vmatmul.mubr.bf16.gmra.mrb[0].mxu0 %v1932
  %v2300 = vpop.f32.mrb[0].mxu0
  %v2301 = vadd.f32 %v1984, %v2300
  %v2302 = vpop.f32.mrb[0].mxu0
  %v2303 = vadd.f32 %v1988, %v2302
  %v2304 = vpop.f32.mrb[0].mxu0
  %v2305 = vadd.f32 %v1984, %v2304
  %v2306 = vpop.f32.mrb[0].mxu0
  %v2307 = vadd.f32 %v1988, %v2306
  %2308 = vmatprep.mubr.bf16.mxu0 0
  %2309 = vmatmul.mubr.bf16.gmra.mrb[0].mxu0 %v1933
  %v2310 = vpop.f32.mrb[0].mxu0
  %v2311 = vadd.f32 %v1984, %v2310
  %v2312 = vpop.f32.mrb[0].mxu0
  %v2313 = vadd.f32 %v1988, %v2312
  %v2314 = vpop.f32.mrb[0].mxu0
  %v2315 = vadd.f32 %v1984, %v2314
  %v2316 = vpop.f32.mrb[0].mxu0
  %v2317 = vadd.f32 %v1988, %v2316
  %2318 = vmatprep.mubr.bf16.mxu0 0
  %2319 = vmatmul.mubr.bf16.gmra.mrb[0].mxu0 %v1934
  %v2320 = vpop.f32.mrb[0].mxu0
  %v2321 = vadd.f32 %v1984, %v2320
  %v2322 = vpop.f32.mrb[0].mxu0
  %v2323 = vadd.f32 %v1988, %v2322
  %v2324 = vpop.f32.mrb[0].mxu0
  %v2325 = vadd.f32 %v1984, %v2324
  %v2326 = vpop.f32.mrb[0].mxu0
  %v2327 = vadd.f32 %v1988, %v2326
  %2328 = vmatprep.mubr.bf16.mxu0 0
  %2329 = vmatmul.mubr.bf16.gmra.mrb[0].mxu0 %v1935
  %v2330 = vpop.f32.mrb[0].mxu0
  %v2331 = vadd.f32 %v1984, %v2330
  %v2332 = vpop.f32.mrb[0].mxu0
  %v2333 = vadd.f32 %v1988, %v2332
  %v2334 = vpop.f32.mrb[0].mxu0
  %v2335 = vadd.f32 %v1984, %v2334
  %v2336 = vpop.f32.mrb[0].mxu0
  %v2337 = vadd.f32 %v1988, %v2336
  %2338 = vmatprep.mubr.bf16.mxu0 0
  %2339 = vmatmul.mubr.bf16.gmra.mrb[0].mxu0 %v1936
  %v2340 = vpop.f32.mrb[0].mxu0
  %v2341 = vadd.f32 %v1984, %v2340
  %v2342 = vpop.f32.mrb[0].mxu0
  %v2343 = vadd.f32 %v1988, %v2342
  %v2344 = vpop.f32.mrb[0].mxu0
  %v2345 = vadd.f32 %v1984, %v2344
  %v2346 = vpop.f32.mrb[0].mxu0
  %v2347 = vadd.f32 %v1988, %v2346
  %2348 = vmatprep.mubr.bf16.mxu0 0
  %2349 = vmatmul.mubr.bf16.gmra.mrb[0].mxu0 %v1937
  %v2350 = vpop.f32.mrb[0].mxu0
  %v2351 = vadd.f32 %v1984, %v2350
  %v2352 = vpop.f32.mrb[0].mxu0
  %v2353 = vadd.f32 %v1988, %v2352
  %v2354 = vpop.f32.mrb[0].mxu0
  %v2355 = vadd.f32 %v1984, %v2354
  %v2356 = vpop.f32.mrb[0].mxu0
  %v2357 = vadd.f32 %v1988, %v2356
  %2358 = vmatprep.mubr.bf16.mxu0 0
  %2359 = vmatmul.mubr.bf16.gmra.mrb[0].mxu0 %v1938
  %v2360 = vpop.f32.mrb[0].mxu0
  %v2361 = vadd.f32 %v1984, %v2360
  %v2362 = vpop.f32.mrb[0].mxu0
  %v2363 = vadd.f32 %v1988, %v2362
  %v2364 = vpop.f32.mrb[0].mxu0
  %v2365 = vadd.f32 %v1984, %v2364
  %v2366 = vpop.f32.mrb[0].mxu0
  %v2367 = vadd.f32 %v1988, %v2366
  %2368 = vmatprep.mubr.bf16.mxu0 0
  %2369 = vmatmul.mubr.bf16.gmra.mrb[0].mxu0 %v1939
  %v2370 = vpop.f32.mrb[0].mxu0
  %v2371 = vadd.f32 %v1984, %v2370
  %v2372 = vpop.f32.mrb[0].mxu0
  %v2373 = vadd.f32 %v1988, %v2372
  %v2374 = vpop.f32.mrb[0].mxu0
  %v2375 = vadd.f32 %v1984, %v2374
  %v2376 = vpop.f32.mrb[0].mxu0
  %v2377 = vadd.f32 %v1988, %v2376
  %2378 = vdwg.mxu0
  %2379 = vst [vmem:[#allocation3] sm:$0xff] %v2188
  %2380 = vst [vmem:[#allocation3 + $0x8] sm:$0xff] %v2190
  %2381 = vst [vmem:[#allocation3 + $0x10] sm:$0xff] %v2301
  %2382 = vst [vmem:[#allocation3 + $0x18] sm:$0xff] %v2303
  %2383 = vst [vmem:[#allocation3 + $0x20] sm:$0xff] %v2192
  %2384 = vst [vmem:[#allocation3 + $0x28] sm:$0xff] %v2194
  %2385 = vst [vmem:[#allocation3 + $0x30] sm:$0xff] %v2305
  %2386 = vst [vmem:[#allocation3 + $0x38] sm:$0xff] %v2307
  %2387 = vst [vmem:[#allocation3 + $0x40] sm:$0xff] %v2198
  %2388 = vst [vmem:[#allocation3 + $0x48] sm:$0xff] %v2200
  %2389 = vst [vmem:[#allocation3 + $0x50] sm:$0xff] %v2311
  %2390 = vst [vmem:[#allocation3 + $0x58] sm:$0xff] %v2313
  %2391 = vst [vmem:[#allocation3 + $0x60] sm:$0xff] %v2202
  %2392 = vst [vmem:[#allocation3 + $0x68] sm:$0xff] %v2204
  %2393 = vst [vmem:[#allocation3 + $0x70] sm:$0xff] %v2315
  %2394 = vst [vmem:[#allocation3 + $0x78] sm:$0xff] %v2317
  %2395 = vst [vmem:[#allocation3 + $0x80] sm:$0xff] %v2208
  %2396 = vst [vmem:[#allocation3 + $0x88] sm:$0xff] %v2210
  %2397 = vst [vmem:[#allocation3 + $0x90] sm:$0xff] %v2321
  %2398 = vst [vmem:[#allocation3 + $0x98] sm:$0xff] %v2323
  %2399 = vst [vmem:[#allocation3 + $0xa0] sm:$0xff] %v2212
  %2400 = vst [vmem:[#allocation3 + $0xa8] sm:$0xff] %v2214
  %2401 = vst [vmem:[#allocation3 + $0xb0] sm:$0xff] %v2325
  %2402 = vst [vmem:[#allocation3 + $0xb8] sm:$0xff] %v2327
  %2403 = vst [vmem:[#allocation3 + $0xc0] sm:$0xff] %v2218
  %2404 = vst [vmem:[#allocation3 + $0xc8] sm:$0xff] %v2220
  %2405 = vst [vmem:[#allocation3 + $0xd0] sm:$0xff] %v2331
  %2406 = vst [vmem:[#allocation3 + $0xd8] sm:$0xff] %v2333
  %2407 = vst [vmem:[#allocation3 + $0xe0] sm:$0xff] %v2222
  %2408 = vst [vmem:[#allocation3 + $0xe8] sm:$0xff] %v2224
  %2409 = vst [vmem:[#allocation3 + $0xf0] sm:$0xff] %v2335
  %2410 = vst [vmem:[#allocation3 + $0xf8] sm:$0xff] %v2337
  %2411 = vst [vmem:[#allocation3 + $0x100] sm:$0xff] %v2228
  %2412 = vst [vmem:[#allocation3 + $0x108] sm:$0xff] %v2230
  %2413 = vst [vmem:[#allocation3 + $0x110] sm:$0xff] %v2341
  %2414 = vst [vmem:[#allocation3 + $0x118] sm:$0xff] %v2343
  %2415 = vst [vmem:[#allocation3 + $0x120] sm:$0xff] %v2232
  %2416 = vst [vmem:[#allocation3 + $0x128] sm:$0xff] %v2234
  %2417 = vst [vmem:[#allocation3 + $0x130] sm:$0xff] %v2345
  %2418 = vst [vmem:[#allocation3 + $0x138] sm:$0xff] %v2347
  %2419 = vst [vmem:[#allocation3 + $0x140] sm:$0xff] %v2238
  %2420 = vst [vmem:[#allocation3 + $0x148] sm:$0xff] %v2240
  %2421 = vst [vmem:[#allocation3 + $0x150] sm:$0xff] %v2351
  %2422 = vst [vmem:[#allocation3 + $0x158] sm:$0xff] %v2353
  %2423 = vst [vmem:[#allocation3 + $0x160] sm:$0xff] %v2242
  %2424 = vst [vmem:[#allocation3 + $0x168] sm:$0xff] %v2244
  %2425 = vst [vmem:[#allocation3 + $0x170] sm:$0xff] %v2355
  %2426 = vst [vmem:[#allocation3 + $0x178] sm:$0xff] %v2357
  %2427 = vst [vmem:[#allocation3 + $0x180] sm:$0xff] %v2248
  %2428 = vst [vmem:[#allocation3 + $0x188] sm:$0xff] %v2250
  %2429 = vst [vmem:[#allocation3 + $0x190] sm:$0xff] %v2361
  %2430 = vst [vmem:[#allocation3 + $0x198] sm:$0xff] %v2363
  %2431 = vst [vmem:[#allocation3 + $0x1a0] sm:$0xff] %v2252
  %2432 = vst [vmem:[#allocation3 + $0x1a8] sm:$0xff] %v2254
  %2433 = vst [vmem:[#allocation3 + $0x1b0] sm:$0xff] %v2365
  %2434 = vst [vmem:[#allocation3 + $0x1b8] sm:$0xff] %v2367
  %2435 = vst [vmem:[#allocation3 + $0x1c0] sm:$0xff] %v2258
  %2436 = vst [vmem:[#allocation3 + $0x1c8] sm:$0xff] %v2260
  %2437 = vst [vmem:[#allocation3 + $0x1d0] sm:$0xff] %v2371
  %2438 = vst [vmem:[#allocation3 + $0x1d8] sm:$0xff] %v2373
  %2439 = vst [vmem:[#allocation3 + $0x1e0] sm:$0xff] %v2262
  %2440 = vst [vmem:[#allocation3 + $0x1e8] sm:$0xff] %v2264
  %2441 = vst [vmem:[#allocation3 + $0x1f0] sm:$0xff] %v2375
  %2442 = vst [vmem:[#allocation3 + $0x1f8] sm:$0xff] %v2377
  %v2443 = vld [vmem:[%s494] sm:$0xff]
  %v2444 = vld [vmem:[%s494 + $0x8] sm:$0xff]
  %v2445 = vld [vmem:[%s494 + $0x10] sm:$0xff]
  %v2446 = vld [vmem:[%s494 + $0x18] sm:$0xff]
  %v2447 = vld [vmem:[%s494 + $0x20] sm:$0xff]
  %v2448 = vld [vmem:[%s494 + $0x28] sm:$0xff]
  %v2449 = vld [vmem:[%s494 + $0x30] sm:$0xff]
  %v2450 = vld [vmem:[%s494 + $0x38] sm:$0xff]
  %v2483 = vunpack.c.l.b16 %v1899
  %v2484 = vunpack.c.h.b16 %v1899
  %v2485 = vunpack.c.l.b16 %v1900
  %v2486 = vunpack.c.h.b16 %v1900
  %v2487 = vunpack.c.l.b16 %v1901
  %v2488 = vunpack.c.h.b16 %v1901
  %v2489 = vunpack.c.l.b16 %v1902
  %v2490 = vunpack.c.h.b16 %v1902
  %v2491 = vunpack.c.l.b16 %v1903
  %v2492 = vunpack.c.h.b16 %v1903
  %v2493 = vunpack.c.l.b16 %v1904
  %v2494 = vunpack.c.h.b16 %v1904
  %v2495 = vunpack.c.l.b16 %v1905
  %v2496 = vunpack.c.h.b16 %v1905
  %v2497 = vunpack.c.l.b16 %v1906
  %v2498 = vunpack.c.h.b16 %v1906
  %v2499 = vunpack.c.l.b16 %v1907
  %v2500 = vunpack.c.h.b16 %v1907
  %v2501 = vunpack.c.l.b16 %v1908
  %v2502 = vunpack.c.h.b16 %v1908
  %v2503 = vunpack.c.l.b16 %v1909
  %v2504 = vunpack.c.h.b16 %v1909
  %v2505 = vunpack.c.l.b16 %v1910
  %v2506 = vunpack.c.h.b16 %v1910
  %v2507 = vunpack.c.l.b16 %v1911
  %v2508 = vunpack.c.h.b16 %v1911
  %v2509 = vunpack.c.l.b16 %v1912
  %v2510 = vunpack.c.h.b16 %v1912
  %v2511 = vunpack.c.l.b16 %v1913
  %v2512 = vunpack.c.h.b16 %v1913
  %v2513 = vunpack.c.l.b16 %v1914
  %v2514 = vunpack.c.h.b16 %v1914
  %v2515 = vunpack.c.l.b16 %v1915
  %v2516 = vunpack.c.h.b16 %v1915
  %v2517 = vunpack.c.l.b16 %v1916
  %v2518 = vunpack.c.h.b16 %v1916
  %v2519 = vunpack.c.l.b16 %v1917
  %v2520 = vunpack.c.h.b16 %v1917
  %v2521 = vunpack.c.l.b16 %v1918
  %v2522 = vunpack.c.h.b16 %v1918
  %v2523 = vunpack.c.l.b16 %v1919
  %v2524 = vunpack.c.h.b16 %v1919
  %v2525 = vunpack.c.l.b16 %v1920
  %v2526 = vunpack.c.h.b16 %v1920
  %v2527 = vunpack.c.l.b16 %v1921
  %v2528 = vunpack.c.h.b16 %v1921
  %v2529 = vunpack.c.l.b16 %v1922
  %v2530 = vunpack.c.h.b16 %v1922
  %v2531 = vunpack.c.l.b16 %v1923
  %v2532 = vunpack.c.h.b16 %v1923
  %v2533 = vunpack.c.l.b16 %v1924
  %v2534 = vunpack.c.h.b16 %v1924
  %v2535 = vunpack.c.l.b16 %v1925
  %v2536 = vunpack.c.h.b16 %v1925
  %v2537 = vunpack.c.l.b16 %v1926
  %v2538 = vunpack.c.h.b16 %v1926
  %v2539 = vunpack.c.l.b16 %v1927
  %v2540 = vunpack.c.h.b16 %v1927
  %v2541 = vunpack.c.l.b16 %v1928
  %v2542 = vunpack.c.h.b16 %v1928
  %v2543 = vunpack.c.l.b16 %v1929
  %v2544 = vunpack.c.h.b16 %v1929
  %v2545 = vunpack.c.l.b16 %v1930
  %v2546 = vunpack.c.h.b16 %v1930
  %v2547 = vpack.c.b16 %v2487, %v2483
  %v2548 = vpack.c.b16 %v2488, %v2484
  %v2549 = vpack.c.b16 %v2489, %v2485
  %v2550 = vpack.c.b16 %v2490, %v2486
  %v2551 = vpack.c.b16 %v2495, %v2491
  %v2552 = vpack.c.b16 %v2496, %v2492
  %v2553 = vpack.c.b16 %v2497, %v2493
  %v2554 = vpack.c.b16 %v2498, %v2494
  %v2555 = vpack.c.b16 %v2503, %v2499
  %v2556 = vpack.c.b16 %v2504, %v2500
  %v2557 = vpack.c.b16 %v2505, %v2501
  %v2558 = vpack.c.b16 %v2506, %v2502
  %v2559 = vpack.c.b16 %v2511, %v2507
  %v2560 = vpack.c.b16 %v2512, %v2508
  %v2561 = vpack.c.b16 %v2513, %v2509
  %v2562 = vpack.c.b16 %v2514, %v2510
  %v2563 = vpack.c.b16 %v2519, %v2515
  %v2564 = vpack.c.b16 %v2520, %v2516
  %v2565 = vpack.c.b16 %v2521, %v2517
  %v2566 = vpack.c.b16 %v2522, %v2518
  %v2567 = vpack.c.b16 %v2527, %v2523
  %v2568 = vpack.c.b16 %v2528, %v2524
  %v2569 = vpack.c.b16 %v2529, %v2525
  %v2570 = vpack.c.b16 %v2530, %v2526
  %v2571 = vpack.c.b16 %v2535, %v2531
  %v2572 = vpack.c.b16 %v2536, %v2532
  %v2573 = vpack.c.b16 %v2537, %v2533
  %v2574 = vpack.c.b16 %v2538, %v2534
  %v2575 = vpack.c.b16 %v2543, %v2539
  %v2576 = vpack.c.b16 %v2544, %v2540
  %v2577 = vpack.c.b16 %v2545, %v2541
  %v2578 = vpack.c.b16 %v2546, %v2542
  %2611 = vmatprep.subr.bf16.mxu0 %v2548
  %2612 = vmatpush1.bf16.msra.mxu0 %v2547
  %2613 = vmatprep.subr.bf16.mxu0 %v2552
  %2614 = vmatpush1.bf16.msra.mxu0 %v2551
  %2615 = vmatprep.subr.bf16.mxu0 %v2556
  %2616 = vmatpush1.bf16.msra.mxu0 %v2555
  %2617 = vmatprep.subr.bf16.mxu0 %v2560
  %2618 = vmatpush1.bf16.msra.mxu0 %v2559
  %2619 = vmatprep.subr.bf16.mxu0 %v2564
  %2620 = vmatpush1.bf16.msra.mxu0 %v2563
  %2621 = vmatprep.subr.bf16.mxu0 %v2568
  %2622 = vmatpush1.bf16.msra.mxu0 %v2567
  %2623 = vmatprep.subr.bf16.mxu0 %v2572
  %2624 = vmatpush1.bf16.msra.mxu0 %v2571
  %2625 = vmatprep.subr.bf16.mxu0 %v2576
  %2626 = vmatpush1.bf16.msra.mxu0 %v2575
  %2627 = vmatprep.subr.bf16.mxu0 0
  %2628 = vmatpush1.bf16.msra.mxu0 0
  %2629 = vmatprep.subr.bf16.mxu0 0
  %2630 = vmatpush1.bf16.msra.mxu0 0
  %2631 = vmatprep.subr.bf16.mxu0 0
  %2632 = vmatpush1.bf16.msra.mxu0 0
  %2633 = vmatprep.subr.bf16.mxu0 0
  %2634 = vmatpush1.bf16.msra.mxu0 0
  %2635 = vmatprep.subr.bf16.mxu0 0
  %2636 = vmatpush1.bf16.msra.mxu0 0
  %2637 = vmatprep.subr.bf16.mxu0 0
  %2638 = vmatpush1.bf16.msra.mxu0 0
  %2639 = vmatprep.subr.bf16.mxu0 0
  %2640 = vmatpush1.bf16.msra.mxu0 0
  %2641 = vmatprep.subr.bf16.mxu0 0
  %2642 = vmatpush1.bf16.msra.mxu0 0
  %2643 = vmatprep.mubr.bf16.mxu0 0
  %2644 = vmatmul.mubr.bf16.gmra.mrb[0].mxu0 0
  %v2645 = vpop.f32.mrb[0].mxu0
  %v2646 = vadd.f32 0.0, %v2645
  %v2647 = vpop.f32.mrb[0].mxu0
  %v2648 = vadd.f32 0.0, %v2647
  %v2649 = vpop.f32.mrb[0].mxu0
  %v2650 = vadd.f32 0.0, %v2649
  %v2651 = vpop.f32.mrb[0].mxu0
  %v2652 = vadd.f32 0.0, %v2651
  %2653 = vdwg.mxu0
  %2654 = vmatprep.subr.bf16.mxu0 %v2550
  %2655 = vmatpush1.bf16.msra.mxu0 %v2549
  %2656 = vmatprep.subr.bf16.mxu0 %v2554
  %2657 = vmatpush1.bf16.msra.mxu0 %v2553
  %2658 = vmatprep.subr.bf16.mxu0 %v2558
  %2659 = vmatpush1.bf16.msra.mxu0 %v2557
  %2660 = vmatprep.subr.bf16.mxu0 %v2562
  %2661 = vmatpush1.bf16.msra.mxu0 %v2561
  %2662 = vmatprep.subr.bf16.mxu0 %v2566
  %2663 = vmatpush1.bf16.msra.mxu0 %v2565
  %2664 = vmatprep.subr.bf16.mxu0 %v2570
  %2665 = vmatpush1.bf16.msra.mxu0 %v2569
  %2666 = vmatprep.subr.bf16.mxu0 %v2574
  %2667 = vmatpush1.bf16.msra.mxu0 %v2573
  %2668 = vmatprep.subr.bf16.mxu0 %v2578
  %2669 = vmatpush1.bf16.msra.mxu0 %v2577
  %2670 = vmatprep.subr.bf16.mxu0 0
  %2671 = vmatpush1.bf16.msra.mxu0 0
  %2672 = vmatprep.subr.bf16.mxu0 0
  %2673 = vmatpush1.bf16.msra.mxu0 0
  %2674 = vmatprep.subr.bf16.mxu0 0
  %2675 = vmatpush1.bf16.msra.mxu0 0
  %2676 = vmatprep.subr.bf16.mxu0 0
  %2677 = vmatpush1.bf16.msra.mxu0 0
  %2678 = vmatprep.subr.bf16.mxu0 0
  %2679 = vmatpush1.bf16.msra.mxu0 0
  %2680 = vmatprep.subr.bf16.mxu0 0
  %2681 = vmatpush1.bf16.msra.mxu0 0
  %2682 = vmatprep.subr.bf16.mxu0 0
  %2683 = vmatpush1.bf16.msra.mxu0 0
  %2684 = vmatprep.subr.bf16.mxu0 0
  %2685 = vmatpush1.bf16.msra.mxu0 0
  %2686 = vmatprep.mubr.bf16.mxu0 0
  %2687 = vmatmul.mubr.bf16.gmra.mrb[0].mxu0 0
  %v2688 = vpop.f32.mrb[0].mxu0
  %v2689 = vadd.f32 0.0, %v2688
  %v2690 = vpop.f32.mrb[0].mxu0
  %v2691 = vadd.f32 0.0, %v2690
  %v2692 = vpop.f32.mrb[0].mxu0
  %v2693 = vadd.f32 0.0, %v2692
  %v2694 = vpop.f32.mrb[0].mxu0
  %v2695 = vadd.f32 0.0, %v2694
  %2696 = vdwg.mxu0
  %v2697 = vadd.f32 %v2443, %v2646
  %v2698 = vadd.f32 %v2444, %v2648
  %v2699 = vadd.f32 %v2445, %v2689
  %v2700 = vadd.f32 %v2446, %v2691
  %v2701 = vadd.f32 %v2447, %v2650
  %v2702 = vadd.f32 %v2448, %v2652
  %v2703 = vadd.f32 %v2449, %v2693
  %v2704 = vadd.f32 %v2450, %v2695
  %v2705 = vxor.u32 %v2697, 2147483648
  %v2706 = vxor.u32 %v2698, 2147483648
  %v2707 = vxor.u32 %v2699, 2147483648
  %v2708 = vxor.u32 %v2701, 2147483648
  %v2709 = vxor.u32 %v2702, 2147483648
  %v2710 = vxor.u32 %v2703, 2147483648
  %v2711 = vmul.f32 %v2705, 1.442695
  %v2712 = vpow.pop %v2711
  %v2713 = vmul.f32 %v2706, 1.442695
  %v2714 = vpow.pop %v2713
  %v2715 = vmul.f32 %v2707, 1.442695
  %v2716 = vpow.pop %v2715
  %v2717 = vmul.f32 %v2708, 1.442695
  %v2718 = vpow.pop %v2717
  %v2719 = vmul.f32 %v2709, 1.442695
  %v2720 = vpow.pop %v2719
  %v2721 = vmul.f32 %v2710, 1.442695
  %v2722 = vpow.pop %v2721
  %v2723 = vadd.f32 %v2712, 1.0
  %v2724 = vadd.f32 %v2714, 1.0
  %v2725 = vadd.f32 %v2716, 1.0
  %v2726 = vadd.f32 %v2718, 1.0
  %v2727 = vadd.f32 %v2720, 1.0
  %v2728 = vadd.f32 %v2722, 1.0
  %v2729 = vrcp.pop %v2723
  %v2730 = vmul.f32 1.0, %v2729
  %v2731 = vrcp.pop %v2724
  %v2732 = vmul.f32 1.0, %v2731
  %v2733 = vrcp.pop %v2725
  %v2734 = vmul.f32 1.0, %v2733
  %v2735 = vrcp.pop %v2726
  %v2736 = vmul.f32 1.0, %v2735
  %v2737 = vrcp.pop %v2727
  %v2738 = vmul.f32 1.0, %v2737
  %v2739 = vrcp.pop %v2728
  %v2740 = vmul.f32 1.0, %v2739
  %v2741 = vtanh.pop %v2700
  %v2742 = vtanh.pop %v2704
  %v2743 = vmul.f32 %v2732, 0.0
  %v2744 = vmul.f32 %v2738, 0.0
  %v2745 = vmul.f32 %v2730, %v2741
  %v2746 = vmul.f32 %v2736, %v2742
  %v2747 = vadd.f32 %v2743, %v2745
  %v2748 = vadd.f32 %v2744, %v2746
  %v2749 = vtanh.pop %v2747
  %v2750 = vtanh.pop %v2748
  %v2751 = vmul.f32 %v2734, %v2749
  %v2752 = vmul.f32 %v2740, %v2750
  %v2753 = vpack.c.bf16 %v2752, %v2751
  %2754 = vst [vmem:[#allocation2] sm:$0xff] %v2753
  %v2755 = vld [vmem:[%s809] sm:$0xff]
  %v2756 = vld [vmem:[%s809 + $0x8] sm:$0xff]
  %v2757 = vld [vmem:[%s809 + $0x10] sm:$0xff]
  %v2758 = vld [vmem:[%s809 + $0x18] sm:$0xff]
  %v2759 = vld [vmem:[%s809 + $0x20] sm:$0xff]
  %v2760 = vld [vmem:[%s809 + $0x28] sm:$0xff]
  %v2761 = vld [vmem:[%s809 + $0x30] sm:$0xff]
  %v2762 = vld [vmem:[%s809 + $0x38] sm:$0xff]
  %2763 = vmatprep.subr.bf16.mxu0 %v2548
  %2764 = vmatpush1.bf16.msra.mxu0 %v2547
  %2765 = vmatprep.subr.bf16.mxu0 %v2552
  %2766 = vmatpush1.bf16.msra.mxu0 %v2551
  %2767 = vmatprep.subr.bf16.mxu0 %v2556
  %2768 = vmatpush1.bf16.msra.mxu0 %v2555
  %2769 = vmatprep.subr.bf16.mxu0 %v2560
  %2770 = vmatpush1.bf16.msra.mxu0 %v2559
  %2771 = vmatprep.subr.bf16.mxu0 %v2564
  %2772 = vmatpush1.bf16.msra.mxu0 %v2563
  %2773 = vmatprep.subr.bf16.mxu0 %v2568
  %2774 = vmatpush1.bf16.msra.mxu0 %v2567
  %2775 = vmatprep.subr.bf16.mxu0 %v2572
  %2776 = vmatpush1.bf16.msra.mxu0 %v2571
  %2777 = vmatprep.subr.bf16.mxu0 %v2576
  %2778 = vmatpush1.bf16.msra.mxu0 %v2575
  %2779 = vmatprep.subr.bf16.mxu0 0
  %2780 = vmatpush1.bf16.msra.mxu0 0
  %2781 = vmatprep.subr.bf16.mxu0 0
  %2782 = vmatpush1.bf16.msra.mxu0 0
  %2783 = vmatprep.subr.bf16.mxu0 0
  %2784 = vmatpush1.bf16.msra.mxu0 0
  %2785 = vmatprep.subr.bf16.mxu0 0
  %2786 = vmatpush1.bf16.msra.mxu0 0
  %2787 = vmatprep.subr.bf16.mxu0 0
  %2788 = vmatpush1.bf16.msra.mxu0 0
  %2789 = vmatprep.subr.bf16.mxu0 0
  %2790 = vmatpush1.bf16.msra.mxu0 0
  %2791 = vmatprep.subr.bf16.mxu0 0
  %2792 = vmatpush1.bf16.msra.mxu0 0
  %2793 = vmatprep.subr.bf16.mxu0 0
  %2794 = vmatpush1.bf16.msra.mxu0 0
  %2795 = vmatprep.mubr.bf16.mxu0 0
  %2796 = vmatmul.mubr.bf16.gmra.mrb[0].mxu0 %v2753
  %v2797 = vpop.f32.mrb[0].mxu0
  %v2798 = vadd.f32 0.0, %v2797
  %v2799 = vpop.f32.mrb[0].mxu0
  %v2800 = vadd.f32 0.0, %v2799
  %v2801 = vpop.f32.mrb[0].mxu0
  %v2802 = vadd.f32 0.0, %v2801
  %v2803 = vpop.f32.mrb[0].mxu0
  %v2804 = vadd.f32 0.0, %v2803
  %2805 = vdwg.mxu0
  %2806 = vmatprep.subr.bf16.mxu0 %v2550
  %2807 = vmatpush1.bf16.msra.mxu0 %v2549
  %2808 = vmatprep.subr.bf16.mxu0 %v2554
  %2809 = vmatpush1.bf16.msra.mxu0 %v2553
  %2810 = vmatprep.subr.bf16.mxu0 %v2558
  %2811 = vmatpush1.bf16.msra.mxu0 %v2557
  %2812 = vmatprep.subr.bf16.mxu0 %v2562
  %2813 = vmatpush1.bf16.msra.mxu0 %v2561
  %2814 = vmatprep.subr.bf16.mxu0 %v2566
  %2815 = vmatpush1.bf16.msra.mxu0 %v2565
  %2816 = vmatprep.subr.bf16.mxu0 %v2570
  %2817 = vmatpush1.bf16.msra.mxu0 %v2569
  %2818 = vmatprep.subr.bf16.mxu0 %v2574
  %2819 = vmatpush1.bf16.msra.mxu0 %v2573
  %2820 = vmatprep.subr.bf16.mxu0 %v2578
  %2821 = vmatpush1.bf16.msra.mxu0 %v2577
  %2822 = vmatprep.subr.bf16.mxu0 0
  %2823 = vmatpush1.bf16.msra.mxu0 0
  %2824 = vmatprep.subr.bf16.mxu0 0
  %2825 = vmatpush1.bf16.msra.mxu0 0
  %2826 = vmatprep.subr.bf16.mxu0 0
  %2827 = vmatpush1.bf16.msra.mxu0 0
  %2828 = vmatprep.subr.bf16.mxu0 0
  %2829 = vmatpush1.bf16.msra.mxu0 0
  %2830 = vmatprep.subr.bf16.mxu0 0
  %2831 = vmatpush1.bf16.msra.mxu0 0
  %2832 = vmatprep.subr.bf16.mxu0 0
  %2833 = vmatpush1.bf16.msra.mxu0 0
  %2834 = vmatprep.subr.bf16.mxu0 0
  %2835 = vmatpush1.bf16.msra.mxu0 0
  %2836 = vmatprep.subr.bf16.mxu0 0
  %2837 = vmatpush1.bf16.msra.mxu0 0
  %2838 = vmatprep.mubr.bf16.mxu0 0
  %2839 = vmatmul.mubr.bf16.gmra.mrb[0].mxu0 %v2753
  %v2840 = vpop.f32.mrb[0].mxu0
  %v2841 = vadd.f32 0.0, %v2840
  %v2842 = vpop.f32.mrb[0].mxu0
  %v2843 = vadd.f32 0.0, %v2842
  %v2844 = vpop.f32.mrb[0].mxu0
  %v2845 = vadd.f32 0.0, %v2844
  %v2846 = vpop.f32.mrb[0].mxu0
  %v2847 = vadd.f32 0.0, %v2846
  %2848 = vdwg.mxu0
  %v2849 = vadd.f32 %v2755, %v2798
  %v2850 = vadd.f32 %v2756, %v2800
  %v2851 = vadd.f32 %v2757, %v2841
  %v2852 = vadd.f32 %v2758, %v2843
  %v2853 = vadd.f32 %v2759, %v2802
  %v2854 = vadd.f32 %v2760, %v2804
  %v2855 = vadd.f32 %v2761, %v2845
  %v2856 = vadd.f32 %v2762, %v2847
  %v2857 = vxor.u32 %v2849, 2147483648
  %v2858 = vxor.u32 %v2850, 2147483648
  %v2859 = vxor.u32 %v2851, 2147483648
  %v2860 = vxor.u32 %v2853, 2147483648
  %v2861 = vxor.u32 %v2854, 2147483648
  %v2862 = vxor.u32 %v2855, 2147483648
  %v2863 = vmul.f32 %v2857, 1.442695
  %v2864 = vpow.pop %v2863
  %v2865 = vmul.f32 %v2858, 1.442695
  %v2866 = vpow.pop %v2865
  %v2867 = vmul.f32 %v2859, 1.442695
  %v2868 = vpow.pop %v2867
  %v2869 = vmul.f32 %v2860, 1.442695
  %v2870 = vpow.pop %v2869
  %v2871 = vmul.f32 %v2861, 1.442695
  %v2872 = vpow.pop %v2871
  %v2873 = vmul.f32 %v2862, 1.442695
  %v2874 = vpow.pop %v2873
  %v2875 = vadd.f32 %v2864, 1.0
  %v2876 = vadd.f32 %v2866, 1.0
  %v2877 = vadd.f32 %v2868, 1.0
  %v2878 = vadd.f32 %v2870, 1.0
  %v2879 = vadd.f32 %v2872, 1.0
  %v2880 = vadd.f32 %v2874, 1.0
  %v2881 = vrcp.pop %v2875
  %v2882 = vmul.f32 1.0, %v2881
  %v2883 = vrcp.pop %v2876
  %v2884 = vmul.f32 1.0, %v2883
  %v2885 = vrcp.pop %v2877
  %v2886 = vmul.f32 1.0, %v2885
  %v2887 = vrcp.pop %v2878
  %v2888 = vmul.f32 1.0, %v2887
  %v2889 = vrcp.pop %v2879
  %v2890 = vmul.f32 1.0, %v2889
  %v2891 = vrcp.pop %v2880
  %v2892 = vmul.f32 1.0, %v2891
  %v2893 = vtanh.pop %v2852
  %v2894 = vtanh.pop %v2856
  %v2895 = vmul.f32 %v2884, %v2747
  %v2896 = vmul.f32 %v2890, %v2748
  %v2897 = vmul.f32 %v2882, %v2893
  %v2898 = vmul.f32 %v2888, %v2894
  %v2899 = vadd.f32 %v2895, %v2897
  %v2900 = vadd.f32 %v2896, %v2898
  %v2901 = vtanh.pop %v2899
  %v2902 = vtanh.pop %v2900
  %v2903 = vmul.f32 %v2886, %v2901
  %v2904 = vmul.f32 %v2892, %v2902
  %v2905 = vpack.c.bf16 %v2904, %v2903
  %2906 = vst [vmem:[%s961] sm:$0xff] %v2905
  %v2907 = vld [vmem:[%s965] sm:$0xff]
  %v2908 = vld [vmem:[%s965 + $0x8] sm:$0xff]
  %v2909 = vld [vmem:[%s965 + $0x10] sm:$0xff]
  %v2910 = vld [vmem:[%s965 + $0x18] sm:$0xff]
  %v2911 = vld [vmem:[%s965 + $0x20] sm:$0xff]
  %v2912 = vld [vmem:[%s965 + $0x28] sm:$0xff]
  %v2913 = vld [vmem:[%s965 + $0x30] sm:$0xff]
  %v2914 = vld [vmem:[%s965 + $0x38] sm:$0xff]
  %2915 = vmatprep.subr.bf16.mxu0 %v2548
  %2916 = vmatpush1.bf16.msra.mxu0 %v2547
  %2917 = vmatprep.subr.bf16.mxu0 %v2552
  %2918 = vmatpush1.bf16.msra.mxu0 %v2551
  %2919 = vmatprep.subr.bf16.mxu0 %v2556
  %2920 = vmatpush1.bf16.msra.mxu0 %v2555
  %2921 = vmatprep.subr.bf16.mxu0 %v2560
  %2922 = vmatpush1.bf16.msra.mxu0 %v2559
  %2923 = vmatprep.subr.bf16.mxu0 %v2564
  %2924 = vmatpush1.bf16.msra.mxu0 %v2563
  %2925 = vmatprep.subr.bf16.mxu0 %v2568
  %2926 = vmatpush1.bf16.msra.mxu0 %v2567
  %2927 = vmatprep.subr.bf16.mxu0 %v2572
  %2928 = vmatpush1.bf16.msra.mxu0 %v2571
  %2929 = vmatprep.subr.bf16.mxu0 %v2576
  %2930 = vmatpush1.bf16.msra.mxu0 %v2575
  %2931 = vmatprep.subr.bf16.mxu0 0
  %2932 = vmatpush1.bf16.msra.mxu0 0
  %2933 = vmatprep.subr.bf16.mxu0 0
  %2934 = vmatpush1.bf16.msra.mxu0 0
  %2935 = vmatprep.subr.bf16.mxu0 0
  %2936 = vmatpush1.bf16.msra.mxu0 0
  %2937 = vmatprep.subr.bf16.mxu0 0
  %2938 = vmatpush1.bf16.msra.mxu0 0
  %2939 = vmatprep.subr.bf16.mxu0 0
  %2940 = vmatpush1.bf16.msra.mxu0 0
  %2941 = vmatprep.subr.bf16.mxu0 0
  %2942 = vmatpush1.bf16.msra.mxu0 0
  %2943 = vmatprep.subr.bf16.mxu0 0
  %2944 = vmatpush1.bf16.msra.mxu0 0
  %2945 = vmatprep.subr.bf16.mxu0 0
  %2946 = vmatpush1.bf16.msra.mxu0 0
  %2947 = vmatprep.mubr.bf16.mxu0 0
  %2948 = vmatmul.mubr.bf16.gmra.mrb[0].mxu0 %v2905
  %v2949 = vpop.f32.mrb[0].mxu0
  %v2950 = vadd.f32 0.0, %v2949
  %v2951 = vpop.f32.mrb[0].mxu0
  %v2952 = vadd.f32 0.0, %v2951
  %v2953 = vpop.f32.mrb[0].mxu0
  %v2954 = vadd.f32 0.0, %v2953
  %v2955 = vpop.f32.mrb[0].mxu0
  %v2956 = vadd.f32 0.0, %v2955
  %2957 = vdwg.mxu0
  %2958 = vmatprep.subr.bf16.mxu0 %v2550
  %2959 = vmatpush1.bf16.msra.mxu0 %v2549
  %2960 = vmatprep.subr.bf16.mxu0 %v2554
  %2961 = vmatpush1.bf16.msra.mxu0 %v2553
  %2962 = vmatprep.subr.bf16.mxu0 %v2558
  %2963 = vmatpush1.bf16.msra.mxu0 %v2557
  %2964 = vmatprep.subr.bf16.mxu0 %v2562
  %2965 = vmatpush1.bf16.msra.mxu0 %v2561
  %2966 = vmatprep.subr.bf16.mxu0 %v2566
  %2967 = vmatpush1.bf16.msra.mxu0 %v2565
  %2968 = vmatprep.subr.bf16.mxu0 %v2570
  %2969 = vmatpush1.bf16.msra.mxu0 %v2569
  %2970 = vmatprep.subr.bf16.mxu0 %v2574
  %2971 = vmatpush1.bf16.msra.mxu0 %v2573
  %2972 = vmatprep.subr.bf16.mxu0 %v2578
  %2973 = vmatpush1.bf16.msra.mxu0 %v2577
  %2974 = vmatprep.subr.bf16.mxu0 0
  %2975 = vmatpush1.bf16.msra.mxu0 0
  %2976 = vmatprep.subr.bf16.mxu0 0
  %2977 = vmatpush1.bf16.msra.mxu0 0
  %2978 = vmatprep.subr.bf16.mxu0 0
  %2979 = vmatpush1.bf16.msra.mxu0 0
  %2980 = vmatprep.subr.bf16.mxu0 0
  %2981 = vmatpush1.bf16.msra.mxu0 0
  %2982 = vmatprep.subr.bf16.mxu0 0
  %2983 = vmatpush1.bf16.msra.mxu0 0
  %2984 = vmatprep.subr.bf16.mxu0 0
  %2985 = vmatpush1.bf16.msra.mxu0 0
  %2986 = vmatprep.subr.bf16.mxu0 0
  %2987 = vmatpush1.bf16.msra.mxu0 0
  %2988 = vmatprep.subr.bf16.mxu0 0
  %2989 = vmatpush1.bf16.msra.mxu0 0
  %2990 = vmatprep.mubr.bf16.mxu0 0
  %2991 = vmatmul.mubr.bf16.gmra.mrb[0].mxu0 %v2905
  %v2992 = vpop.f32.mrb[0].mxu0
  %v2993 = vadd.f32 0.0, %v2992
  %v2994 = vpop.f32.mrb[0].mxu0
  %v2995 = vadd.f32 0.0, %v2994
  %v2996 = vpop.f32.mrb[0].mxu0
  %v2997 = vadd.f32 0.0, %v2996
  %v2998 = vpop.f32.mrb[0].mxu0
  %v2999 = vadd.f32 0.0, %v2998
  %3000 = vdwg.mxu0
  %v3001 = vadd.f32 %v2907, %v2950
  %v3002 = vadd.f32 %v2908, %v2952
  %v3003 = vadd.f32 %v2909, %v2993
  %v3004 = vadd.f32 %v2910, %v2995
  %v3005 = vadd.f32 %v2911, %v2954
  %v3006 = vadd.f32 %v2912, %v2956
  %v3007 = vadd.f32 %v2913, %v2997
  %v3008 = vadd.f32 %v2914, %v2999
  %v3009 = vxor.u32 %v3001, 2147483648
  %v3010 = vxor.u32 %v3002, 2147483648
  %v3011 = vxor.u32 %v3003, 2147483648
  %v3012 = vxor.u32 %v3005, 2147483648
  %v3013 = vxor.u32 %v3006, 2147483648
  %v3014 = vxor.u32 %v3007, 2147483648
  %v3015 = vmul.f32 %v3009, 1.442695
  %v3016 = vpow.pop %v3015
  %v3017 = vmul.f32 %v3010, 1.442695
  %v3018 = vpow.pop %v3017
  %v3019 = vmul.f32 %v3011, 1.442695
  %v3020 = vpow.pop %v3019
  %v3021 = vmul.f32 %v3012, 1.442695
  %v3022 = vpow.pop %v3021
  %v3023 = vmul.f32 %v3013, 1.442695
  %v3024 = vpow.pop %v3023
  %v3025 = vmul.f32 %v3014, 1.442695
  %v3026 = vpow.pop %v3025
  %v3027 = vadd.f32 %v3016, 1.0
  %v3028 = vadd.f32 %v3018, 1.0
  %v3029 = vadd.f32 %v3020, 1.0
  %v3030 = vadd.f32 %v3022, 1.0
  %v3031 = vadd.f32 %v3024, 1.0
  %v3032 = vadd.f32 %v3026, 1.0
  %v3033 = vrcp.pop %v3027
  %v3034 = vmul.f32 1.0, %v3033
  %v3035 = vrcp.pop %v3028
  %v3036 = vmul.f32 1.0, %v3035
  %v3037 = vrcp.pop %v3029
  %v3038 = vmul.f32 1.0, %v3037
  %v3039 = vrcp.pop %v3030
  %v3040 = vmul.f32 1.0, %v3039
  %v3041 = vrcp.pop %v3031
  %v3042 = vmul.f32 1.0, %v3041
  %v3043 = vrcp.pop %v3032
  %v3044 = vmul.f32 1.0, %v3043
  %v3045 = vtanh.pop %v3004
  %v3046 = vtanh.pop %v3008
  %v3047 = vmul.f32 %v3036, %v2899
  %v3048 = vmul.f32 %v3042, %v2900
  %v3049 = vmul.f32 %v3034, %v3045
  %v3050 = vmul.f32 %v3040, %v3046
  %v3051 = vadd.f32 %v3047, %v3049
  %v3052 = vadd.f32 %v3048, %v3050
  %v3053 = vtanh.pop %v3051
  %v3054 = vtanh.pop %v3052
  %v3055 = vmul.f32 %v3038, %v3053
  %v3056 = vmul.f32 %v3044, %v3054
  %v3057 = vpack.c.bf16 %v3056, %v3055
  %3058 = vst [vmem:[%s1117] sm:$0xff] %v3057
  %v3059 = vld [vmem:[%s1121] sm:$0xff]
  %v3060 = vld [vmem:[%s1121 + $0x8] sm:$0xff]
  %v3061 = vld [vmem:[%s1121 + $0x10] sm:$0xff]
  %v3062 = vld [vmem:[%s1121 + $0x18] sm:$0xff]
  %v3063 = vld [vmem:[%s1121 + $0x20] sm:$0xff]
  %v3064 = vld [vmem:[%s1121 + $0x28] sm:$0xff]
  %v3065 = vld [vmem:[%s1121 + $0x30] sm:$0xff]
  %v3066 = vld [vmem:[%s1121 + $0x38] sm:$0xff]
  %3067 = vmatprep.subr.bf16.mxu0 %v2548
  %3068 = vmatpush1.bf16.msra.mxu0 %v2547
  %3069 = vmatprep.subr.bf16.mxu0 %v2552
  %3070 = vmatpush1.bf16.msra.mxu0 %v2551
  %3071 = vmatprep.subr.bf16.mxu0 %v2556
  %3072 = vmatpush1.bf16.msra.mxu0 %v2555
  %3073 = vmatprep.subr.bf16.mxu0 %v2560
  %3074 = vmatpush1.bf16.msra.mxu0 %v2559
  %3075 = vmatprep.subr.bf16.mxu0 %v2564
  %3076 = vmatpush1.bf16.msra.mxu0 %v2563
  %3077 = vmatprep.subr.bf16.mxu0 %v2568
  %3078 = vmatpush1.bf16.msra.mxu0 %v2567
  %3079 = vmatprep.subr.bf16.mxu0 %v2572
  %3080 = vmatpush1.bf16.msra.mxu0 %v2571
  %3081 = vmatprep.subr.bf16.mxu0 %v2576
  %3082 = vmatpush1.bf16.msra.mxu0 %v2575
  %3083 = vmatprep.subr.bf16.mxu0 0
  %3084 = vmatpush1.bf16.msra.mxu0 0
  %3085 = vmatprep.subr.bf16.mxu0 0
  %3086 = vmatpush1.bf16.msra.mxu0 0
  %3087 = vmatprep.subr.bf16.mxu0 0
  %3088 = vmatpush1.bf16.msra.mxu0 0
  %3089 = vmatprep.subr.bf16.mxu0 0
  %3090 = vmatpush1.bf16.msra.mxu0 0
  %3091 = vmatprep.subr.bf16.mxu0 0
  %3092 = vmatpush1.bf16.msra.mxu0 0
  %3093 = vmatprep.subr.bf16.mxu0 0
  %3094 = vmatpush1.bf16.msra.mxu0 0
  %3095 = vmatprep.subr.bf16.mxu0 0
  %3096 = vmatpush1.bf16.msra.mxu0 0
  %3097 = vmatprep.subr.bf16.mxu0 0
  %3098 = vmatpush1.bf16.msra.mxu0 0
  %3099 = vmatprep.mubr.bf16.mxu0 0
  %3100 = vmatmul.mubr.bf16.gmra.mrb[0].mxu0 %v3057
  %v3101 = vpop.f32.mrb[0].mxu0
  %v3102 = vadd.f32 0.0, %v3101
  %v3103 = vpop.f32.mrb[0].mxu0
  %v3104 = vadd.f32 0.0, %v3103
  %v3105 = vpop.f32.mrb[0].mxu0
  %v3106 = vadd.f32 0.0, %v3105
  %v3107 = vpop.f32.mrb[0].mxu0
  %v3108 = vadd.f32 0.0, %v3107
  %3109 = vdwg.mxu0
  %3110 = vmatprep.subr.bf16.mxu0 %v2550
  %3111 = vmatpush1.bf16.msra.mxu0 %v2549
  %3112 = vmatprep.subr.bf16.mxu0 %v2554
  %3113 = vmatpush1.bf16.msra.mxu0 %v2553
  %3114 = vmatprep.subr.bf16.mxu0 %v2558
  %3115 = vmatpush1.bf16.msra.mxu0 %v2557
  %3116 = vmatprep.subr.bf16.mxu0 %v2562
  %3117 = vmatpush1.bf16.msra.mxu0 %v2561
  %3118 = vmatprep.subr.bf16.mxu0 %v2566
  %3119 = vmatpush1.bf16.msra.mxu0 %v2565
  %3120 = vmatprep.subr.bf16.mxu0 %v2570
  %3121 = vmatpush1.bf16.msra.mxu0 %v2569
  %3122 = vmatprep.subr.bf16.mxu0 %v2574
  %3123 = vmatpush1.bf16.msra.mxu0 %v2573
  %3124 = vmatprep.subr.bf16.mxu0 %v2578
  %3125 = vmatpush1.bf16.msra.mxu0 %v2577
  %3126 = vmatprep.subr.bf16.mxu0 0
  %3127 = vmatpush1.bf16.msra.mxu0 0
  %3128 = vmatprep.subr.bf16.mxu0 0
  %3129 = vmatpush1.bf16.msra.mxu0 0
  %3130 = vmatprep.subr.bf16.mxu0 0
  %3131 = vmatpush1.bf16.msra.mxu0 0
  %3132 = vmatprep.subr.bf16.mxu0 0
  %3133 = vmatpush1.bf16.msra.mxu0 0
  %3134 = vmatprep.subr.bf16.mxu0 0
  %3135 = vmatpush1.bf16.msra.mxu0 0
  %3136 = vmatprep.subr.bf16.mxu0 0
  %3137 = vmatpush1.bf16.msra.mxu0 0
  %3138 = vmatprep.subr.bf16.mxu0 0
  %3139 = vmatpush1.bf16.msra.mxu0 0
  %3140 = vmatprep.subr.bf16.mxu0 0
  %3141 = vmatpush1.bf16.msra.mxu0 0
  %3142 = vmatprep.mubr.bf16.mxu0 0
  %3143 = vmatmul.mubr.bf16.gmra.mrb[0].mxu0 %v3057
  %v3144 = vpop.f32.mrb[0].mxu0
  %v3145 = vadd.f32 0.0, %v3144
  %v3146 = vpop.f32.mrb[0].mxu0
  %v3147 = vadd.f32 0.0, %v3146
  %v3148 = vpop.f32.mrb[0].mxu0
  %v3149 = vadd.f32 0.0, %v3148
  %v3150 = vpop.f32.mrb[0].mxu0
  %v3151 = vadd.f32 0.0, %v3150
  %3152 = vdwg.mxu0
  %v3153 = vadd.f32 %v3059, %v3102
  %v3154 = vadd.f32 %v3060, %v3104
  %v3155 = vadd.f32 %v3061, %v3145
  %v3156 = vadd.f32 %v3062, %v3147
  %v3157 = vadd.f32 %v3063, %v3106
  %v3158 = vadd.f32 %v3064, %v3108
  %v3159 = vadd.f32 %v3065, %v3149
  %v3160 = vadd.f32 %v3066, %v3151
  %v3161 = vxor.u32 %v3153, 2147483648
  %v3162 = vxor.u32 %v3154, 2147483648
  %v3163 = vxor.u32 %v3155, 2147483648
  %v3164 = vxor.u32 %v3157, 2147483648
  %v3165 = vxor.u32 %v3158, 2147483648
  %v3166 = vxor.u32 %v3159, 2147483648
  %v3167 = vmul.f32 %v3161, 1.442695
  %v3168 = vpow.pop %v3167
  %v3169 = vmul.f32 %v3162, 1.442695
  %v3170 = vpow.pop %v3169
  %v3171 = vmul.f32 %v3163, 1.442695
  %v3172 = vpow.pop %v3171
  %v3173 = vmul.f32 %v3164, 1.442695
  %v3174 = vpow.pop %v3173
  %v3175 = vmul.f32 %v3165, 1.442695
  %v3176 = vpow.pop %v3175
  %v3177 = vmul.f32 %v3166, 1.442695
  %v3178 = vpow.pop %v3177
  %v3179 = vadd.f32 %v3168, 1.0
  %v3180 = vadd.f32 %v3170, 1.0
  %v3181 = vadd.f32 %v3172, 1.0
  %v3182 = vadd.f32 %v3174, 1.0
  %v3183 = vadd.f32 %v3176, 1.0
  %v3184 = vadd.f32 %v3178, 1.0
  %v3185 = vrcp.pop %v3179
  %v3186 = vmul.f32 1.0, %v3185
  %v3187 = vrcp.pop %v3180
  %v3188 = vmul.f32 1.0, %v3187
  %v3189 = vrcp.pop %v3181
  %v3190 = vmul.f32 1.0, %v3189
  %v3191 = vrcp.pop %v3182
  %v3192 = vmul.f32 1.0, %v3191
  %v3193 = vrcp.pop %v3183
  %v3194 = vmul.f32 1.0, %v3193
  %v3195 = vrcp.pop %v3184
  %v3196 = vmul.f32 1.0, %v3195
  %v3197 = vtanh.pop %v3156
  %v3198 = vtanh.pop %v3160
  %v3199 = vmul.f32 %v3188, %v3051
  %v3200 = vmul.f32 %v3194, %v3052
  %v3201 = vmul.f32 %v3186, %v3197
  %v3202 = vmul.f32 %v3192, %v3198
  %v3203 = vadd.f32 %v3199, %v3201
  %v3204 = vadd.f32 %v3200, %v3202
  %v3205 = vtanh.pop %v3203
  %v3206 = vtanh.pop %v3204
  %v3207 = vmul.f32 %v3190, %v3205
  %v3208 = vmul.f32 %v3196, %v3206
  %v3209 = vpack.c.bf16 %v3208, %v3207
  %3210 = vst [vmem:[%s1273] sm:$0xff] %v3209
  %v3211 = vld [vmem:[%s1277] sm:$0xff]
  %v3212 = vld [vmem:[%s1277 + $0x8] sm:$0xff]
  %v3213 = vld [vmem:[%s1277 + $0x10] sm:$0xff]
  %v3214 = vld [vmem:[%s1277 + $0x18] sm:$0xff]
  %v3215 = vld [vmem:[%s1277 + $0x20] sm:$0xff]
  %v3216 = vld [vmem:[%s1277 + $0x28] sm:$0xff]
  %v3217 = vld [vmem:[%s1277 + $0x30] sm:$0xff]
  %v3218 = vld [vmem:[%s1277 + $0x38] sm:$0xff]
  %3219 = vmatprep.subr.bf16.mxu0 %v2548
  %3220 = vmatpush1.bf16.msra.mxu0 %v2547
  %3221 = vmatprep.subr.bf16.mxu0 %v2552
  %3222 = vmatpush1.bf16.msra.mxu0 %v2551
  %3223 = vmatprep.subr.bf16.mxu0 %v2556
  %3224 = vmatpush1.bf16.msra.mxu0 %v2555
  %3225 = vmatprep.subr.bf16.mxu0 %v2560
  %3226 = vmatpush1.bf16.msra.mxu0 %v2559
  %3227 = vmatprep.subr.bf16.mxu0 %v2564
  %3228 = vmatpush1.bf16.msra.mxu0 %v2563
  %3229 = vmatprep.subr.bf16.mxu0 %v2568
  %3230 = vmatpush1.bf16.msra.mxu0 %v2567
  %3231 = vmatprep.subr.bf16.mxu0 %v2572
  %3232 = vmatpush1.bf16.msra.mxu0 %v2571
  %3233 = vmatprep.subr.bf16.mxu0 %v2576
  %3234 = vmatpush1.bf16.msra.mxu0 %v2575
  %3235 = vmatprep.subr.bf16.mxu0 0
  %3236 = vmatpush1.bf16.msra.mxu0 0
  %3237 = vmatprep.subr.bf16.mxu0 0
  %3238 = vmatpush1.bf16.msra.mxu0 0
  %3239 = vmatprep.subr.bf16.mxu0 0
  %3240 = vmatpush1.bf16.msra.mxu0 0
  %3241 = vmatprep.subr.bf16.mxu0 0
  %3242 = vmatpush1.bf16.msra.mxu0 0
  %3243 = vmatprep.subr.bf16.mxu0 0
  %3244 = vmatpush1.bf16.msra.mxu0 0
  %3245 = vmatprep.subr.bf16.mxu0 0
  %3246 = vmatpush1.bf16.msra.mxu0 0
  %3247 = vmatprep.subr.bf16.mxu0 0
  %3248 = vmatpush1.bf16.msra.mxu0 0
  %3249 = vmatprep.subr.bf16.mxu0 0
  %3250 = vmatpush1.bf16.msra.mxu0 0
  %3251 = vmatprep.mubr.bf16.mxu0 0
  %3252 = vmatmul.mubr.bf16.gmra.mrb[0].mxu0 %v3209
  %v3253 = vpop.f32.mrb[0].mxu0
  %v3254 = vadd.f32 0.0, %v3253
  %v3255 = vpop.f32.mrb[0].mxu0
  %v3256 = vadd.f32 0.0, %v3255
  %v3257 = vpop.f32.mrb[0].mxu0
  %v3258 = vadd.f32 0.0, %v3257
  %v3259 = vpop.f32.mrb[0].mxu0
  %v3260 = vadd.f32 0.0, %v3259
  %3261 = vdwg.mxu0
  %3262 = vmatprep.subr.bf16.mxu0 %v2550
  %3263 = vmatpush1.bf16.msra.mxu0 %v2549
  %3264 = vmatprep.subr.bf16.mxu0 %v2554
  %3265 = vmatpush1.bf16.msra.mxu0 %v2553
  %3266 = vmatprep.subr.bf16.mxu0 %v2558
  %3267 = vmatpush1.bf16.msra.mxu0 %v2557
  %3268 = vmatprep.subr.bf16.mxu0 %v2562
  %3269 = vmatpush1.bf16.msra.mxu0 %v2561
  %3270 = vmatprep.subr.bf16.mxu0 %v2566
  %3271 = vmatpush1.bf16.msra.mxu0 %v2565
  %3272 = vmatprep.subr.bf16.mxu0 %v2570
  %3273 = vmatpush1.bf16.msra.mxu0 %v2569
  %3274 = vmatprep.subr.bf16.mxu0 %v2574
  %3275 = vmatpush1.bf16.msra.mxu0 %v2573
  %3276 = vmatprep.subr.bf16.mxu0 %v2578
  %3277 = vmatpush1.bf16.msra.mxu0 %v2577
  %3278 = vmatprep.subr.bf16.mxu0 0
  %3279 = vmatpush1.bf16.msra.mxu0 0
  %3280 = vmatprep.subr.bf16.mxu0 0
  %3281 = vmatpush1.bf16.msra.mxu0 0
  %3282 = vmatprep.subr.bf16.mxu0 0
  %3283 = vmatpush1.bf16.msra.mxu0 0
  %3284 = vmatprep.subr.bf16.mxu0 0
  %3285 = vmatpush1.bf16.msra.mxu0 0
  %3286 = vmatprep.subr.bf16.mxu0 0
  %3287 = vmatpush1.bf16.msra.mxu0 0
  %3288 = vmatprep.subr.bf16.mxu0 0
  %3289 = vmatpush1.bf16.msra.mxu0 0
  %3290 = vmatprep.subr.bf16.mxu0 0
  %3291 = vmatpush1.bf16.msra.mxu0 0
  %3292 = vmatprep.subr.bf16.mxu0 0
  %3293 = vmatpush1.bf16.msra.mxu0 0
  %3294 = vmatprep.mubr.bf16.mxu0 0
  %3295 = vmatmul.mubr.bf16.gmra.mrb[0].mxu0 %v3209
  %v3296 = vpop.f32.mrb[0].mxu0
  %v3297 = vadd.f32 0.0, %v3296
  %v3298 = vpop.f32.mrb[0].mxu0
  %v3299 = vadd.f32 0.0, %v3298
  %v3300 = vpop.f32.mrb[0].mxu0
  %v3301 = vadd.f32 0.0, %v3300
  %v3302 = vpop.f32.mrb[0].mxu0
  %v3303 = vadd.f32 0.0, %v3302
  %3304 = vdwg.mxu0
  %v3305 = vadd.f32 %v3211, %v3254
  %v3306 = vadd.f32 %v3212, %v3256
  %v3307 = vadd.f32 %v3213, %v3297
  %v3308 = vadd.f32 %v3214, %v3299
  %v3309 = vadd.f32 %v3215, %v3258
  %v3310 = vadd.f32 %v3216, %v3260
  %v3311 = vadd.f32 %v3217, %v3301
  %v3312 = vadd.f32 %v3218, %v3303
  %v3313 = vxor.u32 %v3305, 2147483648
  %v3314 = vxor.u32 %v3306, 2147483648
  %v3315 = vxor.u32 %v3307, 2147483648
  %v3316 = vxor.u32 %v3309, 2147483648
  %v3317 = vxor.u32 %v3310, 2147483648
  %v3318 = vxor.u32 %v3311, 2147483648
  %v3319 = vmul.f32 %v3313, 1.442695
  %v3320 = vpow.pop %v3319
  %v3321 = vmul.f32 %v3314, 1.442695
  %v3322 = vpow.pop %v3321
  %v3323 = vmul.f32 %v3315, 1.442695
  %v3324 = vpow.pop %v3323
  %v3325 = vmul.f32 %v3316, 1.442695
  %v3326 = vpow.pop %v3325
  %v3327 = vmul.f32 %v3317, 1.442695
  %v3328 = vpow.pop %v3327
  %v3329 = vmul.f32 %v3318, 1.442695
  %v3330 = vpow.pop %v3329
  %v3331 = vadd.f32 %v3320, 1.0
  %v3332 = vadd.f32 %v3322, 1.0
  %v3333 = vadd.f32 %v3324, 1.0
  %v3334 = vadd.f32 %v3326, 1.0
  %v3335 = vadd.f32 %v3328, 1.0
  %v3336 = vadd.f32 %v3330, 1.0
  %v3337 = vrcp.pop %v3331
  %v3338 = vmul.f32 1.0, %v3337
  %v3339 = vrcp.pop %v3332
  %v3340 = vmul.f32 1.0, %v3339
  %v3341 = vrcp.pop %v3333
  %v3342 = vmul.f32 1.0, %v3341
  %v3343 = vrcp.pop %v3334
  %v3344 = vmul.f32 1.0, %v3343
  %v3345 = vrcp.pop %v3335
  %v3346 = vmul.f32 1.0, %v3345
  %v3347 = vrcp.pop %v3336
  %v3348 = vmul.f32 1.0, %v3347
  %v3349 = vtanh.pop %v3308
  %v3350 = vtanh.pop %v3312
  %v3351 = vmul.f32 %v3340, %v3203
  %v3352 = vmul.f32 %v3346, %v3204
  %v3353 = vmul.f32 %v3338, %v3349
  %v3354 = vmul.f32 %v3344, %v3350
  %v3355 = vadd.f32 %v3351, %v3353
  %v3356 = vadd.f32 %v3352, %v3354
  %v3357 = vtanh.pop %v3355
  %v3358 = vtanh.pop %v3356
  %v3359 = vmul.f32 %v3342, %v3357
  %v3360 = vmul.f32 %v3348, %v3358
  %v3361 = vpack.c.bf16 %v3360, %v3359
  %3362 = vst [vmem:[%s1429] sm:$0xff] %v3361
  %v3363 = vld [vmem:[%s1433] sm:$0xff]
  %v3364 = vld [vmem:[%s1433 + $0x8] sm:$0xff]
  %v3365 = vld [vmem:[%s1433 + $0x10] sm:$0xff]
  %v3366 = vld [vmem:[%s1433 + $0x18] sm:$0xff]
  %v3367 = vld [vmem:[%s1433 + $0x20] sm:$0xff]
  %v3368 = vld [vmem:[%s1433 + $0x28] sm:$0xff]
  %v3369 = vld [vmem:[%s1433 + $0x30] sm:$0xff]
  %v3370 = vld [vmem:[%s1433 + $0x38] sm:$0xff]
  %3371 = vmatprep.subr.bf16.mxu0 %v2548
  %3372 = vmatpush1.bf16.msra.mxu0 %v2547
  %3373 = vmatprep.subr.bf16.mxu0 %v2552
  %3374 = vmatpush1.bf16.msra.mxu0 %v2551
  %3375 = vmatprep.subr.bf16.mxu0 %v2556
  %3376 = vmatpush1.bf16.msra.mxu0 %v2555
  %3377 = vmatprep.subr.bf16.mxu0 %v2560
  %3378 = vmatpush1.bf16.msra.mxu0 %v2559
  %3379 = vmatprep.subr.bf16.mxu0 %v2564
  %3380 = vmatpush1.bf16.msra.mxu0 %v2563
  %3381 = vmatprep.subr.bf16.mxu0 %v2568
  %3382 = vmatpush1.bf16.msra.mxu0 %v2567
  %3383 = vmatprep.subr.bf16.mxu0 %v2572
  %3384 = vmatpush1.bf16.msra.mxu0 %v2571
  %3385 = vmatprep.subr.bf16.mxu0 %v2576
  %3386 = vmatpush1.bf16.msra.mxu0 %v2575
  %3387 = vmatprep.subr.bf16.mxu0 0
  %3388 = vmatpush1.bf16.msra.mxu0 0
  %3389 = vmatprep.subr.bf16.mxu0 0
  %3390 = vmatpush1.bf16.msra.mxu0 0
  %3391 = vmatprep.subr.bf16.mxu0 0
  %3392 = vmatpush1.bf16.msra.mxu0 0
  %3393 = vmatprep.subr.bf16.mxu0 0
  %3394 = vmatpush1.bf16.msra.mxu0 0
  %3395 = vmatprep.subr.bf16.mxu0 0
  %3396 = vmatpush1.bf16.msra.mxu0 0
  %3397 = vmatprep.subr.bf16.mxu0 0
  %3398 = vmatpush1.bf16.msra.mxu0 0
  %3399 = vmatprep.subr.bf16.mxu0 0
  %3400 = vmatpush1.bf16.msra.mxu0 0
  %3401 = vmatprep.subr.bf16.mxu0 0
  %3402 = vmatpush1.bf16.msra.mxu0 0
  %3403 = vmatprep.mubr.bf16.mxu0 0
  %3404 = vmatmul.mubr.bf16.gmra.mrb[0].mxu0 %v3361
  %v3405 = vpop.f32.mrb[0].mxu0
  %v3406 = vadd.f32 0.0, %v3405
  %v3407 = vpop.f32.mrb[0].mxu0
  %v3408 = vadd.f32 0.0, %v3407
  %v3409 = vpop.f32.mrb[0].mxu0
  %v3410 = vadd.f32 0.0, %v3409
  %v3411 = vpop.f32.mrb[0].mxu0
  %v3412 = vadd.f32 0.0, %v3411
  %3413 = vdwg.mxu0
  %3414 = vmatprep.subr.bf16.mxu0 %v2550
  %3415 = vmatpush1.bf16.msra.mxu0 %v2549
  %3416 = vmatprep.subr.bf16.mxu0 %v2554
  %3417 = vmatpush1.bf16.msra.mxu0 %v2553
  %3418 = vmatprep.subr.bf16.mxu0 %v2558
  %3419 = vmatpush1.bf16.msra.mxu0 %v2557
  %3420 = vmatprep.subr.bf16.mxu0 %v2562
  %3421 = vmatpush1.bf16.msra.mxu0 %v2561
  %3422 = vmatprep.subr.bf16.mxu0 %v2566
  %3423 = vmatpush1.bf16.msra.mxu0 %v2565
  %3424 = vmatprep.subr.bf16.mxu0 %v2570
  %3425 = vmatpush1.bf16.msra.mxu0 %v2569
  %3426 = vmatprep.subr.bf16.mxu0 %v2574
  %3427 = vmatpush1.bf16.msra.mxu0 %v2573
  %3428 = vmatprep.subr.bf16.mxu0 %v2578
  %3429 = vmatpush1.bf16.msra.mxu0 %v2577
  %3430 = vmatprep.subr.bf16.mxu0 0
  %3431 = vmatpush1.bf16.msra.mxu0 0
  %3432 = vmatprep.subr.bf16.mxu0 0
  %3433 = vmatpush1.bf16.msra.mxu0 0
  %3434 = vmatprep.subr.bf16.mxu0 0
  %3435 = vmatpush1.bf16.msra.mxu0 0
  %3436 = vmatprep.subr.bf16.mxu0 0
  %3437 = vmatpush1.bf16.msra.mxu0 0
  %3438 = vmatprep.subr.bf16.mxu0 0
  %3439 = vmatpush1.bf16.msra.mxu0 0
  %3440 = vmatprep.subr.bf16.mxu0 0
  %3441 = vmatpush1.bf16.msra.mxu0 0
  %3442 = vmatprep.subr.bf16.mxu0 0
  %3443 = vmatpush1.bf16.msra.mxu0 0
  %3444 = vmatprep.subr.bf16.mxu0 0
  %3445 = vmatpush1.bf16.msra.mxu0 0
  %3446 = vmatprep.mubr.bf16.mxu0 0
  %3447 = vmatmul.mubr.bf16.gmra.mrb[0].mxu0 %v3361
  %v3448 = vpop.f32.mrb[0].mxu0
  %v3449 = vadd.f32 0.0, %v3448
  %v3450 = vpop.f32.mrb[0].mxu0
  %v3451 = vadd.f32 0.0, %v3450
  %v3452 = vpop.f32.mrb[0].mxu0
  %v3453 = vadd.f32 0.0, %v3452
  %v3454 = vpop.f32.mrb[0].mxu0
  %v3455 = vadd.f32 0.0, %v3454
  %3456 = vdwg.mxu0
  %v3457 = vadd.f32 %v3363, %v3406
  %v3458 = vadd.f32 %v3364, %v3408
  %v3459 = vadd.f32 %v3365, %v3449
  %v3460 = vadd.f32 %v3366, %v3451
  %v3461 = vadd.f32 %v3367, %v3410
  %v3462 = vadd.f32 %v3368, %v3412
  %v3463 = vadd.f32 %v3369, %v3453
  %v3464 = vadd.f32 %v3370, %v3455
  %v3465 = vxor.u32 %v3457, 2147483648
  %v3466 = vxor.u32 %v3458, 2147483648
  %v3467 = vxor.u32 %v3459, 2147483648
  %v3468 = vxor.u32 %v3461, 2147483648
  %v3469 = vxor.u32 %v3462, 2147483648
  %v3470 = vxor.u32 %v3463, 2147483648
  %v3471 = vmul.f32 %v3465, 1.442695
  %v3472 = vpow.pop %v3471
  %v3473 = vmul.f32 %v3466, 1.442695
  %v3474 = vpow.pop %v3473
  %v3475 = vmul.f32 %v3467, 1.442695
  %v3476 = vpow.pop %v3475
  %v3477 = vmul.f32 %v3468, 1.442695
  %v3478 = vpow.pop %v3477
  %v3479 = vmul.f32 %v3469, 1.442695
  %v3480 = vpow.pop %v3479
  %v3481 = vmul.f32 %v3470, 1.442695
  %v3482 = vpow.pop %v3481
  %v3483 = vadd.f32 %v3472, 1.0
  %v3484 = vadd.f32 %v3474, 1.0
  %v3485 = vadd.f32 %v3476, 1.0
  %v3486 = vadd.f32 %v3478, 1.0
  %v3487 = vadd.f32 %v3480, 1.0
  %v3488 = vadd.f32 %v3482, 1.0
  %v3489 = vrcp.pop %v3483
  %v3490 = vmul.f32 1.0, %v3489
  %v3491 = vrcp.pop %v3484
  %v3492 = vmul.f32 1.0, %v3491
  %v3493 = vrcp.pop %v3485
  %v3494 = vmul.f32 1.0, %v3493
  %v3495 = vrcp.pop %v3486
  %v3496 = vmul.f32 1.0, %v3495
  %v3497 = vrcp.pop %v3487
  %v3498 = vmul.f32 1.0, %v3497
  %v3499 = vrcp.pop %v3488
  %v3500 = vmul.f32 1.0, %v3499
  %v3501 = vtanh.pop %v3460
  %v3502 = vtanh.pop %v3464
  %v3503 = vmul.f32 %v3492, %v3355
  %v3504 = vmul.f32 %v3498, %v3356
  %v3505 = vmul.f32 %v3490, %v3501
  %v3506 = vmul.f32 %v3496, %v3502
  %v3507 = vadd.f32 %v3503, %v3505
  %v3508 = vadd.f32 %v3504, %v3506
  %v3509 = vtanh.pop %v3507
  %v3510 = vtanh.pop %v3508
  %v3511 = vmul.f32 %v3494, %v3509
  %v3512 = vmul.f32 %v3500, %v3510
  %v3513 = vpack.c.bf16 %v3512, %v3511
  %3514 = vst [vmem:[%s1585] sm:$0xff] %v3513
  %v3515 = vld [vmem:[%s1589] sm:$0xff]
  %v3516 = vld [vmem:[%s1589 + $0x8] sm:$0xff]
  %v3517 = vld [vmem:[%s1589 + $0x10] sm:$0xff]
  %v3518 = vld [vmem:[%s1589 + $0x18] sm:$0xff]
  %v3519 = vld [vmem:[%s1589 + $0x20] sm:$0xff]
  %v3520 = vld [vmem:[%s1589 + $0x28] sm:$0xff]
  %v3521 = vld [vmem:[%s1589 + $0x30] sm:$0xff]
  %v3522 = vld [vmem:[%s1589 + $0x38] sm:$0xff]
  %3523 = vmatprep.subr.bf16.mxu0 %v2548
  %3524 = vmatpush1.bf16.msra.mxu0 %v2547
  %3525 = vmatprep.subr.bf16.mxu0 %v2552
  %3526 = vmatpush1.bf16.msra.mxu0 %v2551
  %3527 = vmatprep.subr.bf16.mxu0 %v2556
  %3528 = vmatpush1.bf16.msra.mxu0 %v2555
  %3529 = vmatprep.subr.bf16.mxu0 %v2560
  %3530 = vmatpush1.bf16.msra.mxu0 %v2559
  %3531 = vmatprep.subr.bf16.mxu0 %v2564
  %3532 = vmatpush1.bf16.msra.mxu0 %v2563
  %3533 = vmatprep.subr.bf16.mxu0 %v2568
  %3534 = vmatpush1.bf16.msra.mxu0 %v2567
  %3535 = vmatprep.subr.bf16.mxu0 %v2572
  %3536 = vmatpush1.bf16.msra.mxu0 %v2571
  %3537 = vmatprep.subr.bf16.mxu0 %v2576
  %3538 = vmatpush1.bf16.msra.mxu0 %v2575
  %3539 = vmatprep.subr.bf16.mxu0 0
  %3540 = vmatpush1.bf16.msra.mxu0 0
  %3541 = vmatprep.subr.bf16.mxu0 0
  %3542 = vmatpush1.bf16.msra.mxu0 0
  %3543 = vmatprep.subr.bf16.mxu0 0
  %3544 = vmatpush1.bf16.msra.mxu0 0
  %3545 = vmatprep.subr.bf16.mxu0 0
  %3546 = vmatpush1.bf16.msra.mxu0 0
  %3547 = vmatprep.subr.bf16.mxu0 0
  %3548 = vmatpush1.bf16.msra.mxu0 0
  %3549 = vmatprep.subr.bf16.mxu0 0
  %3550 = vmatpush1.bf16.msra.mxu0 0
  %3551 = vmatprep.subr.bf16.mxu0 0
  %3552 = vmatpush1.bf16.msra.mxu0 0
  %3553 = vmatprep.subr.bf16.mxu0 0
  %3554 = vmatpush1.bf16.msra.mxu0 0
  %3555 = vmatprep.mubr.bf16.mxu0 0
  %3556 = vmatmul.mubr.bf16.gmra.mrb[0].mxu0 %v3513
  %v3557 = vpop.f32.mrb[0].mxu0
  %v3558 = vadd.f32 0.0, %v3557
  %v3559 = vpop.f32.mrb[0].mxu0
  %v3560 = vadd.f32 0.0, %v3559
  %v3561 = vpop.f32.mrb[0].mxu0
  %v3562 = vadd.f32 0.0, %v3561
  %v3563 = vpop.f32.mrb[0].mxu0
  %v3564 = vadd.f32 0.0, %v3563
  %3565 = vdwg.mxu0
  %3566 = vmatprep.subr.bf16.mxu0 %v2550
  %3567 = vmatpush1.bf16.msra.mxu0 %v2549
  %3568 = vmatprep.subr.bf16.mxu0 %v2554
  %3569 = vmatpush1.bf16.msra.mxu0 %v2553
  %3570 = vmatprep.subr.bf16.mxu0 %v2558
  %3571 = vmatpush1.bf16.msra.mxu0 %v2557
  %3572 = vmatprep.subr.bf16.mxu0 %v2562
  %3573 = vmatpush1.bf16.msra.mxu0 %v2561
  %3574 = vmatprep.subr.bf16.mxu0 %v2566
  %3575 = vmatpush1.bf16.msra.mxu0 %v2565
  %3576 = vmatprep.subr.bf16.mxu0 %v2570
  %3577 = vmatpush1.bf16.msra.mxu0 %v2569
  %3578 = vmatprep.subr.bf16.mxu0 %v2574
  %3579 = vmatpush1.bf16.msra.mxu0 %v2573
  %3580 = vmatprep.subr.bf16.mxu0 %v2578
  %3581 = vmatpush1.bf16.msra.mxu0 %v2577
  %3582 = vmatprep.subr.bf16.mxu0 0
  %3583 = vmatpush1.bf16.msra.mxu0 0
  %3584 = vmatprep.subr.bf16.mxu0 0
  %3585 = vmatpush1.bf16.msra.mxu0 0
  %3586 = vmatprep.subr.bf16.mxu0 0
  %3587 = vmatpush1.bf16.msra.mxu0 0
  %3588 = vmatprep.subr.bf16.mxu0 0
  %3589 = vmatpush1.bf16.msra.mxu0 0
  %3590 = vmatprep.subr.bf16.mxu0 0
  %3591 = vmatpush1.bf16.msra.mxu0 0
  %3592 = vmatprep.subr.bf16.mxu0 0
  %3593 = vmatpush1.bf16.msra.mxu0 0
  %3594 = vmatprep.subr.bf16.mxu0 0
  %3595 = vmatpush1.bf16.msra.mxu0 0
  %3596 = vmatprep.subr.bf16.mxu0 0
  %3597 = vmatpush1.bf16.msra.mxu0 0
  %3598 = vmatprep.mubr.bf16.mxu0 0
  %3599 = vmatmul.mubr.bf16.gmra.mrb[0].mxu0 %v3513
  %v3600 = vpop.f32.mrb[0].mxu0
  %v3601 = vadd.f32 0.0, %v3600
  %v3602 = vpop.f32.mrb[0].mxu0
  %v3603 = vadd.f32 0.0, %v3602
  %v3604 = vpop.f32.mrb[0].mxu0
  %v3605 = vadd.f32 0.0, %v3604
  %v3606 = vpop.f32.mrb[0].mxu0
  %v3607 = vadd.f32 0.0, %v3606
  %3608 = vdwg.mxu0
  %v3609 = vadd.f32 %v3515, %v3558
  %v3610 = vadd.f32 %v3516, %v3560
  %v3611 = vadd.f32 %v3517, %v3601
  %v3612 = vadd.f32 %v3518, %v3603
  %v3613 = vadd.f32 %v3519, %v3562
  %v3614 = vadd.f32 %v3520, %v3564
  %v3615 = vadd.f32 %v3521, %v3605
  %v3616 = vadd.f32 %v3522, %v3607
  %v3617 = vxor.u32 %v3609, 2147483648
  %v3618 = vxor.u32 %v3610, 2147483648
  %v3619 = vxor.u32 %v3611, 2147483648
  %v3620 = vxor.u32 %v3613, 2147483648
  %v3621 = vxor.u32 %v3614, 2147483648
  %v3622 = vxor.u32 %v3615, 2147483648
  %v3623 = vmul.f32 %v3617, 1.442695
  %v3624 = vpow.pop %v3623
  %v3625 = vmul.f32 %v3618, 1.442695
  %v3626 = vpow.pop %v3625
  %v3627 = vmul.f32 %v3619, 1.442695
  %v3628 = vpow.pop %v3627
  %v3629 = vmul.f32 %v3620, 1.442695
  %v3630 = vpow.pop %v3629
  %v3631 = vmul.f32 %v3621, 1.442695
  %v3632 = vpow.pop %v3631
  %v3633 = vmul.f32 %v3622, 1.442695
  %v3634 = vpow.pop %v3633
  %v3635 = vadd.f32 %v3624, 1.0
  %v3636 = vadd.f32 %v3626, 1.0
  %v3637 = vadd.f32 %v3628, 1.0
  %v3638 = vadd.f32 %v3630, 1.0
  %v3639 = vadd.f32 %v3632, 1.0
  %v3640 = vadd.f32 %v3634, 1.0
  %v3641 = vrcp.pop %v3635
  %v3642 = vmul.f32 1.0, %v3641
  %v3643 = vrcp.pop %v3636
  %v3644 = vmul.f32 1.0, %v3643
  %v3645 = vrcp.pop %v3637
  %v3646 = vmul.f32 1.0, %v3645
  %v3647 = vrcp.pop %v3638
  %v3648 = vmul.f32 1.0, %v3647
  %v3649 = vrcp.pop %v3639
  %v3650 = vmul.f32 1.0, %v3649
  %v3651 = vrcp.pop %v3640
  %v3652 = vmul.f32 1.0, %v3651
  %v3653 = vtanh.pop %v3612
  %v3654 = vtanh.pop %v3616
  %v3655 = vmul.f32 %v3644, %v3507
  %v3656 = vmul.f32 %v3650, %v3508
  %v3657 = vmul.f32 %v3642, %v3653
  %v3658 = vmul.f32 %v3648, %v3654
  %v3659 = vadd.f32 %v3655, %v3657
  %v3660 = vadd.f32 %v3656, %v3658
  %v3661 = vtanh.pop %v3659
  %v3662 = vtanh.pop %v3660
  %v3663 = vmul.f32 %v3646, %v3661
  %v3664 = vmul.f32 %v3652, %v3662
  %v3665 = vpack.c.bf16 %v3664, %v3663
  %3666 = vst [vmem:[%s1741] sm:$0xff] %v3665
  %v3667 = vld [vmem:[%s1745] sm:$0xff]
  %v3668 = vld [vmem:[%s1745 + $0x8] sm:$0xff]
  %v3669 = vld [vmem:[%s1745 + $0x10] sm:$0xff]
  %v3670 = vld [vmem:[%s1745 + $0x18] sm:$0xff]
  %v3671 = vld [vmem:[%s1745 + $0x20] sm:$0xff]
  %v3672 = vld [vmem:[%s1745 + $0x28] sm:$0xff]
  %v3673 = vld [vmem:[%s1745 + $0x30] sm:$0xff]
  %v3674 = vld [vmem:[%s1745 + $0x38] sm:$0xff]
  %3675 = vmatprep.subr.bf16.mxu0 %v2548
  %3676 = vmatpush1.bf16.msra.mxu0 %v2547
  %3677 = vmatprep.subr.bf16.mxu0 %v2552
  %3678 = vmatpush1.bf16.msra.mxu0 %v2551
  %3679 = vmatprep.subr.bf16.mxu0 %v2556
  %3680 = vmatpush1.bf16.msra.mxu0 %v2555
  %3681 = vmatprep.subr.bf16.mxu0 %v2560
  %3682 = vmatpush1.bf16.msra.mxu0 %v2559
  %3683 = vmatprep.subr.bf16.mxu0 %v2564
  %3684 = vmatpush1.bf16.msra.mxu0 %v2563
  %3685 = vmatprep.subr.bf16.mxu0 %v2568
  %3686 = vmatpush1.bf16.msra.mxu0 %v2567
  %3687 = vmatprep.subr.bf16.mxu0 %v2572
  %3688 = vmatpush1.bf16.msra.mxu0 %v2571
  %3689 = vmatprep.subr.bf16.mxu0 %v2576
  %3690 = vmatpush1.bf16.msra.mxu0 %v2575
  %3691 = vmatprep.subr.bf16.mxu0 0
  %3692 = vmatpush1.bf16.msra.mxu0 0
  %3693 = vmatprep.subr.bf16.mxu0 0
  %3694 = vmatpush1.bf16.msra.mxu0 0
  %3695 = vmatprep.subr.bf16.mxu0 0
  %3696 = vmatpush1.bf16.msra.mxu0 0
  %3697 = vmatprep.subr.bf16.mxu0 0
  %3698 = vmatpush1.bf16.msra.mxu0 0
  %3699 = vmatprep.subr.bf16.mxu0 0
  %3700 = vmatpush1.bf16.msra.mxu0 0
  %3701 = vmatprep.subr.bf16.mxu0 0
  %3702 = vmatpush1.bf16.msra.mxu0 0
  %3703 = vmatprep.subr.bf16.mxu0 0
  %3704 = vmatpush1.bf16.msra.mxu0 0
  %3705 = vmatprep.subr.bf16.mxu0 0
  %3706 = vmatpush1.bf16.msra.mxu0 0
  %3707 = vmatprep.mubr.bf16.mxu0 0
  %3708 = vmatmul.mubr.bf16.gmra.mrb[0].mxu0 %v3665
  %v3709 = vpop.f32.mrb[0].mxu0
  %v3710 = vadd.f32 0.0, %v3709
  %v3711 = vpop.f32.mrb[0].mxu0
  %v3712 = vadd.f32 0.0, %v3711
  %v3713 = vpop.f32.mrb[0].mxu0
  %v3714 = vadd.f32 0.0, %v3713
  %v3715 = vpop.f32.mrb[0].mxu0
  %v3716 = vadd.f32 0.0, %v3715
  %3717 = vdwg.mxu0
  %3718 = vmatprep.subr.bf16.mxu0 %v2550
  %3719 = vmatpush1.bf16.msra.mxu0 %v2549
  %3720 = vmatprep.subr.bf16.mxu0 %v2554
  %3721 = vmatpush1.bf16.msra.mxu0 %v2553
  %3722 = vmatprep.subr.bf16.mxu0 %v2558
  %3723 = vmatpush1.bf16.msra.mxu0 %v2557
  %3724 = vmatprep.subr.bf16.mxu0 %v2562
  %3725 = vmatpush1.bf16.msra.mxu0 %v2561
  %3726 = vmatprep.subr.bf16.mxu0 %v2566
  %3727 = vmatpush1.bf16.msra.mxu0 %v2565
  %3728 = vmatprep.subr.bf16.mxu0 %v2570
  %3729 = vmatpush1.bf16.msra.mxu0 %v2569
  %3730 = vmatprep.subr.bf16.mxu0 %v2574
  %3731 = vmatpush1.bf16.msra.mxu0 %v2573
  %3732 = vmatprep.subr.bf16.mxu0 %v2578
  %3733 = vmatpush1.bf16.msra.mxu0 %v2577
  %3734 = vmatprep.subr.bf16.mxu0 0
  %3735 = vmatpush1.bf16.msra.mxu0 0
  %3736 = vmatprep.subr.bf16.mxu0 0
  %3737 = vmatpush1.bf16.msra.mxu0 0
  %3738 = vmatprep.subr.bf16.mxu0 0
  %3739 = vmatpush1.bf16.msra.mxu0 0
  %3740 = vmatprep.subr.bf16.mxu0 0
  %3741 = vmatpush1.bf16.msra.mxu0 0
  %3742 = vmatprep.subr.bf16.mxu0 0
  %3743 = vmatpush1.bf16.msra.mxu0 0
  %3744 = vmatprep.subr.bf16.mxu0 0
  %3745 = vmatpush1.bf16.msra.mxu0 0
  %3746 = vmatprep.subr.bf16.mxu0 0
  %3747 = vmatpush1.bf16.msra.mxu0 0
  %3748 = vmatprep.subr.bf16.mxu0 0
  %3749 = vmatpush1.bf16.msra.mxu0 0
  %3750 = vmatprep.mubr.bf16.mxu0 0
  %3751 = vmatmul.mubr.bf16.gmra.mrb[0].mxu0 %v3665
  %v3752 = vpop.f32.mrb[0].mxu0
  %v3753 = vadd.f32 0.0, %v3752
  %v3754 = vpop.f32.mrb[0].mxu0
  %v3755 = vadd.f32 0.0, %v3754
  %v3756 = vpop.f32.mrb[0].mxu0
  %v3757 = vadd.f32 0.0, %v3756
  %v3758 = vpop.f32.mrb[0].mxu0
  %v3759 = vadd.f32 0.0, %v3758
  %3760 = vdwg.mxu0
  %v3761 = vadd.f32 %v3667, %v3710
  %v3762 = vadd.f32 %v3668, %v3712
  %v3763 = vadd.f32 %v3669, %v3753
  %v3764 = vadd.f32 %v3670, %v3755
  %v3765 = vadd.f32 %v3671, %v3714
  %v3766 = vadd.f32 %v3672, %v3716
  %v3767 = vadd.f32 %v3673, %v3757
  %v3768 = vadd.f32 %v3674, %v3759
  %v3769 = vxor.u32 %v3761, 2147483648
  %v3770 = vxor.u32 %v3762, 2147483648
  %v3771 = vxor.u32 %v3763, 2147483648
  %v3772 = vxor.u32 %v3765, 2147483648
  %v3773 = vxor.u32 %v3766, 2147483648
  %v3774 = vxor.u32 %v3767, 2147483648
  %v3775 = vmul.f32 %v3769, 1.442695
  %v3776 = vpow.pop %v3775
  %v3777 = vmul.f32 %v3770, 1.442695
  %v3778 = vpow.pop %v3777
  %v3779 = vmul.f32 %v3771, 1.442695
  %v3780 = vpow.pop %v3779
  %v3781 = vmul.f32 %v3772, 1.442695
  %v3782 = vpow.pop %v3781
  %v3783 = vmul.f32 %v3773, 1.442695
  %v3784 = vpow.pop %v3783
  %v3785 = vmul.f32 %v3774, 1.442695
  %v3786 = vpow.pop %v3785
  %v3787 = vadd.f32 %v3776, 1.0
  %v3788 = vadd.f32 %v3778, 1.0
  %v3789 = vadd.f32 %v3780, 1.0
  %v3790 = vadd.f32 %v3782, 1.0
  %v3791 = vadd.f32 %v3784, 1.0
  %v3792 = vadd.f32 %v3786, 1.0
  %v3793 = vrcp.pop %v3787
  %v3794 = vmul.f32 1.0, %v3793
  %v3795 = vrcp.pop %v3788
  %v3796 = vmul.f32 1.0, %v3795
  %v3797 = vrcp.pop %v3789
  %v3798 = vmul.f32 1.0, %v3797
  %v3799 = vrcp.pop %v3790
  %v3800 = vmul.f32 1.0, %v3799
  %v3801 = vrcp.pop %v3791
  %v3802 = vmul.f32 1.0, %v3801
  %v3803 = vrcp.pop %v3792
  %v3804 = vmul.f32 1.0, %v3803
  %v3805 = vtanh.pop %v3764
  %v3806 = vtanh.pop %v3768
  %v3807 = vmul.f32 %v3796, %v3659
  %v3808 = vmul.f32 %v3802, %v3660
  %v3809 = vmul.f32 %v3794, %v3805
  %v3810 = vmul.f32 %v3800, %v3806
  %v3811 = vadd.f32 %v3807, %v3809
  %v3812 = vadd.f32 %v3808, %v3810
  %v3813 = vtanh.pop %v3811
  %v3814 = vtanh.pop %v3812
  %v3815 = vmul.f32 %v3798, %v3813
  %v3816 = vmul.f32 %v3804, %v3814
  %v3817 = vpack.c.bf16 %v3816, %v3815
  %3818 = vst [vmem:[%s1897] sm:$0xff] %v3817
  %v3819 = vld [vmem:[%s8] sm:$0xff]
  %v3820 = vld [vmem:[%s8 + $0x8] sm:$0xff]
  %v3821 = vld [vmem:[%s8 + $0x10] sm:$0xff]
  %v3822 = vld [vmem:[%s8 + $0x18] sm:$0xff]
  %v3823 = vld [vmem:[%s8 + $0x20] sm:$0xff]
  %v3824 = vld [vmem:[%s8 + $0x28] sm:$0xff]
  %v3825 = vld [vmem:[%s8 + $0x30] sm:$0xff]
  %v3826 = vld [vmem:[%s8 + $0x38] sm:$0xff]
  %v3827 = vld [vmem:[%s8 + $0x40] sm:$0xff]
  %v3828 = vld [vmem:[%s8 + $0x48] sm:$0xff]
  %v3829 = vld [vmem:[%s8 + $0x50] sm:$0xff]
  %v3830 = vld [vmem:[%s8 + $0x58] sm:$0xff]
  %v3831 = vld [vmem:[%s8 + $0x60] sm:$0xff]
  %v3832 = vld [vmem:[%s8 + $0x68] sm:$0xff]
  %v3833 = vld [vmem:[%s8 + $0x70] sm:$0xff]
  %v3834 = vld [vmem:[%s8 + $0x78] sm:$0xff]
  %v3835 = vld [vmem:[%s8 + $0x80] sm:$0xff]
  %v3836 = vld [vmem:[%s8 + $0x88] sm:$0xff]
  %v3837 = vld [vmem:[%s8 + $0x90] sm:$0xff]
  %v3838 = vld [vmem:[%s8 + $0x98] sm:$0xff]
  %v3839 = vld [vmem:[%s8 + $0xa0] sm:$0xff]
  %v3840 = vld [vmem:[%s8 + $0xa8] sm:$0xff]
  %v3841 = vld [vmem:[%s8 + $0xb0] sm:$0xff]
  %v3842 = vld [vmem:[%s8 + $0xb8] sm:$0xff]
  %v3843 = vld [vmem:[%s8 + $0xc0] sm:$0xff]
  %v3844 = vld [vmem:[%s8 + $0xc8] sm:$0xff]
  %v3845 = vld [vmem:[%s8 + $0xd0] sm:$0xff]
  %v3846 = vld [vmem:[%s8 + $0xd8] sm:$0xff]
  %v3847 = vld [vmem:[%s8 + $0xe0] sm:$0xff]
  %v3848 = vld [vmem:[%s8 + $0xe8] sm:$0xff]
  %v3849 = vld [vmem:[%s8 + $0xf0] sm:$0xff]
  %v3850 = vld [vmem:[%s8 + $0xf8] sm:$0xff]
  %v3851 = vld [vmem:[%s9] sm:$0xf]
  %v3852 = vld [vmem:[#allocation2] sm:$0xff]
  %v3853 = vld [vmem:[#allocation2 + $0x8] sm:$0xff]
  %v3854 = vld [vmem:[#allocation2 + $0x10] sm:$0xff]
  %v3855 = vld [vmem:[#allocation2 + $0x18] sm:$0xff]
  %v3856 = vld [vmem:[#allocation2 + $0x20] sm:$0xff]
  %v3857 = vld [vmem:[#allocation2 + $0x28] sm:$0xff]
  %v3858 = vld [vmem:[#allocation2 + $0x30] sm:$0xff]
  %v3859 = vld [vmem:[#allocation2 + $0x38] sm:$0xff]
  %v3860 = vld [vmem:[%s7] sm:$0xff]
  %v3861 = vld [vmem:[%s7 + $0x8] sm:$0xff]
  %v3862 = vld [vmem:[%s7 + $0x10] sm:$0xff]
  %v3863 = vld [vmem:[%s7 + $0x18] sm:$0xff]
  %v3864 = vld [vmem:[%s7 + $0x20] sm:$0xff]
  %v3865 = vld [vmem:[%s7 + $0x28] sm:$0xff]
  %v3866 = vld [vmem:[%s7 + $0x30] sm:$0xff]
  %v3867 = vld [vmem:[%s7 + $0x38] sm:$0xff]
  %v3868 = vld [vmem:[%s7 + $0x40] sm:$0xff]
  %v3869 = vld [vmem:[%s7 + $0x48] sm:$0xff]
  %v3870 = vld [vmem:[%s7 + $0x50] sm:$0xff]
  %v3871 = vld [vmem:[%s7 + $0x58] sm:$0xff]
  %v3872 = vld [vmem:[%s7 + $0x60] sm:$0xff]
  %v3873 = vld [vmem:[%s7 + $0x68] sm:$0xff]
  %v3874 = vld [vmem:[%s7 + $0x70] sm:$0xff]
  %v3875 = vld [vmem:[%s7 + $0x78] sm:$0xff]
  %v3876 = vld [vmem:[%s7 + $0x80] sm:$0xff]
  %v3877 = vld [vmem:[%s7 + $0x88] sm:$0xff]
  %v3878 = vld [vmem:[%s7 + $0x90] sm:$0xff]
  %v3879 = vld [vmem:[%s7 + $0x98] sm:$0xff]
  %v3880 = vld [vmem:[%s7 + $0xa0] sm:$0xff]
  %v3881 = vld [vmem:[%s7 + $0xa8] sm:$0xff]
  %v3882 = vld [vmem:[%s7 + $0xb0] sm:$0xff]
  %v3883 = vld [vmem:[%s7 + $0xb8] sm:$0xff]
  %v3884 = vld [vmem:[%s7 + $0xc0] sm:$0xff]
  %v3885 = vld [vmem:[%s7 + $0xc8] sm:$0xff]
  %v3886 = vld [vmem:[%s7 + $0xd0] sm:$0xff]
  %v3887 = vld [vmem:[%s7 + $0xd8] sm:$0xff]
  %v3888 = vld [vmem:[%s7 + $0xe0] sm:$0xff]
  %v3889 = vld [vmem:[%s7 + $0xe8] sm:$0xff]
  %v3890 = vld [vmem:[%s7 + $0xf0] sm:$0xff]
  %v3891 = vld [vmem:[%s7 + $0xf8] sm:$0xff]
  %v3893 = vlaneseq
  %v3894 = vshrl.u32 %v3893, 7
  %v3895 = vsub.s32 0, %v3894
  %v3896 = vrot.slane %v3851, %v3895
  %v3897 = vlaneseq
  %v3898 = vshrl.u32 %v3897, 7
  %v3899 = vsub.s32 1, %v3898
  %v3900 = vrot.slane %v3851, %v3899
  %v3901 = vlaneseq
  %v3902 = vshrl.u32 %v3901, 7
  %v3903 = vsub.s32 2, %v3902
  %v3904 = vrot.slane %v3851, %v3903
  %v3905 = vlaneseq
  %v3906 = vshrl.u32 %v3905, 7
  %v3907 = vsub.s32 3, %v3906
  %v3908 = vrot.slane %v3851, %v3907
  %v3945 = vunpack.c.l.b16 %v3860
  %v3946 = vunpack.c.h.b16 %v3860
  %v3947 = vunpack.c.l.b16 %v3861
  %v3948 = vunpack.c.h.b16 %v3861
  %v3949 = vunpack.c.l.b16 %v3862
  %v3950 = vunpack.c.h.b16 %v3862
  %v3951 = vunpack.c.l.b16 %v3863
  %v3952 = vunpack.c.h.b16 %v3863
  %v3953 = vunpack.c.l.b16 %v3864
  %v3954 = vunpack.c.h.b16 %v3864
  %v3955 = vunpack.c.l.b16 %v3865
  %v3956 = vunpack.c.h.b16 %v3865
  %v3957 = vunpack.c.l.b16 %v3866
  %v3958 = vunpack.c.h.b16 %v3866
  %v3959 = vunpack.c.l.b16 %v3867
  %v3960 = vunpack.c.h.b16 %v3867
  %v3961 = vunpack.c.l.b16 %v3868
  %v3962 = vunpack.c.h.b16 %v3868
  %v3963 = vunpack.c.l.b16 %v3869
  %v3964 = vunpack.c.h.b16 %v3869
  %v3965 = vunpack.c.l.b16 %v3870
  %v3966 = vunpack.c.h.b16 %v3870
  %v3967 = vunpack.c.l.b16 %v3871
  %v3968 = vunpack.c.h.b16 %v3871
  %v3969 = vunpack.c.l.b16 %v3872
  %v3970 = vunpack.c.h.b16 %v3872
  %v3971 = vunpack.c.l.b16 %v3873
  %v3972 = vunpack.c.h.b16 %v3873
  %v3973 = vunpack.c.l.b16 %v3874
  %v3974 = vunpack.c.h.b16 %v3874
  %v3975 = vunpack.c.l.b16 %v3875
  %v3976 = vunpack.c.h.b16 %v3875
  %v3977 = vunpack.c.l.b16 %v3876
  %v3978 = vunpack.c.h.b16 %v3876
  %v3979 = vunpack.c.l.b16 %v3877
  %v3980 = vunpack.c.h.b16 %v3877
  %v3981 = vunpack.c.l.b16 %v3878
  %v3982 = vunpack.c.h.b16 %v3878
  %v3983 = vunpack.c.l.b16 %v3879
  %v3984 = vunpack.c.h.b16 %v3879
  %v3985 = vunpack.c.l.b16 %v3880
  %v3986 = vunpack.c.h.b16 %v3880
  %v3987 = vunpack.c.l.b16 %v3881
  %v3988 = vunpack.c.h.b16 %v3881
  %v3989 = vunpack.c.l.b16 %v3882
  %v3990 = vunpack.c.h.b16 %v3882
  %v3991 = vunpack.c.l.b16 %v3883
  %v3992 = vunpack.c.h.b16 %v3883
  %v3993 = vunpack.c.l.b16 %v3884
  %v3994 = vunpack.c.h.b16 %v3884
  %v3995 = vunpack.c.l.b16 %v3885
  %v3996 = vunpack.c.h.b16 %v3885
  %v3997 = vunpack.c.l.b16 %v3886
  %v3998 = vunpack.c.h.b16 %v3886
  %v3999 = vunpack.c.l.b16 %v3887
  %v4000 = vunpack.c.h.b16 %v3887
  %v4001 = vunpack.c.l.b16 %v3888
  %v4002 = vunpack.c.h.b16 %v3888
  %v4003 = vunpack.c.l.b16 %v3889
  %v4004 = vunpack.c.h.b16 %v3889
  %v4005 = vunpack.c.l.b16 %v3890
  %v4006 = vunpack.c.h.b16 %v3890
  %v4007 = vunpack.c.l.b16 %v3891
  %v4008 = vunpack.c.h.b16 %v3891
  %v4009 = vpack.c.b16 %v3949, %v3945
  %v4010 = vpack.c.b16 %v3950, %v3946
  %v4011 = vpack.c.b16 %v3951, %v3947
  %v4012 = vpack.c.b16 %v3952, %v3948
  %v4013 = vpack.c.b16 %v3957, %v3953
  %v4014 = vpack.c.b16 %v3958, %v3954
  %v4015 = vpack.c.b16 %v3959, %v3955
  %v4016 = vpack.c.b16 %v3960, %v3956
  %v4017 = vpack.c.b16 %v3965, %v3961
  %v4018 = vpack.c.b16 %v3966, %v3962
  %v4019 = vpack.c.b16 %v3967, %v3963
  %v4020 = vpack.c.b16 %v3968, %v3964
  %v4021 = vpack.c.b16 %v3973, %v3969
  %v4022 = vpack.c.b16 %v3974, %v3970
  %v4023 = vpack.c.b16 %v3975, %v3971
  %v4024 = vpack.c.b16 %v3976, %v3972
  %v4025 = vpack.c.b16 %v3981, %v3977
  %v4026 = vpack.c.b16 %v3982, %v3978
  %v4027 = vpack.c.b16 %v3983, %v3979
  %v4028 = vpack.c.b16 %v3984, %v3980
  %v4029 = vpack.c.b16 %v3989, %v3985
  %v4030 = vpack.c.b16 %v3990, %v3986
  %v4031 = vpack.c.b16 %v3991, %v3987
  %v4032 = vpack.c.b16 %v3992, %v3988
  %v4033 = vpack.c.b16 %v3997, %v3993
  %v4034 = vpack.c.b16 %v3998, %v3994
  %v4035 = vpack.c.b16 %v3999, %v3995
  %v4036 = vpack.c.b16 %v4000, %v3996
  %v4037 = vpack.c.b16 %v4005, %v4001
  %v4038 = vpack.c.b16 %v4006, %v4002
  %v4039 = vpack.c.b16 %v4007, %v4003
  %v4040 = vpack.c.b16 %v4008, %v4004
  %4073 = vmatprep.subr.bf16.mxu0 %v4010
  %4074 = vmatpush1.bf16.msra.mxu0 %v4009
  %4075 = vmatprep.subr.bf16.mxu0 %v4014
  %4076 = vmatpush1.bf16.msra.mxu0 %v4013
  %4077 = vmatprep.subr.bf16.mxu0 %v4018
  %4078 = vmatpush1.bf16.msra.mxu0 %v4017
  %4079 = vmatprep.subr.bf16.mxu0 %v4022
  %4080 = vmatpush1.bf16.msra.mxu0 %v4021
  %4081 = vmatprep.subr.bf16.mxu0 %v4026
  %4082 = vmatpush1.bf16.msra.mxu0 %v4025
  %4083 = vmatprep.subr.bf16.mxu0 %v4030
  %4084 = vmatpush1.bf16.msra.mxu0 %v4029
  %4085 = vmatprep.subr.bf16.mxu0 %v4034
  %4086 = vmatpush1.bf16.msra.mxu0 %v4033
  %4087 = vmatprep.subr.bf16.mxu0 %v4038
  %4088 = vmatpush1.bf16.msra.mxu0 %v4037
  %4089 = vmatprep.subr.bf16.mxu0 0
  %4090 = vmatpush1.bf16.msra.mxu0 0
  %4091 = vmatprep.subr.bf16.mxu0 0
  %4092 = vmatpush1.bf16.msra.mxu0 0
  %4093 = vmatprep.subr.bf16.mxu0 0
  %4094 = vmatpush1.bf16.msra.mxu0 0
  %4095 = vmatprep.subr.bf16.mxu0 0
  %4096 = vmatpush1.bf16.msra.mxu0 0
  %4097 = vmatprep.subr.bf16.mxu0 0
  %4098 = vmatpush1.bf16.msra.mxu0 0
  %4099 = vmatprep.subr.bf16.mxu0 0
  %4100 = vmatpush1.bf16.msra.mxu0 0
  %4101 = vmatprep.subr.bf16.mxu0 0
  %4102 = vmatpush1.bf16.msra.mxu0 0
  %4103 = vmatprep.subr.bf16.mxu0 0
  %4104 = vmatpush1.bf16.msra.mxu0 0
  %4105 = vmatprep.mubr.bf16.mxu0 0
  %4106 = vmatmul.mubr.bf16.gmra.mrb[0].mxu0 %v3852
  %v4107 = vpop.f32.mrb[0].mxu0
  %v4108 = vadd.f32 %v3896, %v4107
  %v4109 = vpop.f32.mrb[0].mxu0
  %v4110 = vadd.f32 %v3900, %v4109
  %v4111 = vpop.f32.mrb[0].mxu0
  %v4112 = vadd.f32 %v3896, %v4111
  %v4113 = vpop.f32.mrb[0].mxu0
  %v4114 = vadd.f32 %v3900, %v4113
  %4115 = vmatprep.mubr.bf16.mxu0 0
  %4116 = vmatmul.mubr.bf16.gmra.mrb[0].mxu0 %v3853
  %v4117 = vpop.f32.mrb[0].mxu0
  %v4118 = vadd.f32 %v3896, %v4117
  %v4119 = vpop.f32.mrb[0].mxu0
  %v4120 = vadd.f32 %v3900, %v4119
  %v4121 = vpop.f32.mrb[0].mxu0
  %v4122 = vadd.f32 %v3896, %v4121
  %v4123 = vpop.f32.mrb[0].mxu0
  %v4124 = vadd.f32 %v3900, %v4123
  %4125 = vmatprep.mubr.bf16.mxu0 0
  %4126 = vmatmul.mubr.bf16.gmra.mrb[0].mxu0 %v3854
  %v4127 = vpop.f32.mrb[0].mxu0
  %v4128 = vadd.f32 %v3896, %v4127
  %v4129 = vpop.f32.mrb[0].mxu0
  %v4130 = vadd.f32 %v3900, %v4129
  %v4131 = vpop.f32.mrb[0].mxu0
  %v4132 = vadd.f32 %v3896, %v4131
  %v4133 = vpop.f32.mrb[0].mxu0
  %v4134 = vadd.f32 %v3900, %v4133
  %4135 = vmatprep.mubr.bf16.mxu0 0
  %4136 = vmatmul.mubr.bf16.gmra.mrb[0].mxu0 %v3855
  %v4137 = vpop.f32.mrb[0].mxu0
  %v4138 = vadd.f32 %v3896, %v4137
  %v4139 = vpop.f32.mrb[0].mxu0
  %v4140 = vadd.f32 %v3900, %v4139
  %v4141 = vpop.f32.mrb[0].mxu0
  %v4142 = vadd.f32 %v3896, %v4141
  %v4143 = vpop.f32.mrb[0].mxu0
  %v4144 = vadd.f32 %v3900, %v4143
  %4145 = vmatprep.mubr.bf16.mxu0 0
  %4146 = vmatmul.mubr.bf16.gmra.mrb[0].mxu0 %v3856
  %v4147 = vpop.f32.mrb[0].mxu0
  %v4148 = vadd.f32 %v3896, %v4147
  %v4149 = vpop.f32.mrb[0].mxu0
  %v4150 = vadd.f32 %v3900, %v4149
  %v4151 = vpop.f32.mrb[0].mxu0
  %v4152 = vadd.f32 %v3896, %v4151
  %v4153 = vpop.f32.mrb[0].mxu0
  %v4154 = vadd.f32 %v3900, %v4153
  %4155 = vmatprep.mubr.bf16.mxu0 0
  %4156 = vmatmul.mubr.bf16.gmra.mrb[0].mxu0 %v3857
  %v4157 = vpop.f32.mrb[0].mxu0
  %v4158 = vadd.f32 %v3896, %v4157
  %v4159 = vpop.f32.mrb[0].mxu0
  %v4160 = vadd.f32 %v3900, %v4159
  %v4161 = vpop.f32.mrb[0].mxu0
  %v4162 = vadd.f32 %v3896, %v4161
  %v4163 = vpop.f32.mrb[0].mxu0
  %v4164 = vadd.f32 %v3900, %v4163
  %4165 = vmatprep.mubr.bf16.mxu0 0
  %4166 = vmatmul.mubr.bf16.gmra.mrb[0].mxu0 %v3858
  %v4167 = vpop.f32.mrb[0].mxu0
  %v4168 = vadd.f32 %v3896, %v4167
  %v4169 = vpop.f32.mrb[0].mxu0
  %v4170 = vadd.f32 %v3900, %v4169
  %v4171 = vpop.f32.mrb[0].mxu0
  %v4172 = vadd.f32 %v3896, %v4171
  %v4173 = vpop.f32.mrb[0].mxu0
  %v4174 = vadd.f32 %v3900, %v4173
  %4175 = vmatprep.mubr.bf16.mxu0 0
  %4176 = vmatmul.mubr.bf16.gmra.mrb[0].mxu0 %v3859
  %v4177 = vpop.f32.mrb[0].mxu0
  %v4178 = vadd.f32 %v3896, %v4177
  %v4179 = vpop.f32.mrb[0].mxu0
  %v4180 = vadd.f32 %v3900, %v4179
  %v4181 = vpop.f32.mrb[0].mxu0
  %v4182 = vadd.f32 %v3896, %v4181
  %v4183 = vpop.f32.mrb[0].mxu0
  %v4184 = vadd.f32 %v3900, %v4183
  %4185 = vdwg.mxu0
  %4186 = vmatprep.subr.bf16.mxu0 %v4012
  %4187 = vmatpush1.bf16.msra.mxu0 %v4011
  %4188 = vmatprep.subr.bf16.mxu0 %v4016
  %4189 = vmatpush1.bf16.msra.mxu0 %v4015
  %4190 = vmatprep.subr.bf16.mxu0 %v4020
  %4191 = vmatpush1.bf16.msra.mxu0 %v4019
  %4192 = vmatprep.subr.bf16.mxu0 %v4024
  %4193 = vmatpush1.bf16.msra.mxu0 %v4023
  %4194 = vmatprep.subr.bf16.mxu0 %v4028
  %4195 = vmatpush1.bf16.msra.mxu0 %v4027
  %4196 = vmatprep.subr.bf16.mxu0 %v4032
  %4197 = vmatpush1.bf16.msra.mxu0 %v4031
  %4198 = vmatprep.subr.bf16.mxu0 %v4036
  %4199 = vmatpush1.bf16.msra.mxu0 %v4035
  %4200 = vmatprep.subr.bf16.mxu0 %v4040
  %4201 = vmatpush1.bf16.msra.mxu0 %v4039
  %4202 = vmatprep.subr.bf16.mxu0 0
  %4203 = vmatpush1.bf16.msra.mxu0 0
  %4204 = vmatprep.subr.bf16.mxu0 0
  %4205 = vmatpush1.bf16.msra.mxu0 0
  %4206 = vmatprep.subr.bf16.mxu0 0
  %4207 = vmatpush1.bf16.msra.mxu0 0
  %4208 = vmatprep.subr.bf16.mxu0 0
  %4209 = vmatpush1.bf16.msra.mxu0 0
  %4210 = vmatprep.subr.bf16.mxu0 0
  %4211 = vmatpush1.bf16.msra.mxu0 0
  %4212 = vmatprep.subr.bf16.mxu0 0
  %4213 = vmatpush1.bf16.msra.mxu0 0
  %4214 = vmatprep.subr.bf16.mxu0 0
  %4215 = vmatpush1.bf16.msra.mxu0 0
  %4216 = vmatprep.subr.bf16.mxu0 0
  %4217 = vmatpush1.bf16.msra.mxu0 0
  %4218 = vmatprep.mubr.bf16.mxu0 0
  %4219 = vmatmul.mubr.bf16.gmra.mrb[0].mxu0 %v3852
  %v4220 = vpop.f32.mrb[0].mxu0
  %v4221 = vadd.f32 %v3904, %v4220
  %v4222 = vpop.f32.mrb[0].mxu0
  %v4223 = vadd.f32 %v3908, %v4222
  %v4224 = vpop.f32.mrb[0].mxu0
  %v4225 = vadd.f32 %v3904, %v4224
  %v4226 = vpop.f32.mrb[0].mxu0
  %v4227 = vadd.f32 %v3908, %v4226
  %4228 = vmatprep.mubr.bf16.mxu0 0
  %4229 = vmatmul.mubr.bf16.gmra.mrb[0].mxu0 %v3853
  %v4230 = vpop.f32.mrb[0].mxu0
  %v4231 = vadd.f32 %v3904, %v4230
  %v4232 = vpop.f32.mrb[0].mxu0
  %v4233 = vadd.f32 %v3908, %v4232
  %v4234 = vpop.f32.mrb[0].mxu0
  %v4235 = vadd.f32 %v3904, %v4234
  %v4236 = vpop.f32.mrb[0].mxu0
  %v4237 = vadd.f32 %v3908, %v4236
  %4238 = vmatprep.mubr.bf16.mxu0 0
  %4239 = vmatmul.mubr.bf16.gmra.mrb[0].mxu0 %v3854
  %v4240 = vpop.f32.mrb[0].mxu0
  %v4241 = vadd.f32 %v3904, %v4240
  %v4242 = vpop.f32.mrb[0].mxu0
  %v4243 = vadd.f32 %v3908, %v4242
  %v4244 = vpop.f32.mrb[0].mxu0
  %v4245 = vadd.f32 %v3904, %v4244
  %v4246 = vpop.f32.mrb[0].mxu0
  %v4247 = vadd.f32 %v3908, %v4246
  %4248 = vmatprep.mubr.bf16.mxu0 0
  %4249 = vmatmul.mubr.bf16.gmra.mrb[0].mxu0 %v3855
  %v4250 = vpop.f32.mrb[0].mxu0
  %v4251 = vadd.f32 %v3904, %v4250
  %v4252 = vpop.f32.mrb[0].mxu0
  %v4253 = vadd.f32 %v3908, %v4252
  %v4254 = vpop.f32.mrb[0].mxu0
  %v4255 = vadd.f32 %v3904, %v4254
  %v4256 = vpop.f32.mrb[0].mxu0
  %v4257 = vadd.f32 %v3908, %v4256
  %4258 = vmatprep.mubr.bf16.mxu0 0
  %4259 = vmatmul.mubr.bf16.gmra.mrb[0].mxu0 %v3856
  %v4260 = vpop.f32.mrb[0].mxu0
  %v4261 = vadd.f32 %v3904, %v4260
  %v4262 = vpop.f32.mrb[0].mxu0
  %v4263 = vadd.f32 %v3908, %v4262
  %v4264 = vpop.f32.mrb[0].mxu0
  %v4265 = vadd.f32 %v3904, %v4264
  %v4266 = vpop.f32.mrb[0].mxu0
  %v4267 = vadd.f32 %v3908, %v4266
  %4268 = vmatprep.mubr.bf16.mxu0 0
  %4269 = vmatmul.mubr.bf16.gmra.mrb[0].mxu0 %v3857
  %v4270 = vpop.f32.mrb[0].mxu0
  %v4271 = vadd.f32 %v3904, %v4270
  %v4272 = vpop.f32.mrb[0].mxu0
  %v4273 = vadd.f32 %v3908, %v4272
  %v4274 = vpop.f32.mrb[0].mxu0
  %v4275 = vadd.f32 %v3904, %v4274
  %v4276 = vpop.f32.mrb[0].mxu0
  %v4277 = vadd.f32 %v3908, %v4276
  %4278 = vmatprep.mubr.bf16.mxu0 0
  %4279 = vmatmul.mubr.bf16.gmra.mrb[0].mxu0 %v3858
  %v4280 = vpop.f32.mrb[0].mxu0
  %v4281 = vadd.f32 %v3904, %v4280
  %v4282 = vpop.f32.mrb[0].mxu0
  %v4283 = vadd.f32 %v3908, %v4282
  %v4284 = vpop.f32.mrb[0].mxu0
  %v4285 = vadd.f32 %v3904, %v4284
  %v4286 = vpop.f32.mrb[0].mxu0
  %v4287 = vadd.f32 %v3908, %v4286
  %4288 = vmatprep.mubr.bf16.mxu0 0
  %4289 = vmatmul.mubr.bf16.gmra.mrb[0].mxu0 %v3859
  %v4290 = vpop.f32.mrb[0].mxu0
  %v4291 = vadd.f32 %v3904, %v4290
  %v4292 = vpop.f32.mrb[0].mxu0
  %v4293 = vadd.f32 %v3908, %v4292
  %v4294 = vpop.f32.mrb[0].mxu0
  %v4295 = vadd.f32 %v3904, %v4294
  %v4296 = vpop.f32.mrb[0].mxu0
  %v4297 = vadd.f32 %v3908, %v4296
  %4298 = vdwg.mxu0
  %4299 = vst [vmem:[#allocation3] sm:$0xff] %v4108
  %4300 = vst [vmem:[#allocation3 + $0x8] sm:$0xff] %v4110
  %4301 = vst [vmem:[#allocation3 + $0x10] sm:$0xff] %v4221
  %4302 = vst [vmem:[#allocation3 + $0x18] sm:$0xff] %v4223
  %4303 = vst [vmem:[#allocation3 + $0x20] sm:$0xff] %v4112
  %4304 = vst [vmem:[#allocation3 + $0x28] sm:$0xff] %v4114
  %4305 = vst [vmem:[#allocation3 + $0x30] sm:$0xff] %v4225
  %4306 = vst [vmem:[#allocation3 + $0x38] sm:$0xff] %v4227
  %4307 = vst [vmem:[#allocation3 + $0x40] sm:$0xff] %v4118
  %4308 = vst [vmem:[#allocation3 + $0x48] sm:$0xff] %v4120
  %4309 = vst [vmem:[#allocation3 + $0x50] sm:$0xff] %v4231
  %4310 = vst [vmem:[#allocation3 + $0x58] sm:$0xff] %v4233
  %4311 = vst [vmem:[#allocation3 + $0x60] sm:$0xff] %v4122
  %4312 = vst [vmem:[#allocation3 + $0x68] sm:$0xff] %v4124
  %4313 = vst [vmem:[#allocation3 + $0x70] sm:$0xff] %v4235
  %4314 = vst [vmem:[#allocation3 + $0x78] sm:$0xff] %v4237
  %4315 = vst [vmem:[#allocation3 + $0x80] sm:$0xff] %v4128
  %4316 = vst [vmem:[#allocation3 + $0x88] sm:$0xff] %v4130
  %4317 = vst [vmem:[#allocation3 + $0x90] sm:$0xff] %v4241
  %4318 = vst [vmem:[#allocation3 + $0x98] sm:$0xff] %v4243
  %4319 = vst [vmem:[#allocation3 + $0xa0] sm:$0xff] %v4132
  %4320 = vst [vmem:[#allocation3 + $0xa8] sm:$0xff] %v4134
  %4321 = vst [vmem:[#allocation3 + $0xb0] sm:$0xff] %v4245
  %4322 = vst [vmem:[#allocation3 + $0xb8] sm:$0xff] %v4247
  %4323 = vst [vmem:[#allocation3 + $0xc0] sm:$0xff] %v4138
  %4324 = vst [vmem:[#allocation3 + $0xc8] sm:$0xff] %v4140
  %4325 = vst [vmem:[#allocation3 + $0xd0] sm:$0xff] %v4251
  %4326 = vst [vmem:[#allocation3 + $0xd8] sm:$0xff] %v4253
  %4327 = vst [vmem:[#allocation3 + $0xe0] sm:$0xff] %v4142
  %4328 = vst [vmem:[#allocation3 + $0xe8] sm:$0xff] %v4144
  %4329 = vst [vmem:[#allocation3 + $0xf0] sm:$0xff] %v4255
  %4330 = vst [vmem:[#allocation3 + $0xf8] sm:$0xff] %v4257
  %4331 = vst [vmem:[#allocation3 + $0x100] sm:$0xff] %v4148
  %4332 = vst [vmem:[#allocation3 + $0x108] sm:$0xff] %v4150
  %4333 = vst [vmem:[#allocation3 + $0x110] sm:$0xff] %v4261
  %4334 = vst [vmem:[#allocation3 + $0x118] sm:$0xff] %v4263
  %4335 = vst [vmem:[#allocation3 + $0x120] sm:$0xff] %v4152
  %4336 = vst [vmem:[#allocation3 + $0x128] sm:$0xff] %v4154
  %4337 = vst [vmem:[#allocation3 + $0x130] sm:$0xff] %v4265
  %4338 = vst [vmem:[#allocation3 + $0x138] sm:$0xff] %v4267
  %4339 = vst [vmem:[#allocation3 + $0x140] sm:$0xff] %v4158
  %4340 = vst [vmem:[#allocation3 + $0x148] sm:$0xff] %v4160
  %4341 = vst [vmem:[#allocation3 + $0x150] sm:$0xff] %v4271
  %4342 = vst [vmem:[#allocation3 + $0x158] sm:$0xff] %v4273
  %4343 = vst [vmem:[#allocation3 + $0x160] sm:$0xff] %v4162
  %4344 = vst [vmem:[#allocation3 + $0x168] sm:$0xff] %v4164
  %4345 = vst [vmem:[#allocation3 + $0x170] sm:$0xff] %v4275
  %4346 = vst [vmem:[#allocation3 + $0x178] sm:$0xff] %v4277
  %4347 = vst [vmem:[#allocation3 + $0x180] sm:$0xff] %v4168
  %4348 = vst [vmem:[#allocation3 + $0x188] sm:$0xff] %v4170
  %4349 = vst [vmem:[#allocation3 + $0x190] sm:$0xff] %v4281
  %4350 = vst [vmem:[#allocation3 + $0x198] sm:$0xff] %v4283
  %4351 = vst [vmem:[#allocation3 + $0x1a0] sm:$0xff] %v4172
  %4352 = vst [vmem:[#allocation3 + $0x1a8] sm:$0xff] %v4174
  %4353 = vst [vmem:[#allocation3 + $0x1b0] sm:$0xff] %v4285
  %4354 = vst [vmem:[#allocation3 + $0x1b8] sm:$0xff] %v4287
  %4355 = vst [vmem:[#allocation3 + $0x1c0] sm:$0xff] %v4178
  %4356 = vst [vmem:[#allocation3 + $0x1c8] sm:$0xff] %v4180
  %4357 = vst [vmem:[#allocation3 + $0x1d0] sm:$0xff] %v4291
  %4358 = vst [vmem:[#allocation3 + $0x1d8] sm:$0xff] %v4293
  %4359 = vst [vmem:[#allocation3 + $0x1e0] sm:$0xff] %v4182
  %4360 = vst [vmem:[#allocation3 + $0x1e8] sm:$0xff] %v4184
  %4361 = vst [vmem:[#allocation3 + $0x1f0] sm:$0xff] %v4295
  %4362 = vst [vmem:[#allocation3 + $0x1f8] sm:$0xff] %v4297
  %v4363 = vld [vmem:[%s494] sm:$0xff]
  %v4364 = vld [vmem:[%s494 + $0x8] sm:$0xff]
  %v4365 = vld [vmem:[%s494 + $0x10] sm:$0xff]
  %v4366 = vld [vmem:[%s494 + $0x18] sm:$0xff]
  %v4367 = vld [vmem:[%s494 + $0x20] sm:$0xff]
  %v4368 = vld [vmem:[%s494 + $0x28] sm:$0xff]
  %v4369 = vld [vmem:[%s494 + $0x30] sm:$0xff]
  %v4370 = vld [vmem:[%s494 + $0x38] sm:$0xff]
  %v4403 = vunpack.c.l.b16 %v3819
  %v4404 = vunpack.c.h.b16 %v3819
  %v4405 = vunpack.c.l.b16 %v3820
  %v4406 = vunpack.c.h.b16 %v3820
  %v4407 = vunpack.c.l.b16 %v3821
  %v4408 = vunpack.c.h.b16 %v3821
  %v4409 = vunpack.c.l.b16 %v3822
  %v4410 = vunpack.c.h.b16 %v3822
  %v4411 = vunpack.c.l.b16 %v3823
  %v4412 = vunpack.c.h.b16 %v3823
  %v4413 = vunpack.c.l.b16 %v3824
  %v4414 = vunpack.c.h.b16 %v3824
  %v4415 = vunpack.c.l.b16 %v3825
  %v4416 = vunpack.c.h.b16 %v3825
  %v4417 = vunpack.c.l.b16 %v3826
  %v4418 = vunpack.c.h.b16 %v3826
  %v4419 = vunpack.c.l.b16 %v3827
  %v4420 = vunpack.c.h.b16 %v3827
  %v4421 = vunpack.c.l.b16 %v3828
  %v4422 = vunpack.c.h.b16 %v3828
  %v4423 = vunpack.c.l.b16 %v3829
  %v4424 = vunpack.c.h.b16 %v3829
  %v4425 = vunpack.c.l.b16 %v3830
  %v4426 = vunpack.c.h.b16 %v3830
  %v4427 = vunpack.c.l.b16 %v3831
  %v4428 = vunpack.c.h.b16 %v3831
  %v4429 = vunpack.c.l.b16 %v3832
  %v4430 = vunpack.c.h.b16 %v3832
  %v4431 = vunpack.c.l.b16 %v3833
  %v4432 = vunpack.c.h.b16 %v3833
  %v4433 = vunpack.c.l.b16 %v3834
  %v4434 = vunpack.c.h.b16 %v3834
  %v4435 = vunpack.c.l.b16 %v3835
  %v4436 = vunpack.c.h.b16 %v3835
  %v4437 = vunpack.c.l.b16 %v3836
  %v4438 = vunpack.c.h.b16 %v3836
  %v4439 = vunpack.c.l.b16 %v3837
  %v4440 = vunpack.c.h.b16 %v3837
  %v4441 = vunpack.c.l.b16 %v3838
  %v4442 = vunpack.c.h.b16 %v3838
  %v4443 = vunpack.c.l.b16 %v3839
  %v4444 = vunpack.c.h.b16 %v3839
  %v4445 = vunpack.c.l.b16 %v3840
  %v4446 = vunpack.c.h.b16 %v3840
  %v4447 = vunpack.c.l.b16 %v3841
  %v4448 = vunpack.c.h.b16 %v3841
  %v4449 = vunpack.c.l.b16 %v3842
  %v4450 = vunpack.c.h.b16 %v3842
  %v4451 = vunpack.c.l.b16 %v3843
  %v4452 = vunpack.c.h.b16 %v3843
  %v4453 = vunpack.c.l.b16 %v3844
  %v4454 = vunpack.c.h.b16 %v3844
  %v4455 = vunpack.c.l.b16 %v3845
  %v4456 = vunpack.c.h.b16 %v3845
  %v4457 = vunpack.c.l.b16 %v3846
  %v4458 = vunpack.c.h.b16 %v3846
  %v4459 = vunpack.c.l.b16 %v3847
  %v4460 = vunpack.c.h.b16 %v3847
  %v4461 = vunpack.c.l.b16 %v3848
  %v4462 = vunpack.c.h.b16 %v3848
  %v4463 = vunpack.c.l.b16 %v3849
  %v4464 = vunpack.c.h.b16 %v3849
  %v4465 = vunpack.c.l.b16 %v3850
  %v4466 = vunpack.c.h.b16 %v3850
  %v4467 = vpack.c.b16 %v4407, %v4403
  %v4468 = vpack.c.b16 %v4408, %v4404
  %v4469 = vpack.c.b16 %v4409, %v4405
  %v4470 = vpack.c.b16 %v4410, %v4406
  %v4471 = vpack.c.b16 %v4415, %v4411
  %v4472 = vpack.c.b16 %v4416, %v4412
  %v4473 = vpack.c.b16 %v4417, %v4413
  %v4474 = vpack.c.b16 %v4418, %v4414
  %v4475 = vpack.c.b16 %v4423, %v4419
  %v4476 = vpack.c.b16 %v4424, %v4420
  %v4477 = vpack.c.b16 %v4425, %v4421
  %v4478 = vpack.c.b16 %v4426, %v4422
  %v4479 = vpack.c.b16 %v4431, %v4427
  %v4480 = vpack.c.b16 %v4432, %v4428
  %v4481 = vpack.c.b16 %v4433, %v4429
  %v4482 = vpack.c.b16 %v4434, %v4430
  %v4483 = vpack.c.b16 %v4439, %v4435
  %v4484 = vpack.c.b16 %v4440, %v4436
  %v4485 = vpack.c.b16 %v4441, %v4437
  %v4486 = vpack.c.b16 %v4442, %v4438
  %v4487 = vpack.c.b16 %v4447, %v4443
  %v4488 = vpack.c.b16 %v4448, %v4444
  %v4489 = vpack.c.b16 %v4449, %v4445
  %v4490 = vpack.c.b16 %v4450, %v4446
  %v4491 = vpack.c.b16 %v4455, %v4451
  %v4492 = vpack.c.b16 %v4456, %v4452
  %v4493 = vpack.c.b16 %v4457, %v4453
  %v4494 = vpack.c.b16 %v4458, %v4454
  %v4495 = vpack.c.b16 %v4463, %v4459
  %v4496 = vpack.c.b16 %v4464, %v4460
  %v4497 = vpack.c.b16 %v4465, %v4461
  %v4498 = vpack.c.b16 %v4466, %v4462
  %4531 = vmatprep.subr.bf16.mxu0 %v4468
  %4532 = vmatpush1.bf16.msra.mxu0 %v4467
  %4533 = vmatprep.subr.bf16.mxu0 %v4472
  %4534 = vmatpush1.bf16.msra.mxu0 %v4471
  %4535 = vmatprep.subr.bf16.mxu0 %v4476
  %4536 = vmatpush1.bf16.msra.mxu0 %v4475
  %4537 = vmatprep.subr.bf16.mxu0 %v4480
  %4538 = vmatpush1.bf16.msra.mxu0 %v4479
  %4539 = vmatprep.subr.bf16.mxu0 %v4484
  %4540 = vmatpush1.bf16.msra.mxu0 %v4483
  %4541 = vmatprep.subr.bf16.mxu0 %v4488
  %4542 = vmatpush1.bf16.msra.mxu0 %v4487
  %4543 = vmatprep.subr.bf16.mxu0 %v4492
  %4544 = vmatpush1.bf16.msra.mxu0 %v4491
  %4545 = vmatprep.subr.bf16.mxu0 %v4496
  %4546 = vmatpush1.bf16.msra.mxu0 %v4495
  %4547 = vmatprep.subr.bf16.mxu0 0
  %4548 = vmatpush1.bf16.msra.mxu0 0
  %4549 = vmatprep.subr.bf16.mxu0 0
  %4550 = vmatpush1.bf16.msra.mxu0 0
  %4551 = vmatprep.subr.bf16.mxu0 0
  %4552 = vmatpush1.bf16.msra.mxu0 0
  %4553 = vmatprep.subr.bf16.mxu0 0
  %4554 = vmatpush1.bf16.msra.mxu0 0
  %4555 = vmatprep.subr.bf16.mxu0 0
  %4556 = vmatpush1.bf16.msra.mxu0 0
  %4557 = vmatprep.subr.bf16.mxu0 0
  %4558 = vmatpush1.bf16.msra.mxu0 0
  %4559 = vmatprep.subr.bf16.mxu0 0
  %4560 = vmatpush1.bf16.msra.mxu0 0
  %4561 = vmatprep.subr.bf16.mxu0 0
  %4562 = vmatpush1.bf16.msra.mxu0 0
  %4563 = vmatprep.mubr.bf16.mxu0 0
  %4564 = vmatmul.mubr.bf16.gmra.mrb[0].mxu0 0
  %v4565 = vpop.f32.mrb[0].mxu0
  %v4566 = vadd.f32 0.0, %v4565
  %v4567 = vpop.f32.mrb[0].mxu0
  %v4568 = vadd.f32 0.0, %v4567
  %v4569 = vpop.f32.mrb[0].mxu0
  %v4570 = vadd.f32 0.0, %v4569
  %v4571 = vpop.f32.mrb[0].mxu0
  %v4572 = vadd.f32 0.0, %v4571
  %4573 = vdwg.mxu0
  %4574 = vmatprep.subr.bf16.mxu0 %v4470
  %4575 = vmatpush1.bf16.msra.mxu0 %v4469
  %4576 = vmatprep.subr.bf16.mxu0 %v4474
  %4577 = vmatpush1.bf16.msra.mxu0 %v4473
  %4578 = vmatprep.subr.bf16.mxu0 %v4478
  %4579 = vmatpush1.bf16.msra.mxu0 %v4477
  %4580 = vmatprep.subr.bf16.mxu0 %v4482
  %4581 = vmatpush1.bf16.msra.mxu0 %v4481
  %4582 = vmatprep.subr.bf16.mxu0 %v4486
  %4583 = vmatpush1.bf16.msra.mxu0 %v4485
  %4584 = vmatprep.subr.bf16.mxu0 %v4490
  %4585 = vmatpush1.bf16.msra.mxu0 %v4489
  %4586 = vmatprep.subr.bf16.mxu0 %v4494
  %4587 = vmatpush1.bf16.msra.mxu0 %v4493
  %4588 = vmatprep.subr.bf16.mxu0 %v4498
  %4589 = vmatpush1.bf16.msra.mxu0 %v4497
  %4590 = vmatprep.subr.bf16.mxu0 0
  %4591 = vmatpush1.bf16.msra.mxu0 0
  %4592 = vmatprep.subr.bf16.mxu0 0
  %4593 = vmatpush1.bf16.msra.mxu0 0
  %4594 = vmatprep.subr.bf16.mxu0 0
  %4595 = vmatpush1.bf16.msra.mxu0 0
  %4596 = vmatprep.subr.bf16.mxu0 0
  %4597 = vmatpush1.bf16.msra.mxu0 0
  %4598 = vmatprep.subr.bf16.mxu0 0
  %4599 = vmatpush1.bf16.msra.mxu0 0
  %4600 = vmatprep.subr.bf16.mxu0 0
  %4601 = vmatpush1.bf16.msra.mxu0 0
  %4602 = vmatprep.subr.bf16.mxu0 0
  %4603 = vmatpush1.bf16.msra.mxu0 0
  %4604 = vmatprep.subr.bf16.mxu0 0
  %4605 = vmatpush1.bf16.msra.mxu0 0
  %4606 = vmatprep.mubr.bf16.mxu0 0
  %4607 = vmatmul.mubr.bf16.gmra.mrb[0].mxu0 0
  %v4608 = vpop.f32.mrb[0].mxu0
  %v4609 = vadd.f32 0.0, %v4608
  %v4610 = vpop.f32.mrb[0].mxu0
  %v4611 = vadd.f32 0.0, %v4610
  %v4612 = vpop.f32.mrb[0].mxu0
  %v4613 = vadd.f32 0.0, %v4612
  %v4614 = vpop.f32.mrb[0].mxu0
  %v4615 = vadd.f32 0.0, %v4614
  %4616 = vdwg.mxu0
  %v4617 = vadd.f32 %v4363, %v4566
  %v4618 = vadd.f32 %v4364, %v4568
  %v4619 = vadd.f32 %v4365, %v4609
  %v4620 = vadd.f32 %v4366, %v4611
  %v4621 = vadd.f32 %v4367, %v4570
  %v4622 = vadd.f32 %v4368, %v4572
  %v4623 = vadd.f32 %v4369, %v4613
  %v4624 = vadd.f32 %v4370, %v4615
  %v4625 = vxor.u32 %v4617, 2147483648
  %v4626 = vxor.u32 %v4618, 2147483648
  %v4627 = vxor.u32 %v4619, 2147483648
  %v4628 = vxor.u32 %v4621, 2147483648
  %v4629 = vxor.u32 %v4622, 2147483648
  %v4630 = vxor.u32 %v4623, 2147483648
  %v4631 = vmul.f32 %v4625, 1.442695
  %v4632 = vpow.pop %v4631
  %v4633 = vmul.f32 %v4626, 1.442695
  %v4634 = vpow.pop %v4633
  %v4635 = vmul.f32 %v4627, 1.442695
  %v4636 = vpow.pop %v4635
  %v4637 = vmul.f32 %v4628, 1.442695
  %v4638 = vpow.pop %v4637
  %v4639 = vmul.f32 %v4629, 1.442695
  %v4640 = vpow.pop %v4639
  %v4641 = vmul.f32 %v4630, 1.442695
  %v4642 = vpow.pop %v4641
  %v4643 = vadd.f32 %v4632, 1.0
  %v4644 = vadd.f32 %v4634, 1.0
  %v4645 = vadd.f32 %v4636, 1.0
  %v4646 = vadd.f32 %v4638, 1.0
  %v4647 = vadd.f32 %v4640, 1.0
  %v4648 = vadd.f32 %v4642, 1.0
  %v4649 = vrcp.pop %v4643
  %v4650 = vmul.f32 1.0, %v4649
  %v4651 = vrcp.pop %v4644
  %v4652 = vmul.f32 1.0, %v4651
  %v4653 = vrcp.pop %v4645
  %v4654 = vmul.f32 1.0, %v4653
  %v4655 = vrcp.pop %v4646
  %v4656 = vmul.f32 1.0, %v4655
  %v4657 = vrcp.pop %v4647
  %v4658 = vmul.f32 1.0, %v4657
  %v4659 = vrcp.pop %v4648
  %v4660 = vmul.f32 1.0, %v4659
  %v4661 = vtanh.pop %v4620
  %v4662 = vtanh.pop %v4624
  %v4663 = vmul.f32 %v4652, 0.0
  %v4664 = vmul.f32 %v4658, 0.0
  %v4665 = vmul.f32 %v4650, %v4661
  %v4666 = vmul.f32 %v4656, %v4662
  %v4667 = vadd.f32 %v4663, %v4665
  %v4668 = vadd.f32 %v4664, %v4666
  %v4669 = vtanh.pop %v4667
  %v4670 = vtanh.pop %v4668
  %v4671 = vmul.f32 %v4654, %v4669
  %v4672 = vmul.f32 %v4660, %v4670
  %v4673 = vld [vmem:[%s809] sm:$0xff]
  %v4674 = vld [vmem:[%s809 + $0x8] sm:$0xff]
  %v4675 = vld [vmem:[%s809 + $0x10] sm:$0xff]
  %v4676 = vld [vmem:[%s809 + $0x18] sm:$0xff]
  %v4677 = vld [vmem:[%s809 + $0x20] sm:$0xff]
  %v4678 = vld [vmem:[%s809 + $0x28] sm:$0xff]
  %v4679 = vld [vmem:[%s809 + $0x30] sm:$0xff]
  %v4680 = vld [vmem:[%s809 + $0x38] sm:$0xff]
  %v4681 = vpack.c.bf16 %v4672, %v4671
  %4682 = vmatprep.subr.bf16.mxu0 %v4468
  %4683 = vmatpush1.bf16.msra.mxu0 %v4467
  %4684 = vmatprep.subr.bf16.mxu0 %v4472
  %4685 = vmatpush1.bf16.msra.mxu0 %v4471
  %4686 = vmatprep.subr.bf16.mxu0 %v4476
  %4687 = vmatpush1.bf16.msra.mxu0 %v4475
  %4688 = vmatprep.subr.bf16.mxu0 %v4480
  %4689 = vmatpush1.bf16.msra.mxu0 %v4479
  %4690 = vmatprep.subr.bf16.mxu0 %v4484
  %4691 = vmatpush1.bf16.msra.mxu0 %v4483
  %4692 = vmatprep.subr.bf16.mxu0 %v4488
  %4693 = vmatpush1.bf16.msra.mxu0 %v4487
  %4694 = vmatprep.subr.bf16.mxu0 %v4492
  %4695 = vmatpush1.bf16.msra.mxu0 %v4491
  %4696 = vmatprep.subr.bf16.mxu0 %v4496
  %4697 = vmatpush1.bf16.msra.mxu0 %v4495
  %4698 = vmatprep.subr.bf16.mxu0 0
  %4699 = vmatpush1.bf16.msra.mxu0 0
  %4700 = vmatprep.subr.bf16.mxu0 0
  %4701 = vmatpush1.bf16.msra.mxu0 0
  %4702 = vmatprep.subr.bf16.mxu0 0
  %4703 = vmatpush1.bf16.msra.mxu0 0
  %4704 = vmatprep.subr.bf16.mxu0 0
  %4705 = vmatpush1.bf16.msra.mxu0 0
  %4706 = vmatprep.subr.bf16.mxu0 0
  %4707 = vmatpush1.bf16.msra.mxu0 0
  %4708 = vmatprep.subr.bf16.mxu0 0
  %4709 = vmatpush1.bf16.msra.mxu0 0
  %4710 = vmatprep.subr.bf16.mxu0 0
  %4711 = vmatpush1.bf16.msra.mxu0 0
  %4712 = vmatprep.subr.bf16.mxu0 0
  %4713 = vmatpush1.bf16.msra.mxu0 0
  %4714 = vmatprep.mubr.bf16.mxu0 0
  %4715 = vmatmul.mubr.bf16.gmra.mrb[0].mxu0 %v4681
  %v4716 = vpop.f32.mrb[0].mxu0
  %v4717 = vadd.f32 0.0, %v4716
  %v4718 = vpop.f32.mrb[0].mxu0
  %v4719 = vadd.f32 0.0, %v4718
  %v4720 = vpop.f32.mrb[0].mxu0
  %v4721 = vadd.f32 0.0, %v4720
  %v4722 = vpop.f32.mrb[0].mxu0
  %v4723 = vadd.f32 0.0, %v4722
  %4724 = vdwg.mxu0
  %4725 = vmatprep.subr.bf16.mxu0 %v4470
  %4726 = vmatpush1.bf16.msra.mxu0 %v4469
  %4727 = vmatprep.subr.bf16.mxu0 %v4474
  %4728 = vmatpush1.bf16.msra.mxu0 %v4473
  %4729 = vmatprep.subr.bf16.mxu0 %v4478
  %4730 = vmatpush1.bf16.msra.mxu0 %v4477
  %4731 = vmatprep.subr.bf16.mxu0 %v4482
  %4732 = vmatpush1.bf16.msra.mxu0 %v4481
  %4733 = vmatprep.subr.bf16.mxu0 %v4486
  %4734 = vmatpush1.bf16.msra.mxu0 %v4485
  %4735 = vmatprep.subr.bf16.mxu0 %v4490
  %4736 = vmatpush1.bf16.msra.mxu0 %v4489
  %4737 = vmatprep.subr.bf16.mxu0 %v4494
  %4738 = vmatpush1.bf16.msra.mxu0 %v4493
  %4739 = vmatprep.subr.bf16.mxu0 %v4498
  %4740 = vmatpush1.bf16.msra.mxu0 %v4497
  %4741 = vmatprep.subr.bf16.mxu0 0
  %4742 = vmatpush1.bf16.msra.mxu0 0
  %4743 = vmatprep.subr.bf16.mxu0 0
  %4744 = vmatpush1.bf16.msra.mxu0 0
  %4745 = vmatprep.subr.bf16.mxu0 0
  %4746 = vmatpush1.bf16.msra.mxu0 0
  %4747 = vmatprep.subr.bf16.mxu0 0
  %4748 = vmatpush1.bf16.msra.mxu0 0
  %4749 = vmatprep.subr.bf16.mxu0 0
  %4750 = vmatpush1.bf16.msra.mxu0 0
  %4751 = vmatprep.subr.bf16.mxu0 0
  %4752 = vmatpush1.bf16.msra.mxu0 0
  %4753 = vmatprep.subr.bf16.mxu0 0
  %4754 = vmatpush1.bf16.msra.mxu0 0
  %4755 = vmatprep.subr.bf16.mxu0 0
  %4756 = vmatpush1.bf16.msra.mxu0 0
  %4757 = vmatprep.mubr.bf16.mxu0 0
  %4758 = vmatmul.mubr.bf16.gmra.mrb[0].mxu0 %v4681
  %v4759 = vpop.f32.mrb[0].mxu0
  %v4760 = vadd.f32 0.0, %v4759
  %v4761 = vpop.f32.mrb[0].mxu0
  %v4762 = vadd.f32 0.0, %v4761
  %v4763 = vpop.f32.mrb[0].mxu0
  %v4764 = vadd.f32 0.0, %v4763
  %v4765 = vpop.f32.mrb[0].mxu0
  %v4766 = vadd.f32 0.0, %v4765
  %4767 = vdwg.mxu0
  %v4768 = vadd.f32 %v4673, %v4717
  %v4769 = vadd.f32 %v4674, %v4719
  %v4770 = vadd.f32 %v4675, %v4760
  %v4771 = vadd.f32 %v4676, %v4762
  %v4772 = vadd.f32 %v4677, %v4721
  %v4773 = vadd.f32 %v4678, %v4723
  %v4774 = vadd.f32 %v4679, %v4764
  %v4775 = vadd.f32 %v4680, %v4766
  %v4776 = vxor.u32 %v4768, 2147483648
  %v4777 = vxor.u32 %v4769, 2147483648
  %v4778 = vxor.u32 %v4770, 2147483648
  %v4779 = vxor.u32 %v4772, 2147483648
  %v4780 = vxor.u32 %v4773, 2147483648
  %v4781 = vxor.u32 %v4774, 2147483648
  %v4782 = vmul.f32 %v4776, 1.442695
  %v4783 = vpow.pop %v4782
  %v4784 = vmul.f32 %v4777, 1.442695
  %v4785 = vpow.pop %v4784
  %v4786 = vmul.f32 %v4778, 1.442695
  %v4787 = vpow.pop %v4786
  %v4788 = vmul.f32 %v4779, 1.442695
  %v4789 = vpow.pop %v4788
  %v4790 = vmul.f32 %v4780, 1.442695
  %v4791 = vpow.pop %v4790
  %v4792 = vmul.f32 %v4781, 1.442695
  %v4793 = vpow.pop %v4792
  %v4794 = vadd.f32 %v4783, 1.0
  %v4795 = vadd.f32 %v4785, 1.0
  %v4796 = vadd.f32 %v4787, 1.0
  %v4797 = vadd.f32 %v4789, 1.0
  %v4798 = vadd.f32 %v4791, 1.0
  %v4799 = vadd.f32 %v4793, 1.0
  %v4800 = vrcp.pop %v4794
  %v4801 = vmul.f32 1.0, %v4800
  %v4802 = vrcp.pop %v4795
  %v4803 = vmul.f32 1.0, %v4802
  %v4804 = vrcp.pop %v4796
  %v4805 = vmul.f32 1.0, %v4804
  %v4806 = vrcp.pop %v4797
  %v4807 = vmul.f32 1.0, %v4806
  %v4808 = vrcp.pop %v4798
  %v4809 = vmul.f32 1.0, %v4808
  %v4810 = vrcp.pop %v4799
  %v4811 = vmul.f32 1.0, %v4810
  %v4812 = vtanh.pop %v4771
  %v4813 = vtanh.pop %v4775
  %v4814 = vmul.f32 %v4803, %v4667
  %v4815 = vmul.f32 %v4809, %v4668
  %v4816 = vmul.f32 %v4801, %v4812
  %v4817 = vmul.f32 %v4807, %v4813
  %v4818 = vadd.f32 %v4814, %v4816
  %v4819 = vadd.f32 %v4815, %v4817
  %v4820 = vtanh.pop %v4818
  %v4821 = vtanh.pop %v4819
  %v4822 = vmul.f32 %v4805, %v4820
  %v4823 = vmul.f32 %v4811, %v4821
  %v4824 = vld [vmem:[%s965] sm:$0xff]
  %v4825 = vld [vmem:[%s965 + $0x8] sm:$0xff]
  %v4826 = vld [vmem:[%s965 + $0x10] sm:$0xff]
  %v4827 = vld [vmem:[%s965 + $0x18] sm:$0xff]
  %v4828 = vld [vmem:[%s965 + $0x20] sm:$0xff]
  %v4829 = vld [vmem:[%s965 + $0x28] sm:$0xff]
  %v4830 = vld [vmem:[%s965 + $0x30] sm:$0xff]
  %v4831 = vld [vmem:[%s965 + $0x38] sm:$0xff]
  %v4832 = vpack.c.bf16 %v4823, %v4822
  %4833 = vmatprep.subr.bf16.mxu0 %v4468
  %4834 = vmatpush1.bf16.msra.mxu0 %v4467
  %4835 = vmatprep.subr.bf16.mxu0 %v4472
  %4836 = vmatpush1.bf16.msra.mxu0 %v4471
  %4837 = vmatprep.subr.bf16.mxu0 %v4476
  %4838 = vmatpush1.bf16.msra.mxu0 %v4475
  %4839 = vmatprep.subr.bf16.mxu0 %v4480
  %4840 = vmatpush1.bf16.msra.mxu0 %v4479
  %4841 = vmatprep.subr.bf16.mxu0 %v4484
  %4842 = vmatpush1.bf16.msra.mxu0 %v4483
  %4843 = vmatprep.subr.bf16.mxu0 %v4488
  %4844 = vmatpush1.bf16.msra.mxu0 %v4487
  %4845 = vmatprep.subr.bf16.mxu0 %v4492
  %4846 = vmatpush1.bf16.msra.mxu0 %v4491
  %4847 = vmatprep.subr.bf16.mxu0 %v4496
  %4848 = vmatpush1.bf16.msra.mxu0 %v4495
  %4849 = vmatprep.subr.bf16.mxu0 0
  %4850 = vmatpush1.bf16.msra.mxu0 0
  %4851 = vmatprep.subr.bf16.mxu0 0
  %4852 = vmatpush1.bf16.msra.mxu0 0
  %4853 = vmatprep.subr.bf16.mxu0 0
  %4854 = vmatpush1.bf16.msra.mxu0 0
  %4855 = vmatprep.subr.bf16.mxu0 0
  %4856 = vmatpush1.bf16.msra.mxu0 0
  %4857 = vmatprep.subr.bf16.mxu0 0
  %4858 = vmatpush1.bf16.msra.mxu0 0
  %4859 = vmatprep.subr.bf16.mxu0 0
  %4860 = vmatpush1.bf16.msra.mxu0 0
  %4861 = vmatprep.subr.bf16.mxu0 0
  %4862 = vmatpush1.bf16.msra.mxu0 0
  %4863 = vmatprep.subr.bf16.mxu0 0
  %4864 = vmatpush1.bf16.msra.mxu0 0
  %4865 = vmatprep.mubr.bf16.mxu0 0
  %4866 = vmatmul.mubr.bf16.gmra.mrb[0].mxu0 %v4832
  %v4867 = vpop.f32.mrb[0].mxu0
  %v4868 = vadd.f32 0.0, %v4867
  %v4869 = vpop.f32.mrb[0].mxu0
  %v4870 = vadd.f32 0.0, %v4869
  %v4871 = vpop.f32.mrb[0].mxu0
  %v4872 = vadd.f32 0.0, %v4871
  %v4873 = vpop.f32.mrb[0].mxu0
  %v4874 = vadd.f32 0.0, %v4873
  %4875 = vdwg.mxu0
  %4876 = vmatprep.subr.bf16.mxu0 %v4470
  %4877 = vmatpush1.bf16.msra.mxu0 %v4469
  %4878 = vmatprep.subr.bf16.mxu0 %v4474
  %4879 = vmatpush1.bf16.msra.mxu0 %v4473
  %4880 = vmatprep.subr.bf16.mxu0 %v4478
  %4881 = vmatpush1.bf16.msra.mxu0 %v4477
  %4882 = vmatprep.subr.bf16.mxu0 %v4482
  %4883 = vmatpush1.bf16.msra.mxu0 %v4481
  %4884 = vmatprep.subr.bf16.mxu0 %v4486
  %4885 = vmatpush1.bf16.msra.mxu0 %v4485
  %4886 = vmatprep.subr.bf16.mxu0 %v4490
  %4887 = vmatpush1.bf16.msra.mxu0 %v4489
  %4888 = vmatprep.subr.bf16.mxu0 %v4494
  %4889 = vmatpush1.bf16.msra.mxu0 %v4493
  %4890 = vmatprep.subr.bf16.mxu0 %v4498
  %4891 = vmatpush1.bf16.msra.mxu0 %v4497
  %4892 = vmatprep.subr.bf16.mxu0 0
  %4893 = vmatpush1.bf16.msra.mxu0 0
  %4894 = vmatprep.subr.bf16.mxu0 0
  %4895 = vmatpush1.bf16.msra.mxu0 0
  %4896 = vmatprep.subr.bf16.mxu0 0
  %4897 = vmatpush1.bf16.msra.mxu0 0
  %4898 = vmatprep.subr.bf16.mxu0 0
  %4899 = vmatpush1.bf16.msra.mxu0 0
  %4900 = vmatprep.subr.bf16.mxu0 0
  %4901 = vmatpush1.bf16.msra.mxu0 0
  %4902 = vmatprep.subr.bf16.mxu0 0
  %4903 = vmatpush1.bf16.msra.mxu0 0
  %4904 = vmatprep.subr.bf16.mxu0 0
  %4905 = vmatpush1.bf16.msra.mxu0 0
  %4906 = vmatprep.subr.bf16.mxu0 0
  %4907 = vmatpush1.bf16.msra.mxu0 0
  %4908 = vmatprep.mubr.bf16.mxu0 0
  %4909 = vmatmul.mubr.bf16.gmra.mrb[0].mxu0 %v4832
  %v4910 = vpop.f32.mrb[0].mxu0
  %v4911 = vadd.f32 0.0, %v4910
  %v4912 = vpop.f32.mrb[0].mxu0
  %v4913 = vadd.f32 0.0, %v4912
  %v4914 = vpop.f32.mrb[0].mxu0
  %v4915 = vadd.f32 0.0, %v4914
  %v4916 = vpop.f32.mrb[0].mxu0
  %v4917 = vadd.f32 0.0, %v4916
  %4918 = vdwg.mxu0
  %v4919 = vadd.f32 %v4824, %v4868
  %v4920 = vadd.f32 %v4825, %v4870
  %v4921 = vadd.f32 %v4826, %v4911
  %v4922 = vadd.f32 %v4827, %v4913
  %v4923 = vadd.f32 %v4828, %v4872
  %v4924 = vadd.f32 %v4829, %v4874
  %v4925 = vadd.f32 %v4830, %v4915
  %v4926 = vadd.f32 %v4831, %v4917
  %v4927 = vxor.u32 %v4919, 2147483648
  %v4928 = vxor.u32 %v4920, 2147483648
  %v4929 = vxor.u32 %v4921, 2147483648
  %v4930 = vxor.u32 %v4923, 2147483648
  %v4931 = vxor.u32 %v4924, 2147483648
  %v4932 = vxor.u32 %v4925, 2147483648
  %v4933 = vmul.f32 %v4927, 1.442695
  %v4934 = vpow.pop %v4933
  %v4935 = vmul.f32 %v4928, 1.442695
  %v4936 = vpow.pop %v4935
  %v4937 = vmul.f32 %v4929, 1.442695
  %v4938 = vpow.pop %v4937
  %v4939 = vmul.f32 %v4930, 1.442695
  %v4940 = vpow.pop %v4939
  %v4941 = vmul.f32 %v4931, 1.442695
  %v4942 = vpow.pop %v4941
  %v4943 = vmul.f32 %v4932, 1.442695
  %v4944 = vpow.pop %v4943
  %v4945 = vadd.f32 %v4934, 1.0
  %v4946 = vadd.f32 %v4936, 1.0
  %v4947 = vadd.f32 %v4938, 1.0
  %v4948 = vadd.f32 %v4940, 1.0
  %v4949 = vadd.f32 %v4942, 1.0
  %v4950 = vadd.f32 %v4944, 1.0
  %v4951 = vrcp.pop %v4945
  %v4952 = vmul.f32 1.0, %v4951
  %v4953 = vrcp.pop %v4946
  %v4954 = vmul.f32 1.0, %v4953
  %v4955 = vrcp.pop %v4947
  %v4956 = vmul.f32 1.0, %v4955
  %v4957 = vrcp.pop %v4948
  %v4958 = vmul.f32 1.0, %v4957
  %v4959 = vrcp.pop %v4949
  %v4960 = vmul.f32 1.0, %v4959
  %v4961 = vrcp.pop %v4950
  %v4962 = vmul.f32 1.0, %v4961
  %v4963 = vtanh.pop %v4922
  %v4964 = vtanh.pop %v4926
  %v4965 = vmul.f32 %v4954, %v4818
  %v4966 = vmul.f32 %v4960, %v4819
  %v4967 = vmul.f32 %v4952, %v4963
  %v4968 = vmul.f32 %v4958, %v4964
  %v4969 = vadd.f32 %v4965, %v4967
  %v4970 = vadd.f32 %v4966, %v4968
  %v4971 = vtanh.pop %v4969
  %v4972 = vtanh.pop %v4970
  %v4973 = vmul.f32 %v4956, %v4971
  %v4974 = vmul.f32 %v4962, %v4972
  %v4975 = vld [vmem:[%s1121] sm:$0xff]
  %v4976 = vld [vmem:[%s1121 + $0x8] sm:$0xff]
  %v4977 = vld [vmem:[%s1121 + $0x10] sm:$0xff]
  %v4978 = vld [vmem:[%s1121 + $0x18] sm:$0xff]
  %v4979 = vld [vmem:[%s1121 + $0x20] sm:$0xff]
  %v4980 = vld [vmem:[%s1121 + $0x28] sm:$0xff]
  %v4981 = vld [vmem:[%s1121 + $0x30] sm:$0xff]
  %v4982 = vld [vmem:[%s1121 + $0x38] sm:$0xff]
  %v4983 = vpack.c.bf16 %v4974, %v4973
  %4984 = vmatprep.subr.bf16.mxu0 %v4468
  %4985 = vmatpush1.bf16.msra.mxu0 %v4467
  %4986 = vmatprep.subr.bf16.mxu0 %v4472
  %4987 = vmatpush1.bf16.msra.mxu0 %v4471
  %4988 = vmatprep.subr.bf16.mxu0 %v4476
  %4989 = vmatpush1.bf16.msra.mxu0 %v4475
  %4990 = vmatprep.subr.bf16.mxu0 %v4480
  %4991 = vmatpush1.bf16.msra.mxu0 %v4479
  %4992 = vmatprep.subr.bf16.mxu0 %v4484
  %4993 = vmatpush1.bf16.msra.mxu0 %v4483
  %4994 = vmatprep.subr.bf16.mxu0 %v4488
  %4995 = vmatpush1.bf16.msra.mxu0 %v4487
  %4996 = vmatprep.subr.bf16.mxu0 %v4492
  %4997 = vmatpush1.bf16.msra.mxu0 %v4491
  %4998 = vmatprep.subr.bf16.mxu0 %v4496
  %4999 = vmatpush1.bf16.msra.mxu0 %v4495
  %5000 = vmatprep.subr.bf16.mxu0 0
  %5001 = vmatpush1.bf16.msra.mxu0 0
  %5002 = vmatprep.subr.bf16.mxu0 0
  %5003 = vmatpush1.bf16.msra.mxu0 0
  %5004 = vmatprep.subr.bf16.mxu0 0
  %5005 = vmatpush1.bf16.msra.mxu0 0
  %5006 = vmatprep.subr.bf16.mxu0 0
  %5007 = vmatpush1.bf16.msra.mxu0 0
  %5008 = vmatprep.subr.bf16.mxu0 0
  %5009 = vmatpush1.bf16.msra.mxu0 0
  %5010 = vmatprep.subr.bf16.mxu0 0
  %5011 = vmatpush1.bf16.msra.mxu0 0
  %5012 = vmatprep.subr.bf16.mxu0 0
  %5013 = vmatpush1.bf16.msra.mxu0 0
  %5014 = vmatprep.subr.bf16.mxu0 0
  %5015 = vmatpush1.bf16.msra.mxu0 0
  %5016 = vmatprep.mubr.bf16.mxu0 0
  %5017 = vmatmul.mubr.bf16.gmra.mrb[0].mxu0 %v4983
  %v5018 = vpop.f32.mrb[0].mxu0
  %v5019 = vadd.f32 0.0, %v5018
  %v5020 = vpop.f32.mrb[0].mxu0
  %v5021 = vadd.f32 0.0, %v5020
  %v5022 = vpop.f32.mrb[0].mxu0
  %v5023 = vadd.f32 0.0, %v5022
  %v5024 = vpop.f32.mrb[0].mxu0
  %v5025 = vadd.f32 0.0, %v5024
  %5026 = vdwg.mxu0
  %5027 = vmatprep.subr.bf16.mxu0 %v4470
  %5028 = vmatpush1.bf16.msra.mxu0 %v4469
  %5029 = vmatprep.subr.bf16.mxu0 %v4474
  %5030 = vmatpush1.bf16.msra.mxu0 %v4473
  %5031 = vmatprep.subr.bf16.mxu0 %v4478
  %5032 = vmatpush1.bf16.msra.mxu0 %v4477
  %5033 = vmatprep.subr.bf16.mxu0 %v4482
  %5034 = vmatpush1.bf16.msra.mxu0 %v4481
  %5035 = vmatprep.subr.bf16.mxu0 %v4486
  %5036 = vmatpush1.bf16.msra.mxu0 %v4485
  %5037 = vmatprep.subr.bf16.mxu0 %v4490
  %5038 = vmatpush1.bf16.msra.mxu0 %v4489
  %5039 = vmatprep.subr.bf16.mxu0 %v4494
  %5040 = vmatpush1.bf16.msra.mxu0 %v4493
  %5041 = vmatprep.subr.bf16.mxu0 %v4498
  %5042 = vmatpush1.bf16.msra.mxu0 %v4497
  %5043 = vmatprep.subr.bf16.mxu0 0
  %5044 = vmatpush1.bf16.msra.mxu0 0
  %5045 = vmatprep.subr.bf16.mxu0 0
  %5046 = vmatpush1.bf16.msra.mxu0 0
  %5047 = vmatprep.subr.bf16.mxu0 0
  %5048 = vmatpush1.bf16.msra.mxu0 0
  %5049 = vmatprep.subr.bf16.mxu0 0
  %5050 = vmatpush1.bf16.msra.mxu0 0
  %5051 = vmatprep.subr.bf16.mxu0 0
  %5052 = vmatpush1.bf16.msra.mxu0 0
  %5053 = vmatprep.subr.bf16.mxu0 0
  %5054 = vmatpush1.bf16.msra.mxu0 0
  %5055 = vmatprep.subr.bf16.mxu0 0
  %5056 = vmatpush1.bf16.msra.mxu0 0
  %5057 = vmatprep.subr.bf16.mxu0 0
  %5058 = vmatpush1.bf16.msra.mxu0 0
  %5059 = vmatprep.mubr.bf16.mxu0 0
  %5060 = vmatmul.mubr.bf16.gmra.mrb[0].mxu0 %v4983
  %v5061 = vpop.f32.mrb[0].mxu0
  %v5062 = vadd.f32 0.0, %v5061
  %v5063 = vpop.f32.mrb[0].mxu0
  %v5064 = vadd.f32 0.0, %v5063
  %v5065 = vpop.f32.mrb[0].mxu0
  %v5066 = vadd.f32 0.0, %v5065
  %v5067 = vpop.f32.mrb[0].mxu0
  %v5068 = vadd.f32 0.0, %v5067
  %5069 = vdwg.mxu0
  %v5070 = vadd.f32 %v4975, %v5019
  %v5071 = vadd.f32 %v4976, %v5021
  %v5072 = vadd.f32 %v4977, %v5062
  %v5073 = vadd.f32 %v4978, %v5064
  %v5074 = vadd.f32 %v4979, %v5023
  %v5075 = vadd.f32 %v4980, %v5025
  %v5076 = vadd.f32 %v4981, %v5066
  %v5077 = vadd.f32 %v4982, %v5068
  %v5078 = vxor.u32 %v5070, 2147483648
  %v5079 = vxor.u32 %v5071, 2147483648
  %v5080 = vxor.u32 %v5072, 2147483648
  %v5081 = vxor.u32 %v5074, 2147483648
  %v5082 = vxor.u32 %v5075, 2147483648
  %v5083 = vxor.u32 %v5076, 2147483648
  %v5084 = vmul.f32 %v5078, 1.442695
  %v5085 = vpow.pop %v5084
  %v5086 = vmul.f32 %v5079, 1.442695
  %v5087 = vpow.pop %v5086
  %v5088 = vmul.f32 %v5080, 1.442695
  %v5089 = vpow.pop %v5088
  %v5090 = vmul.f32 %v5081, 1.442695
  %v5091 = vpow.pop %v5090
  %v5092 = vmul.f32 %v5082, 1.442695
  %v5093 = vpow.pop %v5092
  %v5094 = vmul.f32 %v5083, 1.442695
  %v5095 = vpow.pop %v5094
  %v5096 = vadd.f32 %v5085, 1.0
  %v5097 = vadd.f32 %v5087, 1.0
  %v5098 = vadd.f32 %v5089, 1.0
  %v5099 = vadd.f32 %v5091, 1.0
  %v5100 = vadd.f32 %v5093, 1.0
  %v5101 = vadd.f32 %v5095, 1.0
  %v5102 = vrcp.pop %v5096
  %v5103 = vmul.f32 1.0, %v5102
  %v5104 = vrcp.pop %v5097
  %v5105 = vmul.f32 1.0, %v5104
  %v5106 = vrcp.pop %v5098
  %v5107 = vmul.f32 1.0, %v5106
  %v5108 = vrcp.pop %v5099
  %v5109 = vmul.f32 1.0, %v5108
  %v5110 = vrcp.pop %v5100
  %v5111 = vmul.f32 1.0, %v5110
  %v5112 = vrcp.pop %v5101
  %v5113 = vmul.f32 1.0, %v5112
  %v5114 = vtanh.pop %v5073
  %v5115 = vtanh.pop %v5077
  %v5116 = vmul.f32 %v5105, %v4969
  %v5117 = vmul.f32 %v5111, %v4970
  %v5118 = vmul.f32 %v5103, %v5114
  %v5119 = vmul.f32 %v5109, %v5115
  %v5120 = vadd.f32 %v5116, %v5118
  %v5121 = vadd.f32 %v5117, %v5119
  %v5122 = vtanh.pop %v5120
  %v5123 = vtanh.pop %v5121
  %v5124 = vmul.f32 %v5107, %v5122
  %v5125 = vmul.f32 %v5113, %v5123
  %v5126 = vld [vmem:[%s1277] sm:$0xff]
  %v5127 = vld [vmem:[%s1277 + $0x8] sm:$0xff]
  %v5128 = vld [vmem:[%s1277 + $0x10] sm:$0xff]
  %v5129 = vld [vmem:[%s1277 + $0x18] sm:$0xff]
  %v5130 = vld [vmem:[%s1277 + $0x20] sm:$0xff]
  %v5131 = vld [vmem:[%s1277 + $0x28] sm:$0xff]
  %v5132 = vld [vmem:[%s1277 + $0x30] sm:$0xff]
  %v5133 = vld [vmem:[%s1277 + $0x38] sm:$0xff]
  %v5134 = vpack.c.bf16 %v5125, %v5124
  %5135 = vmatprep.subr.bf16.mxu0 %v4468
  %5136 = vmatpush1.bf16.msra.mxu0 %v4467
  %5137 = vmatprep.subr.bf16.mxu0 %v4472
  %5138 = vmatpush1.bf16.msra.mxu0 %v4471
  %5139 = vmatprep.subr.bf16.mxu0 %v4476
  %5140 = vmatpush1.bf16.msra.mxu0 %v4475
  %5141 = vmatprep.subr.bf16.mxu0 %v4480
  %5142 = vmatpush1.bf16.msra.mxu0 %v4479
  %5143 = vmatprep.subr.bf16.mxu0 %v4484
  %5144 = vmatpush1.bf16.msra.mxu0 %v4483
  %5145 = vmatprep.subr.bf16.mxu0 %v4488
  %5146 = vmatpush1.bf16.msra.mxu0 %v4487
  %5147 = vmatprep.subr.bf16.mxu0 %v4492
  %5148 = vmatpush1.bf16.msra.mxu0 %v4491
  %5149 = vmatprep.subr.bf16.mxu0 %v4496
  %5150 = vmatpush1.bf16.msra.mxu0 %v4495
  %5151 = vmatprep.subr.bf16.mxu0 0
  %5152 = vmatpush1.bf16.msra.mxu0 0
  %5153 = vmatprep.subr.bf16.mxu0 0
  %5154 = vmatpush1.bf16.msra.mxu0 0
  %5155 = vmatprep.subr.bf16.mxu0 0
  %5156 = vmatpush1.bf16.msra.mxu0 0
  %5157 = vmatprep.subr.bf16.mxu0 0
  %5158 = vmatpush1.bf16.msra.mxu0 0
  %5159 = vmatprep.subr.bf16.mxu0 0
  %5160 = vmatpush1.bf16.msra.mxu0 0
  %5161 = vmatprep.subr.bf16.mxu0 0
  %5162 = vmatpush1.bf16.msra.mxu0 0
  %5163 = vmatprep.subr.bf16.mxu0 0
  %5164 = vmatpush1.bf16.msra.mxu0 0
  %5165 = vmatprep.subr.bf16.mxu0 0
  %5166 = vmatpush1.bf16.msra.mxu0 0
  %5167 = vmatprep.mubr.bf16.mxu0 0
  %5168 = vmatmul.mubr.bf16.gmra.mrb[0].mxu0 %v5134
  %v5169 = vpop.f32.mrb[0].mxu0
  %v5170 = vadd.f32 0.0, %v5169
  %v5171 = vpop.f32.mrb[0].mxu0
  %v5172 = vadd.f32 0.0, %v5171
  %v5173 = vpop.f32.mrb[0].mxu0
  %v5174 = vadd.f32 0.0, %v5173
  %v5175 = vpop.f32.mrb[0].mxu0
  %v5176 = vadd.f32 0.0, %v5175
  %5177 = vdwg.mxu0
  %5178 = vmatprep.subr.bf16.mxu0 %v4470
  %5179 = vmatpush1.bf16.msra.mxu0 %v4469
  %5180 = vmatprep.subr.bf16.mxu0 %v4474
  %5181 = vmatpush1.bf16.msra.mxu0 %v4473
  %5182 = vmatprep.subr.bf16.mxu0 %v4478
  %5183 = vmatpush1.bf16.msra.mxu0 %v4477
  %5184 = vmatprep.subr.bf16.mxu0 %v4482
  %5185 = vmatpush1.bf16.msra.mxu0 %v4481
  %5186 = vmatprep.subr.bf16.mxu0 %v4486
  %5187 = vmatpush1.bf16.msra.mxu0 %v4485
  %5188 = vmatprep.subr.bf16.mxu0 %v4490
  %5189 = vmatpush1.bf16.msra.mxu0 %v4489
  %5190 = vmatprep.subr.bf16.mxu0 %v4494
  %5191 = vmatpush1.bf16.msra.mxu0 %v4493
  %5192 = vmatprep.subr.bf16.mxu0 %v4498
  %5193 = vmatpush1.bf16.msra.mxu0 %v4497
  %5194 = vmatprep.subr.bf16.mxu0 0
  %5195 = vmatpush1.bf16.msra.mxu0 0
  %5196 = vmatprep.subr.bf16.mxu0 0
  %5197 = vmatpush1.bf16.msra.mxu0 0
  %5198 = vmatprep.subr.bf16.mxu0 0
  %5199 = vmatpush1.bf16.msra.mxu0 0
  %5200 = vmatprep.subr.bf16.mxu0 0
  %5201 = vmatpush1.bf16.msra.mxu0 0
  %5202 = vmatprep.subr.bf16.mxu0 0
  %5203 = vmatpush1.bf16.msra.mxu0 0
  %5204 = vmatprep.subr.bf16.mxu0 0
  %5205 = vmatpush1.bf16.msra.mxu0 0
  %5206 = vmatprep.subr.bf16.mxu0 0
  %5207 = vmatpush1.bf16.msra.mxu0 0
  %5208 = vmatprep.subr.bf16.mxu0 0
  %5209 = vmatpush1.bf16.msra.mxu0 0
  %5210 = vmatprep.mubr.bf16.mxu0 0
  %5211 = vmatmul.mubr.bf16.gmra.mrb[0].mxu0 %v5134
  %v5212 = vpop.f32.mrb[0].mxu0
  %v5213 = vadd.f32 0.0, %v5212
  %v5214 = vpop.f32.mrb[0].mxu0
  %v5215 = vadd.f32 0.0, %v5214
  %v5216 = vpop.f32.mrb[0].mxu0
  %v5217 = vadd.f32 0.0, %v5216
  %v5218 = vpop.f32.mrb[0].mxu0
  %v5219 = vadd.f32 0.0, %v5218
  %5220 = vdwg.mxu0
  %v5221 = vadd.f32 %v5126, %v5170
  %v5222 = vadd.f32 %v5127, %v5172
  %v5223 = vadd.f32 %v5128, %v5213
  %v5224 = vadd.f32 %v5129, %v5215
  %v5225 = vadd.f32 %v5130, %v5174
  %v5226 = vadd.f32 %v5131, %v5176
  %v5227 = vadd.f32 %v5132, %v5217
  %v5228 = vadd.f32 %v5133, %v5219
  %v5229 = vxor.u32 %v5221, 2147483648
  %v5230 = vxor.u32 %v5222, 2147483648
  %v5231 = vxor.u32 %v5223, 2147483648
  %v5232 = vxor.u32 %v5225, 2147483648
  %v5233 = vxor.u32 %v5226, 2147483648
  %v5234 = vxor.u32 %v5227, 2147483648
  %v5235 = vmul.f32 %v5229, 1.442695
  %v5236 = vpow.pop %v5235
  %v5237 = vmul.f32 %v5230, 1.442695
  %v5238 = vpow.pop %v5237
  %v5239 = vmul.f32 %v5231, 1.442695
  %v5240 = vpow.pop %v5239
  %v5241 = vmul.f32 %v5232, 1.442695
  %v5242 = vpow.pop %v5241
  %v5243 = vmul.f32 %v5233, 1.442695
  %v5244 = vpow.pop %v5243
  %v5245 = vmul.f32 %v5234, 1.442695
  %v5246 = vpow.pop %v5245
  %v5247 = vadd.f32 %v5236, 1.0
  %v5248 = vadd.f32 %v5238, 1.0
  %v5249 = vadd.f32 %v5240, 1.0
  %v5250 = vadd.f32 %v5242, 1.0
  %v5251 = vadd.f32 %v5244, 1.0
  %v5252 = vadd.f32 %v5246, 1.0
  %v5253 = vrcp.pop %v5247
  %v5254 = vmul.f32 1.0, %v5253
  %v5255 = vrcp.pop %v5248
  %v5256 = vmul.f32 1.0, %v5255
  %v5257 = vrcp.pop %v5249
  %v5258 = vmul.f32 1.0, %v5257
  %v5259 = vrcp.pop %v5250
  %v5260 = vmul.f32 1.0, %v5259
  %v5261 = vrcp.pop %v5251
  %v5262 = vmul.f32 1.0, %v5261
  %v5263 = vrcp.pop %v5252
  %v5264 = vmul.f32 1.0, %v5263
  %v5265 = vtanh.pop %v5224
  %v5266 = vtanh.pop %v5228
  %v5267 = vmul.f32 %v5256, %v5120
  %v5268 = vmul.f32 %v5262, %v5121
  %v5269 = vmul.f32 %v5254, %v5265
  %v5270 = vmul.f32 %v5260, %v5266
  %v5271 = vadd.f32 %v5267, %v5269
  %v5272 = vadd.f32 %v5268, %v5270
  %v5273 = vtanh.pop %v5271
  %v5274 = vtanh.pop %v5272
  %v5275 = vmul.f32 %v5258, %v5273
  %v5276 = vmul.f32 %v5264, %v5274
  %v5277 = vld [vmem:[%s1433] sm:$0xff]
  %v5278 = vld [vmem:[%s1433 + $0x8] sm:$0xff]
  %v5279 = vld [vmem:[%s1433 + $0x10] sm:$0xff]
  %v5280 = vld [vmem:[%s1433 + $0x18] sm:$0xff]
  %v5281 = vld [vmem:[%s1433 + $0x20] sm:$0xff]
  %v5282 = vld [vmem:[%s1433 + $0x28] sm:$0xff]
  %v5283 = vld [vmem:[%s1433 + $0x30] sm:$0xff]
  %v5284 = vld [vmem:[%s1433 + $0x38] sm:$0xff]
  %v5285 = vpack.c.bf16 %v5276, %v5275
  %5286 = vmatprep.subr.bf16.mxu0 %v4468
  %5287 = vmatpush1.bf16.msra.mxu0 %v4467
  %5288 = vmatprep.subr.bf16.mxu0 %v4472
  %5289 = vmatpush1.bf16.msra.mxu0 %v4471
  %5290 = vmatprep.subr.bf16.mxu0 %v4476
  %5291 = vmatpush1.bf16.msra.mxu0 %v4475
  %5292 = vmatprep.subr.bf16.mxu0 %v4480
  %5293 = vmatpush1.bf16.msra.mxu0 %v4479
  %5294 = vmatprep.subr.bf16.mxu0 %v4484
  %5295 = vmatpush1.bf16.msra.mxu0 %v4483
  %5296 = vmatprep.subr.bf16.mxu0 %v4488
  %5297 = vmatpush1.bf16.msra.mxu0 %v4487
  %5298 = vmatprep.subr.bf16.mxu0 %v4492
  %5299 = vmatpush1.bf16.msra.mxu0 %v4491
  %5300 = vmatprep.subr.bf16.mxu0 %v4496
  %5301 = vmatpush1.bf16.msra.mxu0 %v4495
  %5302 = vmatprep.subr.bf16.mxu0 0
  %5303 = vmatpush1.bf16.msra.mxu0 0
  %5304 = vmatprep.subr.bf16.mxu0 0
  %5305 = vmatpush1.bf16.msra.mxu0 0
  %5306 = vmatprep.subr.bf16.mxu0 0
  %5307 = vmatpush1.bf16.msra.mxu0 0
  %5308 = vmatprep.subr.bf16.mxu0 0
  %5309 = vmatpush1.bf16.msra.mxu0 0
  %5310 = vmatprep.subr.bf16.mxu0 0
  %5311 = vmatpush1.bf16.msra.mxu0 0
  %5312 = vmatprep.subr.bf16.mxu0 0
  %5313 = vmatpush1.bf16.msra.mxu0 0
  %5314 = vmatprep.subr.bf16.mxu0 0
  %5315 = vmatpush1.bf16.msra.mxu0 0
  %5316 = vmatprep.subr.bf16.mxu0 0
  %5317 = vmatpush1.bf16.msra.mxu0 0
  %5318 = vmatprep.mubr.bf16.mxu0 0
  %5319 = vmatmul.mubr.bf16.gmra.mrb[0].mxu0 %v5285
  %v5320 = vpop.f32.mrb[0].mxu0
  %v5321 = vadd.f32 0.0, %v5320
  %v5322 = vpop.f32.mrb[0].mxu0
  %v5323 = vadd.f32 0.0, %v5322
  %v5324 = vpop.f32.mrb[0].mxu0
  %v5325 = vadd.f32 0.0, %v5324
  %v5326 = vpop.f32.mrb[0].mxu0
  %v5327 = vadd.f32 0.0, %v5326
  %5328 = vdwg.mxu0
  %5329 = vmatprep.subr.bf16.mxu0 %v4470
  %5330 = vmatpush1.bf16.msra.mxu0 %v4469
  %5331 = vmatprep.subr.bf16.mxu0 %v4474
  %5332 = vmatpush1.bf16.msra.mxu0 %v4473
  %5333 = vmatprep.subr.bf16.mxu0 %v4478
  %5334 = vmatpush1.bf16.msra.mxu0 %v4477
  %5335 = vmatprep.subr.bf16.mxu0 %v4482
  %5336 = vmatpush1.bf16.msra.mxu0 %v4481
  %5337 = vmatprep.subr.bf16.mxu0 %v4486
  %5338 = vmatpush1.bf16.msra.mxu0 %v4485
  %5339 = vmatprep.subr.bf16.mxu0 %v4490
  %5340 = vmatpush1.bf16.msra.mxu0 %v4489
  %5341 = vmatprep.subr.bf16.mxu0 %v4494
  %5342 = vmatpush1.bf16.msra.mxu0 %v4493
  %5343 = vmatprep.subr.bf16.mxu0 %v4498
  %5344 = vmatpush1.bf16.msra.mxu0 %v4497
  %5345 = vmatprep.subr.bf16.mxu0 0
  %5346 = vmatpush1.bf16.msra.mxu0 0
  %5347 = vmatprep.subr.bf16.mxu0 0
  %5348 = vmatpush1.bf16.msra.mxu0 0
  %5349 = vmatprep.subr.bf16.mxu0 0
  %5350 = vmatpush1.bf16.msra.mxu0 0
  %5351 = vmatprep.subr.bf16.mxu0 0
  %5352 = vmatpush1.bf16.msra.mxu0 0
  %5353 = vmatprep.subr.bf16.mxu0 0
  %5354 = vmatpush1.bf16.msra.mxu0 0
  %5355 = vmatprep.subr.bf16.mxu0 0
  %5356 = vmatpush1.bf16.msra.mxu0 0
  %5357 = vmatprep.subr.bf16.mxu0 0
  %5358 = vmatpush1.bf16.msra.mxu0 0
  %5359 = vmatprep.subr.bf16.mxu0 0
  %5360 = vmatpush1.bf16.msra.mxu0 0
  %5361 = vmatprep.mubr.bf16.mxu0 0
  %5362 = vmatmul.mubr.bf16.gmra.mrb[0].mxu0 %v5285
  %v5363 = vpop.f32.mrb[0].mxu0
  %v5364 = vadd.f32 0.0, %v5363
  %v5365 = vpop.f32.mrb[0].mxu0
  %v5366 = vadd.f32 0.0, %v5365
  %v5367 = vpop.f32.mrb[0].mxu0
  %v5368 = vadd.f32 0.0, %v5367
  %v5369 = vpop.f32.mrb[0].mxu0
  %v5370 = vadd.f32 0.0, %v5369
  %5371 = vdwg.mxu0
  %v5372 = vadd.f32 %v5277, %v5321
  %v5373 = vadd.f32 %v5278, %v5323
  %v5374 = vadd.f32 %v5279, %v5364
  %v5375 = vadd.f32 %v5280, %v5366
  %v5376 = vadd.f32 %v5281, %v5325
  %v5377 = vadd.f32 %v5282, %v5327
  %v5378 = vadd.f32 %v5283, %v5368
  %v5379 = vadd.f32 %v5284, %v5370
  %v5380 = vxor.u32 %v5372, 2147483648
  %v5381 = vxor.u32 %v5373, 2147483648
  %v5382 = vxor.u32 %v5374, 2147483648
  %v5383 = vxor.u32 %v5376, 2147483648
  %v5384 = vxor.u32 %v5377, 2147483648
  %v5385 = vxor.u32 %v5378, 2147483648
  %v5386 = vmul.f32 %v5380, 1.442695
  %v5387 = vpow.pop %v5386
  %v5388 = vmul.f32 %v5381, 1.442695
  %v5389 = vpow.pop %v5388
  %v5390 = vmul.f32 %v5382, 1.442695
  %v5391 = vpow.pop %v5390
  %v5392 = vmul.f32 %v5383, 1.442695
  %v5393 = vpow.pop %v5392
  %v5394 = vmul.f32 %v5384, 1.442695
  %v5395 = vpow.pop %v5394
  %v5396 = vmul.f32 %v5385, 1.442695
  %v5397 = vpow.pop %v5396
  %v5398 = vadd.f32 %v5387, 1.0
  %v5399 = vadd.f32 %v5389, 1.0
  %v5400 = vadd.f32 %v5391, 1.0
  %v5401 = vadd.f32 %v5393, 1.0
  %v5402 = vadd.f32 %v5395, 1.0
  %v5403 = vadd.f32 %v5397, 1.0
  %v5404 = vrcp.pop %v5398
  %v5405 = vmul.f32 1.0, %v5404
  %v5406 = vrcp.pop %v5399
  %v5407 = vmul.f32 1.0, %v5406
  %v5408 = vrcp.pop %v5400
  %v5409 = vmul.f32 1.0, %v5408
  %v5410 = vrcp.pop %v5401
  %v5411 = vmul.f32 1.0, %v5410
  %v5412 = vrcp.pop %v5402
  %v5413 = vmul.f32 1.0, %v5412
  %v5414 = vrcp.pop %v5403
  %v5415 = vmul.f32 1.0, %v5414
  %v5416 = vtanh.pop %v5375
  %v5417 = vtanh.pop %v5379
  %v5418 = vmul.f32 %v5407, %v5271
  %v5419 = vmul.f32 %v5413, %v5272
  %v5420 = vmul.f32 %v5405, %v5416
  %v5421 = vmul.f32 %v5411, %v5417
  %v5422 = vadd.f32 %v5418, %v5420
  %v5423 = vadd.f32 %v5419, %v5421
  %v5424 = vtanh.pop %v5422
  %v5425 = vtanh.pop %v5423
  %v5426 = vmul.f32 %v5409, %v5424
  %v5427 = vmul.f32 %v5415, %v5425
  %v5428 = vld [vmem:[%s1589] sm:$0xff]
  %v5429 = vld [vmem:[%s1589 + $0x8] sm:$0xff]
  %v5430 = vld [vmem:[%s1589 + $0x10] sm:$0xff]
  %v5431 = vld [vmem:[%s1589 + $0x18] sm:$0xff]
  %v5432 = vld [vmem:[%s1589 + $0x20] sm:$0xff]
  %v5433 = vld [vmem:[%s1589 + $0x28] sm:$0xff]
  %v5434 = vld [vmem:[%s1589 + $0x30] sm:$0xff]
  %v5435 = vld [vmem:[%s1589 + $0x38] sm:$0xff]
  %v5436 = vpack.c.bf16 %v5427, %v5426
  %5437 = vmatprep.subr.bf16.mxu0 %v4468
  %5438 = vmatpush1.bf16.msra.mxu0 %v4467
  %5439 = vmatprep.subr.bf16.mxu0 %v4472
  %5440 = vmatpush1.bf16.msra.mxu0 %v4471
  %5441 = vmatprep.subr.bf16.mxu0 %v4476
  %5442 = vmatpush1.bf16.msra.mxu0 %v4475
  %5443 = vmatprep.subr.bf16.mxu0 %v4480
  %5444 = vmatpush1.bf16.msra.mxu0 %v4479
  %5445 = vmatprep.subr.bf16.mxu0 %v4484
  %5446 = vmatpush1.bf16.msra.mxu0 %v4483
  %5447 = vmatprep.subr.bf16.mxu0 %v4488
  %5448 = vmatpush1.bf16.msra.mxu0 %v4487
  %5449 = vmatprep.subr.bf16.mxu0 %v4492
  %5450 = vmatpush1.bf16.msra.mxu0 %v4491
  %5451 = vmatprep.subr.bf16.mxu0 %v4496
  %5452 = vmatpush1.bf16.msra.mxu0 %v4495
  %5453 = vmatprep.subr.bf16.mxu0 0
  %5454 = vmatpush1.bf16.msra.mxu0 0
  %5455 = vmatprep.subr.bf16.mxu0 0
  %5456 = vmatpush1.bf16.msra.mxu0 0
  %5457 = vmatprep.subr.bf16.mxu0 0
  %5458 = vmatpush1.bf16.msra.mxu0 0
  %5459 = vmatprep.subr.bf16.mxu0 0
  %5460 = vmatpush1.bf16.msra.mxu0 0
  %5461 = vmatprep.subr.bf16.mxu0 0
  %5462 = vmatpush1.bf16.msra.mxu0 0
  %5463 = vmatprep.subr.bf16.mxu0 0
  %5464 = vmatpush1.bf16.msra.mxu0 0
  %5465 = vmatprep.subr.bf16.mxu0 0
  %5466 = vmatpush1.bf16.msra.mxu0 0
  %5467 = vmatprep.subr.bf16.mxu0 0
  %5468 = vmatpush1.bf16.msra.mxu0 0
  %5469 = vmatprep.mubr.bf16.mxu0 0
  %5470 = vmatmul.mubr.bf16.gmra.mrb[0].mxu0 %v5436
  %v5471 = vpop.f32.mrb[0].mxu0
  %v5472 = vadd.f32 0.0, %v5471
  %v5473 = vpop.f32.mrb[0].mxu0
  %v5474 = vadd.f32 0.0, %v5473
  %v5475 = vpop.f32.mrb[0].mxu0
  %v5476 = vadd.f32 0.0, %v5475
  %v5477 = vpop.f32.mrb[0].mxu0
  %v5478 = vadd.f32 0.0, %v5477
  %5479 = vdwg.mxu0
  %5480 = vmatprep.subr.bf16.mxu0 %v4470
  %5481 = vmatpush1.bf16.msra.mxu0 %v4469
  %5482 = vmatprep.subr.bf16.mxu0 %v4474
  %5483 = vmatpush1.bf16.msra.mxu0 %v4473
  %5484 = vmatprep.subr.bf16.mxu0 %v4478
  %5485 = vmatpush1.bf16.msra.mxu0 %v4477
  %5486 = vmatprep.subr.bf16.mxu0 %v4482
  %5487 = vmatpush1.bf16.msra.mxu0 %v4481
  %5488 = vmatprep.subr.bf16.mxu0 %v4486
  %5489 = vmatpush1.bf16.msra.mxu0 %v4485
  %5490 = vmatprep.subr.bf16.mxu0 %v4490
  %5491 = vmatpush1.bf16.msra.mxu0 %v4489
  %5492 = vmatprep.subr.bf16.mxu0 %v4494
  %5493 = vmatpush1.bf16.msra.mxu0 %v4493
  %5494 = vmatprep.subr.bf16.mxu0 %v4498
  %5495 = vmatpush1.bf16.msra.mxu0 %v4497
  %5496 = vmatprep.subr.bf16.mxu0 0
  %5497 = vmatpush1.bf16.msra.mxu0 0
  %5498 = vmatprep.subr.bf16.mxu0 0
  %5499 = vmatpush1.bf16.msra.mxu0 0
  %5500 = vmatprep.subr.bf16.mxu0 0
  %5501 = vmatpush1.bf16.msra.mxu0 0
  %5502 = vmatprep.subr.bf16.mxu0 0
  %5503 = vmatpush1.bf16.msra.mxu0 0
  %5504 = vmatprep.subr.bf16.mxu0 0
  %5505 = vmatpush1.bf16.msra.mxu0 0
  %5506 = vmatprep.subr.bf16.mxu0 0
  %5507 = vmatpush1.bf16.msra.mxu0 0
  %5508 = vmatprep.subr.bf16.mxu0 0
  %5509 = vmatpush1.bf16.msra.mxu0 0
  %5510 = vmatprep.subr.bf16.mxu0 0
  %5511 = vmatpush1.bf16.msra.mxu0 0
  %5512 = vmatprep.mubr.bf16.mxu0 0
  %5513 = vmatmul.mubr.bf16.gmra.mrb[0].mxu0 %v5436
  %v5514 = vpop.f32.mrb[0].mxu0
  %v5515 = vadd.f32 0.0, %v5514
  %v5516 = vpop.f32.mrb[0].mxu0
  %v5517 = vadd.f32 0.0, %v5516
  %v5518 = vpop.f32.mrb[0].mxu0
  %v5519 = vadd.f32 0.0, %v5518
  %v5520 = vpop.f32.mrb[0].mxu0
  %v5521 = vadd.f32 0.0, %v5520
  %5522 = vdwg.mxu0
  %v5523 = vadd.f32 %v5428, %v5472
  %v5524 = vadd.f32 %v5429, %v5474
  %v5525 = vadd.f32 %v5430, %v5515
  %v5526 = vadd.f32 %v5431, %v5517
  %v5527 = vadd.f32 %v5432, %v5476
  %v5528 = vadd.f32 %v5433, %v5478
  %v5529 = vadd.f32 %v5434, %v5519
  %v5530 = vadd.f32 %v5435, %v5521
  %v5531 = vxor.u32 %v5523, 2147483648
  %v5532 = vxor.u32 %v5524, 2147483648
  %v5533 = vxor.u32 %v5525, 2147483648
  %v5534 = vxor.u32 %v5527, 2147483648
  %v5535 = vxor.u32 %v5528, 2147483648
  %v5536 = vxor.u32 %v5529, 2147483648
  %v5537 = vmul.f32 %v5531, 1.442695
  %v5538 = vpow.pop %v5537
  %v5539 = vmul.f32 %v5532, 1.442695
  %v5540 = vpow.pop %v5539
  %v5541 = vmul.f32 %v5533, 1.442695
  %v5542 = vpow.pop %v5541
  %v5543 = vmul.f32 %v5534, 1.442695
  %v5544 = vpow.pop %v5543
  %v5545 = vmul.f32 %v5535, 1.442695
  %v5546 = vpow.pop %v5545
  %v5547 = vmul.f32 %v5536, 1.442695
  %v5548 = vpow.pop %v5547
  %v5549 = vadd.f32 %v5538, 1.0
  %v5550 = vadd.f32 %v5540, 1.0
  %v5551 = vadd.f32 %v5542, 1.0
  %v5552 = vadd.f32 %v5544, 1.0
  %v5553 = vadd.f32 %v5546, 1.0
  %v5554 = vadd.f32 %v5548, 1.0
  %v5555 = vrcp.pop %v5549
  %v5556 = vmul.f32 1.0, %v5555
  %v5557 = vrcp.pop %v5550
  %v5558 = vmul.f32 1.0, %v5557
  %v5559 = vrcp.pop %v5551
  %v5560 = vmul.f32 1.0, %v5559
  %v5561 = vrcp.pop %v5552
  %v5562 = vmul.f32 1.0, %v5561
  %v5563 = vrcp.pop %v5553
  %v5564 = vmul.f32 1.0, %v5563
  %v5565 = vrcp.pop %v5554
  %v5566 = vmul.f32 1.0, %v5565
  %v5567 = vtanh.pop %v5526
  %v5568 = vtanh.pop %v5530
  %v5569 = vmul.f32 %v5558, %v5422
  %v5570 = vmul.f32 %v5564, %v5423
  %v5571 = vmul.f32 %v5556, %v5567
  %v5572 = vmul.f32 %v5562, %v5568
  %v5573 = vadd.f32 %v5569, %v5571
  %v5574 = vadd.f32 %v5570, %v5572
  %v5575 = vtanh.pop %v5573
  %v5576 = vtanh.pop %v5574
  %v5577 = vmul.f32 %v5560, %v5575
  %v5578 = vmul.f32 %v5566, %v5576
  %v5579 = vld [vmem:[%s1745] sm:$0xff]
  %v5580 = vld [vmem:[%s1745 + $0x8] sm:$0xff]
  %v5581 = vld [vmem:[%s1745 + $0x10] sm:$0xff]
  %v5582 = vld [vmem:[%s1745 + $0x18] sm:$0xff]
  %v5583 = vld [vmem:[%s1745 + $0x20] sm:$0xff]
  %v5584 = vld [vmem:[%s1745 + $0x28] sm:$0xff]
  %v5585 = vld [vmem:[%s1745 + $0x30] sm:$0xff]
  %v5586 = vld [vmem:[%s1745 + $0x38] sm:$0xff]
  %v5587 = vpack.c.bf16 %v5578, %v5577
  %5588 = vmatprep.subr.bf16.mxu0 %v4468
  %5589 = vmatpush1.bf16.msra.mxu0 %v4467
  %5590 = vmatprep.subr.bf16.mxu0 %v4472
  %5591 = vmatpush1.bf16.msra.mxu0 %v4471
  %5592 = vmatprep.subr.bf16.mxu0 %v4476
  %5593 = vmatpush1.bf16.msra.mxu0 %v4475
  %5594 = vmatprep.subr.bf16.mxu0 %v4480
  %5595 = vmatpush1.bf16.msra.mxu0 %v4479
  %5596 = vmatprep.subr.bf16.mxu0 %v4484
  %5597 = vmatpush1.bf16.msra.mxu0 %v4483
  %5598 = vmatprep.subr.bf16.mxu0 %v4488
  %5599 = vmatpush1.bf16.msra.mxu0 %v4487
  %5600 = vmatprep.subr.bf16.mxu0 %v4492
  %5601 = vmatpush1.bf16.msra.mxu0 %v4491
  %5602 = vmatprep.subr.bf16.mxu0 %v4496
  %5603 = vmatpush1.bf16.msra.mxu0 %v4495
  %5604 = vmatprep.subr.bf16.mxu0 0
  %5605 = vmatpush1.bf16.msra.mxu0 0
  %5606 = vmatprep.subr.bf16.mxu0 0
  %5607 = vmatpush1.bf16.msra.mxu0 0
  %5608 = vmatprep.subr.bf16.mxu0 0
  %5609 = vmatpush1.bf16.msra.mxu0 0
  %5610 = vmatprep.subr.bf16.mxu0 0
  %5611 = vmatpush1.bf16.msra.mxu0 0
  %5612 = vmatprep.subr.bf16.mxu0 0
  %5613 = vmatpush1.bf16.msra.mxu0 0
  %5614 = vmatprep.subr.bf16.mxu0 0
  %5615 = vmatpush1.bf16.msra.mxu0 0
  %5616 = vmatprep.subr.bf16.mxu0 0
  %5617 = vmatpush1.bf16.msra.mxu0 0
  %5618 = vmatprep.subr.bf16.mxu0 0
  %5619 = vmatpush1.bf16.msra.mxu0 0
  %5620 = vmatprep.mubr.bf16.mxu0 0
  %5621 = vmatmul.mubr.bf16.gmra.mrb[0].mxu0 %v5587
  %v5622 = vpop.f32.mrb[0].mxu0
  %v5623 = vadd.f32 0.0, %v5622
  %v5624 = vpop.f32.mrb[0].mxu0
  %v5625 = vadd.f32 0.0, %v5624
  %v5626 = vpop.f32.mrb[0].mxu0
  %v5627 = vadd.f32 0.0, %v5626
  %v5628 = vpop.f32.mrb[0].mxu0
  %v5629 = vadd.f32 0.0, %v5628
  %5630 = vdwg.mxu0
  %5631 = vmatprep.subr.bf16.mxu0 %v4470
  %5632 = vmatpush1.bf16.msra.mxu0 %v4469
  %5633 = vmatprep.subr.bf16.mxu0 %v4474
  %5634 = vmatpush1.bf16.msra.mxu0 %v4473
  %5635 = vmatprep.subr.bf16.mxu0 %v4478
  %5636 = vmatpush1.bf16.msra.mxu0 %v4477
  %5637 = vmatprep.subr.bf16.mxu0 %v4482
  %5638 = vmatpush1.bf16.msra.mxu0 %v4481
  %5639 = vmatprep.subr.bf16.mxu0 %v4486
  %5640 = vmatpush1.bf16.msra.mxu0 %v4485
  %5641 = vmatprep.subr.bf16.mxu0 %v4490
  %5642 = vmatpush1.bf16.msra.mxu0 %v4489
  %5643 = vmatprep.subr.bf16.mxu0 %v4494
  %5644 = vmatpush1.bf16.msra.mxu0 %v4493
  %5645 = vmatprep.subr.bf16.mxu0 %v4498
  %5646 = vmatpush1.bf16.msra.mxu0 %v4497
  %5647 = vmatprep.subr.bf16.mxu0 0
  %5648 = vmatpush1.bf16.msra.mxu0 0
  %5649 = vmatprep.subr.bf16.mxu0 0
  %5650 = vmatpush1.bf16.msra.mxu0 0
  %5651 = vmatprep.subr.bf16.mxu0 0
  %5652 = vmatpush1.bf16.msra.mxu0 0
  %5653 = vmatprep.subr.bf16.mxu0 0
  %5654 = vmatpush1.bf16.msra.mxu0 0
  %5655 = vmatprep.subr.bf16.mxu0 0
  %5656 = vmatpush1.bf16.msra.mxu0 0
  %5657 = vmatprep.subr.bf16.mxu0 0
  %5658 = vmatpush1.bf16.msra.mxu0 0
  %5659 = vmatprep.subr.bf16.mxu0 0
  %5660 = vmatpush1.bf16.msra.mxu0 0
  %5661 = vmatprep.subr.bf16.mxu0 0
  %5662 = vmatpush1.bf16.msra.mxu0 0
  %5663 = vmatprep.mubr.bf16.mxu0 0
  %5664 = vmatmul.mubr.bf16.gmra.mrb[0].mxu0 %v5587
  %v5665 = vpop.f32.mrb[0].mxu0
  %v5666 = vadd.f32 0.0, %v5665
  %v5667 = vpop.f32.mrb[0].mxu0
  %v5668 = vadd.f32 0.0, %v5667
  %v5669 = vpop.f32.mrb[0].mxu0
  %v5670 = vadd.f32 0.0, %v5669
  %v5671 = vpop.f32.mrb[0].mxu0
  %v5672 = vadd.f32 0.0, %v5671
  %5673 = vdwg.mxu0
  %v5674 = vadd.f32 %v5579, %v5623
  %v5675 = vadd.f32 %v5580, %v5625
  %v5676 = vadd.f32 %v5581, %v5666
  %v5677 = vadd.f32 %v5582, %v5668
  %v5678 = vadd.f32 %v5583, %v5627
  %v5679 = vadd.f32 %v5584, %v5629
  %v5680 = vadd.f32 %v5585, %v5670
  %v5681 = vadd.f32 %v5586, %v5672
  %v5682 = vxor.u32 %v5674, 2147483648
  %v5683 = vxor.u32 %v5675, 2147483648
  %v5684 = vxor.u32 %v5676, 2147483648
  %v5685 = vxor.u32 %v5678, 2147483648
  %v5686 = vxor.u32 %v5679, 2147483648
  %v5687 = vxor.u32 %v5680, 2147483648
  %v5688 = vmul.f32 %v5682, 1.442695
  %v5689 = vpow.pop %v5688
  %v5690 = vmul.f32 %v5683, 1.442695
  %v5691 = vpow.pop %v5690
  %v5692 = vmul.f32 %v5684, 1.442695
  %v5693 = vpow.pop %v5692
  %v5694 = vmul.f32 %v5685, 1.442695
  %v5695 = vpow.pop %v5694
  %v5696 = vmul.f32 %v5686, 1.442695
  %v5697 = vpow.pop %v5696
  %v5698 = vmul.f32 %v5687, 1.442695
  %v5699 = vpow.pop %v5698
  %v5700 = vadd.f32 %v5689, 1.0
  %v5701 = vadd.f32 %v5691, 1.0
  %v5702 = vadd.f32 %v5693, 1.0
  %v5703 = vadd.f32 %v5695, 1.0
  %v5704 = vadd.f32 %v5697, 1.0
  %v5705 = vadd.f32 %v5699, 1.0
  %v5706 = vrcp.pop %v5700
  %v5707 = vmul.f32 1.0, %v5706
  %v5708 = vrcp.pop %v5701
  %v5709 = vmul.f32 1.0, %v5708
  %v5710 = vrcp.pop %v5702
  %v5711 = vmul.f32 1.0, %v5710
  %v5712 = vrcp.pop %v5703
  %v5713 = vmul.f32 1.0, %v5712
  %v5714 = vrcp.pop %v5704
  %v5715 = vmul.f32 1.0, %v5714
  %v5716 = vrcp.pop %v5705
  %v5717 = vmul.f32 1.0, %v5716
  %v5718 = vtanh.pop %v5677
  %v5719 = vtanh.pop %v5681
  %v5720 = vmul.f32 %v5709, %v5573
  %v5721 = vmul.f32 %v5715, %v5574
  %v5722 = vmul.f32 %v5707, %v5718
  %v5723 = vmul.f32 %v5713, %v5719
  %v5724 = vadd.f32 %v5720, %v5722
  %v5725 = vadd.f32 %v5721, %v5723
  %v5726 = vtanh.pop %v5724
  %v5727 = vtanh.pop %v5725
  %v5728 = vmul.f32 %v5711, %v5726
  %v5729 = vmul.f32 %v5717, %v5727
  %v5730 = vpack.c.bf16 %v5729, %v5728
  %v5731 = vld [vmem:[%s10] sm:$0xf]
  %v5732 = vld [vmem:[%s10 + $0x4] sm:$0xf]
  %v5733 = vld [vmem:[%s10 + $0x8] sm:$0xf]
  %v5734 = vld [vmem:[%s10 + $0xc] sm:$0xf]
  %v5735 = vld [vmem:[%s10 + $0x10] sm:$0xf]
  %v5736 = vld [vmem:[%s10 + $0x14] sm:$0xf]
  %v5737 = vld [vmem:[%s10 + $0x18] sm:$0xf]
  %v5738 = vld [vmem:[%s10 + $0x1c] sm:$0xf]
  %v5739 = vld [vmem:[%s10 + $0x20] sm:$0xf]
  %v5740 = vld [vmem:[%s10 + $0x24] sm:$0xf]
  %v5741 = vld [vmem:[%s10 + $0x28] sm:$0xf]
  %v5742 = vld [vmem:[%s10 + $0x2c] sm:$0xf]
  %v5743 = vld [vmem:[%s10 + $0x30] sm:$0xf]
  %v5744 = vld [vmem:[%s10 + $0x34] sm:$0xf]
  %v5745 = vld [vmem:[%s10 + $0x38] sm:$0xf]
  %v5746 = vld [vmem:[%s10 + $0x3c] sm:$0xf]
  %v5747 = vld [vmem:[%s11] sm:$0x1]
  %v5749 = vlaneseq
  %v5750 = vshrl.u32 %v5749, 7
  %v5751 = vsub.s32 0, %v5750
  %v5752 = vrot.slane %v5747, %v5751
  %v5770 = vunpack.c.l.b16 %v5731
  %v5771 = vunpack.c.l.b16 %v5732
  %v5772 = vunpack.c.l.b16 %v5733
  %v5773 = vunpack.c.l.b16 %v5734
  %v5774 = vunpack.c.l.b16 %v5735
  %v5775 = vunpack.c.l.b16 %v5736
  %v5776 = vunpack.c.l.b16 %v5737
  %v5777 = vunpack.c.l.b16 %v5738
  %v5778 = vunpack.c.l.b16 %v5739
  %v5779 = vunpack.c.l.b16 %v5740
  %v5780 = vunpack.c.l.b16 %v5741
  %v5781 = vunpack.c.l.b16 %v5742
  %v5782 = vunpack.c.l.b16 %v5743
  %v5783 = vunpack.c.l.b16 %v5744
  %v5784 = vunpack.c.l.b16 %v5745
  %v5785 = vunpack.c.l.b16 %v5746
  %v5786 = vpack.c.b16 %v5771, %v5770
  %v5787 = vpack.c.b16 %v5773, %v5772
  %v5788 = vpack.c.b16 %v5775, %v5774
  %v5789 = vpack.c.b16 %v5777, %v5776
  %v5790 = vpack.c.b16 %v5779, %v5778
  %v5791 = vpack.c.b16 %v5781, %v5780
  %v5792 = vpack.c.b16 %v5783, %v5782
  %v5793 = vpack.c.b16 %v5785, %v5784
  %5802 = vmatprep.subr.bf16.mxu0 0
  %5803 = vmatpush1.bf16.msra.mxu0 %v5786
  %5804 = vmatprep.subr.bf16.mxu0 0
  %5805 = vmatpush1.bf16.msra.mxu0 %v5787
  %5806 = vmatprep.subr.bf16.mxu0 0
  %5807 = vmatpush1.bf16.msra.mxu0 %v5788
  %5808 = vmatprep.subr.bf16.mxu0 0
  %5809 = vmatpush1.bf16.msra.mxu0 %v5789
  %5810 = vmatprep.subr.bf16.mxu0 0
  %5811 = vmatpush1.bf16.msra.mxu0 %v5790
  %5812 = vmatprep.subr.bf16.mxu0 0
  %5813 = vmatpush1.bf16.msra.mxu0 %v5791
  %5814 = vmatprep.subr.bf16.mxu0 0
  %5815 = vmatpush1.bf16.msra.mxu0 %v5792
  %5816 = vmatprep.subr.bf16.mxu0 0
  %5817 = vmatpush1.bf16.msra.mxu0 %v5793
  %5818 = vmatprep.subr.bf16.mxu0 0
  %5819 = vmatpush1.bf16.msra.mxu0 0
  %5820 = vmatprep.subr.bf16.mxu0 0
  %5821 = vmatpush1.bf16.msra.mxu0 0
  %5822 = vmatprep.subr.bf16.mxu0 0
  %5823 = vmatpush1.bf16.msra.mxu0 0
  %5824 = vmatprep.subr.bf16.mxu0 0
  %5825 = vmatpush1.bf16.msra.mxu0 0
  %5826 = vmatprep.subr.bf16.mxu0 0
  %5827 = vmatpush1.bf16.msra.mxu0 0
  %5828 = vmatprep.subr.bf16.mxu0 0
  %5829 = vmatpush1.bf16.msra.mxu0 0
  %5830 = vmatprep.subr.bf16.mxu0 0
  %5831 = vmatpush1.bf16.msra.mxu0 0
  %5832 = vmatprep.subr.bf16.mxu0 0
  %5833 = vmatpush1.bf16.msra.mxu0 0
  %5834 = vmatprep.mubr.bf16.mxu0 0
  %5835 = vmatmul.mubr.bf16.gmra.mrb[0].mxu0 %v5730
  %v5836 = vpop.f32.mrb[0].mxu0
  %v5837 = vadd.f32 %v5752, %v5836
  %v5838 = vpop.f32.mrb[0].mxu0
  %v5839 = vpop.f32.mrb[0].mxu0
  %v5840 = vadd.f32 %v5752, %v5839
  %v5841 = vpop.f32.mrb[0].mxu0
  %5842 = vdwg.mxu0
  %5843 = vst [vmem:[%s12] sm:$0xff] %v5837
  %5844 = vst [vmem:[%s12 + $0x8] sm:$0xff] %v5840
  // Predicated region
  $region50: #{lstm_model_forward.1} parent=0 // pred_check
    _
  $region51: #{lstm_model_forward.1} parent=0 // pred_check_branch
    %5846 = sbr.rel (0) target = $region53
  $region52: #{lstm_model_forward.1} parent=0 // pred_region
    _
  $region53: #{lstm_model_forward.1} parent=0 // pred_fallthru
    _
  // Predicated region
  $region54: #{lstm_model_forward.1} parent=0 // pred_check
    _
  $region55: #{lstm_model_forward.1} parent=0 // pred_check_branch
    %5848 = sbr.rel (0) target = $region57
  $region56: #{lstm_model_forward.1} parent=0 // pred_region
    _
  $region57: #{lstm_model_forward.1} parent=0 // pred_fallthru
    _

</llo_original>
